<compile_context>
chip_gen: v7x
topology: tpu7x:2x2x1
jax: 0.10.0
libtpu: 0.0.40
codegen_flags: <defaults>
</compile_context>

<pallas_src>
import functools
import math

import jax
import jax.numpy as jnp
from jax.experimental import pallas as pl
from jax.experimental.pallas import tpu as pltpu

LN_EPS = 1e-5
NEG_INF = -1e10


# ----------------------------- in-kernel helpers -----------------------------

def _layer_norm(x, g, b, eps):
    """x: (L, D) f32, g/b: (1, D). PyTorch nn.LayerNorm semantics (biased variance)."""
    mean = jnp.mean(x, axis=-1, keepdims=True)
    var = jnp.mean(jnp.square(x - mean), axis=-1, keepdims=True)
    return (x - mean) * jax.lax.rsqrt(var + eps) * g + b


def _attention_core(q, k, v, bias, wo, n_heads, inv_scale, attn_sink=None):
    """q: (Lq, D), k/v: (Lk, D), bias: additive f32 (broadcasts to (Lq, Lk)), wo: (D, D).

    Returns concat_h(softmax(q_h k_h^T / s + bias) v_h) @ wo, with wo folded into the
    per-head accumulation (no lane-axis concatenate, no per-head HBM stores).
    """
    Lq, D = q.shape
    dh = D // n_heads
    y = jnp.zeros((Lq, D), jnp.float32)
    # Unrolled head loop with static lane slices (dh=8). TODO(synk): head-batched
    # dot_general once dh/H are large enough for relayout cost to matter.
    for h in range(n_heads):
        sl = slice(h * dh, (h + 1) * dh)
        e = jax.lax.dot_general(q[:, sl], k[:, sl], (((1,), (1,)), ((), ())),
                                preferred_element_type=jnp.float32) * inv_scale
        e = e + bias
        e = e - jnp.max(e, axis=-1, keepdims=True)
        p = jnp.exp(e)
        a = p / jnp.sum(p, axis=-1, keepdims=True)
        if attn_sink is not None:
            # Resident VMEM output block; only the last layer's values reach HBM.
            attn_sink[0, h] = a
        ctx = jnp.dot(a, v[:, sl], preferred_element_type=jnp.float32)      # (Lq, dh)
        y = y + jnp.dot(ctx, wo[sl, :], preferred_element_type=jnp.float32)  # (Lq, D)
    return y


def _self_mha(x, bias, wqkv, bqkv, wo, bo, n_heads, inv_scale, attn_sink=None):
    """Fused QKV projection + multi-head attention + output projection."""
    D = x.shape[-1]
    qkv = jnp.dot(x, wqkv, preferred_element_type=jnp.float32) + bqkv        # (L, 3D)
    q, k, v = qkv[:, :D], qkv[:, D:2 * D], qkv[:, 2 * D:]
    return _attention_core(q, k, v, bias, wo, n_heads, inv_scale, attn_sink) + bo


def _cross_mha(x, kv_src, bias, wq, bq, wkv, bkv, wo, bo, n_heads, inv_scale,
               attn_sink=None):
    D = x.shape[-1]
    q = jnp.dot(x, wq, preferred_element_type=jnp.float32) + bq              # (Lq, D)
    kv = jnp.dot(kv_src, wkv, preferred_element_type=jnp.float32) + bkv      # (Lk, 2D)
    k, v = kv[:, :D], kv[:, D:]
    return _attention_core(q, k, v, bias, wo, n_heads, inv_scale, attn_sink) + bo


def _ffn(x, w1, b1, w2, b2):
    h = jnp.maximum(jnp.dot(x, w1, preferred_element_type=jnp.float32) + b1, 0.0)
    return jnp.dot(h, w2, preferred_element_type=jnp.float32) + b2


# ----------------------------- fused encoder kernel -----------------------------

def _encoder_kernel(x_ref, bias_ref,
                    wqkv_ref, bqkv_ref, wo_ref, bo_ref, g1_ref, be1_ref,
                    w1_ref, b1_ref, w2_ref, b2_ref, g2_ref, be2_ref,
                    o_ref, *, n_heads, inv_scale, eps):
    # Layer 0: seed the resident carry buffer with the embedding block.
    @pl.when(pl.program_id(1) == 0)
    def _():
        o_ref[...] = x_ref[...]

    x = o_ref[0]                                   # (Ls, D), carried across layers
    bias = bias_ref[0]                             # (1, Ls) additive key-pad bias

    y = _self_mha(x, bias, wqkv_ref[0], bqkv_ref[0], wo_ref[0], bo_ref[0],
                  n_heads, inv_scale)
    x = _layer_norm(x + y, g1_ref[0], be1_ref[0], eps)

    y = _ffn(x, w1_ref[0], b1_ref[0], w2_ref[0], b2_ref[0])
    x = _layer_norm(x + y, g2_ref[0], be2_ref[0], eps)

    o_ref[0] = x


def encoder_forward(p, src, src_bias, n_heads):
    B, Ls = src.shape
    D = p["tok_emb"].shape[1]
    nl, _, F = p["w1"].shape
    dh = D // n_heads

    x = (jnp.take(p["tok_emb"], src, axis=0) * math.sqrt(D)
         + p["pos_emb"][:Ls][None, :, :]).astype(jnp.float32)

    d3 = lambda b, l: (b, 0, 0)    # data blocks: indexed by batch, resident across layers
    w3 = lambda b, l: (l, 0, 0)    # weight blocks: indexed by layer

    return pl.pallas_call(
        functools.partial(_encoder_kernel, n_heads=n_heads,
                          inv_scale=1.0 / math.sqrt(dh), eps=LN_EPS),
        out_shape=jax.ShapeDtypeStruct((B, Ls, D), jnp.float32),
        grid=(B, nl),
        in_specs=[
            pl.BlockSpec((1, Ls, D), d3),          # token+pos embeddings
            pl.BlockSpec((1, 1, Ls), d3),          # additive src mask bias
            pl.BlockSpec((1, D, 3 * D), w3),       # fused QKV weight
            pl.BlockSpec((1, 1, 3 * D), w3),
            pl.BlockSpec((1, D, D), w3),           # wo
            pl.BlockSpec((1, 1, D), w3),
            pl.BlockSpec((1, 1, D), w3),           # ln1 gamma / beta
            pl.BlockSpec((1, 1, D), w3),
            pl.BlockSpec((1, D, F), w3),           # ffn fc1
            pl.BlockSpec((1, 1, F), w3),
            pl.BlockSpec((1, F, D), w3),           # ffn fc2
            pl.BlockSpec((1, 1, D), w3),
            pl.BlockSpec((1, 1, D), w3),           # ln2 gamma / beta
            pl.BlockSpec((1, 1, D), w3),
        ],
        out_specs=pl.BlockSpec((1, Ls, D), d3),
        compiler_params=pltpu.CompilerParams(
            dimension_semantics=("parallel", "arbitrary")),
    )(x, src_bias,
      p["w_qkv"], p["b_qkv"], p["wo"], p["bo"], p["ln1_g"], p["ln1_b"],
      p["w1"], p["b1"], p["w2"], p["b2"], p["ln2_g"], p["ln2_b"])


# ----------------------------- fused decoder kernel -----------------------------

def _decoder_kernel(x_ref, enc_ref, tbias_ref, sbias_ref,
                    swqkv_ref, sbqkv_ref, swo_ref, sbo_ref, g1_ref, be1_ref,
                    cwq_ref, cbq_ref, cwkv_ref, cbkv_ref, cwo_ref, cbo_ref,
                    g2_ref, be2_ref,
                    w1_ref, b1_ref, w2_ref, b2_ref, g3_ref, be3_ref,
                    o_ref, a_ref, *, n_heads, inv_scale, eps):
    @pl.when(pl.program_id(1) == 0)
    def _():
        o_ref[...] = x_ref[...]

    x = o_ref[0]                                   # (Lt, D), carried across layers
    enc = enc_ref[0]                               # (Ls, D), resident across layers
    tbias = tbias_ref[0]                           # (Lt, Lt) causal + pad additive bias
    sbias = sbias_ref[0]                           # (1, Ls) key-pad additive bias

    # masked self-attention block
    y = _self_mha(x, tbias, swqkv_ref[0], sbqkv_ref[0], swo_ref[0], sbo_ref[0],
                  n_heads, inv_scale)
    x = _layer_norm(x + y, g1_ref[0], be1_ref[0], eps)

    # cross-attention block; a_ref is resident so only the LAST layer's probabilities
    # (the ones the PyTorch module returns) are written back to HBM.
    y = _cross_mha(x, enc, sbias, cwq_ref[0], cbq_ref[0], cwkv_ref[0], cbkv_ref[0],
                   cwo_ref[0], cbo_ref[0], n_heads, inv_scale, attn_sink=a_ref)
    x = _layer_norm(x + y, g2_ref[0], be2_ref[0], eps)

    # position-wise FFN block
    y = _ffn(x, w1_ref[0], b1_ref[0], w2_ref[0], b2_ref[0])
    x = _layer_norm(x + y, g3_ref[0], be3_ref[0], eps)

    o_ref[0] = x


def decoder_forward(p, trg, enc_src, trg_bias, src_bias, n_heads):
    B, Lt = trg.shape
    Ls = enc_src.shape[1]
    D = p["tok_emb"].shape[1]
    nl, _, F = p["w1"].shape
    H = n_heads
    dh = D // n_heads

    x = (jnp.take(p["tok_emb"], trg, axis=0) * math.sqrt(D)
         + p["pos_emb"][:Lt][None, :, :]).astype(jnp.float32)

    d3 = lambda b, l: (b, 0, 0)
    d4 = lambda b, l: (b, 0, 0, 0)
    w3 = lambda b, l: (l, 0, 0)

    x_out, attention = pl.pallas_call(
        functools.partial(_decoder_kernel, n_heads=n_heads,
                          inv_scale=1.0 / math.sqrt(dh), eps=LN_EPS),
        out_shape=(jax.ShapeDtypeStruct((B, Lt, D), jnp.float32),
                   jax.ShapeDtypeStruct((B, H, Lt, Ls), jnp.float32)),
        grid=(B, nl),
        in_specs=[
            pl.BlockSpec((1, Lt, D), d3),          # trg token+pos embeddings
            pl.BlockSpec((1, Ls, D), d3),          # encoder output
            pl.BlockSpec((1, Lt, Lt), d3),         # additive trg (causal+pad) bias
            pl.BlockSpec((1, 1, Ls), d3),          # additive src pad bias
            pl.BlockSpec((1, D, 3 * D), w3), pl.BlockSpec((1, 1, 3 * D), w3),  # self qkv
            pl.BlockSpec((1, D, D), w3), pl.BlockSpec((1, 1, D), w3),          # self wo
            pl.BlockSpec((1, 1, D), w3), pl.BlockSpec((1, 1, D), w3),          # ln1
            pl.BlockSpec((1, D, D), w3), pl.BlockSpec((1, 1, D), w3),          # cross wq
            pl.BlockSpec((1, D, 2 * D), w3), pl.BlockSpec((1, 1, 2 * D), w3),  # cross wkv
            pl.BlockSpec((1, D, D), w3), pl.BlockSpec((1, 1, D), w3),          # cross wo
            pl.BlockSpec((1, 1, D), w3), pl.BlockSpec((1, 1, D), w3),          # ln2
            pl.BlockSpec((1, D, F), w3), pl.BlockSpec((1, 1, F), w3),          # ffn fc1
            pl.BlockSpec((1, F, D), w3), pl.BlockSpec((1, 1, D), w3),          # ffn fc2
            pl.BlockSpec((1, 1, D), w3), pl.BlockSpec((1, 1, D), w3),          # ln3
        ],
        out_specs=(pl.BlockSpec((1, Lt, D), d3),
                   pl.BlockSpec((1, H, Lt, Ls), d4)),
        compiler_params=pltpu.CompilerParams(
            dimension_semantics=("parallel", "arbitrary")),
    )(x, enc_src, trg_bias, src_bias,
      p["self_w_qkv"], p["self_b_qkv"], p["self_wo"], p["self_bo"],
      p["ln1_g"], p["ln1_b"],
      p["cross_wq"], p["cross_bq"], p["cross_wkv"], p["cross_bkv"],
      p["cross_wo"], p["cross_bo"], p["ln2_g"], p["ln2_b"],
      p["w1"], p["b1"], p["w2"], p["b2"], p["ln3_g"], p["ln3_b"])

    logits = linear(x_out.reshape(B * Lt, D), p["fc_out_w"], p["fc_out_b"])
    return logits.reshape(B, Lt, -1), attention


# ----------------------------- fc_out linear kernel -----------------------------

def _linear_kernel(x_ref, w_ref, b_ref, o_ref):
    o_ref[...] = (jnp.dot(x_ref[...], w_ref[...], preferred_element_type=jnp.float32)
                  + b_ref[...]).astype(o_ref.dtype)


def linear(x, w, b, tm=256, tn=512):
    """x: (M, K), w: (K, N), b: (N,). nn.Linear (weight pre-transposed).

    Grid ordered (N-tiles, M-tiles) with M fastest-varying so the (K, tn) weight tile stays
    VMEM-resident while activation row tiles stream (matters at real vocabulary sizes)."""
    M, K = x.shape
    N = w.shape[1]
    tm = min(tm, M)
    tn = min(tn, N)
    return pl.pallas_call(
        _linear_kernel,
        out_shape=jax.ShapeDtypeStruct((M, N), jnp.float32),
        grid=(pl.cdiv(N, tn), pl.cdiv(M, tm)),
        in_specs=[
            pl.BlockSpec((tm, K), lambda j, i: (i, 0)),
            pl.BlockSpec((K, tn), lambda j, i: (0, j)),
            pl.BlockSpec((1, tn), lambda j, i: (0, j)),
        ],
        out_specs=pl.BlockSpec((tm, tn), lambda j, i: (i, j)),
        compiler_params=pltpu.CompilerParams(
            dimension_semantics=("parallel", "parallel")),
    )(x, w, b.reshape(1, N))


# ----------------------------- masks (hoisted, additive f32) -----------------------------

def make_bias(src, trg, src_pad_idx, trg_pad_idx):
    """Additive attention biases (0 where allowed, -1e10 where masked), built once per forward."""
    src_bias = jnp.where((src != src_pad_idx)[:, None, :], 0.0, NEG_INF).astype(jnp.float32)
    Lt = trg.shape[1]
    trg_pad = (trg != trg_pad_idx)[:, None, :]                     # (B, 1, Lt)
    causal = jnp.tril(jnp.ones((Lt, Lt), dtype=bool))[None]        # (1, Lt, Lt)
    trg_bias = jnp.where(trg_pad & causal, 0.0, NEG_INF).astype(jnp.float32)
    return src_bias, trg_bias


def seq2seq_forward(params, src, trg, src_pad_idx, trg_pad_idx, n_heads):
    src_bias, trg_bias = make_bias(src, trg, src_pad_idx, trg_pad_idx)
    enc_src = encoder_forward(params["encoder"], src, src_bias, n_heads)
    output, attention = decoder_forward(params["decoder"], trg, enc_src,
                                        trg_bias, src_bias, n_heads)
    return output, attention


# ----------------------------- deterministic init -----------------------------

def init_params(key, input_dim, output_dim, hid_dim, n_layers, n_heads, pf_dim, max_len):
    keys = [key]

    def nxt():
        keys[0], k = jax.random.split(keys[0])
        return k

    def dense(din, dout):
        lim = 1.0 / math.sqrt(din)
        w = jax.random.uniform(nxt(), (din, dout), jnp.float32, -lim, lim)
        b = jax.random.uniform(nxt(), (dout,), jnp.float32, -lim, lim)
        return w, b

    def stacked_dense(din, dout):
        ws, bs = [], []
        for _ in range(n_layers):
            w, b = dense(din, dout)
            ws.append(w)
            bs.append(b[None, :])
        return jnp.stack(ws), jnp.stack(bs)        # (nl, din, dout), (nl, 1, dout)

    def stacked_ln():
        return (jnp.ones((n_layers, 1, hid_dim), jnp.float32),
                jnp.zeros((n_layers, 1, hid_dim), jnp.float32))

    # encoder (per-layer weights stacked along a leading layer axis)
    e_wqkv, e_bqkv = stacked_dense(hid_dim, 3 * hid_dim)
    e_wo, e_bo = stacked_dense(hid_dim, hid_dim)
    e_ln1g, e_ln1b = stacked_ln()
    e_w1, e_b1 = stacked_dense(hid_dim, pf_dim)
    e_w2, e_b2 = stacked_dense(pf_dim, hid_dim)
    e_ln2g, e_ln2b = stacked_ln()
    encoder = dict(
        tok_emb=jax.random.normal(nxt(), (input_dim, hid_dim), jnp.float32),
        pos_emb=jax.random.normal(nxt(), (max_len, hid_dim), jnp.float32),
        w_qkv=e_wqkv, b_qkv=e_bqkv, wo=e_wo, bo=e_bo,
        ln1_g=e_ln1g, ln1_b=e_ln1b,
        w1=e_w1, b1=e_b1, w2=e_w2, b2=e_b2,
        ln2_g=e_ln2g, ln2_b=e_ln2b)

    # decoder
    d_swqkv, d_sbqkv = stacked_dense(hid_dim, 3 * hid_dim)
    d_swo, d_sbo = stacked_dense(hid_dim, hid_dim)
    d_ln1g, d_ln1b = stacked_ln()
    d_cwq, d_cbq = stacked_dense(hid_dim, hid_dim)
    d_cwkv, d_cbkv = stacked_dense(hid_dim, 2 * hid_dim)
    d_cwo, d_cbo = stacked_dense(hid_dim, hid_dim)
    d_ln2g, d_ln2b = stacked_ln()
    d_w1, d_b1 = stacked_dense(hid_dim, pf_dim)
    d_w2, d_b2 = stacked_dense(pf_dim, hid_dim)
    d_ln3g, d_ln3b = stacked_ln()
    fc_out_w, fc_out_b = dense(hid_dim, output_dim)
    decoder = dict(
        tok_emb=jax.random.normal(nxt(), (output_dim, hid_dim), jnp.float32),
        pos_emb=jax.random.normal(nxt(), (max_len, hid_dim), jnp.float32),
        self_w_qkv=d_swqkv, self_b_qkv=d_sbqkv, self_wo=d_swo, self_bo=d_sbo,
        ln1_g=d_ln1g, ln1_b=d_ln1b,
        cross_wq=d_cwq, cross_bq=d_cbq, cross_wkv=d_cwkv, cross_bkv=d_cbkv,
        cross_wo=d_cwo, cross_bo=d_cbo, ln2_g=d_ln2g, ln2_b=d_ln2b,
        w1=d_w1, b1=d_b1, w2=d_w2, b2=d_b2, ln3_g=d_ln3g, ln3_b=d_ln3b,
        fc_out_w=fc_out_w, fc_out_b=fc_out_b)

    return dict(encoder=encoder, decoder=decoder)


# --------------------------------- main ------------------------------------

if __name__ == "__main__":
    INPUT_DIM, OUTPUT_DIM = 100, 100
    HID_DIM, N_LAYERS, N_HEADS, PF_DIM, MAX_LEN = 32, 2, 4, 64, 50
    SRC_PAD_IDX, TRG_PAD_IDX = 1, 1
    B, LS, LT = 2, 8, 8

    root = jax.random.PRNGKey(0)
    pk, sk, tk = jax.random.split(root, 3)
    params = init_params(pk, INPUT_DIM, OUTPUT_DIM, HID_DIM, N_LAYERS, N_HEADS,
                         PF_DIM, MAX_LEN)

    src = jax.random.randint(sk, (B, LS), 2, INPUT_DIM, dtype=jnp.int32)
    trg = jax.random.randint(tk, (B, LT), 2, OUTPUT_DIM, dtype=jnp.int32)
    # introduce some padding tokens so the masks are non-trivial
    src = src.at[:, -2:].set(SRC_PAD_IDX)
    trg = trg.at[:, -1:].set(TRG_PAD_IDX)

    fwd = jax.jit(functools.partial(seq2seq_forward, src_pad_idx=SRC_PAD_IDX,
                                    trg_pad_idx=TRG_PAD_IDX, n_heads=N_HEADS))
    output, attention = fwd(params, src, trg)
    output, attention = jax.block_until_ready((output, attention))

    assert output.shape == (B, LT, OUTPUT_DIM), output.shape
    assert attention.shape == (B, N_HEADS, LT, LS), attention.shape
    assert bool(jnp.all(jnp.isfinite(output))) and bool(jnp.all(jnp.isfinite(attention)))
    # attention rows over non-masked keys must sum to ~1 (exact-division softmax)
    assert bool(jnp.all(jnp.abs(jnp.sum(attention, axis=-1) - 1.0) < 1e-4))
    print("KERNEL_OK")
</pallas_src>

<mosaic_0001>
module attributes {stable_mosaic.version = 11 : i64} {
  func.func @_linear_kernel(%arg0: i32, %arg1: i32, %arg2: memref<16x32xf32, #tpu.memory_space<vmem>>, %arg3: memref<32x100xf32, #tpu.memory_space<vmem>>, %arg4: memref<1x100xf32, #tpu.memory_space<vmem>>, %arg5: memref<16x100xf32, #tpu.memory_space<vmem>>) attributes {dimension_semantics = [#tpu.dimension_semantics<parallel>, #tpu.dimension_semantics<parallel>], iteration_bounds = array<i64: 1, 1>, scalar_prefetch = 0 : i64, scratch_operands = 0 : i64, tpu.core_type = #tpu.core_type<tc>, window_params = [{transform_indices = @transform_0, window_bounds = array<i64: 16, 32>}, {transform_indices = @transform_1, window_bounds = array<i64: 32, 100>}, {transform_indices = @transform_2, window_bounds = array<i64: 1, 100>}, {transform_indices = @transform_3, window_bounds = array<i64: 16, 100>}]} {
    %c0 = arith.constant 0 : index
    %c0_0 = arith.constant 0 : index
    %0 = vector.load %arg2[%c0, %c0_0] : memref<16x32xf32, #tpu.memory_space<vmem>>, vector<16x32xf32>
    %c0_1 = arith.constant 0 : index
    %c0_2 = arith.constant 0 : index
    %1 = vector.load %arg3[%c0_1, %c0_2] : memref<32x100xf32, #tpu.memory_space<vmem>>, vector<32x100xf32>
    %cst = arith.constant dense<0.000000e+00> : vector<16x100xf32>
    %2 = tpu.matmul %0, %1, %cst {dimension_numbers = #tpu.dot_dimension_numbers<[1], [0], [0], [1], [0, 0, 1, 1], [], []>} : vector<16x32xf32>, vector<32x100xf32>, vector<16x100xf32> -> vector<16x100xf32>
    %c0_3 = arith.constant 0 : index
    %c0_4 = arith.constant 0 : index
    %3 = vector.load %arg4[%c0_3, %c0_4] : memref<1x100xf32, #tpu.memory_space<vmem>>, vector<1x100xf32>
    %4 = vector.broadcast %3 : vector<1x100xf32> to vector<16x100xf32>
    %5 = arith.addf %2, %4 : vector<16x100xf32>
    %c0_5 = arith.constant 0 : index
    %c0_6 = arith.constant 0 : index
    %6 = vector.load %arg5[%c0_5, %c0_6] : memref<16x100xf32, #tpu.memory_space<vmem>>, vector<16x100xf32>
    tpu.vector_store %arg5[%c0_5, %c0_6], %5 {strides = array<i32>} : memref<16x100xf32, #tpu.memory_space<vmem>>, vector<16x100xf32>,
    return
  }
  func.func @transform_0(%arg0: i32, %arg1: i32) -> (i32, i32) {
    %c0_i32 = arith.constant 0 : i32
    %c0_i32_0 = arith.constant 0 : i32
    return %arg1, %c0_i32 : i32, i32
  }
  func.func @transform_1(%arg0: i32, %arg1: i32) -> (i32, i32) {
    %c0_i32 = arith.constant 0 : i32
    %c0_i32_0 = arith.constant 0 : i32
    return %c0_i32, %arg0 : i32, i32
  }
  func.func @transform_2(%arg0: i32, %arg1: i32) -> (i32, i32) {
    %c0_i32 = arith.constant 0 : i32
    %c0_i32_0 = arith.constant 0 : i32
    return %c0_i32, %arg0 : i32, i32
  }
  func.func @transform_3(%arg0: i32, %arg1: i32) -> (i32, i32) {
    %c0_i32 = arith.constant 0 : i32
    return %arg1, %arg0 : i32, i32
  }
}

module attributes {stable_mosaic.version = 11 : i64} {
  func.func @_encoder_kernel(%arg0: i32, %arg1: i32, %arg2: memref<1x8x32xf32, #tpu.memory_space<vmem>>, %arg3: memref<1x1x8xf32, #tpu.memory_space<vmem>>, %arg4: memref<1x32x96xf32, #tpu.memory_space<vmem>>, %arg5: memref<1x1x96xf32, #tpu.memory_space<vmem>>, %arg6: memref<1x32x32xf32, #tpu.memory_space<vmem>>, %arg7: memref<1x1x32xf32, #tpu.memory_space<vmem>>, %arg8: memref<1x1x32xf32, #tpu.memory_space<vmem>>, %arg9: memref<1x1x32xf32, #tpu.memory_space<vmem>>, %arg10: memref<1x32x64xf32, #tpu.memory_space<vmem>>, %arg11: memref<1x1x64xf32, #tpu.memory_space<vmem>>, %arg12: memref<1x64x32xf32, #tpu.memory_space<vmem>>, %arg13: memref<1x1x32xf32, #tpu.memory_space<vmem>>, %arg14: memref<1x1x32xf32, #tpu.memory_space<vmem>>, %arg15: memref<1x1x32xf32, #tpu.memory_space<vmem>>, %arg16: memref<1x8x32xf32, #tpu.memory_space<vmem>>) attributes {dimension_semantics = [#tpu.dimension_semantics<parallel>, #tpu.dimension_semantics<arbitrary>], iteration_bounds = array<i64: 2, 2>, scalar_prefetch = 0 : i64, scratch_operands = 0 : i64, tpu.core_type = #tpu.core_type<tc>, window_params = [{transform_indices = @transform_0, window_bounds = array<i64: 1, 8, 32>}, {transform_indices = @transform_1, window_bounds = array<i64: 1, 1, 8>}, {transform_indices = @transform_2, window_bounds = array<i64: 1, 32, 96>}, {transform_indices = @transform_3, window_bounds = array<i64: 1, 1, 96>}, {transform_indices = @transform_4, window_bounds = array<i64: 1, 32, 32>}, {transform_indices = @transform_5, window_bounds = array<i64: 1, 1, 32>}, {transform_indices = @transform_6, window_bounds = array<i64: 1, 1, 32>}, {transform_indices = @transform_7, window_bounds = array<i64: 1, 1, 32>}, {transform_indices = @transform_8, window_bounds = array<i64: 1, 32, 64>}, {transform_indices = @transform_9, window_bounds = array<i64: 1, 1, 64>}, {transform_indices = @transform_10, window_bounds = array<i64: 1, 64, 32>}, {transform_indices = @transform_11, window_bounds = array<i64: 1, 1, 32>}, {transform_indices = @transform_12, window_bounds = array<i64: 1, 1, 32>}, {transform_indices = @transform_13, window_bounds = array<i64: 1, 1, 32>}, {transform_indices = @transform_14, window_bounds = array<i64: 1, 8, 32>}]} {
    %c0_i32 = arith.constant 0 : i32
    %0 = arith.cmpi eq, %arg1, %c0_i32 : i32
    %1 = arith.extui %0 : i1 to i32
    %c0_i32_0 = arith.constant 0 : i32
    %2 = arith.cmpi ne, %1, %c0_i32_0 : i32
    scf.if %2 {
      %c0_83 = arith.constant 0 : index
      %c0_84 = arith.constant 0 : index
      %c0_85 = arith.constant 0 : index
      %181 = vector.load %arg2[%c0_83, %c0_84, %c0_85] : memref<1x8x32xf32, #tpu.memory_space<vmem>>, vector<1x8x32xf32>
      %c0_86 = arith.constant 0 : index
      %c0_87 = arith.constant 0 : index
      %c0_88 = arith.constant 0 : index
      %182 = vector.load %arg16[%c0_86, %c0_87, %c0_88] : memref<1x8x32xf32, #tpu.memory_space<vmem>>, vector<1x8x32xf32>
      tpu.vector_store %arg16[%c0_86, %c0_87, %c0_88], %181 {strides = array<i32>} : memref<1x8x32xf32, #tpu.memory_space<vmem>>, vector<1x8x32xf32>,
    } else {
    }
    %c0 = arith.constant 0 : index
    %c0_1 = arith.constant 0 : index
    %c0_2 = arith.constant 0 : index
    %3 = vector.load %arg16[%c0, %c0_1, %c0_2] : memref<1x8x32xf32, #tpu.memory_space<vmem>>, vector<1x8x32xf32>
    %4 = vector.shape_cast %3 : vector<1x8x32xf32> to vector<8x32xf32>
    %c0_3 = arith.constant 0 : index
    %c0_4 = arith.constant 0 : index
    %c0_5 = arith.constant 0 : index
    %5 = vector.load %arg3[%c0_3, %c0_4, %c0_5] : memref<1x1x8xf32, #tpu.memory_space<vmem>>, vector<1x1x8xf32>
    %6 = vector.shape_cast %5 : vector<1x1x8xf32> to vector<1x8xf32>
    %c0_6 = arith.constant 0 : index
    %c0_7 = arith.constant 0 : index
    %c0_8 = arith.constant 0 : index
    %7 = vector.load %arg4[%c0_6, %c0_7, %c0_8] : memref<1x32x96xf32, #tpu.memory_space<vmem>>, vector<1x32x96xf32>
    %8 = vector.shape_cast %7 : vector<1x32x96xf32> to vector<32x96xf32>
    %c0_9 = arith.constant 0 : index
    %c0_10 = arith.constant 0 : index
    %c0_11 = arith.constant 0 : index
    %9 = vector.load %arg5[%c0_9, %c0_10, %c0_11] : memref<1x1x96xf32, #tpu.memory_space<vmem>>, vector<1x1x96xf32>
    %10 = vector.shape_cast %9 : vector<1x1x96xf32> to vector<1x96xf32>
    %c0_12 = arith.constant 0 : index
    %c0_13 = arith.constant 0 : index
    %c0_14 = arith.constant 0 : index
    %11 = vector.load %arg6[%c0_12, %c0_13, %c0_14] : memref<1x32x32xf32, #tpu.memory_space<vmem>>, vector<1x32x32xf32>
    %12 = vector.shape_cast %11 : vector<1x32x32xf32> to vector<32x32xf32>
    %c0_15 = arith.constant 0 : index
    %c0_16 = arith.constant 0 : index
    %c0_17 = arith.constant 0 : index
    %13 = vector.load %arg7[%c0_15, %c0_16, %c0_17] : memref<1x1x32xf32, #tpu.memory_space<vmem>>, vector<1x1x32xf32>
    %14 = vector.shape_cast %13 : vector<1x1x32xf32> to vector<1x32xf32>
    %cst = arith.constant dense<0.000000e+00> : vector<8x96xf32>
    %15 = tpu.matmul %4, %8, %cst {dimension_numbers = #tpu.dot_dimension_numbers<[1], [0], [0], [1], [0, 0, 1, 1], [], []>} : vector<8x32xf32>, vector<32x96xf32>, vector<8x96xf32> -> vector<8x96xf32>
    %16 = vector.broadcast %10 : vector<1x96xf32> to vector<8x96xf32>
    %17 = arith.addf %15, %16 : vector<8x96xf32>
    %18 = vector.extract_strided_slice %17 {offsets = [0, 0], sizes = [8, 32], strides = [1, 1]} : vector<8x96xf32> to vector<8x32xf32>
    %19 = vector.extract_strided_slice %17 {offsets = [0, 32], sizes = [8, 32], strides = [1, 1]} : vector<8x96xf32> to vector<8x32xf32>
    %20 = vector.extract_strided_slice %17 {offsets = [0, 64], sizes = [8, 32], strides = [1, 1]} : vector<8x96xf32> to vector<8x32xf32>
    %cst_18 = arith.constant 0.000000e+00 : f32
    %21 = vector.broadcast %cst_18 : f32 to vector<8x32xf32>
    %22 = vector.extract_strided_slice %18 {offsets = [0, 0], sizes = [8, 8], strides = [1, 1]} : vector<8x32xf32> to vector<8x8xf32>
    %23 = vector.extract_strided_slice %19 {offsets = [0, 0], sizes = [8, 8], strides = [1, 1]} : vector<8x32xf32> to vector<8x8xf32>
    %cst_19 = arith.constant dense<0.000000e+00> : vector<8x8xf32>
    %24 = tpu.matmul %22, %23, %cst_19 {dimension_numbers = #tpu.dot_dimension_numbers<[1], [1], [0], [0], [0, 0, 1, 0], [], []>} : vector<8x8xf32>, vector<8x8xf32>, vector<8x8xf32> -> vector<8x8xf32>
    %cst_20 = arith.constant 0.353553385 : f32
    %25 = vector.broadcast %cst_20 : f32 to vector<8x8xf32>
    %26 = arith.mulf %24, %25 : vector<8x8xf32>
    %27 = vector.broadcast %6 : vector<1x8xf32> to vector<8x8xf32>
    %28 = arith.addf %26, %27 : vector<8x8xf32>
    %cst_21 = arith.constant dense<0xFF800000> : vector<8xf32>
    %29 = vector.multi_reduction <maximumf>, %28, %cst_21 [1] : vector<8x8xf32> to vector<8xf32>
    %30 = vector.shape_cast %29 : vector<8xf32> to vector<8x1xf32>
    %31 = vector.broadcast %30 : vector<8x1xf32> to vector<8x8xf32>
    %32 = arith.subf %28, %31 : vector<8x8xf32>
    %33 = math.exp %32 : vector<8x8xf32>
    %cst_22 = arith.constant dense<0.000000e+00> : vector<8xf32>
    %34 = vector.multi_reduction <add>, %33, %cst_22 [1] : vector<8x8xf32> to vector<8xf32>
    %35 = vector.shape_cast %34 : vector<8xf32> to vector<8x1xf32>
    %36 = vector.broadcast %35 : vector<8x1xf32> to vector<8x8xf32>
    %37 = arith.divf %33, %36 : vector<8x8xf32>
    %38 = vector.extract_strided_slice %20 {offsets = [0, 0], sizes = [8, 8], strides = [1, 1]} : vector<8x32xf32> to vector<8x8xf32>
    %cst_23 = arith.constant dense<0.000000e+00> : vector<8x8xf32>
    %39 = tpu.matmul %37, %38, %cst_23 {dimension_numbers = #tpu.dot_dimension_numbers<[1], [0], [0], [1], [0, 0, 1, 1], [], []>} : vector<8x8xf32>, vector<8x8xf32>, vector<8x8xf32> -> vector<8x8xf32>
    %40 = vector.extract_strided_slice %12 {offsets = [0, 0], sizes = [8, 32], strides = [1, 1]} : vector<32x32xf32> to vector<8x32xf32>
    %cst_24 = arith.constant dense<0.000000e+00> : vector<8x32xf32>
    %41 = tpu.matmul %39, %40, %cst_24 {dimension_numbers = #tpu.dot_dimension_numbers<[1], [0], [0], [1], [0, 0, 1, 1], [], []>} : vector<8x8xf32>, vector<8x32xf32>, vector<8x32xf32> -> vector<8x32xf32>
    %42 = arith.addf %21, %41 : vector<8x32xf32>
    %43 = vector.extract_strided_slice %18 {offsets = [0, 8], sizes = [8, 8], strides = [1, 1]} : vector<8x32xf32> to vector<8x8xf32>
    %44 = vector.extract_strided_slice %19 {offsets = [0, 8], sizes = [8, 8], strides = [1, 1]} : vector<8x32xf32> to vector<8x8xf32>
    %cst_25 = arith.constant dense<0.000000e+00> : vector<8x8xf32>
    %45 = tpu.matmul %43, %44, %cst_25 {dimension_numbers = #tpu.dot_dimension_numbers<[1], [1], [0], [0], [0, 0, 1, 0], [], []>} : vector<8x8xf32>, vector<8x8xf32>, vector<8x8xf32> -> vector<8x8xf32>
    %cst_26 = arith.constant 0.353553385 : f32
    %46 = vector.broadcast %cst_26 : f32 to vector<8x8xf32>
    %47 = arith.mulf %45, %46 : vector<8x8xf32>
    %48 = vector.broadcast %6 : vector<1x8xf32> to vector<8x8xf32>
    %49 = arith.addf %47, %48 : vector<8x8xf32>
    %cst_27 = arith.constant dense<0xFF800000> : vector<8xf32>
    %50 = vector.multi_reduction <maximumf>, %49, %cst_27 [1] : vector<8x8xf32> to vector<8xf32>
    %51 = vector.shape_cast %50 : vector<8xf32> to vector<8x1xf32>
    %52 = vector.broadcast %51 : vector<8x1xf32> to vector<8x8xf32>
    %53 = arith.subf %49, %52 : vector<8x8xf32>
    %54 = math.exp %53 : vector<8x8xf32>
    %cst_28 = arith.constant dense<0.000000e+00> : vector<8xf32>
    %55 = vector.multi_reduction <add>, %54, %cst_28 [1] : vector<8x8xf32> to vector<8xf32>
    %56 = vector.shape_cast %55 : vector<8xf32> to vector<8x1xf32>
    %57 = vector.broadcast %56 : vector<8x1xf32> to vector<8x8xf32>
    %58 = arith.divf %54, %57 : vector<8x8xf32>
    %59 = vector.extract_strided_slice %20 {offsets = [0, 8], sizes = [8, 8], strides = [1, 1]} : vector<8x32xf32> to vector<8x8xf32>
    %cst_29 = arith.constant dense<0.000000e+00> : vector<8x8xf32>
    %60 = tpu.matmul %58, %59, %cst_29 {dimension_numbers = #tpu.dot_dimension_numbers<[1], [0], [0], [1], [0, 0, 1, 1], [], []>} : vector<8x8xf32>, vector<8x8xf32>, vector<8x8xf32> -> vector<8x8xf32>
    %61 = vector.extract_strided_slice %12 {offsets = [8, 0], sizes = [8, 32], strides = [1, 1]} : vector<32x32xf32> to vector<8x32xf32>
    %cst_30 = arith.constant dense<0.000000e+00> : vector<8x32xf32>
    %62 = tpu.matmul %60, %61, %cst_30 {dimension_numbers = #tpu.dot_dimension_numbers<[1], [0], [0], [1], [0, 0, 1, 1], [], []>} : vector<8x8xf32>, vector<8x32xf32>, vector<8x32xf32> -> vector<8x32xf32>
    %63 = arith.addf %42, %62 : vector<8x32xf32>
    %64 = vector.extract_strided_slice %18 {offsets = [0, 16], sizes = [8, 8], strides = [1, 1]} : vector<8x32xf32> to vector<8x8xf32>
    %65 = vector.extract_strided_slice %19 {offsets = [0, 16], sizes = [8, 8], strides = [1, 1]} : vector<8x32xf32> to vector<8x8xf32>
    %cst_31 = arith.constant dense<0.000000e+00> : vector<8x8xf32>
    %66 = tpu.matmul %64, %65, %cst_31 {dimension_numbers = #tpu.dot_dimension_numbers<[1], [1], [0], [0], [0, 0, 1, 0], [], []>} : vector<8x8xf32>, vector<8x8xf32>, vector<8x8xf32> -> vector<8x8xf32>
    %cst_32 = arith.constant 0.353553385 : f32
    %67 = vector.broadcast %cst_32 : f32 to vector<8x8xf32>
    %68 = arith.mulf %66, %67 : vector<8x8xf32>
    %69 = vector.broadcast %6 : vector<1x8xf32> to vector<8x8xf32>
    %70 = arith.addf %68, %69 : vector<8x8xf32>
    %cst_33 = arith.constant dense<0xFF800000> : vector<8xf32>
    %71 = vector.multi_reduction <maximumf>, %70, %cst_33 [1] : vector<8x8xf32> to vector<8xf32>
    %72 = vector.shape_cast %71 : vector<8xf32> to vector<8x1xf32>
    %73 = vector.broadcast %72 : vector<8x1xf32> to vector<8x8xf32>
    %74 = arith.subf %70, %73 : vector<8x8xf32>
    %75 = math.exp %74 : vector<8x8xf32>
    %cst_34 = arith.constant dense<0.000000e+00> : vector<8xf32>
    %76 = vector.multi_reduction <add>, %75, %cst_34 [1] : vector<8x8xf32> to vector<8xf32>
    %77 = vector.shape_cast %76 : vector<8xf32> to vector<8x1xf32>
    %78 = vector.broadcast %77 : vector<8x1xf32> to vector<8x8xf32>
    %79 = arith.divf %75, %78 : vector<8x8xf32>
    %80 = vector.extract_strided_slice %20 {offsets = [0, 16], sizes = [8, 8], strides = [1, 1]} : vector<8x32xf32> to vector<8x8xf32>
    %cst_35 = arith.constant dense<0.000000e+00> : vector<8x8xf32>
    %81 = tpu.matmul %79, %80, %cst_35 {dimension_numbers = #tpu.dot_dimension_numbers<[1], [0], [0], [1], [0, 0, 1, 1], [], []>} : vector<8x8xf32>, vector<8x8xf32>, vector<8x8xf32> -> vector<8x8xf32>
    %82 = vector.extract_strided_slice %12 {offsets = [16, 0], sizes = [8, 32], strides = [1, 1]} : vector<32x32xf32> to vector<8x32xf32>
    %cst_36 = arith.constant dense<0.000000e+00> : vector<8x32xf32>
    %83 = tpu.matmul %81, %82, %cst_36 {dimension_numbers = #tpu.dot_dimension_numbers<[1], [0], [0], [1], [0, 0, 1, 1], [], []>} : vector<8x8xf32>, vector<8x32xf32>, vector<8x32xf32> -> vector<8x32xf32>
    %84 = arith.addf %63, %83 : vector<8x32xf32>
    %85 = vector.extract_strided_slice %18 {offsets = [0, 24], sizes = [8, 8], strides = [1, 1]} : vector<8x32xf32> to vector<8x8xf32>
    %86 = vector.extract_strided_slice %19 {offsets = [0, 24], sizes = [8, 8], strides = [1, 1]} : vector<8x32xf32> to vector<8x8xf32>
    %cst_37 = arith.constant dense<0.000000e+00> : vector<8x8xf32>
    %87 = tpu.matmul %85, %86, %cst_37 {dimension_numbers = #tpu.dot_dimension_numbers<[1], [1], [0], [0], [0, 0, 1, 0], [], []>} : vector<8x8xf32>, vector<8x8xf32>, vector<8x8xf32> -> vector<8x8xf32>
    %cst_38 = arith.constant 0.353553385 : f32
    %88 = vector.broadcast %cst_38 : f32 to vector<8x8xf32>
    %89 = arith.mulf %87, %88 : vector<8x8xf32>
    %90 = vector.broadcast %6 : vector<1x8xf32> to vector<8x8xf32>
    %91 = arith.addf %89, %90 : vector<8x8xf32>
    %cst_39 = arith.constant dense<0xFF800000> : vector<8xf32>
    %92 = vector.multi_reduction <maximumf>, %91, %cst_39 [1] : vector<8x8xf32> to vector<8xf32>
    %93 = vector.shape_cast %92 : vector<8xf32> to vector<8x1xf32>
    %94 = vector.broadcast %93 : vector<8x1xf32> to vector<8x8xf32>
    %95 = arith.subf %91, %94 : vector<8x8xf32>
    %96 = math.exp %95 : vector<8x8xf32>
    %cst_40 = arith.constant dense<0.000000e+00> : vector<8xf32>
    %97 = vector.multi_reduction <add>, %96, %cst_40 [1] : vector<8x8xf32> to vector<8xf32>
    %98 = vector.shape_cast %97 : vector<8xf32> to vector<8x1xf32>
    %99 = vector.broadcast %98 : vector<8x1xf32> to vector<8x8xf32>
    %100 = arith.divf %96, %99 : vector<8x8xf32>
    %101 = vector.extract_strided_slice %20 {offsets = [0, 24], sizes = [8, 8], strides = [1, 1]} : vector<8x32xf32> to vector<8x8xf32>
    %cst_41 = arith.constant dense<0.000000e+00> : vector<8x8xf32>
    %102 = tpu.matmul %100, %101, %cst_41 {dimension_numbers = #tpu.dot_dimension_numbers<[1], [0], [0], [1], [0, 0, 1, 1], [], []>} : vector<8x8xf32>, vector<8x8xf32>, vector<8x8xf32> -> vector<8x8xf32>
    %103 = vector.extract_strided_slice %12 {offsets = [24, 0], sizes = [8, 32], strides = [1, 1]} : vector<32x32xf32> to vector<8x32xf32>
    %cst_42 = arith.constant dense<0.000000e+00> : vector<8x32xf32>
    %104 = tpu.matmul %102, %103, %cst_42 {dimension_numbers = #tpu.dot_dimension_numbers<[1], [0], [0], [1], [0, 0, 1, 1], [], []>} : vector<8x8xf32>, vector<8x32xf32>, vector<8x32xf32> -> vector<8x32xf32>
    %105 = arith.addf %84, %104 : vector<8x32xf32>
    %106 = vector.broadcast %14 : vector<1x32xf32> to vector<8x32xf32>
    %107 = arith.addf %105, %106 : vector<8x32xf32>
    %108 = arith.addf %4, %107 : vector<8x32xf32>
    %c0_43 = arith.constant 0 : index
    %c0_44 = arith.constant 0 : index
    %c0_45 = arith.constant 0 : index
    %109 = vector.load %arg8[%c0_43, %c0_44, %c0_45] : memref<1x1x32xf32, #tpu.memory_space<vmem>>, vector<1x1x32xf32>
    %110 = vector.shape_cast %109 : vector<1x1x32xf32> to vector<1x32xf32>
    %c0_46 = arith.constant 0 : index
    %c0_47 = arith.constant 0 : index
    %c0_48 = arith.constant 0 : index
    %111 = vector.load %arg9[%c0_46, %c0_47, %c0_48] : memref<1x1x32xf32, #tpu.memory_space<vmem>>, vector<1x1x32xf32>
    %112 = vector.shape_cast %111 : vector<1x1x32xf32> to vector<1x32xf32>
    %cst_49 = arith.constant dense<0.000000e+00> : vector<8xf32>
    %113 = vector.multi_reduction <add>, %108, %cst_49 [1] : vector<8x32xf32> to vector<8xf32>
    %114 = vector.shape_cast %113 : vector<8xf32> to vector<8x1xf32>
    %cst_50 = arith.constant 3.200000e+01 : f32
    %115 = vector.broadcast %cst_50 : f32 to vector<8x1xf32>
    %116 = arith.divf %114, %115 : vector<8x1xf32>
    %117 = vector.broadcast %116 : vector<8x1xf32> to vector<8x32xf32>
    %118 = arith.subf %108, %117 : vector<8x32xf32>
    %119 = arith.mulf %118, %118 : vector<8x32xf32>
    %cst_51 = arith.constant dense<0.000000e+00> : vector<8xf32>
    %120 = vector.multi_reduction <add>, %119, %cst_51 [1] : vector<8x32xf32> to vector<8xf32>
    %121 = vector.shape_cast %120 : vector<8xf32> to vector<8x1xf32>
    %cst_52 = arith.constant 3.200000e+01 : f32
    %122 = vector.broadcast %cst_52 : f32 to vector<8x1xf32>
    %123 = arith.divf %121, %122 : vector<8x1xf32>
    %124 = vector.broadcast %116 : vector<8x1xf32> to vector<8x32xf32>
    %125 = arith.subf %108, %124 : vector<8x32xf32>
    %cst_53 = arith.constant 9.99999974E-6 : f32
    %126 = vector.broadcast %cst_53 : f32 to vector<8x1xf32>
    %127 = arith.addf %123, %126 : vector<8x1xf32>
    %128 = math.rsqrt %127 : vector<8x1xf32>
    %129 = vector.broadcast %128 : vector<8x1xf32> to vector<8x32xf32>
    %130 = arith.mulf %125, %129 : vector<8x32xf32>
    %131 = vector.broadcast %110 : vector<1x32xf32> to vector<8x32xf32>
    %132 = arith.mulf %130, %131 : vector<8x32xf32>
    %133 = vector.broadcast %112 : vector<1x32xf32> to vector<8x32xf32>
    %134 = arith.addf %132, %133 : vector<8x32xf32>
    %c0_54 = arith.constant 0 : index
    %c0_55 = arith.constant 0 : index
    %c0_56 = arith.constant 0 : index
    %135 = vector.load %arg10[%c0_54, %c0_55, %c0_56] : memref<1x32x64xf32, #tpu.memory_space<vmem>>, vector<1x32x64xf32>
    %136 = vector.shape_cast %135 : vector<1x32x64xf32> to vector<32x64xf32>
    %c0_57 = arith.constant 0 : index
    %c0_58 = arith.constant 0 : index
    %c0_59 = arith.constant 0 : index
    %137 = vector.load %arg11[%c0_57, %c0_58, %c0_59] : memref<1x1x64xf32, #tpu.memory_space<vmem>>, vector<1x1x64xf32>
    %138 = vector.shape_cast %137 : vector<1x1x64xf32> to vector<1x64xf32>
    %c0_60 = arith.constant 0 : index
    %c0_61 = arith.constant 0 : index
    %c0_62 = arith.constant 0 : index
    %139 = vector.load %arg12[%c0_60, %c0_61, %c0_62] : memref<1x64x32xf32, #tpu.memory_space<vmem>>, vector<1x64x32xf32>
    %140 = vector.shape_cast %139 : vector<1x64x32xf32> to vector<64x32xf32>
    %c0_63 = arith.constant 0 : index
    %c0_64 = arith.constant 0 : index
    %c0_65 = arith.constant 0 : index
    %141 = vector.load %arg13[%c0_63, %c0_64, %c0_65] : memref<1x1x32xf32, #tpu.memory_space<vmem>>, vector<1x1x32xf32>
    %142 = vector.shape_cast %141 : vector<1x1x32xf32> to vector<1x32xf32>
    %cst_66 = arith.constant dense<0.000000e+00> : vector<8x64xf32>
    %143 = tpu.matmul %134, %136, %cst_66 {dimension_numbers = #tpu.dot_dimension_numbers<[1], [0], [0], [1], [0, 0, 1, 1], [], []>} : vector<8x32xf32>, vector<32x64xf32>, vector<8x64xf32> -> vector<8x64xf32>
    %144 = vector.broadcast %138 : vector<1x64xf32> to vector<8x64xf32>
    %145 = arith.addf %143, %144 : vector<8x64xf32>
    %cst_67 = arith.constant 0.000000e+00 : f32
    %146 = vector.broadcast %cst_67 : f32 to vector<8x64xf32>
    %147 = arith.maximumf %145, %146 : vector<8x64xf32>
    %cst_68 = arith.constant dense<0.000000e+00> : vector<8x32xf32>
    %148 = tpu.matmul %147, %140, %cst_68 {dimension_numbers = #tpu.dot_dimension_numbers<[1], [0], [0], [1], [0, 0, 1, 1], [], []>} : vector<8x64xf32>, vector<64x32xf32>, vector<8x32xf32> -> vector<8x32xf32>
    %149 = vector.broadcast %142 : vector<1x32xf32> to vector<8x32xf32>
    %150 = arith.addf %148, %149 : vector<8x32xf32>
    %151 = arith.addf %134, %150 : vector<8x32xf32>
    %c0_69 = arith.constant 0 : index
    %c0_70 = arith.constant 0 : index
    %c0_71 = arith.constant 0 : index
    %152 = vector.load %arg14[%c0_69, %c0_70, %c0_71] : memref<1x1x32xf32, #tpu.memory_space<vmem>>, vector<1x1x32xf32>
    %153 = vector.shape_cast %152 : vector<1x1x32xf32> to vector<1x32xf32>
    %c0_72 = arith.constant 0 : index
    %c0_73 = arith.constant 0 : index
    %c0_74 = arith.constant 0 : index
    %154 = vector.load %arg15[%c0_72, %c0_73, %c0_74] : memref<1x1x32xf32, #tpu.memory_space<vmem>>, vector<1x1x32xf32>
    %155 = vector.shape_cast %154 : vector<1x1x32xf32> to vector<1x32xf32>
    %cst_75 = arith.constant dense<0.000000e+00> : vector<8xf32>
    %156 = vector.multi_reduction <add>, %151, %cst_75 [1] : vector<8x32xf32> to vector<8xf32>
    %157 = vector.shape_cast %156 : vector<8xf32> to vector<8x1xf32>
    %cst_76 = arith.constant 3.200000e+01 : f32
    %158 = vector.broadcast %cst_76 : f32 to vector<8x1xf32>
    %159 = arith.divf %157, %158 : vector<8x1xf32>
    %160 = vector.broadcast %159 : vector<8x1xf32> to vector<8x32xf32>
    %161 = arith.subf %151, %160 : vector<8x32xf32>
    %162 = arith.mulf %161, %161 : vector<8x32xf32>
    %cst_77 = arith.constant dense<0.000000e+00> : vector<8xf32>
    %163 = vector.multi_reduction <add>, %162, %cst_77 [1] : vector<8x32xf32> to vector<8xf32>
    %164 = vector.shape_cast %163 : vector<8xf32> to vector<8x1xf32>
    %cst_78 = arith.constant 3.200000e+01 : f32
    %165 = vector.broadcast %cst_78 : f32 to vector<8x1xf32>
    %166 = arith.divf %164, %165 : vector<8x1xf32>
    %167 = vector.broadcast %159 : vector<8x1xf32> to vector<8x32xf32>
    %168 = arith.subf %151, %167 : vector<8x32xf32>
    %cst_79 = arith.constant 9.99999974E-6 : f32
    %169 = vector.broadcast %cst_79 : f32 to vector<8x1xf32>
    %170 = arith.addf %166, %169 : vector<8x1xf32>
    %171 = math.rsqrt %170 : vector<8x1xf32>
    %172 = vector.broadcast %171 : vector<8x1xf32> to vector<8x32xf32>
    %173 = arith.mulf %168, %172 : vector<8x32xf32>
    %174 = vector.broadcast %153 : vector<1x32xf32> to vector<8x32xf32>
    %175 = arith.mulf %173, %174 : vector<8x32xf32>
    %176 = vector.broadcast %155 : vector<1x32xf32> to vector<8x32xf32>
    %177 = arith.addf %175, %176 : vector<8x32xf32>
    %c0_80 = arith.constant 0 : index
    %c0_81 = arith.constant 0 : index
    %c0_82 = arith.constant 0 : index
    %178 = vector.load %arg16[%c0_80, %c0_81, %c0_82] : memref<1x8x32xf32, #tpu.memory_space<vmem>>, vector<1x8x32xf32>
    %179 = vector.shape_cast %178 : vector<1x8x32xf32> to vector<8x32xf32>
    %180 = vector.shape_cast %177 : vector<8x32xf32> to vector<1x8x32xf32>
    tpu.vector_store %arg16[%c0_80, %c0_81, %c0_82], %180 {strides = array<i32>} : memref<1x8x32xf32, #tpu.memory_space<vmem>>, vector<1x8x32xf32>,
    return
  }
  func.func @transform_0(%arg0: i32, %arg1: i32) -> (i32, i32, i32) {
    %c0_i32 = arith.constant 0 : i32
    %c0_i32_0 = arith.constant 0 : i32
    %c0_i32_1 = arith.constant 0 : i32
    return %arg0, %c0_i32, %c0_i32_0 : i32, i32, i32
  }
  func.func @transform_1(%arg0: i32, %arg1: i32) -> (i32, i32, i32) {
    %c0_i32 = arith.constant 0 : i32
    %c0_i32_0 = arith.constant 0 : i32
    %c0_i32_1 = arith.constant 0 : i32
    return %arg0, %c0_i32, %c0_i32_0 : i32, i32, i32
  }
  func.func @transform_2(%arg0: i32, %arg1: i32) -> (i32, i32, i32) {
    %c0_i32 = arith.constant 0 : i32
    %c0_i32_0 = arith.constant 0 : i32
    %c0_i32_1 = arith.constant 0 : i32
    return %arg1, %c0_i32, %c0_i32_0 : i32, i32, i32
  }
  func.func @transform_3(%arg0: i32, %arg1: i32) -> (i32, i32, i32) {
    %c0_i32 = arith.constant 0 : i32
    %c0_i32_0 = arith.constant 0 : i32
    %c0_i32_1 = arith.constant 0 : i32
    return %arg1, %c0_i32, %c0_i32_0 : i32, i32, i32
  }
  func.func @transform_4(%arg0: i32, %arg1: i32) -> (i32, i32, i32) {
    %c0_i32 = arith.constant 0 : i32
    %c0_i32_0 = arith.constant 0 : i32
    %c0_i32_1 = arith.constant 0 : i32
    return %arg1, %c0_i32, %c0_i32_0 : i32, i32, i32
  }
  func.func @transform_5(%arg0: i32, %arg1: i32) -> (i32, i32, i32) {
    %c0_i32 = arith.constant 0 : i32
    %c0_i32_0 = arith.constant 0 : i32
    %c0_i32_1 = arith.constant 0 : i32
    return %arg1, %c0_i32, %c0_i32_0 : i32, i32, i32
  }
  func.func @transform_6(%arg0: i32, %arg1: i32) -> (i32, i32, i32) {
    %c0_i32 = arith.constant 0 : i32
    %c0_i32_0 = arith.constant 0 : i32
    %c0_i32_1 = arith.constant 0 : i32
    return %arg1, %c0_i32, %c0_i32_0 : i32, i32, i32
  }
  func.func @transform_7(%arg0: i32, %arg1: i32) -> (i32, i32, i32) {
    %c0_i32 = arith.constant 0 : i32
    %c0_i32_0 = arith.constant 0 : i32
    %c0_i32_1 = arith.constant 0 : i32
    return %arg1, %c0_i32, %c0_i32_0 : i32, i32, i32
  }
  func.func @transform_8(%arg0: i32, %arg1: i32) -> (i32, i32, i32) {
    %c0_i32 = arith.constant 0 : i32
    %c0_i32_0 = arith.constant 0 : i32
    %c0_i32_1 = arith.constant 0 : i32
    return %arg1, %c0_i32, %c0_i32_0 : i32, i32, i32
  }
  func.func @transform_9(%arg0: i32, %arg1: i32) -> (i32, i32, i32) {
    %c0_i32 = arith.constant 0 : i32
    %c0_i32_0 = arith.constant 0 : i32
    %c0_i32_1 = arith.constant 0 : i32
    return %arg1, %c0_i32, %c0_i32_0 : i32, i32, i32
  }
  func.func @transform_10(%arg0: i32, %arg1: i32) -> (i32, i32, i32) {
    %c0_i32 = arith.constant 0 : i32
    %c0_i32_0 = arith.constant 0 : i32
    %c0_i32_1 = arith.constant 0 : i32
    return %arg1, %c0_i32, %c0_i32_0 : i32, i32, i32
  }
  func.func @transform_11(%arg0: i32, %arg1: i32) -> (i32, i32, i32) {
    %c0_i32 = arith.constant 0 : i32
    %c0_i32_0 = arith.constant 0 : i32
    %c0_i32_1 = arith.constant 0 : i32
    return %arg1, %c0_i32, %c0_i32_0 : i32, i32, i32
  }
  func.func @transform_12(%arg0: i32, %arg1: i32) -> (i32, i32, i32) {
    %c0_i32 = arith.constant 0 : i32
    %c0_i32_0 = arith.constant 0 : i32
    %c0_i32_1 = arith.constant 0 : i32
    return %arg1, %c0_i32, %c0_i32_0 : i32, i32, i32
  }
  func.func @transform_13(%arg0: i32, %arg1: i32) -> (i32, i32, i32) {
    %c0_i32 = arith.constant 0 : i32
    %c0_i32_0 = arith.constant 0 : i32
    %c0_i32_1 = arith.constant 0 : i32
    return %arg1, %c0_i32, %c0_i32_0 : i32, i32, i32
  }
  func.func @transform_14(%arg0: i32, %arg1: i32) -> (i32, i32, i32) {
    %c0_i32 = arith.constant 0 : i32
    %c0_i32_0 = arith.constant 0 : i32
    %c0_i32_1 = arith.constant 0 : i32
    return %arg0, %c0_i32, %c0_i32_0 : i32, i32, i32
  }
}

module attributes {stable_mosaic.version = 11 : i64} {
  func.func @_decoder_kernel(%arg0: i32, %arg1: i32, %arg2: memref<1x8x32xf32, #tpu.memory_space<vmem>>, %arg3: memref<1x8x32xf32, #tpu.memory_space<vmem>>, %arg4: memref<1x8x8xf32, #tpu.memory_space<vmem>>, %arg5: memref<1x1x8xf32, #tpu.memory_space<vmem>>, %arg6: memref<1x32x96xf32, #tpu.memory_space<vmem>>, %arg7: memref<1x1x96xf32, #tpu.memory_space<vmem>>, %arg8: memref<1x32x32xf32, #tpu.memory_space<vmem>>, %arg9: memref<1x1x32xf32, #tpu.memory_space<vmem>>, %arg10: memref<1x1x32xf32, #tpu.memory_space<vmem>>, %arg11: memref<1x1x32xf32, #tpu.memory_space<vmem>>, %arg12: memref<1x32x32xf32, #tpu.memory_space<vmem>>, %arg13: memref<1x1x32xf32, #tpu.memory_space<vmem>>, %arg14: memref<1x32x64xf32, #tpu.memory_space<vmem>>, %arg15: memref<1x1x64xf32, #tpu.memory_space<vmem>>, %arg16: memref<1x32x32xf32, #tpu.memory_space<vmem>>, %arg17: memref<1x1x32xf32, #tpu.memory_space<vmem>>, %arg18: memref<1x1x32xf32, #tpu.memory_space<vmem>>, %arg19: memref<1x1x32xf32, #tpu.memory_space<vmem>>, %arg20: memref<1x32x64xf32, #tpu.memory_space<vmem>>, %arg21: memref<1x1x64xf32, #tpu.memory_space<vmem>>, %arg22: memref<1x64x32xf32, #tpu.memory_space<vmem>>, %arg23: memref<1x1x32xf32, #tpu.memory_space<vmem>>, %arg24: memref<1x1x32xf32, #tpu.memory_space<vmem>>, %arg25: memref<1x1x32xf32, #tpu.memory_space<vmem>>, %arg26: memref<1x8x32xf32, #tpu.memory_space<vmem>>, %arg27: memref<1x4x8x8xf32, #tpu.memory_space<vmem>>) attributes {dimension_semantics = [#tpu.dimension_semantics<parallel>, #tpu.dimension_semantics<arbitrary>], iteration_bounds = array<i64: 2, 2>, scalar_prefetch = 0 : i64, scratch_operands = 0 : i64, tpu.core_type = #tpu.core_type<tc>, window_params = [{transform_indices = @transform_0, window_bounds = array<i64: 1, 8, 32>}, {transform_indices = @transform_1, window_bounds = array<i64: 1, 8, 32>}, {transform_indices = @transform_2, window_bounds = array<i64: 1, 8, 8>}, {transform_indices = @transform_3, window_bounds = array<i64: 1, 1, 8>}, {transform_indices = @transform_4, window_bounds = array<i64: 1, 32, 96>}, {transform_indices = @transform_5, window_bounds = array<i64: 1, 1, 96>}, {transform_indices = @transform_6, window_bounds = array<i64: 1, 32, 32>}, {transform_indices = @transform_7, window_bounds = array<i64: 1, 1, 32>}, {transform_indices = @transform_8, window_bounds = array<i64: 1, 1, 32>}, {transform_indices = @transform_9, window_bounds = array<i64: 1, 1, 32>}, {transform_indices = @transform_10, window_bounds = array<i64: 1, 32, 32>}, {transform_indices = @transform_11, window_bounds = array<i64: 1, 1, 32>}, {transform_indices = @transform_12, window_bounds = array<i64: 1, 32, 64>}, {transform_indices = @transform_13, window_bounds = array<i64: 1, 1, 64>}, {transform_indices = @transform_14, window_bounds = array<i64: 1, 32, 32>}, {transform_indices = @transform_15, window_bounds = array<i64: 1, 1, 32>}, {transform_indices = @transform_16, window_bounds = array<i64: 1, 1, 32>}, {transform_indices = @transform_17, window_bounds = array<i64: 1, 1, 32>}, {transform_indices = @transform_18, window_bounds = array<i64: 1, 32, 64>}, {transform_indices = @transform_19, window_bounds = array<i64: 1, 1, 64>}, {transform_indices = @transform_20, window_bounds = array<i64: 1, 64, 32>}, {transform_indices = @transform_21, window_bounds = array<i64: 1, 1, 32>}, {transform_indices = @transform_22, window_bounds = array<i64: 1, 1, 32>}, {transform_indices = @transform_23, window_bounds = array<i64: 1, 1, 32>}, {transform_indices = @transform_24, window_bounds = array<i64: 1, 8, 32>}, {transform_indices = @transform_25, window_bounds = array<i64: 1, 4, 8, 8>}]} {
    %c0_i32 = arith.constant 0 : i32
    %0 = arith.cmpi eq, %arg1, %c0_i32 : i32
    %1 = arith.extui %0 : i1 to i32
    %c0_i32_0 = arith.constant 0 : i32
    %2 = arith.cmpi ne, %1, %c0_i32_0 : i32
    scf.if %2 {
      %c0_158 = arith.constant 0 : index
      %c0_159 = arith.constant 0 : index
      %c0_160 = arith.constant 0 : index
      %327 = vector.load %arg2[%c0_158, %c0_159, %c0_160] : memref<1x8x32xf32, #tpu.memory_space<vmem>>, vector<1x8x32xf32>
      %c0_161 = arith.constant 0 : index
      %c0_162 = arith.constant 0 : index
      %c0_163 = arith.constant 0 : index
      %328 = vector.load %arg26[%c0_161, %c0_162, %c0_163] : memref<1x8x32xf32, #tpu.memory_space<vmem>>, vector<1x8x32xf32>
      tpu.vector_store %arg26[%c0_161, %c0_162, %c0_163], %327 {strides = array<i32>} : memref<1x8x32xf32, #tpu.memory_space<vmem>>, vector<1x8x32xf32>,
    } else {
    }
    %c0 = arith.constant 0 : index
    %c0_1 = arith.constant 0 : index
    %c0_2 = arith.constant 0 : index
    %3 = vector.load %arg26[%c0, %c0_1, %c0_2] : memref<1x8x32xf32, #tpu.memory_space<vmem>>, vector<1x8x32xf32>
    %4 = vector.shape_cast %3 : vector<1x8x32xf32> to vector<8x32xf32>
    %c0_3 = arith.constant 0 : index
    %c0_4 = arith.constant 0 : index
    %c0_5 = arith.constant 0 : index
    %5 = vector.load %arg3[%c0_3, %c0_4, %c0_5] : memref<1x8x32xf32, #tpu.memory_space<vmem>>, vector<1x8x32xf32>
    %6 = vector.shape_cast %5 : vector<1x8x32xf32> to vector<8x32xf32>
    %c0_6 = arith.constant 0 : index
    %c0_7 = arith.constant 0 : index
    %c0_8 = arith.constant 0 : index
    %7 = vector.load %arg4[%c0_6, %c0_7, %c0_8] : memref<1x8x8xf32, #tpu.memory_space<vmem>>, vector<1x8x8xf32>
    %8 = vector.shape_cast %7 : vector<1x8x8xf32> to vector<8x8xf32>
    %c0_9 = arith.constant 0 : index
    %c0_10 = arith.constant 0 : index
    %c0_11 = arith.constant 0 : index
    %9 = vector.load %arg5[%c0_9, %c0_10, %c0_11] : memref<1x1x8xf32, #tpu.memory_space<vmem>>, vector<1x1x8xf32>
    %10 = vector.shape_cast %9 : vector<1x1x8xf32> to vector<1x8xf32>
    %c0_12 = arith.constant 0 : index
    %c0_13 = arith.constant 0 : index
    %c0_14 = arith.constant 0 : index
    %11 = vector.load %arg6[%c0_12, %c0_13, %c0_14] : memref<1x32x96xf32, #tpu.memory_space<vmem>>, vector<1x32x96xf32>
    %12 = vector.shape_cast %11 : vector<1x32x96xf32> to vector<32x96xf32>
    %c0_15 = arith.constant 0 : index
    %c0_16 = arith.constant 0 : index
    %c0_17 = arith.constant 0 : index
    %13 = vector.load %arg7[%c0_15, %c0_16, %c0_17] : memref<1x1x96xf32, #tpu.memory_space<vmem>>, vector<1x1x96xf32>
    %14 = vector.shape_cast %13 : vector<1x1x96xf32> to vector<1x96xf32>
    %c0_18 = arith.constant 0 : index
    %c0_19 = arith.constant 0 : index
    %c0_20 = arith.constant 0 : index
    %15 = vector.load %arg8[%c0_18, %c0_19, %c0_20] : memref<1x32x32xf32, #tpu.memory_space<vmem>>, vector<1x32x32xf32>
    %16 = vector.shape_cast %15 : vector<1x32x32xf32> to vector<32x32xf32>
    %c0_21 = arith.constant 0 : index
    %c0_22 = arith.constant 0 : index
    %c0_23 = arith.constant 0 : index
    %17 = vector.load %arg9[%c0_21, %c0_22, %c0_23] : memref<1x1x32xf32, #tpu.memory_space<vmem>>, vector<1x1x32xf32>
    %18 = vector.shape_cast %17 : vector<1x1x32xf32> to vector<1x32xf32>
    %cst = arith.constant dense<0.000000e+00> : vector<8x96xf32>
    %19 = tpu.matmul %4, %12, %cst {dimension_numbers = #tpu.dot_dimension_numbers<[1], [0], [0], [1], [0, 0, 1, 1], [], []>} : vector<8x32xf32>, vector<32x96xf32>, vector<8x96xf32> -> vector<8x96xf32>
    %20 = vector.broadcast %14 : vector<1x96xf32> to vector<8x96xf32>
    %21 = arith.addf %19, %20 : vector<8x96xf32>
    %22 = vector.extract_strided_slice %21 {offsets = [0, 0], sizes = [8, 32], strides = [1, 1]} : vector<8x96xf32> to vector<8x32xf32>
    %23 = vector.extract_strided_slice %21 {offsets = [0, 32], sizes = [8, 32], strides = [1, 1]} : vector<8x96xf32> to vector<8x32xf32>
    %24 = vector.extract_strided_slice %21 {offsets = [0, 64], sizes = [8, 32], strides = [1, 1]} : vector<8x96xf32> to vector<8x32xf32>
    %cst_24 = arith.constant 0.000000e+00 : f32
    %25 = vector.broadcast %cst_24 : f32 to vector<8x32xf32>
    %26 = vector.extract_strided_slice %22 {offsets = [0, 0], sizes = [8, 8], strides = [1, 1]} : vector<8x32xf32> to vector<8x8xf32>
    %27 = vector.extract_strided_slice %23 {offsets = [0, 0], sizes = [8, 8], strides = [1, 1]} : vector<8x32xf32> to vector<8x8xf32>
    %cst_25 = arith.constant dense<0.000000e+00> : vector<8x8xf32>
    %28 = tpu.matmul %26, %27, %cst_25 {dimension_numbers = #tpu.dot_dimension_numbers<[1], [1], [0], [0], [0, 0, 1, 0], [], []>} : vector<8x8xf32>, vector<8x8xf32>, vector<8x8xf32> -> vector<8x8xf32>
    %cst_26 = arith.constant 0.353553385 : f32
    %29 = vector.broadcast %cst_26 : f32 to vector<8x8xf32>
    %30 = arith.mulf %28, %29 : vector<8x8xf32>
    %31 = arith.addf %30, %8 : vector<8x8xf32>
    %cst_27 = arith.constant dense<0xFF800000> : vector<8xf32>
    %32 = vector.multi_reduction <maximumf>, %31, %cst_27 [1] : vector<8x8xf32> to vector<8xf32>
    %33 = vector.shape_cast %32 : vector<8xf32> to vector<8x1xf32>
    %34 = vector.broadcast %33 : vector<8x1xf32> to vector<8x8xf32>
    %35 = arith.subf %31, %34 : vector<8x8xf32>
    %36 = math.exp %35 : vector<8x8xf32>
    %cst_28 = arith.constant dense<0.000000e+00> : vector<8xf32>
    %37 = vector.multi_reduction <add>, %36, %cst_28 [1] : vector<8x8xf32> to vector<8xf32>
    %38 = vector.shape_cast %37 : vector<8xf32> to vector<8x1xf32>
    %39 = vector.broadcast %38 : vector<8x1xf32> to vector<8x8xf32>
    %40 = arith.divf %36, %39 : vector<8x8xf32>
    %41 = vector.extract_strided_slice %24 {offsets = [0, 0], sizes = [8, 8], strides = [1, 1]} : vector<8x32xf32> to vector<8x8xf32>
    %cst_29 = arith.constant dense<0.000000e+00> : vector<8x8xf32>
    %42 = tpu.matmul %40, %41, %cst_29 {dimension_numbers = #tpu.dot_dimension_numbers<[1], [0], [0], [1], [0, 0, 1, 1], [], []>} : vector<8x8xf32>, vector<8x8xf32>, vector<8x8xf32> -> vector<8x8xf32>
    %43 = vector.extract_strided_slice %16 {offsets = [0, 0], sizes = [8, 32], strides = [1, 1]} : vector<32x32xf32> to vector<8x32xf32>
    %cst_30 = arith.constant dense<0.000000e+00> : vector<8x32xf32>
    %44 = tpu.matmul %42, %43, %cst_30 {dimension_numbers = #tpu.dot_dimension_numbers<[1], [0], [0], [1], [0, 0, 1, 1], [], []>} : vector<8x8xf32>, vector<8x32xf32>, vector<8x32xf32> -> vector<8x32xf32>
    %45 = arith.addf %25, %44 : vector<8x32xf32>
    %46 = vector.extract_strided_slice %22 {offsets = [0, 8], sizes = [8, 8], strides = [1, 1]} : vector<8x32xf32> to vector<8x8xf32>
    %47 = vector.extract_strided_slice %23 {offsets = [0, 8], sizes = [8, 8], strides = [1, 1]} : vector<8x32xf32> to vector<8x8xf32>
    %cst_31 = arith.constant dense<0.000000e+00> : vector<8x8xf32>
    %48 = tpu.matmul %46, %47, %cst_31 {dimension_numbers = #tpu.dot_dimension_numbers<[1], [1], [0], [0], [0, 0, 1, 0], [], []>} : vector<8x8xf32>, vector<8x8xf32>, vector<8x8xf32> -> vector<8x8xf32>
    %cst_32 = arith.constant 0.353553385 : f32
    %49 = vector.broadcast %cst_32 : f32 to vector<8x8xf32>
    %50 = arith.mulf %48, %49 : vector<8x8xf32>
    %51 = arith.addf %50, %8 : vector<8x8xf32>
    %cst_33 = arith.constant dense<0xFF800000> : vector<8xf32>
    %52 = vector.multi_reduction <maximumf>, %51, %cst_33 [1] : vector<8x8xf32> to vector<8xf32>
    %53 = vector.shape_cast %52 : vector<8xf32> to vector<8x1xf32>
    %54 = vector.broadcast %53 : vector<8x1xf32> to vector<8x8xf32>
    %55 = arith.subf %51, %54 : vector<8x8xf32>
    %56 = math.exp %55 : vector<8x8xf32>
    %cst_34 = arith.constant dense<0.000000e+00> : vector<8xf32>
    %57 = vector.multi_reduction <add>, %56, %cst_34 [1] : vector<8x8xf32> to vector<8xf32>
    %58 = vector.shape_cast %57 : vector<8xf32> to vector<8x1xf32>
    %59 = vector.broadcast %58 : vector<8x1xf32> to vector<8x8xf32>
    %60 = arith.divf %56, %59 : vector<8x8xf32>
    %61 = vector.extract_strided_slice %24 {offsets = [0, 8], sizes = [8, 8], strides = [1, 1]} : vector<8x32xf32> to vector<8x8xf32>
    %cst_35 = arith.constant dense<0.000000e+00> : vector<8x8xf32>
    %62 = tpu.matmul %60, %61, %cst_35 {dimension_numbers = #tpu.dot_dimension_numbers<[1], [0], [0], [1], [0, 0, 1, 1], [], []>} : vector<8x8xf32>, vector<8x8xf32>, vector<8x8xf32> -> vector<8x8xf32>
    %63 = vector.extract_strided_slice %16 {offsets = [8, 0], sizes = [8, 32], strides = [1, 1]} : vector<32x32xf32> to vector<8x32xf32>
    %cst_36 = arith.constant dense<0.000000e+00> : vector<8x32xf32>
    %64 = tpu.matmul %62, %63, %cst_36 {dimension_numbers = #tpu.dot_dimension_numbers<[1], [0], [0], [1], [0, 0, 1, 1], [], []>} : vector<8x8xf32>, vector<8x32xf32>, vector<8x32xf32> -> vector<8x32xf32>
    %65 = arith.addf %45, %64 : vector<8x32xf32>
    %66 = vector.extract_strided_slice %22 {offsets = [0, 16], sizes = [8, 8], strides = [1, 1]} : vector<8x32xf32> to vector<8x8xf32>
    %67 = vector.extract_strided_slice %23 {offsets = [0, 16], sizes = [8, 8], strides = [1, 1]} : vector<8x32xf32> to vector<8x8xf32>
    %cst_37 = arith.constant dense<0.000000e+00> : vector<8x8xf32>
    %68 = tpu.matmul %66, %67, %cst_37 {dimension_numbers = #tpu.dot_dimension_numbers<[1], [1], [0], [0], [0, 0, 1, 0], [], []>} : vector<8x8xf32>, vector<8x8xf32>, vector<8x8xf32> -> vector<8x8xf32>
    %cst_38 = arith.constant 0.353553385 : f32
    %69 = vector.broadcast %cst_38 : f32 to vector<8x8xf32>
    %70 = arith.mulf %68, %69 : vector<8x8xf32>
    %71 = arith.addf %70, %8 : vector<8x8xf32>
    %cst_39 = arith.constant dense<0xFF800000> : vector<8xf32>
    %72 = vector.multi_reduction <maximumf>, %71, %cst_39 [1] : vector<8x8xf32> to vector<8xf32>
    %73 = vector.shape_cast %72 : vector<8xf32> to vector<8x1xf32>
    %74 = vector.broadcast %73 : vector<8x1xf32> to vector<8x8xf32>
    %75 = arith.subf %71, %74 : vector<8x8xf32>
    %76 = math.exp %75 : vector<8x8xf32>
    %cst_40 = arith.constant dense<0.000000e+00> : vector<8xf32>
    %77 = vector.multi_reduction <add>, %76, %cst_40 [1] : vector<8x8xf32> to vector<8xf32>
    %78 = vector.shape_cast %77 : vector<8xf32> to vector<8x1xf32>
    %79 = vector.broadcast %78 : vector<8x1xf32> to vector<8x8xf32>
    %80 = arith.divf %76, %79 : vector<8x8xf32>
    %81 = vector.extract_strided_slice %24 {offsets = [0, 16], sizes = [8, 8], strides = [1, 1]} : vector<8x32xf32> to vector<8x8xf32>
    %cst_41 = arith.constant dense<0.000000e+00> : vector<8x8xf32>
    %82 = tpu.matmul %80, %81, %cst_41 {dimension_numbers = #tpu.dot_dimension_numbers<[1], [0], [0], [1], [0, 0, 1, 1], [], []>} : vector<8x8xf32>, vector<8x8xf32>, vector<8x8xf32> -> vector<8x8xf32>
    %83 = vector.extract_strided_slice %16 {offsets = [16, 0], sizes = [8, 32], strides = [1, 1]} : vector<32x32xf32> to vector<8x32xf32>
    %cst_42 = arith.constant dense<0.000000e+00> : vector<8x32xf32>
    %84 = tpu.matmul %82, %83, %cst_42 {dimension_numbers = #tpu.dot_dimension_numbers<[1], [0], [0], [1], [0, 0, 1, 1], [], []>} : vector<8x8xf32>, vector<8x32xf32>, vector<8x32xf32> -> vector<8x32xf32>
    %85 = arith.addf %65, %84 : vector<8x32xf32>
    %86 = vector.extract_strided_slice %22 {offsets = [0, 24], sizes = [8, 8], strides = [1, 1]} : vector<8x32xf32> to vector<8x8xf32>
    %87 = vector.extract_strided_slice %23 {offsets = [0, 24], sizes = [8, 8], strides = [1, 1]} : vector<8x32xf32> to vector<8x8xf32>
    %cst_43 = arith.constant dense<0.000000e+00> : vector<8x8xf32>
    %88 = tpu.matmul %86, %87, %cst_43 {dimension_numbers = #tpu.dot_dimension_numbers<[1], [1], [0], [0], [0, 0, 1, 0], [], []>} : vector<8x8xf32>, vector<8x8xf32>, vector<8x8xf32> -> vector<8x8xf32>
    %cst_44 = arith.constant 0.353553385 : f32
    %89 = vector.broadcast %cst_44 : f32 to vector<8x8xf32>
    %90 = arith.mulf %88, %89 : vector<8x8xf32>
    %91 = arith.addf %90, %8 : vector<8x8xf32>
    %cst_45 = arith.constant dense<0xFF800000> : vector<8xf32>
    %92 = vector.multi_reduction <maximumf>, %91, %cst_45 [1] : vector<8x8xf32> to vector<8xf32>
    %93 = vector.shape_cast %92 : vector<8xf32> to vector<8x1xf32>
    %94 = vector.broadcast %93 : vector<8x1xf32> to vector<8x8xf32>
    %95 = arith.subf %91, %94 : vector<8x8xf32>
    %96 = math.exp %95 : vector<8x8xf32>
    %cst_46 = arith.constant dense<0.000000e+00> : vector<8xf32>
    %97 = vector.multi_reduction <add>, %96, %cst_46 [1] : vector<8x8xf32> to vector<8xf32>
    %98 = vector.shape_cast %97 : vector<8xf32> to vector<8x1xf32>
    %99 = vector.broadcast %98 : vector<8x1xf32> to vector<8x8xf32>
    %100 = arith.divf %96, %99 : vector<8x8xf32>
    %101 = vector.extract_strided_slice %24 {offsets = [0, 24], sizes = [8, 8], strides = [1, 1]} : vector<8x32xf32> to vector<8x8xf32>
    %cst_47 = arith.constant dense<0.000000e+00> : vector<8x8xf32>
    %102 = tpu.matmul %100, %101, %cst_47 {dimension_numbers = #tpu.dot_dimension_numbers<[1], [0], [0], [1], [0, 0, 1, 1], [], []>} : vector<8x8xf32>, vector<8x8xf32>, vector<8x8xf32> -> vector<8x8xf32>
    %103 = vector.extract_strided_slice %16 {offsets = [24, 0], sizes = [8, 32], strides = [1, 1]} : vector<32x32xf32> to vector<8x32xf32>
    %cst_48 = arith.constant dense<0.000000e+00> : vector<8x32xf32>
    %104 = tpu.matmul %102, %103, %cst_48 {dimension_numbers = #tpu.dot_dimension_numbers<[1], [0], [0], [1], [0, 0, 1, 1], [], []>} : vector<8x8xf32>, vector<8x32xf32>, vector<8x32xf32> -> vector<8x32xf32>
    %105 = arith.addf %85, %104 : vector<8x32xf32>
    %106 = vector.broadcast %18 : vector<1x32xf32> to vector<8x32xf32>
    %107 = arith.addf %105, %106 : vector<8x32xf32>
    %108 = arith.addf %4, %107 : vector<8x32xf32>
    %c0_49 = arith.constant 0 : index
    %c0_50 = arith.constant 0 : index
    %c0_51 = arith.constant 0 : index
    %109 = vector.load %arg10[%c0_49, %c0_50, %c0_51] : memref<1x1x32xf32, #tpu.memory_space<vmem>>, vector<1x1x32xf32>
    %110 = vector.shape_cast %109 : vector<1x1x32xf32> to vector<1x32xf32>
    %c0_52 = arith.constant 0 : index
    %c0_53 = arith.constant 0 : index
    %c0_54 = arith.constant 0 : index
    %111 = vector.load %arg11[%c0_52, %c0_53, %c0_54] : memref<1x1x32xf32, #tpu.memory_space<vmem>>, vector<1x1x32xf32>
    %112 = vector.shape_cast %111 : vector<1x1x32xf32> to vector<1x32xf32>
    %cst_55 = arith.constant dense<0.000000e+00> : vector<8xf32>
    %113 = vector.multi_reduction <add>, %108, %cst_55 [1] : vector<8x32xf32> to vector<8xf32>
    %114 = vector.shape_cast %113 : vector<8xf32> to vector<8x1xf32>
    %cst_56 = arith.constant 3.200000e+01 : f32
    %115 = vector.broadcast %cst_56 : f32 to vector<8x1xf32>
    %116 = arith.divf %114, %115 : vector<8x1xf32>
    %117 = vector.broadcast %116 : vector<8x1xf32> to vector<8x32xf32>
    %118 = arith.subf %108, %117 : vector<8x32xf32>
    %119 = arith.mulf %118, %118 : vector<8x32xf32>
    %cst_57 = arith.constant dense<0.000000e+00> : vector<8xf32>
    %120 = vector.multi_reduction <add>, %119, %cst_57 [1] : vector<8x32xf32> to vector<8xf32>
    %121 = vector.shape_cast %120 : vector<8xf32> to vector<8x1xf32>
    %cst_58 = arith.constant 3.200000e+01 : f32
    %122 = vector.broadcast %cst_58 : f32 to vector<8x1xf32>
    %123 = arith.divf %121, %122 : vector<8x1xf32>
    %124 = vector.broadcast %116 : vector<8x1xf32> to vector<8x32xf32>
    %125 = arith.subf %108, %124 : vector<8x32xf32>
    %cst_59 = arith.constant 9.99999974E-6 : f32
    %126 = vector.broadcast %cst_59 : f32 to vector<8x1xf32>
    %127 = arith.addf %123, %126 : vector<8x1xf32>
    %128 = math.rsqrt %127 : vector<8x1xf32>
    %129 = vector.broadcast %128 : vector<8x1xf32> to vector<8x32xf32>
    %130 = arith.mulf %125, %129 : vector<8x32xf32>
    %131 = vector.broadcast %110 : vector<1x32xf32> to vector<8x32xf32>
    %132 = arith.mulf %130, %131 : vector<8x32xf32>
    %133 = vector.broadcast %112 : vector<1x32xf32> to vector<8x32xf32>
    %134 = arith.addf %132, %133 : vector<8x32xf32>
    %c0_60 = arith.constant 0 : index
    %c0_61 = arith.constant 0 : index
    %c0_62 = arith.constant 0 : index
    %135 = vector.load %arg12[%c0_60, %c0_61, %c0_62] : memref<1x32x32xf32, #tpu.memory_space<vmem>>, vector<1x32x32xf32>
    %136 = vector.shape_cast %135 : vector<1x32x32xf32> to vector<32x32xf32>
    %c0_63 = arith.constant 0 : index
    %c0_64 = arith.constant 0 : index
    %c0_65 = arith.constant 0 : index
    %137 = vector.load %arg13[%c0_63, %c0_64, %c0_65] : memref<1x1x32xf32, #tpu.memory_space<vmem>>, vector<1x1x32xf32>
    %138 = vector.shape_cast %137 : vector<1x1x32xf32> to vector<1x32xf32>
    %c0_66 = arith.constant 0 : index
    %c0_67 = arith.constant 0 : index
    %c0_68 = arith.constant 0 : index
    %139 = vector.load %arg14[%c0_66, %c0_67, %c0_68] : memref<1x32x64xf32, #tpu.memory_space<vmem>>, vector<1x32x64xf32>
    %140 = vector.shape_cast %139 : vector<1x32x64xf32> to vector<32x64xf32>
    %c0_69 = arith.constant 0 : index
    %c0_70 = arith.constant 0 : index
    %c0_71 = arith.constant 0 : index
    %141 = vector.load %arg15[%c0_69, %c0_70, %c0_71] : memref<1x1x64xf32, #tpu.memory_space<vmem>>, vector<1x1x64xf32>
    %142 = vector.shape_cast %141 : vector<1x1x64xf32> to vector<1x64xf32>
    %c0_72 = arith.constant 0 : index
    %c0_73 = arith.constant 0 : index
    %c0_74 = arith.constant 0 : index
    %143 = vector.load %arg16[%c0_72, %c0_73, %c0_74] : memref<1x32x32xf32, #tpu.memory_space<vmem>>, vector<1x32x32xf32>
    %144 = vector.shape_cast %143 : vector<1x32x32xf32> to vector<32x32xf32>
    %c0_75 = arith.constant 0 : index
    %c0_76 = arith.constant 0 : index
    %c0_77 = arith.constant 0 : index
    %145 = vector.load %arg17[%c0_75, %c0_76, %c0_77] : memref<1x1x32xf32, #tpu.memory_space<vmem>>, vector<1x1x32xf32>
    %146 = vector.shape_cast %145 : vector<1x1x32xf32> to vector<1x32xf32>
    %cst_78 = arith.constant dense<0.000000e+00> : vector<8x32xf32>
    %147 = tpu.matmul %134, %136, %cst_78 {dimension_numbers = #tpu.dot_dimension_numbers<[1], [0], [0], [1], [0, 0, 1, 1], [], []>} : vector<8x32xf32>, vector<32x32xf32>, vector<8x32xf32> -> vector<8x32xf32>
    %148 = vector.broadcast %138 : vector<1x32xf32> to vector<8x32xf32>
    %149 = arith.addf %147, %148 : vector<8x32xf32>
    %cst_79 = arith.constant dense<0.000000e+00> : vector<8x64xf32>
    %150 = tpu.matmul %6, %140, %cst_79 {dimension_numbers = #tpu.dot_dimension_numbers<[1], [0], [0], [1], [0, 0, 1, 1], [], []>} : vector<8x32xf32>, vector<32x64xf32>, vector<8x64xf32> -> vector<8x64xf32>
    %151 = vector.broadcast %142 : vector<1x64xf32> to vector<8x64xf32>
    %152 = arith.addf %150, %151 : vector<8x64xf32>
    %153 = vector.extract_strided_slice %152 {offsets = [0, 0], sizes = [8, 32], strides = [1, 1]} : vector<8x64xf32> to vector<8x32xf32>
    %154 = vector.extract_strided_slice %152 {offsets = [0, 32], sizes = [8, 32], strides = [1, 1]} : vector<8x64xf32> to vector<8x32xf32>
    %cst_80 = arith.constant 0.000000e+00 : f32
    %155 = vector.broadcast %cst_80 : f32 to vector<8x32xf32>
    %156 = vector.extract_strided_slice %149 {offsets = [0, 0], sizes = [8, 8], strides = [1, 1]} : vector<8x32xf32> to vector<8x8xf32>
    %157 = vector.extract_strided_slice %153 {offsets = [0, 0], sizes = [8, 8], strides = [1, 1]} : vector<8x32xf32> to vector<8x8xf32>
    %cst_81 = arith.constant dense<0.000000e+00> : vector<8x8xf32>
    %158 = tpu.matmul %156, %157, %cst_81 {dimension_numbers = #tpu.dot_dimension_numbers<[1], [1], [0], [0], [0, 0, 1, 0], [], []>} : vector<8x8xf32>, vector<8x8xf32>, vector<8x8xf32> -> vector<8x8xf32>
    %cst_82 = arith.constant 0.353553385 : f32
    %159 = vector.broadcast %cst_82 : f32 to vector<8x8xf32>
    %160 = arith.mulf %158, %159 : vector<8x8xf32>
    %161 = vector.broadcast %10 : vector<1x8xf32> to vector<8x8xf32>
    %162 = arith.addf %160, %161 : vector<8x8xf32>
    %cst_83 = arith.constant dense<0xFF800000> : vector<8xf32>
    %163 = vector.multi_reduction <maximumf>, %162, %cst_83 [1] : vector<8x8xf32> to vector<8xf32>
    %164 = vector.shape_cast %163 : vector<8xf32> to vector<8x1xf32>
    %165 = vector.broadcast %164 : vector<8x1xf32> to vector<8x8xf32>
    %166 = arith.subf %162, %165 : vector<8x8xf32>
    %167 = math.exp %166 : vector<8x8xf32>
    %cst_84 = arith.constant dense<0.000000e+00> : vector<8xf32>
    %168 = vector.multi_reduction <add>, %167, %cst_84 [1] : vector<8x8xf32> to vector<8xf32>
    %169 = vector.shape_cast %168 : vector<8xf32> to vector<8x1xf32>
    %170 = vector.broadcast %169 : vector<8x1xf32> to vector<8x8xf32>
    %171 = arith.divf %167, %170 : vector<8x8xf32>
    %c0_85 = arith.constant 0 : index
    %c0_86 = arith.constant 0 : index
    %c0_87 = arith.constant 0 : index
    %c0_88 = arith.constant 0 : index
    %172 = vector.load %arg27[%c0_85, %c0_86, %c0_87, %c0_88] : memref<1x4x8x8xf32, #tpu.memory_space<vmem>>, vector<1x1x8x8xf32>
    %173 = vector.shape_cast %172 : vector<1x1x8x8xf32> to vector<8x8xf32>
    %174 = vector.shape_cast %171 : vector<8x8xf32> to vector<1x1x8x8xf32>
    tpu.vector_store %arg27[%c0_85, %c0_86, %c0_87, %c0_88], %174 {strides = array<i32>} : memref<1x4x8x8xf32, #tpu.memory_space<vmem>>, vector<1x1x8x8xf32>,
    %175 = vector.extract_strided_slice %154 {offsets = [0, 0], sizes = [8, 8], strides = [1, 1]} : vector<8x32xf32> to vector<8x8xf32>
    %cst_89 = arith.constant dense<0.000000e+00> : vector<8x8xf32>
    %176 = tpu.matmul %171, %175, %cst_89 {dimension_numbers = #tpu.dot_dimension_numbers<[1], [0], [0], [1], [0, 0, 1, 1], [], []>} : vector<8x8xf32>, vector<8x8xf32>, vector<8x8xf32> -> vector<8x8xf32>
    %177 = vector.extract_strided_slice %144 {offsets = [0, 0], sizes = [8, 32], strides = [1, 1]} : vector<32x32xf32> to vector<8x32xf32>
    %cst_90 = arith.constant dense<0.000000e+00> : vector<8x32xf32>
    %178 = tpu.matmul %176, %177, %cst_90 {dimension_numbers = #tpu.dot_dimension_numbers<[1], [0], [0], [1], [0, 0, 1, 1], [], []>} : vector<8x8xf32>, vector<8x32xf32>, vector<8x32xf32> -> vector<8x32xf32>
    %179 = arith.addf %155, %178 : vector<8x32xf32>
    %180 = vector.extract_strided_slice %149 {offsets = [0, 8], sizes = [8, 8], strides = [1, 1]} : vector<8x32xf32> to vector<8x8xf32>
    %181 = vector.extract_strided_slice %153 {offsets = [0, 8], sizes = [8, 8], strides = [1, 1]} : vector<8x32xf32> to vector<8x8xf32>
    %cst_91 = arith.constant dense<0.000000e+00> : vector<8x8xf32>
    %182 = tpu.matmul %180, %181, %cst_91 {dimension_numbers = #tpu.dot_dimension_numbers<[1], [1], [0], [0], [0, 0, 1, 0], [], []>} : vector<8x8xf32>, vector<8x8xf32>, vector<8x8xf32> -> vector<8x8xf32>
    %cst_92 = arith.constant 0.353553385 : f32
    %183 = vector.broadcast %cst_92 : f32 to vector<8x8xf32>
    %184 = arith.mulf %182, %183 : vector<8x8xf32>
    %185 = vector.broadcast %10 : vector<1x8xf32> to vector<8x8xf32>
    %186 = arith.addf %184, %185 : vector<8x8xf32>
    %cst_93 = arith.constant dense<0xFF800000> : vector<8xf32>
    %187 = vector.multi_reduction <maximumf>, %186, %cst_93 [1] : vector<8x8xf32> to vector<8xf32>
    %188 = vector.shape_cast %187 : vector<8xf32> to vector<8x1xf32>
    %189 = vector.broadcast %188 : vector<8x1xf32> to vector<8x8xf32>
    %190 = arith.subf %186, %189 : vector<8x8xf32>
    %191 = math.exp %190 : vector<8x8xf32>
    %cst_94 = arith.constant dense<0.000000e+00> : vector<8xf32>
    %192 = vector.multi_reduction <add>, %191, %cst_94 [1] : vector<8x8xf32> to vector<8xf32>
    %193 = vector.shape_cast %192 : vector<8xf32> to vector<8x1xf32>
    %194 = vector.broadcast %193 : vector<8x1xf32> to vector<8x8xf32>
    %195 = arith.divf %191, %194 : vector<8x8xf32>
    %c0_95 = arith.constant 0 : index
    %c1 = arith.constant 1 : index
    %c0_96 = arith.constant 0 : index
    %c0_97 = arith.constant 0 : index
    %196 = vector.load %arg27[%c0_95, %c1, %c0_96, %c0_97] : memref<1x4x8x8xf32, #tpu.memory_space<vmem>>, vector<1x1x8x8xf32>
    %197 = vector.shape_cast %196 : vector<1x1x8x8xf32> to vector<8x8xf32>
    %198 = vector.shape_cast %195 : vector<8x8xf32> to vector<1x1x8x8xf32>
    tpu.vector_store %arg27[%c0_95, %c1, %c0_96, %c0_97], %198 {strides = array<i32>} : memref<1x4x8x8xf32, #tpu.memory_space<vmem>>, vector<1x1x8x8xf32>,
    %199 = vector.extract_strided_slice %154 {offsets = [0, 8], sizes = [8, 8], strides = [1, 1]} : vector<8x32xf32> to vector<8x8xf32>
    %cst_98 = arith.constant dense<0.000000e+00> : vector<8x8xf32>
    %200 = tpu.matmul %195, %199, %cst_98 {dimension_numbers = #tpu.dot_dimension_numbers<[1], [0], [0], [1], [0, 0, 1, 1], [], []>} : vector<8x8xf32>, vector<8x8xf32>, vector<8x8xf32> -> vector<8x8xf32>
    %201 = vector.extract_strided_slice %144 {offsets = [8, 0], sizes = [8, 32], strides = [1, 1]} : vector<32x32xf32> to vector<8x32xf32>
    %cst_99 = arith.constant dense<0.000000e+00> : vector<8x32xf32>
    %202 = tpu.matmul %200, %201, %cst_99 {dimension_numbers = #tpu.dot_dimension_numbers<[1], [0], [0], [1], [0, 0, 1, 1], [], []>} : vector<8x8xf32>, vector<8x32xf32>, vector<8x32xf32> -> vector<8x32xf32>
    %203 = arith.addf %179, %202 : vector<8x32xf32>
    %204 = vector.extract_strided_slice %149 {offsets = [0, 16], sizes = [8, 8], strides = [1, 1]} : vector<8x32xf32> to vector<8x8xf32>
    %205 = vector.extract_strided_slice %153 {offsets = [0, 16], sizes = [8, 8], strides = [1, 1]} : vector<8x32xf32> to vector<8x8xf32>
    %cst_100 = arith.constant dense<0.000000e+00> : vector<8x8xf32>
    %206 = tpu.matmul %204, %205, %cst_100 {dimension_numbers = #tpu.dot_dimension_numbers<[1], [1], [0], [0], [0, 0, 1, 0], [], []>} : vector<8x8xf32>, vector<8x8xf32>, vector<8x8xf32> -> vector<8x8xf32>
    %cst_101 = arith.constant 0.353553385 : f32
    %207 = vector.broadcast %cst_101 : f32 to vector<8x8xf32>
    %208 = arith.mulf %206, %207 : vector<8x8xf32>
    %209 = vector.broadcast %10 : vector<1x8xf32> to vector<8x8xf32>
    %210 = arith.addf %208, %209 : vector<8x8xf32>
    %cst_102 = arith.constant dense<0xFF800000> : vector<8xf32>
    %211 = vector.multi_reduction <maximumf>, %210, %cst_102 [1] : vector<8x8xf32> to vector<8xf32>
    %212 = vector.shape_cast %211 : vector<8xf32> to vector<8x1xf32>
    %213 = vector.broadcast %212 : vector<8x1xf32> to vector<8x8xf32>
    %214 = arith.subf %210, %213 : vector<8x8xf32>
    %215 = math.exp %214 : vector<8x8xf32>
    %cst_103 = arith.constant dense<0.000000e+00> : vector<8xf32>
    %216 = vector.multi_reduction <add>, %215, %cst_103 [1] : vector<8x8xf32> to vector<8xf32>
    %217 = vector.shape_cast %216 : vector<8xf32> to vector<8x1xf32>
    %218 = vector.broadcast %217 : vector<8x1xf32> to vector<8x8xf32>
    %219 = arith.divf %215, %218 : vector<8x8xf32>
    %c0_104 = arith.constant 0 : index
    %c2 = arith.constant 2 : index
    %c0_105 = arith.constant 0 : index
    %c0_106 = arith.constant 0 : index
    %220 = vector.load %arg27[%c0_104, %c2, %c0_105, %c0_106] : memref<1x4x8x8xf32, #tpu.memory_space<vmem>>, vector<1x1x8x8xf32>
    %221 = vector.shape_cast %220 : vector<1x1x8x8xf32> to vector<8x8xf32>
    %222 = vector.shape_cast %219 : vector<8x8xf32> to vector<1x1x8x8xf32>
    tpu.vector_store %arg27[%c0_104, %c2, %c0_105, %c0_106], %222 {strides = array<i32>} : memref<1x4x8x8xf32, #tpu.memory_space<vmem>>, vector<1x1x8x8xf32>,
    %223 = vector.extract_strided_slice %154 {offsets = [0, 16], sizes = [8, 8], strides = [1, 1]} : vector<8x32xf32> to vector<8x8xf32>
    %cst_107 = arith.constant dense<0.000000e+00> : vector<8x8xf32>
    %224 = tpu.matmul %219, %223, %cst_107 {dimension_numbers = #tpu.dot_dimension_numbers<[1], [0], [0], [1], [0, 0, 1, 1], [], []>} : vector<8x8xf32>, vector<8x8xf32>, vector<8x8xf32> -> vector<8x8xf32>
    %225 = vector.extract_strided_slice %144 {offsets = [16, 0], sizes = [8, 32], strides = [1, 1]} : vector<32x32xf32> to vector<8x32xf32>
    %cst_108 = arith.constant dense<0.000000e+00> : vector<8x32xf32>
    %226 = tpu.matmul %224, %225, %cst_108 {dimension_numbers = #tpu.dot_dimension_numbers<[1], [0], [0], [1], [0, 0, 1, 1], [], []>} : vector<8x8xf32>, vector<8x32xf32>, vector<8x32xf32> -> vector<8x32xf32>
    %227 = arith.addf %203, %226 : vector<8x32xf32>
    %228 = vector.extract_strided_slice %149 {offsets = [0, 24], sizes = [8, 8], strides = [1, 1]} : vector<8x32xf32> to vector<8x8xf32>
    %229 = vector.extract_strided_slice %153 {offsets = [0, 24], sizes = [8, 8], strides = [1, 1]} : vector<8x32xf32> to vector<8x8xf32>
    %cst_109 = arith.constant dense<0.000000e+00> : vector<8x8xf32>
    %230 = tpu.matmul %228, %229, %cst_109 {dimension_numbers = #tpu.dot_dimension_numbers<[1], [1], [0], [0], [0, 0, 1, 0], [], []>} : vector<8x8xf32>, vector<8x8xf32>, vector<8x8xf32> -> vector<8x8xf32>
    %cst_110 = arith.constant 0.353553385 : f32
    %231 = vector.broadcast %cst_110 : f32 to vector<8x8xf32>
    %232 = arith.mulf %230, %231 : vector<8x8xf32>
    %233 = vector.broadcast %10 : vector<1x8xf32> to vector<8x8xf32>
    %234 = arith.addf %232, %233 : vector<8x8xf32>
    %cst_111 = arith.constant dense<0xFF800000> : vector<8xf32>
    %235 = vector.multi_reduction <maximumf>, %234, %cst_111 [1] : vector<8x8xf32> to vector<8xf32>
    %236 = vector.shape_cast %235 : vector<8xf32> to vector<8x1xf32>
    %237 = vector.broadcast %236 : vector<8x1xf32> to vector<8x8xf32>
    %238 = arith.subf %234, %237 : vector<8x8xf32>
    %239 = math.exp %238 : vector<8x8xf32>
    %cst_112 = arith.constant dense<0.000000e+00> : vector<8xf32>
    %240 = vector.multi_reduction <add>, %239, %cst_112 [1] : vector<8x8xf32> to vector<8xf32>
    %241 = vector.shape_cast %240 : vector<8xf32> to vector<8x1xf32>
    %242 = vector.broadcast %241 : vector<8x1xf32> to vector<8x8xf32>
    %243 = arith.divf %239, %242 : vector<8x8xf32>
    %c0_113 = arith.constant 0 : index
    %c3 = arith.constant 3 : index
    %c0_114 = arith.constant 0 : index
    %c0_115 = arith.constant 0 : index
    %244 = vector.load %arg27[%c0_113, %c3, %c0_114, %c0_115] : memref<1x4x8x8xf32, #tpu.memory_space<vmem>>, vector<1x1x8x8xf32>
    %245 = vector.shape_cast %244 : vector<1x1x8x8xf32> to vector<8x8xf32>
    %246 = vector.shape_cast %243 : vector<8x8xf32> to vector<1x1x8x8xf32>
    tpu.vector_store %arg27[%c0_113, %c3, %c0_114, %c0_115], %246 {strides = array<i32>} : memref<1x4x8x8xf32, #tpu.memory_space<vmem>>, vector<1x1x8x8xf32>,
    %247 = vector.extract_strided_slice %154 {offsets = [0, 24], sizes = [8, 8], strides = [1, 1]} : vector<8x32xf32> to vector<8x8xf32>
    %cst_116 = arith.constant dense<0.000000e+00> : vector<8x8xf32>
    %248 = tpu.matmul %243, %247, %cst_116 {dimension_numbers = #tpu.dot_dimension_numbers<[1], [0], [0], [1], [0, 0, 1, 1], [], []>} : vector<8x8xf32>, vector<8x8xf32>, vector<8x8xf32> -> vector<8x8xf32>
    %249 = vector.extract_strided_slice %144 {offsets = [24, 0], sizes = [8, 32], strides = [1, 1]} : vector<32x32xf32> to vector<8x32xf32>
    %cst_117 = arith.constant dense<0.000000e+00> : vector<8x32xf32>
    %250 = tpu.matmul %248, %249, %cst_117 {dimension_numbers = #tpu.dot_dimension_numbers<[1], [0], [0], [1], [0, 0, 1, 1], [], []>} : vector<8x8xf32>, vector<8x32xf32>, vector<8x32xf32> -> vector<8x32xf32>
    %251 = arith.addf %227, %250 : vector<8x32xf32>
    %252 = vector.broadcast %146 : vector<1x32xf32> to vector<8x32xf32>
    %253 = arith.addf %251, %252 : vector<8x32xf32>
    %254 = arith.addf %134, %253 : vector<8x32xf32>
    %c0_118 = arith.constant 0 : index
    %c0_119 = arith.constant 0 : index
    %c0_120 = arith.constant 0 : index
    %255 = vector.load %arg18[%c0_118, %c0_119, %c0_120] : memref<1x1x32xf32, #tpu.memory_space<vmem>>, vector<1x1x32xf32>
    %256 = vector.shape_cast %255 : vector<1x1x32xf32> to vector<1x32xf32>
    %c0_121 = arith.constant 0 : index
    %c0_122 = arith.constant 0 : index
    %c0_123 = arith.constant 0 : index
    %257 = vector.load %arg19[%c0_121, %c0_122, %c0_123] : memref<1x1x32xf32, #tpu.memory_space<vmem>>, vector<1x1x32xf32>
    %258 = vector.shape_cast %257 : vector<1x1x32xf32> to vector<1x32xf32>
    %cst_124 = arith.constant dense<0.000000e+00> : vector<8xf32>
    %259 = vector.multi_reduction <add>, %254, %cst_124 [1] : vector<8x32xf32> to vector<8xf32>
    %260 = vector.shape_cast %259 : vector<8xf32> to vector<8x1xf32>
    %cst_125 = arith.constant 3.200000e+01 : f32
    %261 = vector.broadcast %cst_125 : f32 to vector<8x1xf32>
    %262 = arith.divf %260, %261 : vector<8x1xf32>
    %263 = vector.broadcast %262 : vector<8x1xf32> to vector<8x32xf32>
    %264 = arith.subf %254, %263 : vector<8x32xf32>
    %265 = arith.mulf %264, %264 : vector<8x32xf32>
    %cst_126 = arith.constant dense<0.000000e+00> : vector<8xf32>
    %266 = vector.multi_reduction <add>, %265, %cst_126 [1] : vector<8x32xf32> to vector<8xf32>
    %267 = vector.shape_cast %266 : vector<8xf32> to vector<8x1xf32>
    %cst_127 = arith.constant 3.200000e+01 : f32
    %268 = vector.broadcast %cst_127 : f32 to vector<8x1xf32>
    %269 = arith.divf %267, %268 : vector<8x1xf32>
    %270 = vector.broadcast %262 : vector<8x1xf32> to vector<8x32xf32>
    %271 = arith.subf %254, %270 : vector<8x32xf32>
    %cst_128 = arith.constant 9.99999974E-6 : f32
    %272 = vector.broadcast %cst_128 : f32 to vector<8x1xf32>
    %273 = arith.addf %269, %272 : vector<8x1xf32>
    %274 = math.rsqrt %273 : vector<8x1xf32>
    %275 = vector.broadcast %274 : vector<8x1xf32> to vector<8x32xf32>
    %276 = arith.mulf %271, %275 : vector<8x32xf32>
    %277 = vector.broadcast %256 : vector<1x32xf32> to vector<8x32xf32>
    %278 = arith.mulf %276, %277 : vector<8x32xf32>
    %279 = vector.broadcast %258 : vector<1x32xf32> to vector<8x32xf32>
    %280 = arith.addf %278, %279 : vector<8x32xf32>
    %c0_129 = arith.constant 0 : index
    %c0_130 = arith.constant 0 : index
    %c0_131 = arith.constant 0 : index
    %281 = vector.load %arg20[%c0_129, %c0_130, %c0_131] : memref<1x32x64xf32, #tpu.memory_space<vmem>>, vector<1x32x64xf32>
    %282 = vector.shape_cast %281 : vector<1x32x64xf32> to vector<32x64xf32>
    %c0_132 = arith.constant 0 : index
    %c0_133 = arith.constant 0 : index
    %c0_134 = arith.constant 0 : index
    %283 = vector.load %arg21[%c0_132, %c0_133, %c0_134] : memref<1x1x64xf32, #tpu.memory_space<vmem>>, vector<1x1x64xf32>
    %284 = vector.shape_cast %283 : vector<1x1x64xf32> to vector<1x64xf32>
    %c0_135 = arith.constant 0 : index
    %c0_136 = arith.constant 0 : index
    %c0_137 = arith.constant 0 : index
    %285 = vector.load %arg22[%c0_135, %c0_136, %c0_137] : memref<1x64x32xf32, #tpu.memory_space<vmem>>, vector<1x64x32xf32>
    %286 = vector.shape_cast %285 : vector<1x64x32xf32> to vector<64x32xf32>
    %c0_138 = arith.constant 0 : index
    %c0_139 = arith.constant 0 : index
    %c0_140 = arith.constant 0 : index
    %287 = vector.load %arg23[%c0_138, %c0_139, %c0_140] : memref<1x1x32xf32, #tpu.memory_space<vmem>>, vector<1x1x32xf32>
    %288 = vector.shape_cast %287 : vector<1x1x32xf32> to vector<1x32xf32>
    %cst_141 = arith.constant dense<0.000000e+00> : vector<8x64xf32>
    %289 = tpu.matmul %280, %282, %cst_141 {dimension_numbers = #tpu.dot_dimension_numbers<[1], [0], [0], [1], [0, 0, 1, 1], [], []>} : vector<8x32xf32>, vector<32x64xf32>, vector<8x64xf32> -> vector<8x64xf32>
    %290 = vector.broadcast %284 : vector<1x64xf32> to vector<8x64xf32>
    %291 = arith.addf %289, %290 : vector<8x64xf32>
    %cst_142 = arith.constant 0.000000e+00 : f32
    %292 = vector.broadcast %cst_142 : f32 to vector<8x64xf32>
    %293 = arith.maximumf %291, %292 : vector<8x64xf32>
    %cst_143 = arith.constant dense<0.000000e+00> : vector<8x32xf32>
    %294 = tpu.matmul %293, %286, %cst_143 {dimension_numbers = #tpu.dot_dimension_numbers<[1], [0], [0], [1], [0, 0, 1, 1], [], []>} : vector<8x64xf32>, vector<64x32xf32>, vector<8x32xf32> -> vector<8x32xf32>
    %295 = vector.broadcast %288 : vector<1x32xf32> to vector<8x32xf32>
    %296 = arith.addf %294, %295 : vector<8x32xf32>
    %297 = arith.addf %280, %296 : vector<8x32xf32>
    %c0_144 = arith.constant 0 : index
    %c0_145 = arith.constant 0 : index
    %c0_146 = arith.constant 0 : index
    %298 = vector.load %arg24[%c0_144, %c0_145, %c0_146] : memref<1x1x32xf32, #tpu.memory_space<vmem>>, vector<1x1x32xf32>
    %299 = vector.shape_cast %298 : vector<1x1x32xf32> to vector<1x32xf32>
    %c0_147 = arith.constant 0 : index
    %c0_148 = arith.constant 0 : index
    %c0_149 = arith.constant 0 : index
    %300 = vector.load %arg25[%c0_147, %c0_148, %c0_149] : memref<1x1x32xf32, #tpu.memory_space<vmem>>, vector<1x1x32xf32>
    %301 = vector.shape_cast %300 : vector<1x1x32xf32> to vector<1x32xf32>
    %cst_150 = arith.constant dense<0.000000e+00> : vector<8xf32>
    %302 = vector.multi_reduction <add>, %297, %cst_150 [1] : vector<8x32xf32> to vector<8xf32>
    %303 = vector.shape_cast %302 : vector<8xf32> to vector<8x1xf32>
    %cst_151 = arith.constant 3.200000e+01 : f32
    %304 = vector.broadcast %cst_151 : f32 to vector<8x1xf32>
    %305 = arith.divf %303, %304 : vector<8x1xf32>
    %306 = vector.broadcast %305 : vector<8x1xf32> to vector<8x32xf32>
    %307 = arith.subf %297, %306 : vector<8x32xf32>
    %308 = arith.mulf %307, %307 : vector<8x32xf32>
    %cst_152 = arith.constant dense<0.000000e+00> : vector<8xf32>
    %309 = vector.multi_reduction <add>, %308, %cst_152 [1] : vector<8x32xf32> to vector<8xf32>
    %310 = vector.shape_cast %309 : vector<8xf32> to vector<8x1xf32>
    %cst_153 = arith.constant 3.200000e+01 : f32
    %311 = vector.broadcast %cst_153 : f32 to vector<8x1xf32>
    %312 = arith.divf %310, %311 : vector<8x1xf32>
    %313 = vector.broadcast %305 : vector<8x1xf32> to vector<8x32xf32>
    %314 = arith.subf %297, %313 : vector<8x32xf32>
    %cst_154 = arith.constant 9.99999974E-6 : f32
    %315 = vector.broadcast %cst_154 : f32 to vector<8x1xf32>
    %316 = arith.addf %312, %315 : vector<8x1xf32>
    %317 = math.rsqrt %316 : vector<8x1xf32>
    %318 = vector.broadcast %317 : vector<8x1xf32> to vector<8x32xf32>
    %319 = arith.mulf %314, %318 : vector<8x32xf32>
    %320 = vector.broadcast %299 : vector<1x32xf32> to vector<8x32xf32>
    %321 = arith.mulf %319, %320 : vector<8x32xf32>
    %322 = vector.broadcast %301 : vector<1x32xf32> to vector<8x32xf32>
    %323 = arith.addf %321, %322 : vector<8x32xf32>
    %c0_155 = arith.constant 0 : index
    %c0_156 = arith.constant 0 : index
    %c0_157 = arith.constant 0 : index
    %324 = vector.load %arg26[%c0_155, %c0_156, %c0_157] : memref<1x8x32xf32, #tpu.memory_space<vmem>>, vector<1x8x32xf32>
    %325 = vector.shape_cast %324 : vector<1x8x32xf32> to vector<8x32xf32>
    %326 = vector.shape_cast %323 : vector<8x32xf32> to vector<1x8x32xf32>
    tpu.vector_store %arg26[%c0_155, %c0_156, %c0_157], %326 {strides = array<i32>} : memref<1x8x32xf32, #tpu.memory_space<vmem>>, vector<1x8x32xf32>,
    return
  }
  func.func @transform_0(%arg0: i32, %arg1: i32) -> (i32, i32, i32) {
    %c0_i32 = arith.constant 0 : i32
    %c0_i32_0 = arith.constant 0 : i32
    %c0_i32_1 = arith.constant 0 : i32
    return %arg0, %c0_i32, %c0_i32_0 : i32, i32, i32
  }
  func.func @transform_1(%arg0: i32, %arg1: i32) -> (i32, i32, i32) {
    %c0_i32 = arith.constant 0 : i32
    %c0_i32_0 = arith.constant 0 : i32
    %c0_i32_1 = arith.constant 0 : i32
    return %arg0, %c0_i32, %c0_i32_0 : i32, i32, i32
  }
  func.func @transform_2(%arg0: i32, %arg1: i32) -> (i32, i32, i32) {
    %c0_i32 = arith.constant 0 : i32
    %c0_i32_0 = arith.constant 0 : i32
    %c0_i32_1 = arith.constant 0 : i32
    return %arg0, %c0_i32, %c0_i32_0 : i32, i32, i32
  }
  func.func @transform_3(%arg0: i32, %arg1: i32) -> (i32, i32, i32) {
    %c0_i32 = arith.constant 0 : i32
    %c0_i32_0 = arith.constant 0 : i32
    %c0_i32_1 = arith.constant 0 : i32
    return %arg0, %c0_i32, %c0_i32_0 : i32, i32, i32
  }
  func.func @transform_4(%arg0: i32, %arg1: i32) -> (i32, i32, i32) {
    %c0_i32 = arith.constant 0 : i32
    %c0_i32_0 = arith.constant 0 : i32
    %c0_i32_1 = arith.constant 0 : i32
    return %arg1, %c0_i32, %c0_i32_0 : i32, i32, i32
  }
  func.func @transform_5(%arg0: i32, %arg1: i32) -> (i32, i32, i32) {
    %c0_i32 = arith.constant 0 : i32
    %c0_i32_0 = arith.constant 0 : i32
    %c0_i32_1 = arith.constant 0 : i32
    return %arg1, %c0_i32, %c0_i32_0 : i32, i32, i32
  }
  func.func @transform_6(%arg0: i32, %arg1: i32) -> (i32, i32, i32) {
    %c0_i32 = arith.constant 0 : i32
    %c0_i32_0 = arith.constant 0 : i32
    %c0_i32_1 = arith.constant 0 : i32
    return %arg1, %c0_i32, %c0_i32_0 : i32, i32, i32
  }
  func.func @transform_7(%arg0: i32, %arg1: i32) -> (i32, i32, i32) {
    %c0_i32 = arith.constant 0 : i32
    %c0_i32_0 = arith.constant 0 : i32
    %c0_i32_1 = arith.constant 0 : i32
    return %arg1, %c0_i32, %c0_i32_0 : i32, i32, i32
  }
  func.func @transform_8(%arg0: i32, %arg1: i32) -> (i32, i32, i32) {
    %c0_i32 = arith.constant 0 : i32
    %c0_i32_0 = arith.constant 0 : i32
    %c0_i32_1 = arith.constant 0 : i32
    return %arg1, %c0_i32, %c0_i32_0 : i32, i32, i32
  }
  func.func @transform_9(%arg0: i32, %arg1: i32) -> (i32, i32, i32) {
    %c0_i32 = arith.constant 0 : i32
    %c0_i32_0 = arith.constant 0 : i32
    %c0_i32_1 = arith.constant 0 : i32
    return %arg1, %c0_i32, %c0_i32_0 : i32, i32, i32
  }
  func.func @transform_10(%arg0: i32, %arg1: i32) -> (i32, i32, i32) {
    %c0_i32 = arith.constant 0 : i32
    %c0_i32_0 = arith.constant 0 : i32
    %c0_i32_1 = arith.constant 0 : i32
    return %arg1, %c0_i32, %c0_i32_0 : i32, i32, i32
  }
  func.func @transform_11(%arg0: i32, %arg1: i32) -> (i32, i32, i32) {
    %c0_i32 = arith.constant 0 : i32
    %c0_i32_0 = arith.constant 0 : i32
    %c0_i32_1 = arith.constant 0 : i32
    return %arg1, %c0_i32, %c0_i32_0 : i32, i32, i32
  }
  func.func @transform_12(%arg0: i32, %arg1: i32) -> (i32, i32, i32) {
    %c0_i32 = arith.constant 0 : i32
    %c0_i32_0 = arith.constant 0 : i32
    %c0_i32_1 = arith.constant 0 : i32
    return %arg1, %c0_i32, %c0_i32_0 : i32, i32, i32
  }
  func.func @transform_13(%arg0: i32, %arg1: i32) -> (i32, i32, i32) {
    %c0_i32 = arith.constant 0 : i32
    %c0_i32_0 = arith.constant 0 : i32
    %c0_i32_1 = arith.constant 0 : i32
    return %arg1, %c0_i32, %c0_i32_0 : i32, i32, i32
  }
  func.func @transform_14(%arg0: i32, %arg1: i32) -> (i32, i32, i32) {
    %c0_i32 = arith.constant 0 : i32
    %c0_i32_0 = arith.constant 0 : i32
    %c0_i32_1 = arith.constant 0 : i32
    return %arg1, %c0_i32, %c0_i32_0 : i32, i32, i32
  }
  func.func @transform_15(%arg0: i32, %arg1: i32) -> (i32, i32, i32) {
    %c0_i32 = arith.constant 0 : i32
    %c0_i32_0 = arith.constant 0 : i32
    %c0_i32_1 = arith.constant 0 : i32
    return %arg1, %c0_i32, %c0_i32_0 : i32, i32, i32
  }
  func.func @transform_16(%arg0: i32, %arg1: i32) -> (i32, i32, i32) {
    %c0_i32 = arith.constant 0 : i32
    %c0_i32_0 = arith.constant 0 : i32
    %c0_i32_1 = arith.constant 0 : i32
    return %arg1, %c0_i32, %c0_i32_0 : i32, i32, i32
  }
  func.func @transform_17(%arg0: i32, %arg1: i32) -> (i32, i32, i32) {
    %c0_i32 = arith.constant 0 : i32
    %c0_i32_0 = arith.constant 0 : i32
    %c0_i32_1 = arith.constant 0 : i32
    return %arg1, %c0_i32, %c0_i32_0 : i32, i32, i32
  }
  func.func @transform_18(%arg0: i32, %arg1: i32) -> (i32, i32, i32) {
    %c0_i32 = arith.constant 0 : i32
    %c0_i32_0 = arith.constant 0 : i32
    %c0_i32_1 = arith.constant 0 : i32
    return %arg1, %c0_i32, %c0_i32_0 : i32, i32, i32
  }
  func.func @transform_19(%arg0: i32, %arg1: i32) -> (i32, i32, i32) {
    %c0_i32 = arith.constant 0 : i32
    %c0_i32_0 = arith.constant 0 : i32
    %c0_i32_1 = arith.constant 0 : i32
    return %arg1, %c0_i32, %c0_i32_0 : i32, i32, i32
  }
  func.func @transform_20(%arg0: i32, %arg1: i32) -> (i32, i32, i32) {
    %c0_i32 = arith.constant 0 : i32
    %c0_i32_0 = arith.constant 0 : i32
    %c0_i32_1 = arith.constant 0 : i32
    return %arg1, %c0_i32, %c0_i32_0 : i32, i32, i32
  }
  func.func @transform_21(%arg0: i32, %arg1: i32) -> (i32, i32, i32) {
    %c0_i32 = arith.constant 0 : i32
    %c0_i32_0 = arith.constant 0 : i32
    %c0_i32_1 = arith.constant 0 : i32
    return %arg1, %c0_i32, %c0_i32_0 : i32, i32, i32
  }
  func.func @transform_22(%arg0: i32, %arg1: i32) -> (i32, i32, i32) {
    %c0_i32 = arith.constant 0 : i32
    %c0_i32_0 = arith.constant 0 : i32
    %c0_i32_1 = arith.constant 0 : i32
    return %arg1, %c0_i32, %c0_i32_0 : i32, i32, i32
  }
  func.func @transform_23(%arg0: i32, %arg1: i32) -> (i32, i32, i32) {
    %c0_i32 = arith.constant 0 : i32
    %c0_i32_0 = arith.constant 0 : i32
    %c0_i32_1 = arith.constant 0 : i32
    return %arg1, %c0_i32, %c0_i32_0 : i32, i32, i32
  }
  func.func @transform_24(%arg0: i32, %arg1: i32) -> (i32, i32, i32) {
    %c0_i32 = arith.constant 0 : i32
    %c0_i32_0 = arith.constant 0 : i32
    %c0_i32_1 = arith.constant 0 : i32
    return %arg0, %c0_i32, %c0_i32_0 : i32, i32, i32
  }
  func.func @transform_25(%arg0: i32, %arg1: i32) -> (i32, i32, i32, i32) {
    %c0_i32 = arith.constant 0 : i32
    %c0_i32_0 = arith.constant 0 : i32
    %c0_i32_1 = arith.constant 0 : i32
    %c0_i32_2 = arith.constant 0 : i32
    return %arg0, %c0_i32, %c0_i32_0, %c0_i32_1 : i32, i32, i32, i32
  }
}

</mosaic_0001>

<llo_original>
// kernel: seq2seq_forward.5
$region0: #{seq2seq_forward.5}
  #allocation0 [shape = 'u32[]', space=smem, size = 0x4, offset = 0x4, fixed_abs, tag = 'smem constant byte address 0x4 - core index']
  #allocation1 [shape = 'u32[144,128]{1,0:T(1,128)}', space=vmem, size = 0x12000, scoped, tag = 'internal scratch']
  %s0 = inlined_call_operand.vmem [shape: f32[16,32], index: 0, kind: input, shape index: {}]
  %s1 = inlined_call_operand.vmem [shape: f32[32,100], index: 1, kind: input, shape index: {}]
  %s2 = inlined_call_operand.vmem [shape: f32[1,100], index: 2, kind: input, shape index: {}]
  %s3 = inlined_call_operand.hbm [shape: f32[16,100], index: 3, kind: output, shape index: {}]
  %s4 = sld [smem:[#allocation0]]
  $region22: #{seq2seq_forward.5} parent=0
    _
  %s6 = ssub.s32 1, %s4
  %s7 = scalar_select 0, %s6, %s4
  $region1: #{seq2seq_forward.5} parent=0
    #allocation2 [shape = 'u8[8192]{0}', space=vmem, size = 0x2000, scoped, tag = 'output window, operand 0, single buffered']
    #allocation3 [shape = 's32[1]{0}', space=sflag, size = 0x4, scoped, tag = 'scoped memory for seq2seq_forward.5']
    %8 = vsyncpa [#allocation3], 0
    // Predicated region
    $region2: #{seq2seq_forward.5} parent=1 // pred_check
      _
    $region3: #{seq2seq_forward.5} parent=1 // pred_check_branch
      %10 = sbr.rel (0) target = $region5
    $region4: #{seq2seq_forward.5} parent=1 // pred_region
      _
    $region5: #{seq2seq_forward.5} parent=1 // pred_fallthru
      _
    // Predicated region
    $region6: #{seq2seq_forward.5} parent=1 // pred_check
      _
    $region7: #{seq2seq_forward.5} parent=1 // pred_check_branch
      %12 = sbr.rel (0) target = $region9
    $region8: #{seq2seq_forward.5} parent=1 // pred_region
      _
    $region9: #{seq2seq_forward.5} parent=1 // pred_fallthru
      _
    // Predicated region
    $region10: #{seq2seq_forward.5} parent=1 // pred_check
      _
    $region11: #{seq2seq_forward.5} parent=1 // pred_check_branch
      %14 = sbr.rel (0) target = $region13
    $region12: #{seq2seq_forward.5} parent=1 // pred_region
      _
    $region13: #{seq2seq_forward.5} parent=1 // pred_fallthru
      _
    %v15 = vld [vmem:[%s0] sm:$0xff]
    %v16 = vld [vmem:[%s0 + $0x8] sm:$0xff]
    %v17 = vld [vmem:[%s1] sm:$0xff]
    %v18 = vld [vmem:[%s1 + $0x8] sm:$0xff]
    %v19 = vld [vmem:[%s1 + $0x10] sm:$0xff]
    %v20 = vld [vmem:[%s1 + $0x18] sm:$0xff]
    %v21 = vld [vmem:[%s2] sm:$0x1]
    %v23 = vlaneseq
    %v24 = vshrl.u32 %v23, 7
    %v25 = vsub.s32 0, %v24
    %v26 = vrot.slane %v21, %v25
    %vm28 = vcmask 261120
    %v30 = vsel %vm28, %v15, 0
    %v33 = vsel %vm28, %v16, 0
    %35 = vmatprep.subr.mxu0 0.0
    %36 = vmatpush1.msra.mxu0 %v17
    %37 = vmatprep.subr.mxu0 0.0
    %38 = vmatpush1.msra.mxu0 %v18
    %39 = vmatprep.subr.mxu0 0.0
    %40 = vmatpush1.msra.mxu0 %v19
    %41 = vmatprep.subr.mxu0 0.0
    %42 = vmatpush1.msra.mxu0 %v20
    %43 = vmatprep.subr.mxu0 0.0
    %44 = vmatpush1.msra.mxu0 0.0
    %45 = vmatprep.subr.mxu0 0.0
    %46 = vmatpush1.msra.mxu0 0.0
    %47 = vmatprep.subr.mxu0 0.0
    %48 = vmatpush1.msra.mxu0 0.0
    %49 = vmatprep.subr.mxu0 0.0
    %50 = vmatpush1.msra.mxu0 0.0
    %51 = vmatprep.subr.mxu0 0.0
    %52 = vmatpush1.msra.mxu0 0.0
    %53 = vmatprep.subr.mxu0 0.0
    %54 = vmatpush1.msra.mxu0 0.0
    %55 = vmatprep.subr.mxu0 0.0
    %56 = vmatpush1.msra.mxu0 0.0
    %57 = vmatprep.subr.mxu0 0.0
    %58 = vmatpush1.msra.mxu0 0.0
    %59 = vmatprep.subr.mxu0 0.0
    %60 = vmatpush1.msra.mxu0 0.0
    %61 = vmatprep.subr.mxu0 0.0
    %62 = vmatpush1.msra.mxu0 0.0
    %63 = vmatprep.subr.mxu0 0.0
    %64 = vmatpush1.msra.mxu0 0.0
    %65 = vmatprep.subr.mxu0 0.0
    %66 = vmatpush1.msra.mxu0 0.0
    %67 = vmatprep.subr.mxu0 0.0
    %68 = vmatpush1.msra.mxu0 0.0
    %69 = vmatprep.subr.mxu0 0.0
    %70 = vmatpush1.msra.mxu0 0.0
    %71 = vmatprep.subr.mxu0 0.0
    %72 = vmatpush1.msra.mxu0 0.0
    %73 = vmatprep.subr.mxu0 0.0
    %74 = vmatpush1.msra.mxu0 0.0
    %75 = vmatprep.subr.mxu0 0.0
    %76 = vmatpush1.msra.mxu0 0.0
    %77 = vmatprep.subr.mxu0 0.0
    %78 = vmatpush1.msra.mxu0 0.0
    %79 = vmatprep.subr.mxu0 0.0
    %80 = vmatpush1.msra.mxu0 0.0
    %81 = vmatprep.subr.mxu0 0.0
    %82 = vmatpush1.msra.mxu0 0.0
    %83 = vmatprep.subr.mxu0 0.0
    %84 = vmatpush1.msra.mxu0 0.0
    %85 = vmatprep.subr.mxu0 0.0
    %86 = vmatpush1.msra.mxu0 0.0
    %87 = vmatprep.subr.mxu0 0.0
    %88 = vmatpush1.msra.mxu0 0.0
    %89 = vmatprep.subr.mxu0 0.0
    %90 = vmatpush1.msra.mxu0 0.0
    %91 = vmatprep.subr.mxu0 0.0
    %92 = vmatpush1.msra.mxu0 0.0
    %93 = vmatprep.subr.mxu0 0.0
    %94 = vmatpush1.msra.mxu0 0.0
    %95 = vmatprep.subr.mxu0 0.0
    %96 = vmatpush1.msra.mxu0 0.0
    %97 = vmatprep.subr.mxu0 0.0
    %98 = vmatpush1.msra.mxu0 0.0
    %99 = vmatprep.mubr.f32.mxu0 0.0
    %100 = vmatmul.mubr.f32.gmra.mrb[0].mxu0 %v30
    %v101 = vpop.f32.mrb[0].mxu0
    %v102 = vadd.f32 %v26, %v101
    %v103 = vpop.f32.mrb[0].mxu0
    %104 = vmatprep.mubr.f32.mxu0 0.0
    %105 = vmatmul.mubr.f32.gmra.mrb[0].mxu0 %v33
    %v106 = vpop.f32.mrb[0].mxu0
    %v107 = vadd.f32 %v26, %v106
    %v108 = vpop.f32.mrb[0].mxu0
    %109 = vdwg.mxu0
    %vm110 = vcmask 818176
    %111 = vst.msk [vmem:[#allocation2] sm:$0xff] %vm110, %v102
    %112 = vst.msk [vmem:[#allocation2 + $0x8] sm:$0xff] %vm110, %v107
    // Predicated region
    $region14: #{seq2seq_forward.5} parent=1 // pred_check
      _
    $region15: #{seq2seq_forward.5} parent=1 // pred_check_branch
      %114 = sbr.rel (0) target = $region17
    $region16: #{seq2seq_forward.5} parent=1 // pred_region
      %s116 = ssub.s32 256, 256
      %117 = vsyncadd [#allocation3], %s116
      %s118 = sshll.u32 [#allocation2], 4
      %s119 = int_to_ptr.vmem [resolvable:$true] %s118
      %124 = dma.vmem_to_hbm [thread:$0]  %s119, 256, %s3, [#allocation3], 128, 128, 8
    $region17: #{seq2seq_forward.5} parent=1 // pred_fallthru
      _
    // Predicated region
    $region18: #{seq2seq_forward.5} parent=1 // pred_check
      _
    $region19: #{seq2seq_forward.5} parent=1 // pred_check_branch
      %126 = sbr.rel (0) target = $region21
    $region20: #{seq2seq_forward.5} parent=1 // pred_region
      %127 = dma.done [#allocation3], 256
    $region21: #{seq2seq_forward.5} parent=1 // pred_fallthru
      _
    %128 = vsyncpa [#allocation3], 1

// kernel: seq2seq_forward.3
$region0: #{seq2seq_forward.3}
  #allocation0 [shape = 'u32[]', space=smem, size = 0x4, offset = 0x4, fixed_abs, tag = 'smem constant byte address 0x4 - core index']
  #allocation1 [shape = 'u32[144,128]{1,0:T(1,128)}', space=vmem, size = 0x12000, scoped, tag = 'internal scratch']
  %s0 = inlined_call_operand.vmem [shape: f32[2,8,32], index: 0, kind: input, shape index: {}]
  %s1 = inlined_call_operand.vmem [shape: f32[2,1,8], index: 1, kind: input, shape index: {}]
  %s2 = inlined_call_operand.vmem [shape: f32[2,32,96], index: 2, kind: input, shape index: {}]
  %s3 = inlined_call_operand.vmem [shape: f32[2,1,96], index: 3, kind: input, shape index: {}]
  %s4 = inlined_call_operand.vmem [shape: f32[2,32,32], index: 4, kind: input, shape index: {}]
  %s5 = inlined_call_operand.vmem [shape: f32[2,1,32], index: 5, kind: input, shape index: {}]
  %s6 = inlined_call_operand.vmem [shape: f32[2,1,32], index: 6, kind: input, shape index: {}]
  %s7 = inlined_call_operand.vmem [shape: f32[2,1,32], index: 7, kind: input, shape index: {}]
  %s8 = inlined_call_operand.vmem [shape: f32[2,32,64], index: 8, kind: input, shape index: {}]
  %s9 = inlined_call_operand.vmem [shape: f32[2,1,64], index: 9, kind: input, shape index: {}]
  %s10 = inlined_call_operand.vmem [shape: f32[2,64,32], index: 10, kind: input, shape index: {}]
  %s11 = inlined_call_operand.vmem [shape: f32[2,1,32], index: 11, kind: input, shape index: {}]
  %s12 = inlined_call_operand.vmem [shape: f32[2,1,32], index: 12, kind: input, shape index: {}]
  %s13 = inlined_call_operand.vmem [shape: f32[2,1,32], index: 13, kind: input, shape index: {}]
  %s14 = inlined_call_operand.vmem [shape: f32[2,8,32], index: 14, kind: output, shape index: {}]
  %s15 = sld [smem:[#allocation0]]
  $region93: #{seq2seq_forward.3} parent=0
    _
  %s17 = ssub.s32 1, %s15
  %s18 = scalar_select 0, %s17, %s15
  loop: start=0, step=1, limit=6
  $region2: #{seq2seq_forward.3} parent=0 // loop_pre_header
    _
  $region3: #{seq2seq_forward.3} parent=0 // loop_header
    %s20 = sphi 0, %s24
    %p21 = scmp.ge.s32.totalorder %s20, 6
    %s27 = sphi 0, %s39
    %s28 = sphi 0, %s35
    %s29 = sphi 0, %s27
    %s30 = sphi 0, %s28
    %s31 = sphi 0, %s29
    %s32 = sphi 0, %s30
    %s42 = sphi 0, %s44
    %s45 = sphi 0, %s42
    %s46 = sphi 0, %s45
    %s62 = sphi 0, %s46
    %s68 = sphi 0, %s70
    %s71 = sphi 0, %s68
    %s72 = sphi 0, %s71
    %s88 = sphi 0, %s72
    %s94 = sphi 0, %s96
    %s97 = sphi 0, %s94
    %s98 = sphi 0, %s97
    %s114 = sphi 0, %s98
    %s120 = sphi 0, %s122
    %s123 = sphi 0, %s120
    %s124 = sphi 0, %s123
    %s140 = sphi 0, %s124
    %s146 = sphi 0, %s148
    %s149 = sphi 0, %s146
    %s150 = sphi 0, %s149
    %s166 = sphi 0, %s150
    %s172 = sphi 0, %s174
    %s175 = sphi 0, %s172
    %s176 = sphi 0, %s175
    %s192 = sphi 0, %s176
    %s198 = sphi 0, %s200
    %s201 = sphi 0, %s198
    %s202 = sphi 0, %s201
    %s218 = sphi 0, %s202
    %s224 = sphi 0, %s226
    %s227 = sphi 0, %s224
    %s228 = sphi 0, %s227
    %s244 = sphi 0, %s228
    %s250 = sphi 0, %s252
    %s253 = sphi 0, %s250
    %s254 = sphi 0, %s253
    %s270 = sphi 0, %s254
    %s276 = sphi 0, %s278
    %s279 = sphi 0, %s276
    %s280 = sphi 0, %s279
    %s296 = sphi 0, %s280
    %s302 = sphi 0, %s304
    %s305 = sphi 0, %s302
    %s306 = sphi 0, %s305
    %s322 = sphi 0, %s306
    %s328 = sphi 0, %s330
    %s331 = sphi 0, %s328
    %s332 = sphi 0, %s331
    %s348 = sphi 0, %s332
    %s354 = sphi 0, %s356
    %s357 = sphi 0, %s354
    %s358 = sphi 0, %s357
    %s374 = sphi 0, %s358
    %s380 = sphi 0, %s382
    %s383 = sphi 0, %s380
    %s384 = sphi 0, %s383
    %s400 = sphi 0, %s384
    %s406 = sphi 0, %s408
    %s409 = sphi 0, %s406
    %s410 = sphi 0, %s409
    %s426 = sphi 0, %s410
  $region4: #{seq2seq_forward.3} parent=0 // loop_header_branch
    %23 = sbr.rel (%p21) target = $region8
  $region5: #{seq2seq_forward.3} parent=0 // loop_body
    %s25 = ssub.s32 %s20, 1
    %s26 = ssub.s32 %s20, 2
    %s33 = sadd.s32 1, %s28
    %p34 = scmp.ge.s32.totalorder %s33, 2
    %s35 = scalar_select %p34, 0, %s33
    %s36 = sadd.s32 1, %s27
    %s37 = scalar_select %p34, %s36, %s27
    %p38 = scmp.ge.s32.totalorder %s37, 2
    %s39 = scalar_select %p38, 0, %s37
    %s40 = ssub.s32 %s27, %s39
    %p41 = scmp.eq.s32.totalorder %s40, 0
    %s43 = sadd.s32 %s42, 1
    %s44 = scalar_select %p41, %s42, %s43
    %p47 = pneg %p41
    %p48 = scmp.eq.s32.totalorder %s20, 3
    %p49 = por %p47, %p48
    %p50 = scmp.ne.s32.totalorder %s42, %s45
    %p51 = scmp.eq.s32.totalorder %s20, 0
    %p52 = por %p50, %p51
    %p53 = scmp.ne.s32.totalorder %s42, %s45
    %p54 = scmp.eq.s32.totalorder %s25, 3
    %p55 = por %p53, %p54
    %p56 = scmp.ne.s32.totalorder %s45, %s46
    %p57 = scmp.eq.s32.totalorder %s25, 0
    %p58 = por %p56, %p57
    %p59 = scmp.ne.s32.totalorder %s45, %s46
    %p60 = scmp.eq.s32.totalorder %s26, 3
    %p61 = por %p59, %p60
    %p63 = scmp.ne.s32.totalorder %s46, %s62
    %p64 = scmp.eq.s32.totalorder %s26, 0
    %p65 = por %p63, %p64
    %s66 = ssub.s32 %s27, %s39
    %p67 = scmp.eq.s32.totalorder %s66, 0
    %s69 = sadd.s32 %s68, 1
    %s70 = scalar_select %p67, %s68, %s69
    %p73 = pneg %p67
    %p74 = scmp.eq.s32.totalorder %s20, 3
    %p75 = por %p73, %p74
    %p76 = scmp.ne.s32.totalorder %s68, %s71
    %p77 = scmp.eq.s32.totalorder %s20, 0
    %p78 = por %p76, %p77
    %p79 = scmp.ne.s32.totalorder %s68, %s71
    %p80 = scmp.eq.s32.totalorder %s25, 3
    %p81 = por %p79, %p80
    %p82 = scmp.ne.s32.totalorder %s71, %s72
    %p83 = scmp.eq.s32.totalorder %s25, 0
    %p84 = por %p82, %p83
    %p85 = scmp.ne.s32.totalorder %s71, %s72
    %p86 = scmp.eq.s32.totalorder %s26, 3
    %p87 = por %p85, %p86
    %p89 = scmp.ne.s32.totalorder %s72, %s88
    %p90 = scmp.eq.s32.totalorder %s26, 0
    %p91 = por %p89, %p90
    %s92 = ssub.s32 %s28, %s35
    %p93 = scmp.eq.s32.totalorder %s92, 0
    %s95 = sadd.s32 %s94, 1
    %s96 = scalar_select %p93, %s94, %s95
    %p99 = pneg %p93
    %p100 = scmp.eq.s32.totalorder %s20, 3
    %p101 = por %p99, %p100
    %p102 = scmp.ne.s32.totalorder %s94, %s97
    %p103 = scmp.eq.s32.totalorder %s20, 0
    %p104 = por %p102, %p103
    %p105 = scmp.ne.s32.totalorder %s94, %s97
    %p106 = scmp.eq.s32.totalorder %s25, 3
    %p107 = por %p105, %p106
    %p108 = scmp.ne.s32.totalorder %s97, %s98
    %p109 = scmp.eq.s32.totalorder %s25, 0
    %p110 = por %p108, %p109
    %p111 = scmp.ne.s32.totalorder %s97, %s98
    %p112 = scmp.eq.s32.totalorder %s26, 3
    %p113 = por %p111, %p112
    %p115 = scmp.ne.s32.totalorder %s98, %s114
    %p116 = scmp.eq.s32.totalorder %s26, 0
    %p117 = por %p115, %p116
    %s118 = ssub.s32 %s28, %s35
    %p119 = scmp.eq.s32.totalorder %s118, 0
    %s121 = sadd.s32 %s120, 1
    %s122 = scalar_select %p119, %s120, %s121
    %p125 = pneg %p119
    %p126 = scmp.eq.s32.totalorder %s20, 3
    %p127 = por %p125, %p126
    %p128 = scmp.ne.s32.totalorder %s120, %s123
    %p129 = scmp.eq.s32.totalorder %s20, 0
    %p130 = por %p128, %p129
    %p131 = scmp.ne.s32.totalorder %s120, %s123
    %p132 = scmp.eq.s32.totalorder %s25, 3
    %p133 = por %p131, %p132
    %p134 = scmp.ne.s32.totalorder %s123, %s124
    %p135 = scmp.eq.s32.totalorder %s25, 0
    %p136 = por %p134, %p135
    %p137 = scmp.ne.s32.totalorder %s123, %s124
    %p138 = scmp.eq.s32.totalorder %s26, 3
    %p139 = por %p137, %p138
    %p141 = scmp.ne.s32.totalorder %s124, %s140
    %p142 = scmp.eq.s32.totalorder %s26, 0
    %p143 = por %p141, %p142
    %s144 = ssub.s32 %s28, %s35
    %p145 = scmp.eq.s32.totalorder %s144, 0
    %s147 = sadd.s32 %s146, 1
    %s148 = scalar_select %p145, %s146, %s147
    %p151 = pneg %p145
    %p152 = scmp.eq.s32.totalorder %s20, 3
    %p153 = por %p151, %p152
    %p154 = scmp.ne.s32.totalorder %s146, %s149
    %p155 = scmp.eq.s32.totalorder %s20, 0
    %p156 = por %p154, %p155
    %p157 = scmp.ne.s32.totalorder %s146, %s149
    %p158 = scmp.eq.s32.totalorder %s25, 3
    %p159 = por %p157, %p158
    %p160 = scmp.ne.s32.totalorder %s149, %s150
    %p161 = scmp.eq.s32.totalorder %s25, 0
    %p162 = por %p160, %p161
    %p163 = scmp.ne.s32.totalorder %s149, %s150
    %p164 = scmp.eq.s32.totalorder %s26, 3
    %p165 = por %p163, %p164
    %p167 = scmp.ne.s32.totalorder %s150, %s166
    %p168 = scmp.eq.s32.totalorder %s26, 0
    %p169 = por %p167, %p168
    %s170 = ssub.s32 %s28, %s35
    %p171 = scmp.eq.s32.totalorder %s170, 0
    %s173 = sadd.s32 %s172, 1
    %s174 = scalar_select %p171, %s172, %s173
    %p177 = pneg %p171
    %p178 = scmp.eq.s32.totalorder %s20, 3
    %p179 = por %p177, %p178
    %p180 = scmp.ne.s32.totalorder %s172, %s175
    %p181 = scmp.eq.s32.totalorder %s20, 0
    %p182 = por %p180, %p181
    %p183 = scmp.ne.s32.totalorder %s172, %s175
    %p184 = scmp.eq.s32.totalorder %s25, 3
    %p185 = por %p183, %p184
    %p186 = scmp.ne.s32.totalorder %s175, %s176
    %p187 = scmp.eq.s32.totalorder %s25, 0
    %p188 = por %p186, %p187
    %p189 = scmp.ne.s32.totalorder %s175, %s176
    %p190 = scmp.eq.s32.totalorder %s26, 3
    %p191 = por %p189, %p190
    %p193 = scmp.ne.s32.totalorder %s176, %s192
    %p194 = scmp.eq.s32.totalorder %s26, 0
    %p195 = por %p193, %p194
    %s196 = ssub.s32 %s28, %s35
    %p197 = scmp.eq.s32.totalorder %s196, 0
    %s199 = sadd.s32 %s198, 1
    %s200 = scalar_select %p197, %s198, %s199
    %p203 = pneg %p197
    %p204 = scmp.eq.s32.totalorder %s20, 3
    %p205 = por %p203, %p204
    %p206 = scmp.ne.s32.totalorder %s198, %s201
    %p207 = scmp.eq.s32.totalorder %s20, 0
    %p208 = por %p206, %p207
    %p209 = scmp.ne.s32.totalorder %s198, %s201
    %p210 = scmp.eq.s32.totalorder %s25, 3
    %p211 = por %p209, %p210
    %p212 = scmp.ne.s32.totalorder %s201, %s202
    %p213 = scmp.eq.s32.totalorder %s25, 0
    %p214 = por %p212, %p213
    %p215 = scmp.ne.s32.totalorder %s201, %s202
    %p216 = scmp.eq.s32.totalorder %s26, 3
    %p217 = por %p215, %p216
    %p219 = scmp.ne.s32.totalorder %s202, %s218
    %p220 = scmp.eq.s32.totalorder %s26, 0
    %p221 = por %p219, %p220
    %s222 = ssub.s32 %s28, %s35
    %p223 = scmp.eq.s32.totalorder %s222, 0
    %s225 = sadd.s32 %s224, 1
    %s226 = scalar_select %p223, %s224, %s225
    %p229 = pneg %p223
    %p230 = scmp.eq.s32.totalorder %s20, 3
    %p231 = por %p229, %p230
    %p232 = scmp.ne.s32.totalorder %s224, %s227
    %p233 = scmp.eq.s32.totalorder %s20, 0
    %p234 = por %p232, %p233
    %p235 = scmp.ne.s32.totalorder %s224, %s227
    %p236 = scmp.eq.s32.totalorder %s25, 3
    %p237 = por %p235, %p236
    %p238 = scmp.ne.s32.totalorder %s227, %s228
    %p239 = scmp.eq.s32.totalorder %s25, 0
    %p240 = por %p238, %p239
    %p241 = scmp.ne.s32.totalorder %s227, %s228
    %p242 = scmp.eq.s32.totalorder %s26, 3
    %p243 = por %p241, %p242
    %p245 = scmp.ne.s32.totalorder %s228, %s244
    %p246 = scmp.eq.s32.totalorder %s26, 0
    %p247 = por %p245, %p246
    %s248 = ssub.s32 %s28, %s35
    %p249 = scmp.eq.s32.totalorder %s248, 0
    %s251 = sadd.s32 %s250, 1
    %s252 = scalar_select %p249, %s250, %s251
    %p255 = pneg %p249
    %p256 = scmp.eq.s32.totalorder %s20, 3
    %p257 = por %p255, %p256
    %p258 = scmp.ne.s32.totalorder %s250, %s253
    %p259 = scmp.eq.s32.totalorder %s20, 0
    %p260 = por %p258, %p259
    %p261 = scmp.ne.s32.totalorder %s250, %s253
    %p262 = scmp.eq.s32.totalorder %s25, 3
    %p263 = por %p261, %p262
    %p264 = scmp.ne.s32.totalorder %s253, %s254
    %p265 = scmp.eq.s32.totalorder %s25, 0
    %p266 = por %p264, %p265
    %p267 = scmp.ne.s32.totalorder %s253, %s254
    %p268 = scmp.eq.s32.totalorder %s26, 3
    %p269 = por %p267, %p268
    %p271 = scmp.ne.s32.totalorder %s254, %s270
    %p272 = scmp.eq.s32.totalorder %s26, 0
    %p273 = por %p271, %p272
    %s274 = ssub.s32 %s28, %s35
    %p275 = scmp.eq.s32.totalorder %s274, 0
    %s277 = sadd.s32 %s276, 1
    %s278 = scalar_select %p275, %s276, %s277
    %p281 = pneg %p275
    %p282 = scmp.eq.s32.totalorder %s20, 3
    %p283 = por %p281, %p282
    %p284 = scmp.ne.s32.totalorder %s276, %s279
    %p285 = scmp.eq.s32.totalorder %s20, 0
    %p286 = por %p284, %p285
    %p287 = scmp.ne.s32.totalorder %s276, %s279
    %p288 = scmp.eq.s32.totalorder %s25, 3
    %p289 = por %p287, %p288
    %p290 = scmp.ne.s32.totalorder %s279, %s280
    %p291 = scmp.eq.s32.totalorder %s25, 0
    %p292 = por %p290, %p291
    %p293 = scmp.ne.s32.totalorder %s279, %s280
    %p294 = scmp.eq.s32.totalorder %s26, 3
    %p295 = por %p293, %p294
    %p297 = scmp.ne.s32.totalorder %s280, %s296
    %p298 = scmp.eq.s32.totalorder %s26, 0
    %p299 = por %p297, %p298
    %s300 = ssub.s32 %s28, %s35
    %p301 = scmp.eq.s32.totalorder %s300, 0
    %s303 = sadd.s32 %s302, 1
    %s304 = scalar_select %p301, %s302, %s303
    %p307 = pneg %p301
    %p308 = scmp.eq.s32.totalorder %s20, 3
    %p309 = por %p307, %p308
    %p310 = scmp.ne.s32.totalorder %s302, %s305
    %p311 = scmp.eq.s32.totalorder %s20, 0
    %p312 = por %p310, %p311
    %p313 = scmp.ne.s32.totalorder %s302, %s305
    %p314 = scmp.eq.s32.totalorder %s25, 3
    %p315 = por %p313, %p314
    %p316 = scmp.ne.s32.totalorder %s305, %s306
    %p317 = scmp.eq.s32.totalorder %s25, 0
    %p318 = por %p316, %p317
    %p319 = scmp.ne.s32.totalorder %s305, %s306
    %p320 = scmp.eq.s32.totalorder %s26, 3
    %p321 = por %p319, %p320
    %p323 = scmp.ne.s32.totalorder %s306, %s322
    %p324 = scmp.eq.s32.totalorder %s26, 0
    %p325 = por %p323, %p324
    %s326 = ssub.s32 %s28, %s35
    %p327 = scmp.eq.s32.totalorder %s326, 0
    %s329 = sadd.s32 %s328, 1
    %s330 = scalar_select %p327, %s328, %s329
    %p333 = pneg %p327
    %p334 = scmp.eq.s32.totalorder %s20, 3
    %p335 = por %p333, %p334
    %p336 = scmp.ne.s32.totalorder %s328, %s331
    %p337 = scmp.eq.s32.totalorder %s20, 0
    %p338 = por %p336, %p337
    %p339 = scmp.ne.s32.totalorder %s328, %s331
    %p340 = scmp.eq.s32.totalorder %s25, 3
    %p341 = por %p339, %p340
    %p342 = scmp.ne.s32.totalorder %s331, %s332
    %p343 = scmp.eq.s32.totalorder %s25, 0
    %p344 = por %p342, %p343
    %p345 = scmp.ne.s32.totalorder %s331, %s332
    %p346 = scmp.eq.s32.totalorder %s26, 3
    %p347 = por %p345, %p346
    %p349 = scmp.ne.s32.totalorder %s332, %s348
    %p350 = scmp.eq.s32.totalorder %s26, 0
    %p351 = por %p349, %p350
    %s352 = ssub.s32 %s28, %s35
    %p353 = scmp.eq.s32.totalorder %s352, 0
    %s355 = sadd.s32 %s354, 1
    %s356 = scalar_select %p353, %s354, %s355
    %p359 = pneg %p353
    %p360 = scmp.eq.s32.totalorder %s20, 3
    %p361 = por %p359, %p360
    %p362 = scmp.ne.s32.totalorder %s354, %s357
    %p363 = scmp.eq.s32.totalorder %s20, 0
    %p364 = por %p362, %p363
    %p365 = scmp.ne.s32.totalorder %s354, %s357
    %p366 = scmp.eq.s32.totalorder %s25, 3
    %p367 = por %p365, %p366
    %p368 = scmp.ne.s32.totalorder %s357, %s358
    %p369 = scmp.eq.s32.totalorder %s25, 0
    %p370 = por %p368, %p369
    %p371 = scmp.ne.s32.totalorder %s357, %s358
    %p372 = scmp.eq.s32.totalorder %s26, 3
    %p373 = por %p371, %p372
    %p375 = scmp.ne.s32.totalorder %s358, %s374
    %p376 = scmp.eq.s32.totalorder %s26, 0
    %p377 = por %p375, %p376
    %s378 = ssub.s32 %s28, %s35
    %p379 = scmp.eq.s32.totalorder %s378, 0
    %s381 = sadd.s32 %s380, 1
    %s382 = scalar_select %p379, %s380, %s381
    %p385 = pneg %p379
    %p386 = scmp.eq.s32.totalorder %s20, 3
    %p387 = por %p385, %p386
    %p388 = scmp.ne.s32.totalorder %s380, %s383
    %p389 = scmp.eq.s32.totalorder %s20, 0
    %p390 = por %p388, %p389
    %p391 = scmp.ne.s32.totalorder %s380, %s383
    %p392 = scmp.eq.s32.totalorder %s25, 3
    %p393 = por %p391, %p392
    %p394 = scmp.ne.s32.totalorder %s383, %s384
    %p395 = scmp.eq.s32.totalorder %s25, 0
    %p396 = por %p394, %p395
    %p397 = scmp.ne.s32.totalorder %s383, %s384
    %p398 = scmp.eq.s32.totalorder %s26, 3
    %p399 = por %p397, %p398
    %p401 = scmp.ne.s32.totalorder %s384, %s400
    %p402 = scmp.eq.s32.totalorder %s26, 0
    %p403 = por %p401, %p402
    %s404 = ssub.s32 %s27, %s39
    %p405 = scmp.eq.s32.totalorder %s404, 0
    %s407 = sadd.s32 %s406, 1
    %s408 = scalar_select %p405, %s406, %s407
    %p411 = pneg %p405
    %p412 = scmp.eq.s32.totalorder %s20, 3
    %p413 = por %p411, %p412
    %p414 = scmp.ne.s32.totalorder %s406, %s409
    %p415 = scmp.eq.s32.totalorder %s20, 0
    %p416 = por %p414, %p415
    %p417 = scmp.ne.s32.totalorder %s406, %s409
    %p418 = scmp.eq.s32.totalorder %s25, 3
    %p419 = por %p417, %p418
    %p420 = scmp.ne.s32.totalorder %s409, %s410
    %p421 = scmp.eq.s32.totalorder %s25, 0
    %p422 = por %p420, %p421
    %p423 = scmp.ne.s32.totalorder %s409, %s410
    %p424 = scmp.eq.s32.totalorder %s26, 3
    %p425 = por %p423, %p424
    %p427 = scmp.ne.s32.totalorder %s410, %s426
    %p428 = scmp.eq.s32.totalorder %s26, 0
    %p429 = por %p427, %p428
    %p430 = scmp.le.s32.totalorder 1, %s20
    %p431 = scmp.lt.s32.totalorder %s20, 5
    %p432 = pnand %p430, %p431
    %p433 = pneg %p432
    // Predicated region
    $region9: #{seq2seq_forward.3} parent=5 // pred_check
      _
    $region10: #{seq2seq_forward.3} parent=5 // pred_check_branch
      %435 = sbr.rel (%p432) target = $region12
    $region11: #{seq2seq_forward.3} parent=5 // pred_region
      %s436 = ssub.s32 %s20, 1
    $region12: #{seq2seq_forward.3} parent=5 // pred_fallthru
      _
    %p437 = scmp.lt.s32.totalorder %s20, 4
    // Predicated region
    $region13: #{seq2seq_forward.3} parent=5 // pred_check
      %p438 = pneg %p437
    $region14: #{seq2seq_forward.3} parent=5 // pred_check_branch
      %440 = sbr.rel (%p438) target = $region16
    $region15: #{seq2seq_forward.3} parent=5 // pred_region
      // Predicated region
      $region17: #{seq2seq_forward.3} parent=15 // pred_check
        %p441 = pneg %p52
      $region18: #{seq2seq_forward.3} parent=15 // pred_check_branch
        %443 = sbr.rel (%p441) target = $region20
      $region19: #{seq2seq_forward.3} parent=15 // pred_region
        %p444 = scmp.lt.s32.totalorder %s27, 1
        %s445 = scalar_select %p444, %s27, 1
        %s446 = smul.addr %s445, 8
        %s447 = scalar_lea.vmem %s0, %s446
      $region20: #{seq2seq_forward.3} parent=15 // pred_fallthru
        _
      // Predicated region
      $region21: #{seq2seq_forward.3} parent=15 // pred_check
        %p448 = pneg %p78
      $region22: #{seq2seq_forward.3} parent=15 // pred_check_branch
        %450 = sbr.rel (%p448) target = $region24
      $region23: #{seq2seq_forward.3} parent=15 // pred_region
        %p451 = scmp.lt.s32.totalorder %s27, 1
        %s452 = scalar_select %p451, %s27, 1
        %s453 = scalar_lea.vmem %s1, %s452
      $region24: #{seq2seq_forward.3} parent=15 // pred_fallthru
        _
      // Predicated region
      $region25: #{seq2seq_forward.3} parent=15 // pred_check
        %p454 = pneg %p104
      $region26: #{seq2seq_forward.3} parent=15 // pred_check_branch
        %456 = sbr.rel (%p454) target = $region28
      $region27: #{seq2seq_forward.3} parent=15 // pred_region
        %p457 = scmp.lt.s32.totalorder %s28, 1
        %s458 = scalar_select %p457, %s28, 1
        %s459 = smul.addr %s458, 4
        %s460 = smul.addr %s459, 8
        %s461 = scalar_lea.vmem %s2, %s460
      $region28: #{seq2seq_forward.3} parent=15 // pred_fallthru
        _
      // Predicated region
      $region29: #{seq2seq_forward.3} parent=15 // pred_check
        %p462 = pneg %p130
      $region30: #{seq2seq_forward.3} parent=15 // pred_check_branch
        %464 = sbr.rel (%p462) target = $region32
      $region31: #{seq2seq_forward.3} parent=15 // pred_region
        %p465 = scmp.lt.s32.totalorder %s28, 1
        %s466 = scalar_select %p465, %s28, 1
        %s467 = scalar_lea.vmem %s3, %s466
      $region32: #{seq2seq_forward.3} parent=15 // pred_fallthru
        _
      // Predicated region
      $region33: #{seq2seq_forward.3} parent=15 // pred_check
        %p468 = pneg %p156
      $region34: #{seq2seq_forward.3} parent=15 // pred_check_branch
        %470 = sbr.rel (%p468) target = $region36
      $region35: #{seq2seq_forward.3} parent=15 // pred_region
        %p471 = scmp.lt.s32.totalorder %s28, 1
        %s472 = scalar_select %p471, %s28, 1
        %s473 = smul.addr %s472, 4
        %s474 = smul.addr %s473, 8
        %s475 = scalar_lea.vmem %s4, %s474
      $region36: #{seq2seq_forward.3} parent=15 // pred_fallthru
        _
      // Predicated region
      $region37: #{seq2seq_forward.3} parent=15 // pred_check
        %p476 = pneg %p182
      $region38: #{seq2seq_forward.3} parent=15 // pred_check_branch
        %478 = sbr.rel (%p476) target = $region40
      $region39: #{seq2seq_forward.3} parent=15 // pred_region
        %p479 = scmp.lt.s32.totalorder %s28, 1
        %s480 = scalar_select %p479, %s28, 1
        %s481 = scalar_lea.vmem %s5, %s480
      $region40: #{seq2seq_forward.3} parent=15 // pred_fallthru
        _
      // Predicated region
      $region41: #{seq2seq_forward.3} parent=15 // pred_check
        %p482 = pneg %p208
      $region42: #{seq2seq_forward.3} parent=15 // pred_check_branch
        %484 = sbr.rel (%p482) target = $region44
      $region43: #{seq2seq_forward.3} parent=15 // pred_region
        %p485 = scmp.lt.s32.totalorder %s28, 1
        %s486 = scalar_select %p485, %s28, 1
        %s487 = scalar_lea.vmem %s6, %s486
      $region44: #{seq2seq_forward.3} parent=15 // pred_fallthru
        _
      // Predicated region
      $region45: #{seq2seq_forward.3} parent=15 // pred_check
        %p488 = pneg %p234
      $region46: #{seq2seq_forward.3} parent=15 // pred_check_branch
        %490 = sbr.rel (%p488) target = $region48
      $region47: #{seq2seq_forward.3} parent=15 // pred_region
        %p491 = scmp.lt.s32.totalorder %s28, 1
        %s492 = scalar_select %p491, %s28, 1
        %s493 = scalar_lea.vmem %s7, %s492
      $region48: #{seq2seq_forward.3} parent=15 // pred_fallthru
        _
      // Predicated region
      $region49: #{seq2seq_forward.3} parent=15 // pred_check
        %p494 = pneg %p260
      $region50: #{seq2seq_forward.3} parent=15 // pred_check_branch
        %496 = sbr.rel (%p494) target = $region52
      $region51: #{seq2seq_forward.3} parent=15 // pred_region
        %p497 = scmp.lt.s32.totalorder %s28, 1
        %s498 = scalar_select %p497, %s28, 1
        %s499 = smul.addr %s498, 4
        %s500 = smul.addr %s499, 8
        %s501 = scalar_lea.vmem %s8, %s500
      $region52: #{seq2seq_forward.3} parent=15 // pred_fallthru
        _
      // Predicated region
      $region53: #{seq2seq_forward.3} parent=15 // pred_check
        %p502 = pneg %p286
      $region54: #{seq2seq_forward.3} parent=15 // pred_check_branch
        %504 = sbr.rel (%p502) target = $region56
      $region55: #{seq2seq_forward.3} parent=15 // pred_region
        %p505 = scmp.lt.s32.totalorder %s28, 1
        %s506 = scalar_select %p505, %s28, 1
        %s507 = scalar_lea.vmem %s9, %s506
      $region56: #{seq2seq_forward.3} parent=15 // pred_fallthru
        _
      // Predicated region
      $region57: #{seq2seq_forward.3} parent=15 // pred_check
        %p508 = pneg %p312
      $region58: #{seq2seq_forward.3} parent=15 // pred_check_branch
        %510 = sbr.rel (%p508) target = $region60
      $region59: #{seq2seq_forward.3} parent=15 // pred_region
        %p511 = scmp.lt.s32.totalorder %s28, 1
        %s512 = scalar_select %p511, %s28, 1
        %s513 = smul.addr %s512, 8
        %s514 = smul.addr %s513, 8
        %s515 = scalar_lea.vmem %s10, %s514
      $region60: #{seq2seq_forward.3} parent=15 // pred_fallthru
        _
      // Predicated region
      $region61: #{seq2seq_forward.3} parent=15 // pred_check
        %p516 = pneg %p338
      $region62: #{seq2seq_forward.3} parent=15 // pred_check_branch
        %518 = sbr.rel (%p516) target = $region64
      $region63: #{seq2seq_forward.3} parent=15 // pred_region
        %p519 = scmp.lt.s32.totalorder %s28, 1
        %s520 = scalar_select %p519, %s28, 1
        %s521 = scalar_lea.vmem %s11, %s520
      $region64: #{seq2seq_forward.3} parent=15 // pred_fallthru
        _
      // Predicated region
      $region65: #{seq2seq_forward.3} parent=15 // pred_check
        %p522 = pneg %p364
      $region66: #{seq2seq_forward.3} parent=15 // pred_check_branch
        %524 = sbr.rel (%p522) target = $region68
      $region67: #{seq2seq_forward.3} parent=15 // pred_region
        %p525 = scmp.lt.s32.totalorder %s28, 1
        %s526 = scalar_select %p525, %s28, 1
        %s527 = scalar_lea.vmem %s12, %s526
      $region68: #{seq2seq_forward.3} parent=15 // pred_fallthru
        _
      // Predicated region
      $region69: #{seq2seq_forward.3} parent=15 // pred_check
        %p528 = pneg %p390
      $region70: #{seq2seq_forward.3} parent=15 // pred_check_branch
        %530 = sbr.rel (%p528) target = $region72
      $region71: #{seq2seq_forward.3} parent=15 // pred_region
        %p531 = scmp.lt.s32.totalorder %s28, 1
        %s532 = scalar_select %p531, %s28, 1
        %s533 = scalar_lea.vmem %s13, %s532
      $region72: #{seq2seq_forward.3} parent=15 // pred_fallthru
        _
    $region16: #{seq2seq_forward.3} parent=5 // pred_fallthru
      _
    %p534 = scmp.le.s32.totalorder 1, %s20
    %p535 = scmp.lt.s32.totalorder %s20, 5
    %p536 = pnand %p534, %p535
    %p537 = pneg %p536
    // Predicated region
    $region73: #{seq2seq_forward.3} parent=5 // pred_check
      _
    $region74: #{seq2seq_forward.3} parent=5 // pred_check_branch
      %539 = sbr.rel (%p536) target = $region76
    $region75: #{seq2seq_forward.3} parent=5 // pred_region
      %s540 = ssub.s32 %s20, 1
      %p541 = scmp.lt.s32.totalorder %s29, 1
      %s542 = scalar_select %p541, %s29, 1
      %s543 = smul.addr %s542, 8
      %s544 = scalar_lea.vmem %s0, %s543
      %p545 = pneg %p58
      %p546 = pneg %p55
      %p547 = scmp.lt.s32.totalorder %s29, 1
      %s548 = scalar_select %p547, %s29, 1
      %s549 = scalar_lea.vmem %s1, %s548
      %p550 = pneg %p84
      %p551 = pneg %p81
      %p552 = scmp.lt.s32.totalorder %s30, 1
      %s553 = scalar_select %p552, %s30, 1
      %s554 = smul.addr %s553, 4
      %s555 = smul.addr %s554, 8
      %s556 = scalar_lea.vmem %s2, %s555
      %p557 = pneg %p110
      %p558 = pneg %p107
      %p559 = scmp.lt.s32.totalorder %s30, 1
      %s560 = scalar_select %p559, %s30, 1
      %s561 = scalar_lea.vmem %s3, %s560
      %p562 = pneg %p136
      %p563 = pneg %p133
      %p564 = scmp.lt.s32.totalorder %s30, 1
      %s565 = scalar_select %p564, %s30, 1
      %s566 = smul.addr %s565, 4
      %s567 = smul.addr %s566, 8
      %s568 = scalar_lea.vmem %s4, %s567
      %p569 = pneg %p162
      %p570 = pneg %p159
      %p571 = scmp.lt.s32.totalorder %s30, 1
      %s572 = scalar_select %p571, %s30, 1
      %s573 = scalar_lea.vmem %s5, %s572
      %p574 = pneg %p188
      %p575 = pneg %p185
      %p576 = scmp.lt.s32.totalorder %s30, 1
      %s577 = scalar_select %p576, %s30, 1
      %s578 = scalar_lea.vmem %s6, %s577
      %p579 = pneg %p214
      %p580 = pneg %p211
      %p581 = scmp.lt.s32.totalorder %s30, 1
      %s582 = scalar_select %p581, %s30, 1
      %s583 = scalar_lea.vmem %s7, %s582
      %p584 = pneg %p240
      %p585 = pneg %p237
      %p586 = scmp.lt.s32.totalorder %s30, 1
      %s587 = scalar_select %p586, %s30, 1
      %s588 = smul.addr %s587, 4
      %s589 = smul.addr %s588, 8
      %s590 = scalar_lea.vmem %s8, %s589
      %p591 = pneg %p266
      %p592 = pneg %p263
      %p593 = scmp.lt.s32.totalorder %s30, 1
      %s594 = scalar_select %p593, %s30, 1
      %s595 = scalar_lea.vmem %s9, %s594
      %p596 = pneg %p292
      %p597 = pneg %p289
      %p598 = scmp.lt.s32.totalorder %s30, 1
      %s599 = scalar_select %p598, %s30, 1
      %s600 = smul.addr %s599, 8
      %s601 = smul.addr %s600, 8
      %s602 = scalar_lea.vmem %s10, %s601
      %p603 = pneg %p318
      %p604 = pneg %p315
      %p605 = scmp.lt.s32.totalorder %s30, 1
      %s606 = scalar_select %p605, %s30, 1
      %s607 = scalar_lea.vmem %s11, %s606
      %p608 = pneg %p344
      %p609 = pneg %p341
      %p610 = scmp.lt.s32.totalorder %s30, 1
      %s611 = scalar_select %p610, %s30, 1
      %s612 = scalar_lea.vmem %s12, %s611
      %p613 = pneg %p370
      %p614 = pneg %p367
      %p615 = scmp.lt.s32.totalorder %s30, 1
      %s616 = scalar_select %p615, %s30, 1
      %s617 = scalar_lea.vmem %s13, %s616
      %p618 = pneg %p396
      %p619 = pneg %p393
      %p620 = pneg %p422
      %p621 = pneg %p419
      %p622 = scmp.lt.s32.totalorder %s29, 1
      %s623 = scalar_select %p622, %s29, 1
      %s624 = smul.addr %s623, 8
      %s625 = scalar_lea.vmem %s14, %s624
      %p626 = scmp.lt.s32.totalorder %s29, 1
      %s627 = scalar_select %p626, %s29, 1
      %s628 = smul.addr %s627, 8
      %s629 = scalar_lea.vmem %s0, %s628
      %p630 = scmp.lt.s32.totalorder %s29, 1
      %s631 = scalar_select %p630, %s29, 1
      %s632 = scalar_lea.vmem %s1, %s631
      %p633 = scmp.lt.s32.totalorder %s30, 1
      %s634 = scalar_select %p633, %s30, 1
      %s635 = smul.addr %s634, 4
      %s636 = smul.addr %s635, 8
      %s637 = scalar_lea.vmem %s2, %s636
      %p638 = scmp.lt.s32.totalorder %s30, 1
      %s639 = scalar_select %p638, %s30, 1
      %s640 = scalar_lea.vmem %s3, %s639
      %p641 = scmp.lt.s32.totalorder %s30, 1
      %s642 = scalar_select %p641, %s30, 1
      %s643 = smul.addr %s642, 4
      %s644 = smul.addr %s643, 8
      %s645 = scalar_lea.vmem %s4, %s644
      %p646 = scmp.lt.s32.totalorder %s30, 1
      %s647 = scalar_select %p646, %s30, 1
      %s648 = scalar_lea.vmem %s5, %s647
      %p649 = scmp.lt.s32.totalorder %s30, 1
      %s650 = scalar_select %p649, %s30, 1
      %s651 = scalar_lea.vmem %s6, %s650
      %p652 = scmp.lt.s32.totalorder %s30, 1
      %s653 = scalar_select %p652, %s30, 1
      %s654 = scalar_lea.vmem %s7, %s653
      %p655 = scmp.lt.s32.totalorder %s30, 1
      %s656 = scalar_select %p655, %s30, 1
      %s657 = smul.addr %s656, 4
      %s658 = smul.addr %s657, 8
      %s659 = scalar_lea.vmem %s8, %s658
      %p660 = scmp.lt.s32.totalorder %s30, 1
      %s661 = scalar_select %p660, %s30, 1
      %s662 = scalar_lea.vmem %s9, %s661
      %p663 = scmp.lt.s32.totalorder %s30, 1
      %s664 = scalar_select %p663, %s30, 1
      %s665 = smul.addr %s664, 8
      %s666 = smul.addr %s665, 8
      %s667 = scalar_lea.vmem %s10, %s666
      %p668 = scmp.lt.s32.totalorder %s30, 1
      %s669 = scalar_select %p668, %s30, 1
      %s670 = scalar_lea.vmem %s11, %s669
      %p671 = scmp.lt.s32.totalorder %s30, 1
      %s672 = scalar_select %p671, %s30, 1
      %s673 = scalar_lea.vmem %s12, %s672
      %p674 = scmp.lt.s32.totalorder %s30, 1
      %s675 = scalar_select %p674, %s30, 1
      %s676 = scalar_lea.vmem %s13, %s675
      %p677 = scmp.lt.s32.totalorder %s29, 1
      %s678 = scalar_select %p677, %s29, 1
      %s679 = smul.addr %s678, 8
      %s680 = scalar_lea.vmem %s14, %s679
      %p681 = scmp.eq.s32.totalorder %s30, 0
      // Predicated region
      $region77: #{seq2seq_forward.3} parent=75 // pred_check
        %p682 = pneg %p681
      $region78: #{seq2seq_forward.3} parent=75 // pred_check_branch
        %684 = sbr.rel (%p682) target = $region80
      $region79: #{seq2seq_forward.3} parent=75 // pred_region
        %v685 = vld [vmem:[%s629] sm:$0xff]
        %vm686 = vcmask 261120
        %687 = vst.msk [vmem:[%s680] sm:$0xff] %vm686, %v685
      $region80: #{seq2seq_forward.3} parent=75 // pred_fallthru
        _
      %v688 = vld [vmem:[%s680] sm:$0xff]
      %v689 = vld [vmem:[%s632] sm:$0x1]
      %v690 = vld [vmem:[%s637] sm:$0xff]
      %v691 = vld [vmem:[%s637 + $0x8] sm:$0xff]
      %v692 = vld [vmem:[%s637 + $0x10] sm:$0xff]
      %v693 = vld [vmem:[%s637 + $0x18] sm:$0xff]
      %v694 = vld [vmem:[%s640] sm:$0x1]
      %v695 = vld [vmem:[%s645] sm:$0xff]
      %v696 = vld [vmem:[%s645 + $0x8] sm:$0xff]
      %v697 = vld [vmem:[%s645 + $0x10] sm:$0xff]
      %v698 = vld [vmem:[%s645 + $0x18] sm:$0xff]
      %v699 = vld [vmem:[%s648] sm:$0x1]
      %v701 = vlaneseq
      %v702 = vshrl.u32 %v701, 7
      %v703 = vsub.s32 0, %v702
      %v704 = vrot.slane %v694, %v703
      %vm706 = vcmask 261120
      %v708 = vsel %vm706, %v688, 0
      %710 = vmatprep.subr.mxu0 0.0
      %711 = vmatpush1.msra.mxu0 %v690
      %712 = vmatprep.subr.mxu0 0.0
      %713 = vmatpush1.msra.mxu0 %v691
      %714 = vmatprep.subr.mxu0 0.0
      %715 = vmatpush1.msra.mxu0 %v692
      %716 = vmatprep.subr.mxu0 0.0
      %717 = vmatpush1.msra.mxu0 %v693
      %718 = vmatprep.subr.mxu0 0.0
      %719 = vmatpush1.msra.mxu0 0.0
      %720 = vmatprep.subr.mxu0 0.0
      %721 = vmatpush1.msra.mxu0 0.0
      %722 = vmatprep.subr.mxu0 0.0
      %723 = vmatpush1.msra.mxu0 0.0
      %724 = vmatprep.subr.mxu0 0.0
      %725 = vmatpush1.msra.mxu0 0.0
      %726 = vmatprep.subr.mxu0 0.0
      %727 = vmatpush1.msra.mxu0 0.0
      %728 = vmatprep.subr.mxu0 0.0
      %729 = vmatpush1.msra.mxu0 0.0
      %730 = vmatprep.subr.mxu0 0.0
      %731 = vmatpush1.msra.mxu0 0.0
      %732 = vmatprep.subr.mxu0 0.0
      %733 = vmatpush1.msra.mxu0 0.0
      %734 = vmatprep.subr.mxu0 0.0
      %735 = vmatpush1.msra.mxu0 0.0
      %736 = vmatprep.subr.mxu0 0.0
      %737 = vmatpush1.msra.mxu0 0.0
      %738 = vmatprep.subr.mxu0 0.0
      %739 = vmatpush1.msra.mxu0 0.0
      %740 = vmatprep.subr.mxu0 0.0
      %741 = vmatpush1.msra.mxu0 0.0
      %742 = vmatprep.subr.mxu0 0.0
      %743 = vmatpush1.msra.mxu0 0.0
      %744 = vmatprep.subr.mxu0 0.0
      %745 = vmatpush1.msra.mxu0 0.0
      %746 = vmatprep.subr.mxu0 0.0
      %747 = vmatpush1.msra.mxu0 0.0
      %748 = vmatprep.subr.mxu0 0.0
      %749 = vmatpush1.msra.mxu0 0.0
      %750 = vmatprep.subr.mxu0 0.0
      %751 = vmatpush1.msra.mxu0 0.0
      %752 = vmatprep.subr.mxu0 0.0
      %753 = vmatpush1.msra.mxu0 0.0
      %754 = vmatprep.subr.mxu0 0.0
      %755 = vmatpush1.msra.mxu0 0.0
      %756 = vmatprep.subr.mxu0 0.0
      %757 = vmatpush1.msra.mxu0 0.0
      %758 = vmatprep.subr.mxu0 0.0
      %759 = vmatpush1.msra.mxu0 0.0
      %760 = vmatprep.subr.mxu0 0.0
      %761 = vmatpush1.msra.mxu0 0.0
      %762 = vmatprep.subr.mxu0 0.0
      %763 = vmatpush1.msra.mxu0 0.0
      %764 = vmatprep.subr.mxu0 0.0
      %765 = vmatpush1.msra.mxu0 0.0
      %766 = vmatprep.subr.mxu0 0.0
      %767 = vmatpush1.msra.mxu0 0.0
      %768 = vmatprep.subr.mxu0 0.0
      %769 = vmatpush1.msra.mxu0 0.0
      %770 = vmatprep.subr.mxu0 0.0
      %771 = vmatpush1.msra.mxu0 0.0
      %772 = vmatprep.subr.mxu0 0.0
      %773 = vmatpush1.msra.mxu0 0.0
      %774 = vmatprep.mubr.f32.mxu0 0.0
      %775 = vmatmul.mubr.f32.gmra.mrb[0].mxu0 %v708
      %v776 = vpop.f32.mrb[0].mxu0
      %v777 = vadd.f32 %v704, %v776
      %v778 = vpop.f32.mrb[0].mxu0
      %779 = vdwg.mxu0
      %781 = vrot.lane.b32.xlu0 %v777, 96
      %v782 = vpop.permute.xlu0 %781
      %vm783 = vcmask 64512
      %v784 = vsel %vm783, %v777, 0
      %v786 = vsel %vm783, %v782, 0
      %788 = vmatprep.subr.mxu0 0.0
      %789 = vmatpush1.xpose.msra.mxu0 %v786
      %790 = vmatprep.subr.mxu0 0.0
      %791 = vmatpush1.xpose.msra.mxu0 0.0
      %792 = vmatprep.subr.mxu0 0.0
      %793 = vmatpush1.xpose.msra.mxu0 0.0
      %794 = vmatprep.subr.mxu0 0.0
      %795 = vmatpush1.xpose.msra.mxu0 0.0
      %796 = vmatprep.subr.mxu0 0.0
      %797 = vmatpush1.xpose.msra.mxu0 0.0
      %798 = vmatprep.subr.mxu0 0.0
      %799 = vmatpush1.xpose.msra.mxu0 0.0
      %800 = vmatprep.subr.mxu0 0.0
      %801 = vmatpush1.xpose.msra.mxu0 0.0
      %802 = vmatprep.subr.mxu0 0.0
      %803 = vmatpush1.xpose.msra.mxu0 0.0
      %804 = vmatprep.subr.mxu0 0.0
      %805 = vmatpush1.xpose.msra.mxu0 0.0
      %806 = vmatprep.subr.mxu0 0.0
      %807 = vmatpush1.xpose.msra.mxu0 0.0
      %808 = vmatprep.subr.mxu0 0.0
      %809 = vmatpush1.xpose.msra.mxu0 0.0
      %810 = vmatprep.subr.mxu0 0.0
      %811 = vmatpush1.xpose.msra.mxu0 0.0
      %812 = vmatprep.subr.mxu0 0.0
      %813 = vmatpush1.xpose.msra.mxu0 0.0
      %814 = vmatprep.subr.mxu0 0.0
      %815 = vmatpush1.xpose.msra.mxu0 0.0
      %816 = vmatprep.subr.mxu0 0.0
      %817 = vmatpush1.xpose.msra.mxu0 0.0
      %818 = vmatprep.subr.mxu0 0.0
      %819 = vmatpush1.xpose.msra.mxu0 0.0
      %820 = vmatprep.subr.mxu0 0.0
      %821 = vmatpush1.xpose.msra.mxu0 0.0
      %822 = vmatprep.subr.mxu0 0.0
      %823 = vmatpush1.xpose.msra.mxu0 0.0
      %824 = vmatprep.subr.mxu0 0.0
      %825 = vmatpush1.xpose.msra.mxu0 0.0
      %826 = vmatprep.subr.mxu0 0.0
      %827 = vmatpush1.xpose.msra.mxu0 0.0
      %828 = vmatprep.subr.mxu0 0.0
      %829 = vmatpush1.xpose.msra.mxu0 0.0
      %830 = vmatprep.subr.mxu0 0.0
      %831 = vmatpush1.xpose.msra.mxu0 0.0
      %832 = vmatprep.subr.mxu0 0.0
      %833 = vmatpush1.xpose.msra.mxu0 0.0
      %834 = vmatprep.subr.mxu0 0.0
      %835 = vmatpush1.xpose.msra.mxu0 0.0
      %836 = vmatprep.subr.mxu0 0.0
      %837 = vmatpush1.xpose.msra.mxu0 0.0
      %838 = vmatprep.subr.mxu0 0.0
      %839 = vmatpush1.xpose.msra.mxu0 0.0
      %840 = vmatprep.subr.mxu0 0.0
      %841 = vmatpush1.xpose.msra.mxu0 0.0
      %842 = vmatprep.subr.mxu0 0.0
      %843 = vmatpush1.xpose.msra.mxu0 0.0
      %844 = vmatprep.subr.mxu0 0.0
      %845 = vmatpush1.xpose.msra.mxu0 0.0
      %846 = vmatprep.subr.mxu0 0.0
      %847 = vmatpush1.xpose.msra.mxu0 0.0
      %848 = vmatprep.subr.mxu0 0.0
      %849 = vmatpush1.xpose.msra.mxu0 0.0
      %850 = vmatprep.subr.mxu0 0.0
      %851 = vmatpush1.xpose.msra.mxu0 0.0
      %852 = vmatprep.mubr.f32.mxu0 0.0
      %853 = vmatmul.mubr.f32.gmra.mrb[0].mxu0 %v784
      %v854 = vpop.f32.mrb[0].mxu0
      %v855 = vadd.f32 0.0, %v854
      %v856 = vpop.f32.mrb[0].mxu0
      %857 = vdwg.mxu0
      %v858 = vmul.f32 %v855, 0.35355338
      %v860 = vlaneseq
      %v861 = vshrl.u32 %v860, 7
      %v862 = vsub.s32 0, %v861
      %v863 = vrot.slane %v689, %v862
      %v865 = vadd.f32 %v858, %v863
      %v866 = vsel %vm783, %v865, -inf
      %867 = vmax.xlane.f32.xlu0 %v866
      %v868 = vpop.xlane.xlu0 %867
      %v869 = vsub.f32 %v865, %v868
      %v870 = vmul.f32 %v869, 1.442695
      %v871 = vpow.pop %v870
      %v872 = vsel %vm783, %v871, 0.0
      %873 = vadd.xlane.f32.xlu0 %v872
      %v874 = vpop.xlane.xlu0 %873
      %v875 = vrcp.pop %v874
      %v876 = vmul.f32 %v871, %v875
      %877 = vrot.lane.b32.xlu0 %v777, 64
      %v878 = vpop.permute.xlu0 %877
      %v881 = vsel %vm783, %v876, 0
      %883 = vmatprep.subr.mxu0 0.0
      %884 = vmatpush1.msra.mxu0 %v878
      %885 = vmatprep.subr.mxu0 0.0
      %886 = vmatpush1.msra.mxu0 0.0
      %887 = vmatprep.subr.mxu0 0.0
      %888 = vmatpush1.msra.mxu0 0.0
      %889 = vmatprep.subr.mxu0 0.0
      %890 = vmatpush1.msra.mxu0 0.0
      %891 = vmatprep.subr.mxu0 0.0
      %892 = vmatpush1.msra.mxu0 0.0
      %893 = vmatprep.subr.mxu0 0.0
      %894 = vmatpush1.msra.mxu0 0.0
      %895 = vmatprep.subr.mxu0 0.0
      %896 = vmatpush1.msra.mxu0 0.0
      %897 = vmatprep.subr.mxu0 0.0
      %898 = vmatpush1.msra.mxu0 0.0
      %899 = vmatprep.subr.mxu0 0.0
      %900 = vmatpush1.msra.mxu0 0.0
      %901 = vmatprep.subr.mxu0 0.0
      %902 = vmatpush1.msra.mxu0 0.0
      %903 = vmatprep.subr.mxu0 0.0
      %904 = vmatpush1.msra.mxu0 0.0
      %905 = vmatprep.subr.mxu0 0.0
      %906 = vmatpush1.msra.mxu0 0.0
      %907 = vmatprep.subr.mxu0 0.0
      %908 = vmatpush1.msra.mxu0 0.0
      %909 = vmatprep.subr.mxu0 0.0
      %910 = vmatpush1.msra.mxu0 0.0
      %911 = vmatprep.subr.mxu0 0.0
      %912 = vmatpush1.msra.mxu0 0.0
      %913 = vmatprep.subr.mxu0 0.0
      %914 = vmatpush1.msra.mxu0 0.0
      %915 = vmatprep.subr.mxu0 0.0
      %916 = vmatpush1.msra.mxu0 0.0
      %917 = vmatprep.subr.mxu0 0.0
      %918 = vmatpush1.msra.mxu0 0.0
      %919 = vmatprep.subr.mxu0 0.0
      %920 = vmatpush1.msra.mxu0 0.0
      %921 = vmatprep.subr.mxu0 0.0
      %922 = vmatpush1.msra.mxu0 0.0
      %923 = vmatprep.subr.mxu0 0.0
      %924 = vmatpush1.msra.mxu0 0.0
      %925 = vmatprep.subr.mxu0 0.0
      %926 = vmatpush1.msra.mxu0 0.0
      %927 = vmatprep.subr.mxu0 0.0
      %928 = vmatpush1.msra.mxu0 0.0
      %929 = vmatprep.subr.mxu0 0.0
      %930 = vmatpush1.msra.mxu0 0.0
      %931 = vmatprep.subr.mxu0 0.0
      %932 = vmatpush1.msra.mxu0 0.0
      %933 = vmatprep.subr.mxu0 0.0
      %934 = vmatpush1.msra.mxu0 0.0
      %935 = vmatprep.subr.mxu0 0.0
      %936 = vmatpush1.msra.mxu0 0.0
      %937 = vmatprep.subr.mxu0 0.0
      %938 = vmatpush1.msra.mxu0 0.0
      %939 = vmatprep.subr.mxu0 0.0
      %940 = vmatpush1.msra.mxu0 0.0
      %941 = vmatprep.subr.mxu0 0.0
      %942 = vmatpush1.msra.mxu0 0.0
      %943 = vmatprep.subr.mxu0 0.0
      %944 = vmatpush1.msra.mxu0 0.0
      %945 = vmatprep.subr.mxu0 0.0
      %946 = vmatpush1.msra.mxu0 0.0
      %947 = vmatprep.mubr.f32.mxu0 0.0
      %948 = vmatmul.mubr.f32.gmra.mrb[0].mxu0 %v881
      %v949 = vpop.f32.mrb[0].mxu0
      %v950 = vadd.f32 0.0, %v949
      %v951 = vpop.f32.mrb[0].mxu0
      %952 = vdwg.mxu0
      %953 = vrot.lane.b32.xlu0 %v777, 120
      %v954 = vpop.permute.xlu0 %953
      %955 = vrot.lane.b32.xlu0 %v777, 88
      %v956 = vpop.permute.xlu0 %955
      %v957 = vsel %vm783, %v954, 0
      %v959 = vsel %vm783, %v956, 0
      %961 = vmatprep.subr.mxu0 0.0
      %962 = vmatpush1.xpose.msra.mxu0 %v959
      %963 = vmatprep.subr.mxu0 0.0
      %964 = vmatpush1.xpose.msra.mxu0 0.0
      %965 = vmatprep.subr.mxu0 0.0
      %966 = vmatpush1.xpose.msra.mxu0 0.0
      %967 = vmatprep.subr.mxu0 0.0
      %968 = vmatpush1.xpose.msra.mxu0 0.0
      %969 = vmatprep.subr.mxu0 0.0
      %970 = vmatpush1.xpose.msra.mxu0 0.0
      %971 = vmatprep.subr.mxu0 0.0
      %972 = vmatpush1.xpose.msra.mxu0 0.0
      %973 = vmatprep.subr.mxu0 0.0
      %974 = vmatpush1.xpose.msra.mxu0 0.0
      %975 = vmatprep.subr.mxu0 0.0
      %976 = vmatpush1.xpose.msra.mxu0 0.0
      %977 = vmatprep.subr.mxu0 0.0
      %978 = vmatpush1.xpose.msra.mxu0 0.0
      %979 = vmatprep.subr.mxu0 0.0
      %980 = vmatpush1.xpose.msra.mxu0 0.0
      %981 = vmatprep.subr.mxu0 0.0
      %982 = vmatpush1.xpose.msra.mxu0 0.0
      %983 = vmatprep.subr.mxu0 0.0
      %984 = vmatpush1.xpose.msra.mxu0 0.0
      %985 = vmatprep.subr.mxu0 0.0
      %986 = vmatpush1.xpose.msra.mxu0 0.0
      %987 = vmatprep.subr.mxu0 0.0
      %988 = vmatpush1.xpose.msra.mxu0 0.0
      %989 = vmatprep.subr.mxu0 0.0
      %990 = vmatpush1.xpose.msra.mxu0 0.0
      %991 = vmatprep.subr.mxu0 0.0
      %992 = vmatpush1.xpose.msra.mxu0 0.0
      %993 = vmatprep.subr.mxu0 0.0
      %994 = vmatpush1.xpose.msra.mxu0 0.0
      %995 = vmatprep.subr.mxu0 0.0
      %996 = vmatpush1.xpose.msra.mxu0 0.0
      %997 = vmatprep.subr.mxu0 0.0
      %998 = vmatpush1.xpose.msra.mxu0 0.0
      %999 = vmatprep.subr.mxu0 0.0
      %1000 = vmatpush1.xpose.msra.mxu0 0.0
      %1001 = vmatprep.subr.mxu0 0.0
      %1002 = vmatpush1.xpose.msra.mxu0 0.0
      %1003 = vmatprep.subr.mxu0 0.0
      %1004 = vmatpush1.xpose.msra.mxu0 0.0
      %1005 = vmatprep.subr.mxu0 0.0
      %1006 = vmatpush1.xpose.msra.mxu0 0.0
      %1007 = vmatprep.subr.mxu0 0.0
      %1008 = vmatpush1.xpose.msra.mxu0 0.0
      %1009 = vmatprep.subr.mxu0 0.0
      %1010 = vmatpush1.xpose.msra.mxu0 0.0
      %1011 = vmatprep.subr.mxu0 0.0
      %1012 = vmatpush1.xpose.msra.mxu0 0.0
      %1013 = vmatprep.subr.mxu0 0.0
      %1014 = vmatpush1.xpose.msra.mxu0 0.0
      %1015 = vmatprep.subr.mxu0 0.0
      %1016 = vmatpush1.xpose.msra.mxu0 0.0
      %1017 = vmatprep.subr.mxu0 0.0
      %1018 = vmatpush1.xpose.msra.mxu0 0.0
      %1019 = vmatprep.subr.mxu0 0.0
      %1020 = vmatpush1.xpose.msra.mxu0 0.0
      %1021 = vmatprep.subr.mxu0 0.0
      %1022 = vmatpush1.xpose.msra.mxu0 0.0
      %1023 = vmatprep.subr.mxu0 0.0
      %1024 = vmatpush1.xpose.msra.mxu0 0.0
      %1025 = vmatprep.mubr.f32.mxu0 0.0
      %1026 = vmatmul.mubr.f32.gmra.mrb[0].mxu0 %v957
      %v1027 = vpop.f32.mrb[0].mxu0
      %v1028 = vadd.f32 0.0, %v1027
      %v1029 = vpop.f32.mrb[0].mxu0
      %1030 = vdwg.mxu0
      %v1031 = vmul.f32 %v1028, 0.35355338
      %v1032 = vadd.f32 %v1031, %v863
      %v1033 = vsel %vm783, %v1032, -inf
      %1034 = vmax.xlane.f32.xlu0 %v1033
      %v1035 = vpop.xlane.xlu0 %1034
      %v1036 = vsub.f32 %v1032, %v1035
      %v1037 = vmul.f32 %v1036, 1.442695
      %v1038 = vpow.pop %v1037
      %v1039 = vsel %vm783, %v1038, 0.0
      %1040 = vadd.xlane.f32.xlu0 %v1039
      %v1041 = vpop.xlane.xlu0 %1040
      %v1042 = vrcp.pop %v1041
      %v1043 = vmul.f32 %v1038, %v1042
      %1044 = vrot.lane.b32.xlu0 %v777, 56
      %v1045 = vpop.permute.xlu0 %1044
      %v1048 = vsel %vm783, %v1043, 0
      %1050 = vmatprep.subr.mxu0 0.0
      %1051 = vmatpush1.msra.mxu0 %v1045
      %1052 = vmatprep.subr.mxu0 0.0
      %1053 = vmatpush1.msra.mxu0 0.0
      %1054 = vmatprep.subr.mxu0 0.0
      %1055 = vmatpush1.msra.mxu0 0.0
      %1056 = vmatprep.subr.mxu0 0.0
      %1057 = vmatpush1.msra.mxu0 0.0
      %1058 = vmatprep.subr.mxu0 0.0
      %1059 = vmatpush1.msra.mxu0 0.0
      %1060 = vmatprep.subr.mxu0 0.0
      %1061 = vmatpush1.msra.mxu0 0.0
      %1062 = vmatprep.subr.mxu0 0.0
      %1063 = vmatpush1.msra.mxu0 0.0
      %1064 = vmatprep.subr.mxu0 0.0
      %1065 = vmatpush1.msra.mxu0 0.0
      %1066 = vmatprep.subr.mxu0 0.0
      %1067 = vmatpush1.msra.mxu0 0.0
      %1068 = vmatprep.subr.mxu0 0.0
      %1069 = vmatpush1.msra.mxu0 0.0
      %1070 = vmatprep.subr.mxu0 0.0
      %1071 = vmatpush1.msra.mxu0 0.0
      %1072 = vmatprep.subr.mxu0 0.0
      %1073 = vmatpush1.msra.mxu0 0.0
      %1074 = vmatprep.subr.mxu0 0.0
      %1075 = vmatpush1.msra.mxu0 0.0
      %1076 = vmatprep.subr.mxu0 0.0
      %1077 = vmatpush1.msra.mxu0 0.0
      %1078 = vmatprep.subr.mxu0 0.0
      %1079 = vmatpush1.msra.mxu0 0.0
      %1080 = vmatprep.subr.mxu0 0.0
      %1081 = vmatpush1.msra.mxu0 0.0
      %1082 = vmatprep.subr.mxu0 0.0
      %1083 = vmatpush1.msra.mxu0 0.0
      %1084 = vmatprep.subr.mxu0 0.0
      %1085 = vmatpush1.msra.mxu0 0.0
      %1086 = vmatprep.subr.mxu0 0.0
      %1087 = vmatpush1.msra.mxu0 0.0
      %1088 = vmatprep.subr.mxu0 0.0
      %1089 = vmatpush1.msra.mxu0 0.0
      %1090 = vmatprep.subr.mxu0 0.0
      %1091 = vmatpush1.msra.mxu0 0.0
      %1092 = vmatprep.subr.mxu0 0.0
      %1093 = vmatpush1.msra.mxu0 0.0
      %1094 = vmatprep.subr.mxu0 0.0
      %1095 = vmatpush1.msra.mxu0 0.0
      %1096 = vmatprep.subr.mxu0 0.0
      %1097 = vmatpush1.msra.mxu0 0.0
      %1098 = vmatprep.subr.mxu0 0.0
      %1099 = vmatpush1.msra.mxu0 0.0
      %1100 = vmatprep.subr.mxu0 0.0
      %1101 = vmatpush1.msra.mxu0 0.0
      %1102 = vmatprep.subr.mxu0 0.0
      %1103 = vmatpush1.msra.mxu0 0.0
      %1104 = vmatprep.subr.mxu0 0.0
      %1105 = vmatpush1.msra.mxu0 0.0
      %1106 = vmatprep.subr.mxu0 0.0
      %1107 = vmatpush1.msra.mxu0 0.0
      %1108 = vmatprep.subr.mxu0 0.0
      %1109 = vmatpush1.msra.mxu0 0.0
      %1110 = vmatprep.subr.mxu0 0.0
      %1111 = vmatpush1.msra.mxu0 0.0
      %1112 = vmatprep.subr.mxu0 0.0
      %1113 = vmatpush1.msra.mxu0 0.0
      %1114 = vmatprep.mubr.f32.mxu0 0.0
      %1115 = vmatmul.mubr.f32.gmra.mrb[0].mxu0 %v1048
      %v1116 = vpop.f32.mrb[0].mxu0
      %v1117 = vadd.f32 0.0, %v1116
      %v1118 = vpop.f32.mrb[0].mxu0
      %1119 = vdwg.mxu0
      %v1121 = vsel %vm783, %v1117, 0
      %1123 = vmatprep.subr.mxu0 0.0
      %1124 = vmatpush1.msra.mxu0 %v696
      %1125 = vmatprep.subr.mxu0 0.0
      %1126 = vmatpush1.msra.mxu0 0.0
      %1127 = vmatprep.subr.mxu0 0.0
      %1128 = vmatpush1.msra.mxu0 0.0
      %1129 = vmatprep.subr.mxu0 0.0
      %1130 = vmatpush1.msra.mxu0 0.0
      %1131 = vmatprep.subr.mxu0 0.0
      %1132 = vmatpush1.msra.mxu0 0.0
      %1133 = vmatprep.subr.mxu0 0.0
      %1134 = vmatpush1.msra.mxu0 0.0
      %1135 = vmatprep.subr.mxu0 0.0
      %1136 = vmatpush1.msra.mxu0 0.0
      %1137 = vmatprep.subr.mxu0 0.0
      %1138 = vmatpush1.msra.mxu0 0.0
      %1139 = vmatprep.subr.mxu0 0.0
      %1140 = vmatpush1.msra.mxu0 0.0
      %1141 = vmatprep.subr.mxu0 0.0
      %1142 = vmatpush1.msra.mxu0 0.0
      %1143 = vmatprep.subr.mxu0 0.0
      %1144 = vmatpush1.msra.mxu0 0.0
      %1145 = vmatprep.subr.mxu0 0.0
      %1146 = vmatpush1.msra.mxu0 0.0
      %1147 = vmatprep.subr.mxu0 0.0
      %1148 = vmatpush1.msra.mxu0 0.0
      %1149 = vmatprep.subr.mxu0 0.0
      %1150 = vmatpush1.msra.mxu0 0.0
      %1151 = vmatprep.subr.mxu0 0.0
      %1152 = vmatpush1.msra.mxu0 0.0
      %1153 = vmatprep.subr.mxu0 0.0
      %1154 = vmatpush1.msra.mxu0 0.0
      %1155 = vmatprep.subr.mxu0 0.0
      %1156 = vmatpush1.msra.mxu0 0.0
      %1157 = vmatprep.subr.mxu0 0.0
      %1158 = vmatpush1.msra.mxu0 0.0
      %1159 = vmatprep.subr.mxu0 0.0
      %1160 = vmatpush1.msra.mxu0 0.0
      %1161 = vmatprep.subr.mxu0 0.0
      %1162 = vmatpush1.msra.mxu0 0.0
      %1163 = vmatprep.subr.mxu0 0.0
      %1164 = vmatpush1.msra.mxu0 0.0
      %1165 = vmatprep.subr.mxu0 0.0
      %1166 = vmatpush1.msra.mxu0 0.0
      %1167 = vmatprep.subr.mxu0 0.0
      %1168 = vmatpush1.msra.mxu0 0.0
      %1169 = vmatprep.subr.mxu0 0.0
      %1170 = vmatpush1.msra.mxu0 0.0
      %1171 = vmatprep.subr.mxu0 0.0
      %1172 = vmatpush1.msra.mxu0 0.0
      %1173 = vmatprep.subr.mxu0 0.0
      %1174 = vmatpush1.msra.mxu0 0.0
      %1175 = vmatprep.subr.mxu0 0.0
      %1176 = vmatpush1.msra.mxu0 0.0
      %1177 = vmatprep.subr.mxu0 0.0
      %1178 = vmatpush1.msra.mxu0 0.0
      %1179 = vmatprep.subr.mxu0 0.0
      %1180 = vmatpush1.msra.mxu0 0.0
      %1181 = vmatprep.subr.mxu0 0.0
      %1182 = vmatpush1.msra.mxu0 0.0
      %1183 = vmatprep.subr.mxu0 0.0
      %1184 = vmatpush1.msra.mxu0 0.0
      %1185 = vmatprep.subr.mxu0 0.0
      %1186 = vmatpush1.msra.mxu0 0.0
      %1187 = vmatprep.mubr.f32.mxu0 0.0
      %1188 = vmatmul.mubr.f32.gmra.mrb[0].mxu0 %v1121
      %v1189 = vpop.f32.mrb[0].mxu0
      %v1190 = vadd.f32 0.0, %v1189
      %v1191 = vpop.f32.mrb[0].mxu0
      %1192 = vdwg.mxu0
      %v1194 = vsel %vm783, %v950, 0
      %1196 = vmatprep.subr.mxu0 0.0
      %1197 = vmatpush1.msra.mxu0 %v695
      %1198 = vmatprep.subr.mxu0 0.0
      %1199 = vmatpush1.msra.mxu0 0.0
      %1200 = vmatprep.subr.mxu0 0.0
      %1201 = vmatpush1.msra.mxu0 0.0
      %1202 = vmatprep.subr.mxu0 0.0
      %1203 = vmatpush1.msra.mxu0 0.0
      %1204 = vmatprep.subr.mxu0 0.0
      %1205 = vmatpush1.msra.mxu0 0.0
      %1206 = vmatprep.subr.mxu0 0.0
      %1207 = vmatpush1.msra.mxu0 0.0
      %1208 = vmatprep.subr.mxu0 0.0
      %1209 = vmatpush1.msra.mxu0 0.0
      %1210 = vmatprep.subr.mxu0 0.0
      %1211 = vmatpush1.msra.mxu0 0.0
      %1212 = vmatprep.subr.mxu0 0.0
      %1213 = vmatpush1.msra.mxu0 0.0
      %1214 = vmatprep.subr.mxu0 0.0
      %1215 = vmatpush1.msra.mxu0 0.0
      %1216 = vmatprep.subr.mxu0 0.0
      %1217 = vmatpush1.msra.mxu0 0.0
      %1218 = vmatprep.subr.mxu0 0.0
      %1219 = vmatpush1.msra.mxu0 0.0
      %1220 = vmatprep.subr.mxu0 0.0
      %1221 = vmatpush1.msra.mxu0 0.0
      %1222 = vmatprep.subr.mxu0 0.0
      %1223 = vmatpush1.msra.mxu0 0.0
      %1224 = vmatprep.subr.mxu0 0.0
      %1225 = vmatpush1.msra.mxu0 0.0
      %1226 = vmatprep.subr.mxu0 0.0
      %1227 = vmatpush1.msra.mxu0 0.0
      %1228 = vmatprep.subr.mxu0 0.0
      %1229 = vmatpush1.msra.mxu0 0.0
      %1230 = vmatprep.subr.mxu0 0.0
      %1231 = vmatpush1.msra.mxu0 0.0
      %1232 = vmatprep.subr.mxu0 0.0
      %1233 = vmatpush1.msra.mxu0 0.0
      %1234 = vmatprep.subr.mxu0 0.0
      %1235 = vmatpush1.msra.mxu0 0.0
      %1236 = vmatprep.subr.mxu0 0.0
      %1237 = vmatpush1.msra.mxu0 0.0
      %1238 = vmatprep.subr.mxu0 0.0
      %1239 = vmatpush1.msra.mxu0 0.0
      %1240 = vmatprep.subr.mxu0 0.0
      %1241 = vmatpush1.msra.mxu0 0.0
      %1242 = vmatprep.subr.mxu0 0.0
      %1243 = vmatpush1.msra.mxu0 0.0
      %1244 = vmatprep.subr.mxu0 0.0
      %1245 = vmatpush1.msra.mxu0 0.0
      %1246 = vmatprep.subr.mxu0 0.0
      %1247 = vmatpush1.msra.mxu0 0.0
      %1248 = vmatprep.subr.mxu0 0.0
      %1249 = vmatpush1.msra.mxu0 0.0
      %1250 = vmatprep.subr.mxu0 0.0
      %1251 = vmatpush1.msra.mxu0 0.0
      %1252 = vmatprep.subr.mxu0 0.0
      %1253 = vmatpush1.msra.mxu0 0.0
      %1254 = vmatprep.subr.mxu0 0.0
      %1255 = vmatpush1.msra.mxu0 0.0
      %1256 = vmatprep.subr.mxu0 0.0
      %1257 = vmatpush1.msra.mxu0 0.0
      %1258 = vmatprep.subr.mxu0 0.0
      %1259 = vmatpush1.msra.mxu0 0.0
      %1260 = vmatprep.mubr.f32.mxu0 0.0
      %1261 = vmatmul.mubr.f32.gmra.mrb[0].mxu0 %v1194
      %v1262 = vpop.f32.mrb[0].mxu0
      %v1263 = vadd.f32 %v1190, %v1262
      %v1264 = vpop.f32.mrb[0].mxu0
      %1265 = vdwg.mxu0
      %1266 = vrot.lane.b32.xlu0 %v777, 112
      %v1267 = vpop.permute.xlu0 %1266
      %1268 = vrot.lane.b32.xlu0 %v777, 80
      %v1269 = vpop.permute.xlu0 %1268
      %v1270 = vsel %vm783, %v1267, 0
      %v1272 = vsel %vm783, %v1269, 0
      %1274 = vmatprep.subr.mxu0 0.0
      %1275 = vmatpush1.xpose.msra.mxu0 %v1272
      %1276 = vmatprep.subr.mxu0 0.0
      %1277 = vmatpush1.xpose.msra.mxu0 0.0
      %1278 = vmatprep.subr.mxu0 0.0
      %1279 = vmatpush1.xpose.msra.mxu0 0.0
      %1280 = vmatprep.subr.mxu0 0.0
      %1281 = vmatpush1.xpose.msra.mxu0 0.0
      %1282 = vmatprep.subr.mxu0 0.0
      %1283 = vmatpush1.xpose.msra.mxu0 0.0
      %1284 = vmatprep.subr.mxu0 0.0
      %1285 = vmatpush1.xpose.msra.mxu0 0.0
      %1286 = vmatprep.subr.mxu0 0.0
      %1287 = vmatpush1.xpose.msra.mxu0 0.0
      %1288 = vmatprep.subr.mxu0 0.0
      %1289 = vmatpush1.xpose.msra.mxu0 0.0
      %1290 = vmatprep.subr.mxu0 0.0
      %1291 = vmatpush1.xpose.msra.mxu0 0.0
      %1292 = vmatprep.subr.mxu0 0.0
      %1293 = vmatpush1.xpose.msra.mxu0 0.0
      %1294 = vmatprep.subr.mxu0 0.0
      %1295 = vmatpush1.xpose.msra.mxu0 0.0
      %1296 = vmatprep.subr.mxu0 0.0
      %1297 = vmatpush1.xpose.msra.mxu0 0.0
      %1298 = vmatprep.subr.mxu0 0.0
      %1299 = vmatpush1.xpose.msra.mxu0 0.0
      %1300 = vmatprep.subr.mxu0 0.0
      %1301 = vmatpush1.xpose.msra.mxu0 0.0
      %1302 = vmatprep.subr.mxu0 0.0
      %1303 = vmatpush1.xpose.msra.mxu0 0.0
      %1304 = vmatprep.subr.mxu0 0.0
      %1305 = vmatpush1.xpose.msra.mxu0 0.0
      %1306 = vmatprep.subr.mxu0 0.0
      %1307 = vmatpush1.xpose.msra.mxu0 0.0
      %1308 = vmatprep.subr.mxu0 0.0
      %1309 = vmatpush1.xpose.msra.mxu0 0.0
      %1310 = vmatprep.subr.mxu0 0.0
      %1311 = vmatpush1.xpose.msra.mxu0 0.0
      %1312 = vmatprep.subr.mxu0 0.0
      %1313 = vmatpush1.xpose.msra.mxu0 0.0
      %1314 = vmatprep.subr.mxu0 0.0
      %1315 = vmatpush1.xpose.msra.mxu0 0.0
      %1316 = vmatprep.subr.mxu0 0.0
      %1317 = vmatpush1.xpose.msra.mxu0 0.0
      %1318 = vmatprep.subr.mxu0 0.0
      %1319 = vmatpush1.xpose.msra.mxu0 0.0
      %1320 = vmatprep.subr.mxu0 0.0
      %1321 = vmatpush1.xpose.msra.mxu0 0.0
      %1322 = vmatprep.subr.mxu0 0.0
      %1323 = vmatpush1.xpose.msra.mxu0 0.0
      %1324 = vmatprep.subr.mxu0 0.0
      %1325 = vmatpush1.xpose.msra.mxu0 0.0
      %1326 = vmatprep.subr.mxu0 0.0
      %1327 = vmatpush1.xpose.msra.mxu0 0.0
      %1328 = vmatprep.subr.mxu0 0.0
      %1329 = vmatpush1.xpose.msra.mxu0 0.0
      %1330 = vmatprep.subr.mxu0 0.0
      %1331 = vmatpush1.xpose.msra.mxu0 0.0
      %1332 = vmatprep.subr.mxu0 0.0
      %1333 = vmatpush1.xpose.msra.mxu0 0.0
      %1334 = vmatprep.subr.mxu0 0.0
      %1335 = vmatpush1.xpose.msra.mxu0 0.0
      %1336 = vmatprep.subr.mxu0 0.0
      %1337 = vmatpush1.xpose.msra.mxu0 0.0
      %1338 = vmatprep.mubr.f32.mxu0 0.0
      %1339 = vmatmul.mubr.f32.gmra.mrb[0].mxu0 %v1270
      %v1340 = vpop.f32.mrb[0].mxu0
      %v1341 = vadd.f32 0.0, %v1340
      %v1342 = vpop.f32.mrb[0].mxu0
      %1343 = vdwg.mxu0
      %v1344 = vmul.f32 %v1341, 0.35355338
      %v1345 = vadd.f32 %v1344, %v863
      %v1346 = vsel %vm783, %v1345, -inf
      %1347 = vmax.xlane.f32.xlu0 %v1346
      %v1348 = vpop.xlane.xlu0 %1347
      %v1349 = vsub.f32 %v1345, %v1348
      %v1350 = vmul.f32 %v1349, 1.442695
      %v1351 = vpow.pop %v1350
      %v1352 = vsel %vm783, %v1351, 0.0
      %1353 = vadd.xlane.f32.xlu0 %v1352
      %v1354 = vpop.xlane.xlu0 %1353
      %v1355 = vrcp.pop %v1354
      %v1356 = vmul.f32 %v1351, %v1355
      %1357 = vrot.lane.b32.xlu0 %v777, 48
      %v1358 = vpop.permute.xlu0 %1357
      %v1361 = vsel %vm783, %v1356, 0
      %1363 = vmatprep.subr.mxu0 0.0
      %1364 = vmatpush1.msra.mxu0 %v1358
      %1365 = vmatprep.subr.mxu0 0.0
      %1366 = vmatpush1.msra.mxu0 0.0
      %1367 = vmatprep.subr.mxu0 0.0
      %1368 = vmatpush1.msra.mxu0 0.0
      %1369 = vmatprep.subr.mxu0 0.0
      %1370 = vmatpush1.msra.mxu0 0.0
      %1371 = vmatprep.subr.mxu0 0.0
      %1372 = vmatpush1.msra.mxu0 0.0
      %1373 = vmatprep.subr.mxu0 0.0
      %1374 = vmatpush1.msra.mxu0 0.0
      %1375 = vmatprep.subr.mxu0 0.0
      %1376 = vmatpush1.msra.mxu0 0.0
      %1377 = vmatprep.subr.mxu0 0.0
      %1378 = vmatpush1.msra.mxu0 0.0
      %1379 = vmatprep.subr.mxu0 0.0
      %1380 = vmatpush1.msra.mxu0 0.0
      %1381 = vmatprep.subr.mxu0 0.0
      %1382 = vmatpush1.msra.mxu0 0.0
      %1383 = vmatprep.subr.mxu0 0.0
      %1384 = vmatpush1.msra.mxu0 0.0
      %1385 = vmatprep.subr.mxu0 0.0
      %1386 = vmatpush1.msra.mxu0 0.0
      %1387 = vmatprep.subr.mxu0 0.0
      %1388 = vmatpush1.msra.mxu0 0.0
      %1389 = vmatprep.subr.mxu0 0.0
      %1390 = vmatpush1.msra.mxu0 0.0
      %1391 = vmatprep.subr.mxu0 0.0
      %1392 = vmatpush1.msra.mxu0 0.0
      %1393 = vmatprep.subr.mxu0 0.0
      %1394 = vmatpush1.msra.mxu0 0.0
      %1395 = vmatprep.subr.mxu0 0.0
      %1396 = vmatpush1.msra.mxu0 0.0
      %1397 = vmatprep.subr.mxu0 0.0
      %1398 = vmatpush1.msra.mxu0 0.0
      %1399 = vmatprep.subr.mxu0 0.0
      %1400 = vmatpush1.msra.mxu0 0.0
      %1401 = vmatprep.subr.mxu0 0.0
      %1402 = vmatpush1.msra.mxu0 0.0
      %1403 = vmatprep.subr.mxu0 0.0
      %1404 = vmatpush1.msra.mxu0 0.0
      %1405 = vmatprep.subr.mxu0 0.0
      %1406 = vmatpush1.msra.mxu0 0.0
      %1407 = vmatprep.subr.mxu0 0.0
      %1408 = vmatpush1.msra.mxu0 0.0
      %1409 = vmatprep.subr.mxu0 0.0
      %1410 = vmatpush1.msra.mxu0 0.0
      %1411 = vmatprep.subr.mxu0 0.0
      %1412 = vmatpush1.msra.mxu0 0.0
      %1413 = vmatprep.subr.mxu0 0.0
      %1414 = vmatpush1.msra.mxu0 0.0
      %1415 = vmatprep.subr.mxu0 0.0
      %1416 = vmatpush1.msra.mxu0 0.0
      %1417 = vmatprep.subr.mxu0 0.0
      %1418 = vmatpush1.msra.mxu0 0.0
      %1419 = vmatprep.subr.mxu0 0.0
      %1420 = vmatpush1.msra.mxu0 0.0
      %1421 = vmatprep.subr.mxu0 0.0
      %1422 = vmatpush1.msra.mxu0 0.0
      %1423 = vmatprep.subr.mxu0 0.0
      %1424 = vmatpush1.msra.mxu0 0.0
      %1425 = vmatprep.subr.mxu0 0.0
      %1426 = vmatpush1.msra.mxu0 0.0
      %1427 = vmatprep.mubr.f32.mxu0 0.0
      %1428 = vmatmul.mubr.f32.gmra.mrb[0].mxu0 %v1361
      %v1429 = vpop.f32.mrb[0].mxu0
      %v1430 = vadd.f32 0.0, %v1429
      %v1431 = vpop.f32.mrb[0].mxu0
      %1432 = vdwg.mxu0
      %v1434 = vsel %vm783, %v1430, 0
      %1436 = vmatprep.subr.mxu0 0.0
      %1437 = vmatpush1.msra.mxu0 %v697
      %1438 = vmatprep.subr.mxu0 0.0
      %1439 = vmatpush1.msra.mxu0 0.0
      %1440 = vmatprep.subr.mxu0 0.0
      %1441 = vmatpush1.msra.mxu0 0.0
      %1442 = vmatprep.subr.mxu0 0.0
      %1443 = vmatpush1.msra.mxu0 0.0
      %1444 = vmatprep.subr.mxu0 0.0
      %1445 = vmatpush1.msra.mxu0 0.0
      %1446 = vmatprep.subr.mxu0 0.0
      %1447 = vmatpush1.msra.mxu0 0.0
      %1448 = vmatprep.subr.mxu0 0.0
      %1449 = vmatpush1.msra.mxu0 0.0
      %1450 = vmatprep.subr.mxu0 0.0
      %1451 = vmatpush1.msra.mxu0 0.0
      %1452 = vmatprep.subr.mxu0 0.0
      %1453 = vmatpush1.msra.mxu0 0.0
      %1454 = vmatprep.subr.mxu0 0.0
      %1455 = vmatpush1.msra.mxu0 0.0
      %1456 = vmatprep.subr.mxu0 0.0
      %1457 = vmatpush1.msra.mxu0 0.0
      %1458 = vmatprep.subr.mxu0 0.0
      %1459 = vmatpush1.msra.mxu0 0.0
      %1460 = vmatprep.subr.mxu0 0.0
      %1461 = vmatpush1.msra.mxu0 0.0
      %1462 = vmatprep.subr.mxu0 0.0
      %1463 = vmatpush1.msra.mxu0 0.0
      %1464 = vmatprep.subr.mxu0 0.0
      %1465 = vmatpush1.msra.mxu0 0.0
      %1466 = vmatprep.subr.mxu0 0.0
      %1467 = vmatpush1.msra.mxu0 0.0
      %1468 = vmatprep.subr.mxu0 0.0
      %1469 = vmatpush1.msra.mxu0 0.0
      %1470 = vmatprep.subr.mxu0 0.0
      %1471 = vmatpush1.msra.mxu0 0.0
      %1472 = vmatprep.subr.mxu0 0.0
      %1473 = vmatpush1.msra.mxu0 0.0
      %1474 = vmatprep.subr.mxu0 0.0
      %1475 = vmatpush1.msra.mxu0 0.0
      %1476 = vmatprep.subr.mxu0 0.0
      %1477 = vmatpush1.msra.mxu0 0.0
      %1478 = vmatprep.subr.mxu0 0.0
      %1479 = vmatpush1.msra.mxu0 0.0
      %1480 = vmatprep.subr.mxu0 0.0
      %1481 = vmatpush1.msra.mxu0 0.0
      %1482 = vmatprep.subr.mxu0 0.0
      %1483 = vmatpush1.msra.mxu0 0.0
      %1484 = vmatprep.subr.mxu0 0.0
      %1485 = vmatpush1.msra.mxu0 0.0
      %1486 = vmatprep.subr.mxu0 0.0
      %1487 = vmatpush1.msra.mxu0 0.0
      %1488 = vmatprep.subr.mxu0 0.0
      %1489 = vmatpush1.msra.mxu0 0.0
      %1490 = vmatprep.subr.mxu0 0.0
      %1491 = vmatpush1.msra.mxu0 0.0
      %1492 = vmatprep.subr.mxu0 0.0
      %1493 = vmatpush1.msra.mxu0 0.0
      %1494 = vmatprep.subr.mxu0 0.0
      %1495 = vmatpush1.msra.mxu0 0.0
      %1496 = vmatprep.subr.mxu0 0.0
      %1497 = vmatpush1.msra.mxu0 0.0
      %1498 = vmatprep.subr.mxu0 0.0
      %1499 = vmatpush1.msra.mxu0 0.0
      %1500 = vmatprep.mubr.f32.mxu0 0.0
      %1501 = vmatmul.mubr.f32.gmra.mrb[0].mxu0 %v1434
      %v1502 = vpop.f32.mrb[0].mxu0
      %v1503 = vadd.f32 0.0, %v1502
      %v1504 = vpop.f32.mrb[0].mxu0
      %1505 = vdwg.mxu0
      %v1506 = vadd.f32 %v1263, %v1503
      %1507 = vrot.lane.b32.xlu0 %v777, 104
      %v1508 = vpop.permute.xlu0 %1507
      %1509 = vrot.lane.b32.xlu0 %v777, 72
      %v1510 = vpop.permute.xlu0 %1509
      %v1511 = vsel %vm783, %v1508, 0
      %v1513 = vsel %vm783, %v1510, 0
      %1515 = vmatprep.subr.mxu0 0.0
      %1516 = vmatpush1.xpose.msra.mxu0 %v1513
      %1517 = vmatprep.subr.mxu0 0.0
      %1518 = vmatpush1.xpose.msra.mxu0 0.0
      %1519 = vmatprep.subr.mxu0 0.0
      %1520 = vmatpush1.xpose.msra.mxu0 0.0
      %1521 = vmatprep.subr.mxu0 0.0
      %1522 = vmatpush1.xpose.msra.mxu0 0.0
      %1523 = vmatprep.subr.mxu0 0.0
      %1524 = vmatpush1.xpose.msra.mxu0 0.0
      %1525 = vmatprep.subr.mxu0 0.0
      %1526 = vmatpush1.xpose.msra.mxu0 0.0
      %1527 = vmatprep.subr.mxu0 0.0
      %1528 = vmatpush1.xpose.msra.mxu0 0.0
      %1529 = vmatprep.subr.mxu0 0.0
      %1530 = vmatpush1.xpose.msra.mxu0 0.0
      %1531 = vmatprep.subr.mxu0 0.0
      %1532 = vmatpush1.xpose.msra.mxu0 0.0
      %1533 = vmatprep.subr.mxu0 0.0
      %1534 = vmatpush1.xpose.msra.mxu0 0.0
      %1535 = vmatprep.subr.mxu0 0.0
      %1536 = vmatpush1.xpose.msra.mxu0 0.0
      %1537 = vmatprep.subr.mxu0 0.0
      %1538 = vmatpush1.xpose.msra.mxu0 0.0
      %1539 = vmatprep.subr.mxu0 0.0
      %1540 = vmatpush1.xpose.msra.mxu0 0.0
      %1541 = vmatprep.subr.mxu0 0.0
      %1542 = vmatpush1.xpose.msra.mxu0 0.0
      %1543 = vmatprep.subr.mxu0 0.0
      %1544 = vmatpush1.xpose.msra.mxu0 0.0
      %1545 = vmatprep.subr.mxu0 0.0
      %1546 = vmatpush1.xpose.msra.mxu0 0.0
      %1547 = vmatprep.subr.mxu0 0.0
      %1548 = vmatpush1.xpose.msra.mxu0 0.0
      %1549 = vmatprep.subr.mxu0 0.0
      %1550 = vmatpush1.xpose.msra.mxu0 0.0
      %1551 = vmatprep.subr.mxu0 0.0
      %1552 = vmatpush1.xpose.msra.mxu0 0.0
      %1553 = vmatprep.subr.mxu0 0.0
      %1554 = vmatpush1.xpose.msra.mxu0 0.0
      %1555 = vmatprep.subr.mxu0 0.0
      %1556 = vmatpush1.xpose.msra.mxu0 0.0
      %1557 = vmatprep.subr.mxu0 0.0
      %1558 = vmatpush1.xpose.msra.mxu0 0.0
      %1559 = vmatprep.subr.mxu0 0.0
      %1560 = vmatpush1.xpose.msra.mxu0 0.0
      %1561 = vmatprep.subr.mxu0 0.0
      %1562 = vmatpush1.xpose.msra.mxu0 0.0
      %1563 = vmatprep.subr.mxu0 0.0
      %1564 = vmatpush1.xpose.msra.mxu0 0.0
      %1565 = vmatprep.subr.mxu0 0.0
      %1566 = vmatpush1.xpose.msra.mxu0 0.0
      %1567 = vmatprep.subr.mxu0 0.0
      %1568 = vmatpush1.xpose.msra.mxu0 0.0
      %1569 = vmatprep.subr.mxu0 0.0
      %1570 = vmatpush1.xpose.msra.mxu0 0.0
      %1571 = vmatprep.subr.mxu0 0.0
      %1572 = vmatpush1.xpose.msra.mxu0 0.0
      %1573 = vmatprep.subr.mxu0 0.0
      %1574 = vmatpush1.xpose.msra.mxu0 0.0
      %1575 = vmatprep.subr.mxu0 0.0
      %1576 = vmatpush1.xpose.msra.mxu0 0.0
      %1577 = vmatprep.subr.mxu0 0.0
      %1578 = vmatpush1.xpose.msra.mxu0 0.0
      %1579 = vmatprep.mubr.f32.mxu0 0.0
      %1580 = vmatmul.mubr.f32.gmra.mrb[0].mxu0 %v1511
      %v1581 = vpop.f32.mrb[0].mxu0
      %v1582 = vadd.f32 0.0, %v1581
      %v1583 = vpop.f32.mrb[0].mxu0
      %1584 = vdwg.mxu0
      %v1585 = vmul.f32 %v1582, 0.35355338
      %v1586 = vadd.f32 %v1585, %v863
      %v1587 = vsel %vm783, %v1586, -inf
      %1588 = vmax.xlane.f32.xlu0 %v1587
      %v1589 = vpop.xlane.xlu0 %1588
      %v1590 = vsub.f32 %v1586, %v1589
      %v1591 = vmul.f32 %v1590, 1.442695
      %v1592 = vpow.pop %v1591
      %v1593 = vsel %vm783, %v1592, 0.0
      %1594 = vadd.xlane.f32.xlu0 %v1593
      %v1595 = vpop.xlane.xlu0 %1594
      %v1596 = vrcp.pop %v1595
      %v1597 = vmul.f32 %v1592, %v1596
      %1598 = vrot.lane.b32.xlu0 %v777, 40
      %v1599 = vpop.permute.xlu0 %1598
      %v1602 = vsel %vm783, %v1597, 0
      %1604 = vmatprep.subr.mxu0 0.0
      %1605 = vmatpush1.msra.mxu0 %v1599
      %1606 = vmatprep.subr.mxu0 0.0
      %1607 = vmatpush1.msra.mxu0 0.0
      %1608 = vmatprep.subr.mxu0 0.0
      %1609 = vmatpush1.msra.mxu0 0.0
      %1610 = vmatprep.subr.mxu0 0.0
      %1611 = vmatpush1.msra.mxu0 0.0
      %1612 = vmatprep.subr.mxu0 0.0
      %1613 = vmatpush1.msra.mxu0 0.0
      %1614 = vmatprep.subr.mxu0 0.0
      %1615 = vmatpush1.msra.mxu0 0.0
      %1616 = vmatprep.subr.mxu0 0.0
      %1617 = vmatpush1.msra.mxu0 0.0
      %1618 = vmatprep.subr.mxu0 0.0
      %1619 = vmatpush1.msra.mxu0 0.0
      %1620 = vmatprep.subr.mxu0 0.0
      %1621 = vmatpush1.msra.mxu0 0.0
      %1622 = vmatprep.subr.mxu0 0.0
      %1623 = vmatpush1.msra.mxu0 0.0
      %1624 = vmatprep.subr.mxu0 0.0
      %1625 = vmatpush1.msra.mxu0 0.0
      %1626 = vmatprep.subr.mxu0 0.0
      %1627 = vmatpush1.msra.mxu0 0.0
      %1628 = vmatprep.subr.mxu0 0.0
      %1629 = vmatpush1.msra.mxu0 0.0
      %1630 = vmatprep.subr.mxu0 0.0
      %1631 = vmatpush1.msra.mxu0 0.0
      %1632 = vmatprep.subr.mxu0 0.0
      %1633 = vmatpush1.msra.mxu0 0.0
      %1634 = vmatprep.subr.mxu0 0.0
      %1635 = vmatpush1.msra.mxu0 0.0
      %1636 = vmatprep.subr.mxu0 0.0
      %1637 = vmatpush1.msra.mxu0 0.0
      %1638 = vmatprep.subr.mxu0 0.0
      %1639 = vmatpush1.msra.mxu0 0.0
      %1640 = vmatprep.subr.mxu0 0.0
      %1641 = vmatpush1.msra.mxu0 0.0
      %1642 = vmatprep.subr.mxu0 0.0
      %1643 = vmatpush1.msra.mxu0 0.0
      %1644 = vmatprep.subr.mxu0 0.0
      %1645 = vmatpush1.msra.mxu0 0.0
      %1646 = vmatprep.subr.mxu0 0.0
      %1647 = vmatpush1.msra.mxu0 0.0
      %1648 = vmatprep.subr.mxu0 0.0
      %1649 = vmatpush1.msra.mxu0 0.0
      %1650 = vmatprep.subr.mxu0 0.0
      %1651 = vmatpush1.msra.mxu0 0.0
      %1652 = vmatprep.subr.mxu0 0.0
      %1653 = vmatpush1.msra.mxu0 0.0
      %1654 = vmatprep.subr.mxu0 0.0
      %1655 = vmatpush1.msra.mxu0 0.0
      %1656 = vmatprep.subr.mxu0 0.0
      %1657 = vmatpush1.msra.mxu0 0.0
      %1658 = vmatprep.subr.mxu0 0.0
      %1659 = vmatpush1.msra.mxu0 0.0
      %1660 = vmatprep.subr.mxu0 0.0
      %1661 = vmatpush1.msra.mxu0 0.0
      %1662 = vmatprep.subr.mxu0 0.0
      %1663 = vmatpush1.msra.mxu0 0.0
      %1664 = vmatprep.subr.mxu0 0.0
      %1665 = vmatpush1.msra.mxu0 0.0
      %1666 = vmatprep.subr.mxu0 0.0
      %1667 = vmatpush1.msra.mxu0 0.0
      %1668 = vmatprep.mubr.f32.mxu0 0.0
      %1669 = vmatmul.mubr.f32.gmra.mrb[0].mxu0 %v1602
      %v1670 = vpop.f32.mrb[0].mxu0
      %v1671 = vadd.f32 0.0, %v1670
      %v1672 = vpop.f32.mrb[0].mxu0
      %1673 = vdwg.mxu0
      %v1675 = vsel %vm783, %v1671, 0
      %1677 = vmatprep.subr.mxu0 0.0
      %1678 = vmatpush1.msra.mxu0 %v698
      %1679 = vmatprep.subr.mxu0 0.0
      %1680 = vmatpush1.msra.mxu0 0.0
      %1681 = vmatprep.subr.mxu0 0.0
      %1682 = vmatpush1.msra.mxu0 0.0
      %1683 = vmatprep.subr.mxu0 0.0
      %1684 = vmatpush1.msra.mxu0 0.0
      %1685 = vmatprep.subr.mxu0 0.0
      %1686 = vmatpush1.msra.mxu0 0.0
      %1687 = vmatprep.subr.mxu0 0.0
      %1688 = vmatpush1.msra.mxu0 0.0
      %1689 = vmatprep.subr.mxu0 0.0
      %1690 = vmatpush1.msra.mxu0 0.0
      %1691 = vmatprep.subr.mxu0 0.0
      %1692 = vmatpush1.msra.mxu0 0.0
      %1693 = vmatprep.subr.mxu0 0.0
      %1694 = vmatpush1.msra.mxu0 0.0
      %1695 = vmatprep.subr.mxu0 0.0
      %1696 = vmatpush1.msra.mxu0 0.0
      %1697 = vmatprep.subr.mxu0 0.0
      %1698 = vmatpush1.msra.mxu0 0.0
      %1699 = vmatprep.subr.mxu0 0.0
      %1700 = vmatpush1.msra.mxu0 0.0
      %1701 = vmatprep.subr.mxu0 0.0
      %1702 = vmatpush1.msra.mxu0 0.0
      %1703 = vmatprep.subr.mxu0 0.0
      %1704 = vmatpush1.msra.mxu0 0.0
      %1705 = vmatprep.subr.mxu0 0.0
      %1706 = vmatpush1.msra.mxu0 0.0
      %1707 = vmatprep.subr.mxu0 0.0
      %1708 = vmatpush1.msra.mxu0 0.0
      %1709 = vmatprep.subr.mxu0 0.0
      %1710 = vmatpush1.msra.mxu0 0.0
      %1711 = vmatprep.subr.mxu0 0.0
      %1712 = vmatpush1.msra.mxu0 0.0
      %1713 = vmatprep.subr.mxu0 0.0
      %1714 = vmatpush1.msra.mxu0 0.0
      %1715 = vmatprep.subr.mxu0 0.0
      %1716 = vmatpush1.msra.mxu0 0.0
      %1717 = vmatprep.subr.mxu0 0.0
      %1718 = vmatpush1.msra.mxu0 0.0
      %1719 = vmatprep.subr.mxu0 0.0
      %1720 = vmatpush1.msra.mxu0 0.0
      %1721 = vmatprep.subr.mxu0 0.0
      %1722 = vmatpush1.msra.mxu0 0.0
      %1723 = vmatprep.subr.mxu0 0.0
      %1724 = vmatpush1.msra.mxu0 0.0
      %1725 = vmatprep.subr.mxu0 0.0
      %1726 = vmatpush1.msra.mxu0 0.0
      %1727 = vmatprep.subr.mxu0 0.0
      %1728 = vmatpush1.msra.mxu0 0.0
      %1729 = vmatprep.subr.mxu0 0.0
      %1730 = vmatpush1.msra.mxu0 0.0
      %1731 = vmatprep.subr.mxu0 0.0
      %1732 = vmatpush1.msra.mxu0 0.0
      %1733 = vmatprep.subr.mxu0 0.0
      %1734 = vmatpush1.msra.mxu0 0.0
      %1735 = vmatprep.subr.mxu0 0.0
      %1736 = vmatpush1.msra.mxu0 0.0
      %1737 = vmatprep.subr.mxu0 0.0
      %1738 = vmatpush1.msra.mxu0 0.0
      %1739 = vmatprep.subr.mxu0 0.0
      %1740 = vmatpush1.msra.mxu0 0.0
      %1741 = vmatprep.mubr.f32.mxu0 0.0
      %1742 = vmatmul.mubr.f32.gmra.mrb[0].mxu0 %v1675
      %v1743 = vpop.f32.mrb[0].mxu0
      %v1744 = vadd.f32 0.0, %v1743
      %v1745 = vpop.f32.mrb[0].mxu0
      %1746 = vdwg.mxu0
      %v1747 = vadd.f32 %v1506, %v1744
      %v1749 = vlaneseq
      %v1750 = vshrl.u32 %v1749, 7
      %v1751 = vsub.s32 0, %v1750
      %v1752 = vrot.slane %v699, %v1751
      %v1754 = vadd.f32 %v1747, %v1752
      %v1755 = vadd.f32 %v688, %v1754
      %v1756 = vld [vmem:[%s651] sm:$0x1]
      %v1757 = vld [vmem:[%s654] sm:$0x1]
      %v1758 = vsel %vm706, %v1755, 0.0
      %1759 = vadd.xlane.f32.xlu0 %v1758
      %v1760 = vpop.xlane.xlu0 %1759
      %v1761 = vrcp.pop 32.0
      %v1762 = vmul.f32 %v1760, %v1761
      %v1763 = vsub.f32 %v1755, %v1762
      %v1764 = vmul.f32 %v1763, %v1763
      %v1765 = vsel %vm706, %v1764, 0.0
      %1766 = vadd.xlane.f32.xlu0 %v1765
      %v1767 = vpop.xlane.xlu0 %1766
      %v1768 = vmul.f32 %v1767, %v1761
      %v1769 = vadd.f32 %v1768, 1e-05
      %v1770 = vrsqrt.pop %v1769
      %v1771 = vmul.f32 %v1763, %v1770
      %v1773 = vlaneseq
      %v1774 = vshrl.u32 %v1773, 7
      %v1775 = vsub.s32 0, %v1774
      %v1776 = vrot.slane %v1756, %v1775
      %v1778 = vmul.f32 %v1771, %v1776
      %v1780 = vlaneseq
      %v1781 = vshrl.u32 %v1780, 7
      %v1782 = vsub.s32 0, %v1781
      %v1783 = vrot.slane %v1757, %v1782
      %v1785 = vadd.f32 %v1778, %v1783
      %v1786 = vld [vmem:[%s659] sm:$0xff]
      %v1787 = vld [vmem:[%s659 + $0x8] sm:$0xff]
      %v1788 = vld [vmem:[%s659 + $0x10] sm:$0xff]
      %v1789 = vld [vmem:[%s659 + $0x18] sm:$0xff]
      %v1790 = vld [vmem:[%s662] sm:$0x1]
      %v1791 = vld [vmem:[%s667] sm:$0xff]
      %v1792 = vld [vmem:[%s667 + $0x8] sm:$0xff]
      %v1793 = vld [vmem:[%s667 + $0x10] sm:$0xff]
      %v1794 = vld [vmem:[%s667 + $0x18] sm:$0xff]
      %v1795 = vld [vmem:[%s667 + $0x20] sm:$0xff]
      %v1796 = vld [vmem:[%s667 + $0x28] sm:$0xff]
      %v1797 = vld [vmem:[%s667 + $0x30] sm:$0xff]
      %v1798 = vld [vmem:[%s667 + $0x38] sm:$0xff]
      %v1799 = vld [vmem:[%s670] sm:$0x1]
      %v1801 = vlaneseq
      %v1802 = vshrl.u32 %v1801, 7
      %v1803 = vsub.s32 0, %v1802
      %v1804 = vrot.slane %v1790, %v1803
      %v1807 = vsel %vm706, %v1785, 0
      %1809 = vmatprep.subr.mxu0 0.0
      %1810 = vmatpush1.msra.mxu0 %v1786
      %1811 = vmatprep.subr.mxu0 0.0
      %1812 = vmatpush1.msra.mxu0 %v1787
      %1813 = vmatprep.subr.mxu0 0.0
      %1814 = vmatpush1.msra.mxu0 %v1788
      %1815 = vmatprep.subr.mxu0 0.0
      %1816 = vmatpush1.msra.mxu0 %v1789
      %1817 = vmatprep.subr.mxu0 0.0
      %1818 = vmatpush1.msra.mxu0 0.0
      %1819 = vmatprep.subr.mxu0 0.0
      %1820 = vmatpush1.msra.mxu0 0.0
      %1821 = vmatprep.subr.mxu0 0.0
      %1822 = vmatpush1.msra.mxu0 0.0
      %1823 = vmatprep.subr.mxu0 0.0
      %1824 = vmatpush1.msra.mxu0 0.0
      %1825 = vmatprep.subr.mxu0 0.0
      %1826 = vmatpush1.msra.mxu0 0.0
      %1827 = vmatprep.subr.mxu0 0.0
      %1828 = vmatpush1.msra.mxu0 0.0
      %1829 = vmatprep.subr.mxu0 0.0
      %1830 = vmatpush1.msra.mxu0 0.0
      %1831 = vmatprep.subr.mxu0 0.0
      %1832 = vmatpush1.msra.mxu0 0.0
      %1833 = vmatprep.subr.mxu0 0.0
      %1834 = vmatpush1.msra.mxu0 0.0
      %1835 = vmatprep.subr.mxu0 0.0
      %1836 = vmatpush1.msra.mxu0 0.0
      %1837 = vmatprep.subr.mxu0 0.0
      %1838 = vmatpush1.msra.mxu0 0.0
      %1839 = vmatprep.subr.mxu0 0.0
      %1840 = vmatpush1.msra.mxu0 0.0
      %1841 = vmatprep.subr.mxu0 0.0
      %1842 = vmatpush1.msra.mxu0 0.0
      %1843 = vmatprep.subr.mxu0 0.0
      %1844 = vmatpush1.msra.mxu0 0.0
      %1845 = vmatprep.subr.mxu0 0.0
      %1846 = vmatpush1.msra.mxu0 0.0
      %1847 = vmatprep.subr.mxu0 0.0
      %1848 = vmatpush1.msra.mxu0 0.0
      %1849 = vmatprep.subr.mxu0 0.0
      %1850 = vmatpush1.msra.mxu0 0.0
      %1851 = vmatprep.subr.mxu0 0.0
      %1852 = vmatpush1.msra.mxu0 0.0
      %1853 = vmatprep.subr.mxu0 0.0
      %1854 = vmatpush1.msra.mxu0 0.0
      %1855 = vmatprep.subr.mxu0 0.0
      %1856 = vmatpush1.msra.mxu0 0.0
      %1857 = vmatprep.subr.mxu0 0.0
      %1858 = vmatpush1.msra.mxu0 0.0
      %1859 = vmatprep.subr.mxu0 0.0
      %1860 = vmatpush1.msra.mxu0 0.0
      %1861 = vmatprep.subr.mxu0 0.0
      %1862 = vmatpush1.msra.mxu0 0.0
      %1863 = vmatprep.subr.mxu0 0.0
      %1864 = vmatpush1.msra.mxu0 0.0
      %1865 = vmatprep.subr.mxu0 0.0
      %1866 = vmatpush1.msra.mxu0 0.0
      %1867 = vmatprep.subr.mxu0 0.0
      %1868 = vmatpush1.msra.mxu0 0.0
      %1869 = vmatprep.subr.mxu0 0.0
      %1870 = vmatpush1.msra.mxu0 0.0
      %1871 = vmatprep.subr.mxu0 0.0
      %1872 = vmatpush1.msra.mxu0 0.0
      %1873 = vmatprep.mubr.f32.mxu0 0.0
      %1874 = vmatmul.mubr.f32.gmra.mrb[0].mxu0 %v1807
      %v1875 = vpop.f32.mrb[0].mxu0
      %v1876 = vadd.f32 %v1804, %v1875
      %v1877 = vpop.f32.mrb[0].mxu0
      %1878 = vdwg.mxu0
      %v1879 = vmax.f32 %v1876, 0.0
      %v1881 = vlaneseq
      %v1882 = vshrl.u32 %v1881, 7
      %v1883 = vsub.s32 0, %v1882
      %v1884 = vrot.slane %v1799, %v1883
      %vm1886 = vcmask 523264
      %v1888 = vsel %vm1886, %v1879, 0
      %1890 = vmatprep.subr.mxu0 0.0
      %1891 = vmatpush1.msra.mxu0 %v1791
      %1892 = vmatprep.subr.mxu0 0.0
      %1893 = vmatpush1.msra.mxu0 %v1792
      %1894 = vmatprep.subr.mxu0 0.0
      %1895 = vmatpush1.msra.mxu0 %v1793
      %1896 = vmatprep.subr.mxu0 0.0
      %1897 = vmatpush1.msra.mxu0 %v1794
      %1898 = vmatprep.subr.mxu0 0.0
      %1899 = vmatpush1.msra.mxu0 %v1795
      %1900 = vmatprep.subr.mxu0 0.0
      %1901 = vmatpush1.msra.mxu0 %v1796
      %1902 = vmatprep.subr.mxu0 0.0
      %1903 = vmatpush1.msra.mxu0 %v1797
      %1904 = vmatprep.subr.mxu0 0.0
      %1905 = vmatpush1.msra.mxu0 %v1798
      %1906 = vmatprep.subr.mxu0 0.0
      %1907 = vmatpush1.msra.mxu0 0.0
      %1908 = vmatprep.subr.mxu0 0.0
      %1909 = vmatpush1.msra.mxu0 0.0
      %1910 = vmatprep.subr.mxu0 0.0
      %1911 = vmatpush1.msra.mxu0 0.0
      %1912 = vmatprep.subr.mxu0 0.0
      %1913 = vmatpush1.msra.mxu0 0.0
      %1914 = vmatprep.subr.mxu0 0.0
      %1915 = vmatpush1.msra.mxu0 0.0
      %1916 = vmatprep.subr.mxu0 0.0
      %1917 = vmatpush1.msra.mxu0 0.0
      %1918 = vmatprep.subr.mxu0 0.0
      %1919 = vmatpush1.msra.mxu0 0.0
      %1920 = vmatprep.subr.mxu0 0.0
      %1921 = vmatpush1.msra.mxu0 0.0
      %1922 = vmatprep.subr.mxu0 0.0
      %1923 = vmatpush1.msra.mxu0 0.0
      %1924 = vmatprep.subr.mxu0 0.0
      %1925 = vmatpush1.msra.mxu0 0.0
      %1926 = vmatprep.subr.mxu0 0.0
      %1927 = vmatpush1.msra.mxu0 0.0
      %1928 = vmatprep.subr.mxu0 0.0
      %1929 = vmatpush1.msra.mxu0 0.0
      %1930 = vmatprep.subr.mxu0 0.0
      %1931 = vmatpush1.msra.mxu0 0.0
      %1932 = vmatprep.subr.mxu0 0.0
      %1933 = vmatpush1.msra.mxu0 0.0
      %1934 = vmatprep.subr.mxu0 0.0
      %1935 = vmatpush1.msra.mxu0 0.0
      %1936 = vmatprep.subr.mxu0 0.0
      %1937 = vmatpush1.msra.mxu0 0.0
      %1938 = vmatprep.subr.mxu0 0.0
      %1939 = vmatpush1.msra.mxu0 0.0
      %1940 = vmatprep.subr.mxu0 0.0
      %1941 = vmatpush1.msra.mxu0 0.0
      %1942 = vmatprep.subr.mxu0 0.0
      %1943 = vmatpush1.msra.mxu0 0.0
      %1944 = vmatprep.subr.mxu0 0.0
      %1945 = vmatpush1.msra.mxu0 0.0
      %1946 = vmatprep.subr.mxu0 0.0
      %1947 = vmatpush1.msra.mxu0 0.0
      %1948 = vmatprep.subr.mxu0 0.0
      %1949 = vmatpush1.msra.mxu0 0.0
      %1950 = vmatprep.subr.mxu0 0.0
      %1951 = vmatpush1.msra.mxu0 0.0
      %1952 = vmatprep.subr.mxu0 0.0
      %1953 = vmatpush1.msra.mxu0 0.0
      %1954 = vmatprep.mubr.f32.mxu0 0.0
      %1955 = vmatmul.mubr.f32.gmra.mrb[0].mxu0 %v1888
      %v1956 = vpop.f32.mrb[0].mxu0
      %v1957 = vadd.f32 %v1884, %v1956
      %v1958 = vpop.f32.mrb[0].mxu0
      %1959 = vdwg.mxu0
      %v1960 = vadd.f32 %v1785, %v1957
      %v1961 = vld [vmem:[%s673] sm:$0x1]
      %v1962 = vld [vmem:[%s676] sm:$0x1]
      %v1963 = vsel %vm706, %v1960, 0.0
      %1964 = vadd.xlane.f32.xlu0 %v1963
      %v1965 = vpop.xlane.xlu0 %1964
      %v1966 = vmul.f32 %v1965, %v1761
      %v1967 = vsub.f32 %v1960, %v1966
      %v1968 = vmul.f32 %v1967, %v1967
      %v1969 = vsel %vm706, %v1968, 0.0
      %1970 = vadd.xlane.f32.xlu0 %v1969
      %v1971 = vpop.xlane.xlu0 %1970
      %v1972 = vmul.f32 %v1971, %v1761
      %v1973 = vadd.f32 %v1972, 1e-05
      %v1974 = vrsqrt.pop %v1973
      %v1975 = vmul.f32 %v1967, %v1974
      %v1977 = vlaneseq
      %v1978 = vshrl.u32 %v1977, 7
      %v1979 = vsub.s32 0, %v1978
      %v1980 = vrot.slane %v1961, %v1979
      %v1982 = vmul.f32 %v1975, %v1980
      %v1984 = vlaneseq
      %v1985 = vshrl.u32 %v1984, 7
      %v1986 = vsub.s32 0, %v1985
      %v1987 = vrot.slane %v1962, %v1986
      %v1989 = vadd.f32 %v1982, %v1987
      %1990 = vst.msk [vmem:[%s680] sm:$0xff] %vm706, %v1989
      %p1991 = scmp.lt.s32.totalorder %s29, 1
      %s1992 = scalar_select %p1991, %s29, 1
      %s1993 = smul.addr %s1992, 8
      %s1994 = scalar_lea.vmem %s14, %s1993
      // Predicated region
      $region81: #{seq2seq_forward.3} parent=75 // pred_check
        %p1995 = pneg %p419
      $region82: #{seq2seq_forward.3} parent=75 // pred_check_branch
        %1997 = sbr.rel (%p1995) target = $region84
      $region83: #{seq2seq_forward.3} parent=75 // pred_region
        _
      $region84: #{seq2seq_forward.3} parent=75 // pred_fallthru
        _
    $region76: #{seq2seq_forward.3} parent=5 // pred_fallthru
      _
    %p1998 = scmp.le.s32.totalorder 2, %s20
    // Predicated region
    $region85: #{seq2seq_forward.3} parent=5 // pred_check
      %p1999 = pneg %p1998
    $region86: #{seq2seq_forward.3} parent=5 // pred_check_branch
      %2001 = sbr.rel (%p1999) target = $region88
    $region87: #{seq2seq_forward.3} parent=5 // pred_region
      %s2002 = ssub.s32 %s20, 2
      // Predicated region
      $region89: #{seq2seq_forward.3} parent=87 // pred_check
        %p2003 = pneg %p425
      $region90: #{seq2seq_forward.3} parent=87 // pred_check_branch
        %2005 = sbr.rel (%p2003) target = $region92
      $region91: #{seq2seq_forward.3} parent=87 // pred_region
        %p2006 = scmp.lt.s32.totalorder %s31, 1
        %s2007 = scalar_select %p2006, %s31, 1
        %s2008 = smul.addr %s2007, 8
        %s2009 = scalar_lea.vmem %s14, %s2008
      $region92: #{seq2seq_forward.3} parent=87 // pred_fallthru
        _
    $region88: #{seq2seq_forward.3} parent=5 // pred_fallthru
      _
  $region6: #{seq2seq_forward.3} parent=0 // loop_footer
    %s24 = sadd.s32 1, %s20
  $region7: #{seq2seq_forward.3} parent=0 // loop_footer_branch
    %19 = sbr.rel target = $region3
  $region8: #{seq2seq_forward.3} parent=0 // loop_exit
    _

// kernel: seq2seq_forward.4
$region0: #{seq2seq_forward.4}
  #allocation0 [shape = 'u32[]', space=smem, size = 0x4, offset = 0x4, fixed_abs, tag = 'smem constant byte address 0x4 - core index']
  #allocation1 [shape = 'u32[144,128]{1,0:T(1,128)}', space=vmem, size = 0x12000, scoped, tag = 'internal scratch']
  %s0 = inlined_call_operand.vmem [shape: f32[2,8,32], index: 0, kind: input, shape index: {}]
  %s1 = inlined_call_operand.vmem [shape: f32[2,8,32], index: 1, kind: input, shape index: {}]
  %s2 = inlined_call_operand.vmem [shape: f32[2,8,8], index: 2, kind: input, shape index: {}]
  %s3 = inlined_call_operand.vmem [shape: f32[2,1,8], index: 3, kind: input, shape index: {}]
  %s4 = inlined_call_operand.vmem [shape: f32[2,32,96], index: 4, kind: input, shape index: {}]
  %s5 = inlined_call_operand.vmem [shape: f32[2,1,96], index: 5, kind: input, shape index: {}]
  %s6 = inlined_call_operand.vmem [shape: f32[2,32,32], index: 6, kind: input, shape index: {}]
  %s7 = inlined_call_operand.vmem [shape: f32[2,1,32], index: 7, kind: input, shape index: {}]
  %s8 = inlined_call_operand.vmem [shape: f32[2,1,32], index: 8, kind: input, shape index: {}]
  %s9 = inlined_call_operand.vmem [shape: f32[2,1,32], index: 9, kind: input, shape index: {}]
  %s10 = inlined_call_operand.vmem [shape: f32[2,32,32], index: 10, kind: input, shape index: {}]
  %s11 = inlined_call_operand.vmem [shape: f32[2,1,32], index: 11, kind: input, shape index: {}]
  %s12 = inlined_call_operand.vmem [shape: f32[2,32,64], index: 12, kind: input, shape index: {}]
  %s13 = inlined_call_operand.vmem [shape: f32[2,1,64], index: 13, kind: input, shape index: {}]
  %s14 = inlined_call_operand.vmem [shape: f32[2,32,32], index: 14, kind: input, shape index: {}]
  %s15 = inlined_call_operand.vmem [shape: f32[2,1,32], index: 15, kind: input, shape index: {}]
  %s16 = inlined_call_operand.vmem [shape: f32[2,1,32], index: 16, kind: input, shape index: {}]
  %s17 = inlined_call_operand.vmem [shape: f32[2,1,32], index: 17, kind: input, shape index: {}]
  %s18 = inlined_call_operand.vmem [shape: f32[2,32,64], index: 18, kind: input, shape index: {}]
  %s19 = inlined_call_operand.vmem [shape: f32[2,1,64], index: 19, kind: input, shape index: {}]
  %s20 = inlined_call_operand.vmem [shape: f32[2,64,32], index: 20, kind: input, shape index: {}]
  %s21 = inlined_call_operand.vmem [shape: f32[2,1,32], index: 21, kind: input, shape index: {}]
  %s22 = inlined_call_operand.vmem [shape: f32[2,1,32], index: 22, kind: input, shape index: {}]
  %s23 = inlined_call_operand.vmem [shape: f32[2,1,32], index: 23, kind: input, shape index: {}]
  %s24 = inlined_call_operand.vmem [shape: f32[2,8,32], index: 24, kind: output, shape index: {0}]
  %s25 = inlined_call_operand.hbm [shape: f32[2,4,8,8], index: 25, kind: output, shape index: {1}]
  %26 = xla_tuple %s24, %s25
  %s27 = sld [smem:[#allocation0]]
  $region141: #{seq2seq_forward.4} parent=0
    _
  %s29 = ssub.s32 1, %s27
  %s30 = scalar_select 0, %s29, %s27
  $region1: #{seq2seq_forward.4} parent=0
    #allocation2 [shape = 'u8[32768]{0}', space=vmem, size = 0x8000, scoped, tag = 'output window, operand 1']
    #allocation3 [shape = 's32[2]{0}', space=sflag, size = 0x8, scoped, tag = 'scoped memory for seq2seq_forward.4']
    %31 = vsyncpa [#allocation3], 0
    %s32 = scalar_lea.sflag [#allocation3], 1
    %33 = vsyncpa %s32, 0
    loop: start=0, step=1, limit=6
    $region2: #{seq2seq_forward.4} parent=1 // loop_pre_header
      _
    $region3: #{seq2seq_forward.4} parent=1 // loop_header
      %s35 = sphi 0, %s39
      %p36 = scmp.ge.s32.totalorder %s35, 6
      %s42 = sphi 0, %s54
      %s43 = sphi 0, %s50
      %s44 = sphi 0, %s42
      %s45 = sphi 0, %s43
      %s46 = sphi 0, %s44
      %s47 = sphi 0, %s45
      %s57 = sphi 0, %s59
      %s60 = sphi 0, %s57
      %s61 = sphi 0, %s60
      %s77 = sphi 0, %s61
      %s83 = sphi 0, %s85
      %s86 = sphi 0, %s83
      %s87 = sphi 0, %s86
      %s103 = sphi 0, %s87
      %s109 = sphi 0, %s111
      %s112 = sphi 0, %s109
      %s113 = sphi 0, %s112
      %s129 = sphi 0, %s113
      %s135 = sphi 0, %s137
      %s138 = sphi 0, %s135
      %s139 = sphi 0, %s138
      %s155 = sphi 0, %s139
      %s161 = sphi 0, %s163
      %s164 = sphi 0, %s161
      %s165 = sphi 0, %s164
      %s181 = sphi 0, %s165
      %s187 = sphi 0, %s189
      %s190 = sphi 0, %s187
      %s191 = sphi 0, %s190
      %s207 = sphi 0, %s191
      %s213 = sphi 0, %s215
      %s216 = sphi 0, %s213
      %s217 = sphi 0, %s216
      %s233 = sphi 0, %s217
      %s239 = sphi 0, %s241
      %s242 = sphi 0, %s239
      %s243 = sphi 0, %s242
      %s259 = sphi 0, %s243
      %s265 = sphi 0, %s267
      %s268 = sphi 0, %s265
      %s269 = sphi 0, %s268
      %s285 = sphi 0, %s269
      %s291 = sphi 0, %s293
      %s294 = sphi 0, %s291
      %s295 = sphi 0, %s294
      %s311 = sphi 0, %s295
      %s317 = sphi 0, %s319
      %s320 = sphi 0, %s317
      %s321 = sphi 0, %s320
      %s337 = sphi 0, %s321
      %s343 = sphi 0, %s345
      %s346 = sphi 0, %s343
      %s347 = sphi 0, %s346
      %s363 = sphi 0, %s347
      %s369 = sphi 0, %s371
      %s372 = sphi 0, %s369
      %s373 = sphi 0, %s372
      %s389 = sphi 0, %s373
      %s395 = sphi 0, %s397
      %s398 = sphi 0, %s395
      %s399 = sphi 0, %s398
      %s415 = sphi 0, %s399
      %s421 = sphi 0, %s423
      %s424 = sphi 0, %s421
      %s425 = sphi 0, %s424
      %s441 = sphi 0, %s425
      %s447 = sphi 0, %s449
      %s450 = sphi 0, %s447
      %s451 = sphi 0, %s450
      %s467 = sphi 0, %s451
      %s473 = sphi 0, %s475
      %s476 = sphi 0, %s473
      %s477 = sphi 0, %s476
      %s493 = sphi 0, %s477
      %s499 = sphi 0, %s501
      %s502 = sphi 0, %s499
      %s503 = sphi 0, %s502
      %s519 = sphi 0, %s503
      %s525 = sphi 0, %s527
      %s528 = sphi 0, %s525
      %s529 = sphi 0, %s528
      %s545 = sphi 0, %s529
      %s551 = sphi 0, %s553
      %s554 = sphi 0, %s551
      %s555 = sphi 0, %s554
      %s571 = sphi 0, %s555
      %s577 = sphi 0, %s579
      %s580 = sphi 0, %s577
      %s581 = sphi 0, %s580
      %s597 = sphi 0, %s581
      %s603 = sphi 0, %s605
      %s606 = sphi 0, %s603
      %s607 = sphi 0, %s606
      %s623 = sphi 0, %s607
      %s629 = sphi 0, %s631
      %s632 = sphi 0, %s629
      %s633 = sphi 0, %s632
      %s649 = sphi 0, %s633
      %s655 = sphi 0, %s657
      %s658 = sphi 0, %s655
      %s659 = sphi 0, %s658
      %s675 = sphi 0, %s659
      %s681 = sphi 0, %s683
      %s684 = sphi 0, %s681
      %s685 = sphi 0, %s684
      %s701 = sphi 0, %s685
      %s707 = sphi 0, %s709
      %s710 = sphi 0, %s707
      %s711 = sphi 0, %s710
      %s727 = sphi 0, %s711
    $region4: #{seq2seq_forward.4} parent=1 // loop_header_branch
      %38 = sbr.rel (%p36) target = $region8
    $region5: #{seq2seq_forward.4} parent=1 // loop_body
      %s40 = ssub.s32 %s35, 1
      %s41 = ssub.s32 %s35, 2
      %s48 = sadd.s32 1, %s43
      %p49 = scmp.ge.s32.totalorder %s48, 2
      %s50 = scalar_select %p49, 0, %s48
      %s51 = sadd.s32 1, %s42
      %s52 = scalar_select %p49, %s51, %s42
      %p53 = scmp.ge.s32.totalorder %s52, 2
      %s54 = scalar_select %p53, 0, %s52
      %s55 = ssub.s32 %s42, %s54
      %p56 = scmp.eq.s32.totalorder %s55, 0
      %s58 = sadd.s32 %s57, 1
      %s59 = scalar_select %p56, %s57, %s58
      %p62 = pneg %p56
      %p63 = scmp.eq.s32.totalorder %s35, 3
      %p64 = por %p62, %p63
      %p65 = scmp.ne.s32.totalorder %s57, %s60
      %p66 = scmp.eq.s32.totalorder %s35, 0
      %p67 = por %p65, %p66
      %p68 = scmp.ne.s32.totalorder %s57, %s60
      %p69 = scmp.eq.s32.totalorder %s40, 3
      %p70 = por %p68, %p69
      %p71 = scmp.ne.s32.totalorder %s60, %s61
      %p72 = scmp.eq.s32.totalorder %s40, 0
      %p73 = por %p71, %p72
      %p74 = scmp.ne.s32.totalorder %s60, %s61
      %p75 = scmp.eq.s32.totalorder %s41, 3
      %p76 = por %p74, %p75
      %p78 = scmp.ne.s32.totalorder %s61, %s77
      %p79 = scmp.eq.s32.totalorder %s41, 0
      %p80 = por %p78, %p79
      %s81 = ssub.s32 %s42, %s54
      %p82 = scmp.eq.s32.totalorder %s81, 0
      %s84 = sadd.s32 %s83, 1
      %s85 = scalar_select %p82, %s83, %s84
      %p88 = pneg %p82
      %p89 = scmp.eq.s32.totalorder %s35, 3
      %p90 = por %p88, %p89
      %p91 = scmp.ne.s32.totalorder %s83, %s86
      %p92 = scmp.eq.s32.totalorder %s35, 0
      %p93 = por %p91, %p92
      %p94 = scmp.ne.s32.totalorder %s83, %s86
      %p95 = scmp.eq.s32.totalorder %s40, 3
      %p96 = por %p94, %p95
      %p97 = scmp.ne.s32.totalorder %s86, %s87
      %p98 = scmp.eq.s32.totalorder %s40, 0
      %p99 = por %p97, %p98
      %p100 = scmp.ne.s32.totalorder %s86, %s87
      %p101 = scmp.eq.s32.totalorder %s41, 3
      %p102 = por %p100, %p101
      %p104 = scmp.ne.s32.totalorder %s87, %s103
      %p105 = scmp.eq.s32.totalorder %s41, 0
      %p106 = por %p104, %p105
      %s107 = ssub.s32 %s42, %s54
      %p108 = scmp.eq.s32.totalorder %s107, 0
      %s110 = sadd.s32 %s109, 1
      %s111 = scalar_select %p108, %s109, %s110
      %p114 = pneg %p108
      %p115 = scmp.eq.s32.totalorder %s35, 3
      %p116 = por %p114, %p115
      %p117 = scmp.ne.s32.totalorder %s109, %s112
      %p118 = scmp.eq.s32.totalorder %s35, 0
      %p119 = por %p117, %p118
      %p120 = scmp.ne.s32.totalorder %s109, %s112
      %p121 = scmp.eq.s32.totalorder %s40, 3
      %p122 = por %p120, %p121
      %p123 = scmp.ne.s32.totalorder %s112, %s113
      %p124 = scmp.eq.s32.totalorder %s40, 0
      %p125 = por %p123, %p124
      %p126 = scmp.ne.s32.totalorder %s112, %s113
      %p127 = scmp.eq.s32.totalorder %s41, 3
      %p128 = por %p126, %p127
      %p130 = scmp.ne.s32.totalorder %s113, %s129
      %p131 = scmp.eq.s32.totalorder %s41, 0
      %p132 = por %p130, %p131
      %s133 = ssub.s32 %s42, %s54
      %p134 = scmp.eq.s32.totalorder %s133, 0
      %s136 = sadd.s32 %s135, 1
      %s137 = scalar_select %p134, %s135, %s136
      %p140 = pneg %p134
      %p141 = scmp.eq.s32.totalorder %s35, 3
      %p142 = por %p140, %p141
      %p143 = scmp.ne.s32.totalorder %s135, %s138
      %p144 = scmp.eq.s32.totalorder %s35, 0
      %p145 = por %p143, %p144
      %p146 = scmp.ne.s32.totalorder %s135, %s138
      %p147 = scmp.eq.s32.totalorder %s40, 3
      %p148 = por %p146, %p147
      %p149 = scmp.ne.s32.totalorder %s138, %s139
      %p150 = scmp.eq.s32.totalorder %s40, 0
      %p151 = por %p149, %p150
      %p152 = scmp.ne.s32.totalorder %s138, %s139
      %p153 = scmp.eq.s32.totalorder %s41, 3
      %p154 = por %p152, %p153
      %p156 = scmp.ne.s32.totalorder %s139, %s155
      %p157 = scmp.eq.s32.totalorder %s41, 0
      %p158 = por %p156, %p157
      %s159 = ssub.s32 %s43, %s50
      %p160 = scmp.eq.s32.totalorder %s159, 0
      %s162 = sadd.s32 %s161, 1
      %s163 = scalar_select %p160, %s161, %s162
      %p166 = pneg %p160
      %p167 = scmp.eq.s32.totalorder %s35, 3
      %p168 = por %p166, %p167
      %p169 = scmp.ne.s32.totalorder %s161, %s164
      %p170 = scmp.eq.s32.totalorder %s35, 0
      %p171 = por %p169, %p170
      %p172 = scmp.ne.s32.totalorder %s161, %s164
      %p173 = scmp.eq.s32.totalorder %s40, 3
      %p174 = por %p172, %p173
      %p175 = scmp.ne.s32.totalorder %s164, %s165
      %p176 = scmp.eq.s32.totalorder %s40, 0
      %p177 = por %p175, %p176
      %p178 = scmp.ne.s32.totalorder %s164, %s165
      %p179 = scmp.eq.s32.totalorder %s41, 3
      %p180 = por %p178, %p179
      %p182 = scmp.ne.s32.totalorder %s165, %s181
      %p183 = scmp.eq.s32.totalorder %s41, 0
      %p184 = por %p182, %p183
      %s185 = ssub.s32 %s43, %s50
      %p186 = scmp.eq.s32.totalorder %s185, 0
      %s188 = sadd.s32 %s187, 1
      %s189 = scalar_select %p186, %s187, %s188
      %p192 = pneg %p186
      %p193 = scmp.eq.s32.totalorder %s35, 3
      %p194 = por %p192, %p193
      %p195 = scmp.ne.s32.totalorder %s187, %s190
      %p196 = scmp.eq.s32.totalorder %s35, 0
      %p197 = por %p195, %p196
      %p198 = scmp.ne.s32.totalorder %s187, %s190
      %p199 = scmp.eq.s32.totalorder %s40, 3
      %p200 = por %p198, %p199
      %p201 = scmp.ne.s32.totalorder %s190, %s191
      %p202 = scmp.eq.s32.totalorder %s40, 0
      %p203 = por %p201, %p202
      %p204 = scmp.ne.s32.totalorder %s190, %s191
      %p205 = scmp.eq.s32.totalorder %s41, 3
      %p206 = por %p204, %p205
      %p208 = scmp.ne.s32.totalorder %s191, %s207
      %p209 = scmp.eq.s32.totalorder %s41, 0
      %p210 = por %p208, %p209
      %s211 = ssub.s32 %s43, %s50
      %p212 = scmp.eq.s32.totalorder %s211, 0
      %s214 = sadd.s32 %s213, 1
      %s215 = scalar_select %p212, %s213, %s214
      %p218 = pneg %p212
      %p219 = scmp.eq.s32.totalorder %s35, 3
      %p220 = por %p218, %p219
      %p221 = scmp.ne.s32.totalorder %s213, %s216
      %p222 = scmp.eq.s32.totalorder %s35, 0
      %p223 = por %p221, %p222
      %p224 = scmp.ne.s32.totalorder %s213, %s216
      %p225 = scmp.eq.s32.totalorder %s40, 3
      %p226 = por %p224, %p225
      %p227 = scmp.ne.s32.totalorder %s216, %s217
      %p228 = scmp.eq.s32.totalorder %s40, 0
      %p229 = por %p227, %p228
      %p230 = scmp.ne.s32.totalorder %s216, %s217
      %p231 = scmp.eq.s32.totalorder %s41, 3
      %p232 = por %p230, %p231
      %p234 = scmp.ne.s32.totalorder %s217, %s233
      %p235 = scmp.eq.s32.totalorder %s41, 0
      %p236 = por %p234, %p235
      %s237 = ssub.s32 %s43, %s50
      %p238 = scmp.eq.s32.totalorder %s237, 0
      %s240 = sadd.s32 %s239, 1
      %s241 = scalar_select %p238, %s239, %s240
      %p244 = pneg %p238
      %p245 = scmp.eq.s32.totalorder %s35, 3
      %p246 = por %p244, %p245
      %p247 = scmp.ne.s32.totalorder %s239, %s242
      %p248 = scmp.eq.s32.totalorder %s35, 0
      %p249 = por %p247, %p248
      %p250 = scmp.ne.s32.totalorder %s239, %s242
      %p251 = scmp.eq.s32.totalorder %s40, 3
      %p252 = por %p250, %p251
      %p253 = scmp.ne.s32.totalorder %s242, %s243
      %p254 = scmp.eq.s32.totalorder %s40, 0
      %p255 = por %p253, %p254
      %p256 = scmp.ne.s32.totalorder %s242, %s243
      %p257 = scmp.eq.s32.totalorder %s41, 3
      %p258 = por %p256, %p257
      %p260 = scmp.ne.s32.totalorder %s243, %s259
      %p261 = scmp.eq.s32.totalorder %s41, 0
      %p262 = por %p260, %p261
      %s263 = ssub.s32 %s43, %s50
      %p264 = scmp.eq.s32.totalorder %s263, 0
      %s266 = sadd.s32 %s265, 1
      %s267 = scalar_select %p264, %s265, %s266
      %p270 = pneg %p264
      %p271 = scmp.eq.s32.totalorder %s35, 3
      %p272 = por %p270, %p271
      %p273 = scmp.ne.s32.totalorder %s265, %s268
      %p274 = scmp.eq.s32.totalorder %s35, 0
      %p275 = por %p273, %p274
      %p276 = scmp.ne.s32.totalorder %s265, %s268
      %p277 = scmp.eq.s32.totalorder %s40, 3
      %p278 = por %p276, %p277
      %p279 = scmp.ne.s32.totalorder %s268, %s269
      %p280 = scmp.eq.s32.totalorder %s40, 0
      %p281 = por %p279, %p280
      %p282 = scmp.ne.s32.totalorder %s268, %s269
      %p283 = scmp.eq.s32.totalorder %s41, 3
      %p284 = por %p282, %p283
      %p286 = scmp.ne.s32.totalorder %s269, %s285
      %p287 = scmp.eq.s32.totalorder %s41, 0
      %p288 = por %p286, %p287
      %s289 = ssub.s32 %s43, %s50
      %p290 = scmp.eq.s32.totalorder %s289, 0
      %s292 = sadd.s32 %s291, 1
      %s293 = scalar_select %p290, %s291, %s292
      %p296 = pneg %p290
      %p297 = scmp.eq.s32.totalorder %s35, 3
      %p298 = por %p296, %p297
      %p299 = scmp.ne.s32.totalorder %s291, %s294
      %p300 = scmp.eq.s32.totalorder %s35, 0
      %p301 = por %p299, %p300
      %p302 = scmp.ne.s32.totalorder %s291, %s294
      %p303 = scmp.eq.s32.totalorder %s40, 3
      %p304 = por %p302, %p303
      %p305 = scmp.ne.s32.totalorder %s294, %s295
      %p306 = scmp.eq.s32.totalorder %s40, 0
      %p307 = por %p305, %p306
      %p308 = scmp.ne.s32.totalorder %s294, %s295
      %p309 = scmp.eq.s32.totalorder %s41, 3
      %p310 = por %p308, %p309
      %p312 = scmp.ne.s32.totalorder %s295, %s311
      %p313 = scmp.eq.s32.totalorder %s41, 0
      %p314 = por %p312, %p313
      %s315 = ssub.s32 %s43, %s50
      %p316 = scmp.eq.s32.totalorder %s315, 0
      %s318 = sadd.s32 %s317, 1
      %s319 = scalar_select %p316, %s317, %s318
      %p322 = pneg %p316
      %p323 = scmp.eq.s32.totalorder %s35, 3
      %p324 = por %p322, %p323
      %p325 = scmp.ne.s32.totalorder %s317, %s320
      %p326 = scmp.eq.s32.totalorder %s35, 0
      %p327 = por %p325, %p326
      %p328 = scmp.ne.s32.totalorder %s317, %s320
      %p329 = scmp.eq.s32.totalorder %s40, 3
      %p330 = por %p328, %p329
      %p331 = scmp.ne.s32.totalorder %s320, %s321
      %p332 = scmp.eq.s32.totalorder %s40, 0
      %p333 = por %p331, %p332
      %p334 = scmp.ne.s32.totalorder %s320, %s321
      %p335 = scmp.eq.s32.totalorder %s41, 3
      %p336 = por %p334, %p335
      %p338 = scmp.ne.s32.totalorder %s321, %s337
      %p339 = scmp.eq.s32.totalorder %s41, 0
      %p340 = por %p338, %p339
      %s341 = ssub.s32 %s43, %s50
      %p342 = scmp.eq.s32.totalorder %s341, 0
      %s344 = sadd.s32 %s343, 1
      %s345 = scalar_select %p342, %s343, %s344
      %p348 = pneg %p342
      %p349 = scmp.eq.s32.totalorder %s35, 3
      %p350 = por %p348, %p349
      %p351 = scmp.ne.s32.totalorder %s343, %s346
      %p352 = scmp.eq.s32.totalorder %s35, 0
      %p353 = por %p351, %p352
      %p354 = scmp.ne.s32.totalorder %s343, %s346
      %p355 = scmp.eq.s32.totalorder %s40, 3
      %p356 = por %p354, %p355
      %p357 = scmp.ne.s32.totalorder %s346, %s347
      %p358 = scmp.eq.s32.totalorder %s40, 0
      %p359 = por %p357, %p358
      %p360 = scmp.ne.s32.totalorder %s346, %s347
      %p361 = scmp.eq.s32.totalorder %s41, 3
      %p362 = por %p360, %p361
      %p364 = scmp.ne.s32.totalorder %s347, %s363
      %p365 = scmp.eq.s32.totalorder %s41, 0
      %p366 = por %p364, %p365
      %s367 = ssub.s32 %s43, %s50
      %p368 = scmp.eq.s32.totalorder %s367, 0
      %s370 = sadd.s32 %s369, 1
      %s371 = scalar_select %p368, %s369, %s370
      %p374 = pneg %p368
      %p375 = scmp.eq.s32.totalorder %s35, 3
      %p376 = por %p374, %p375
      %p377 = scmp.ne.s32.totalorder %s369, %s372
      %p378 = scmp.eq.s32.totalorder %s35, 0
      %p379 = por %p377, %p378
      %p380 = scmp.ne.s32.totalorder %s369, %s372
      %p381 = scmp.eq.s32.totalorder %s40, 3
      %p382 = por %p380, %p381
      %p383 = scmp.ne.s32.totalorder %s372, %s373
      %p384 = scmp.eq.s32.totalorder %s40, 0
      %p385 = por %p383, %p384
      %p386 = scmp.ne.s32.totalorder %s372, %s373
      %p387 = scmp.eq.s32.totalorder %s41, 3
      %p388 = por %p386, %p387
      %p390 = scmp.ne.s32.totalorder %s373, %s389
      %p391 = scmp.eq.s32.totalorder %s41, 0
      %p392 = por %p390, %p391
      %s393 = ssub.s32 %s43, %s50
      %p394 = scmp.eq.s32.totalorder %s393, 0
      %s396 = sadd.s32 %s395, 1
      %s397 = scalar_select %p394, %s395, %s396
      %p400 = pneg %p394
      %p401 = scmp.eq.s32.totalorder %s35, 3
      %p402 = por %p400, %p401
      %p403 = scmp.ne.s32.totalorder %s395, %s398
      %p404 = scmp.eq.s32.totalorder %s35, 0
      %p405 = por %p403, %p404
      %p406 = scmp.ne.s32.totalorder %s395, %s398
      %p407 = scmp.eq.s32.totalorder %s40, 3
      %p408 = por %p406, %p407
      %p409 = scmp.ne.s32.totalorder %s398, %s399
      %p410 = scmp.eq.s32.totalorder %s40, 0
      %p411 = por %p409, %p410
      %p412 = scmp.ne.s32.totalorder %s398, %s399
      %p413 = scmp.eq.s32.totalorder %s41, 3
      %p414 = por %p412, %p413
      %p416 = scmp.ne.s32.totalorder %s399, %s415
      %p417 = scmp.eq.s32.totalorder %s41, 0
      %p418 = por %p416, %p417
      %s419 = ssub.s32 %s43, %s50
      %p420 = scmp.eq.s32.totalorder %s419, 0
      %s422 = sadd.s32 %s421, 1
      %s423 = scalar_select %p420, %s421, %s422
      %p426 = pneg %p420
      %p427 = scmp.eq.s32.totalorder %s35, 3
      %p428 = por %p426, %p427
      %p429 = scmp.ne.s32.totalorder %s421, %s424
      %p430 = scmp.eq.s32.totalorder %s35, 0
      %p431 = por %p429, %p430
      %p432 = scmp.ne.s32.totalorder %s421, %s424
      %p433 = scmp.eq.s32.totalorder %s40, 3
      %p434 = por %p432, %p433
      %p435 = scmp.ne.s32.totalorder %s424, %s425
      %p436 = scmp.eq.s32.totalorder %s40, 0
      %p437 = por %p435, %p436
      %p438 = scmp.ne.s32.totalorder %s424, %s425
      %p439 = scmp.eq.s32.totalorder %s41, 3
      %p440 = por %p438, %p439
      %p442 = scmp.ne.s32.totalorder %s425, %s441
      %p443 = scmp.eq.s32.totalorder %s41, 0
      %p444 = por %p442, %p443
      %s445 = ssub.s32 %s43, %s50
      %p446 = scmp.eq.s32.totalorder %s445, 0
      %s448 = sadd.s32 %s447, 1
      %s449 = scalar_select %p446, %s447, %s448
      %p452 = pneg %p446
      %p453 = scmp.eq.s32.totalorder %s35, 3
      %p454 = por %p452, %p453
      %p455 = scmp.ne.s32.totalorder %s447, %s450
      %p456 = scmp.eq.s32.totalorder %s35, 0
      %p457 = por %p455, %p456
      %p458 = scmp.ne.s32.totalorder %s447, %s450
      %p459 = scmp.eq.s32.totalorder %s40, 3
      %p460 = por %p458, %p459
      %p461 = scmp.ne.s32.totalorder %s450, %s451
      %p462 = scmp.eq.s32.totalorder %s40, 0
      %p463 = por %p461, %p462
      %p464 = scmp.ne.s32.totalorder %s450, %s451
      %p465 = scmp.eq.s32.totalorder %s41, 3
      %p466 = por %p464, %p465
      %p468 = scmp.ne.s32.totalorder %s451, %s467
      %p469 = scmp.eq.s32.totalorder %s41, 0
      %p470 = por %p468, %p469
      %s471 = ssub.s32 %s43, %s50
      %p472 = scmp.eq.s32.totalorder %s471, 0
      %s474 = sadd.s32 %s473, 1
      %s475 = scalar_select %p472, %s473, %s474
      %p478 = pneg %p472
      %p479 = scmp.eq.s32.totalorder %s35, 3
      %p480 = por %p478, %p479
      %p481 = scmp.ne.s32.totalorder %s473, %s476
      %p482 = scmp.eq.s32.totalorder %s35, 0
      %p483 = por %p481, %p482
      %p484 = scmp.ne.s32.totalorder %s473, %s476
      %p485 = scmp.eq.s32.totalorder %s40, 3
      %p486 = por %p484, %p485
      %p487 = scmp.ne.s32.totalorder %s476, %s477
      %p488 = scmp.eq.s32.totalorder %s40, 0
      %p489 = por %p487, %p488
      %p490 = scmp.ne.s32.totalorder %s476, %s477
      %p491 = scmp.eq.s32.totalorder %s41, 3
      %p492 = por %p490, %p491
      %p494 = scmp.ne.s32.totalorder %s477, %s493
      %p495 = scmp.eq.s32.totalorder %s41, 0
      %p496 = por %p494, %p495
      %s497 = ssub.s32 %s43, %s50
      %p498 = scmp.eq.s32.totalorder %s497, 0
      %s500 = sadd.s32 %s499, 1
      %s501 = scalar_select %p498, %s499, %s500
      %p504 = pneg %p498
      %p505 = scmp.eq.s32.totalorder %s35, 3
      %p506 = por %p504, %p505
      %p507 = scmp.ne.s32.totalorder %s499, %s502
      %p508 = scmp.eq.s32.totalorder %s35, 0
      %p509 = por %p507, %p508
      %p510 = scmp.ne.s32.totalorder %s499, %s502
      %p511 = scmp.eq.s32.totalorder %s40, 3
      %p512 = por %p510, %p511
      %p513 = scmp.ne.s32.totalorder %s502, %s503
      %p514 = scmp.eq.s32.totalorder %s40, 0
      %p515 = por %p513, %p514
      %p516 = scmp.ne.s32.totalorder %s502, %s503
      %p517 = scmp.eq.s32.totalorder %s41, 3
      %p518 = por %p516, %p517
      %p520 = scmp.ne.s32.totalorder %s503, %s519
      %p521 = scmp.eq.s32.totalorder %s41, 0
      %p522 = por %p520, %p521
      %s523 = ssub.s32 %s43, %s50
      %p524 = scmp.eq.s32.totalorder %s523, 0
      %s526 = sadd.s32 %s525, 1
      %s527 = scalar_select %p524, %s525, %s526
      %p530 = pneg %p524
      %p531 = scmp.eq.s32.totalorder %s35, 3
      %p532 = por %p530, %p531
      %p533 = scmp.ne.s32.totalorder %s525, %s528
      %p534 = scmp.eq.s32.totalorder %s35, 0
      %p535 = por %p533, %p534
      %p536 = scmp.ne.s32.totalorder %s525, %s528
      %p537 = scmp.eq.s32.totalorder %s40, 3
      %p538 = por %p536, %p537
      %p539 = scmp.ne.s32.totalorder %s528, %s529
      %p540 = scmp.eq.s32.totalorder %s40, 0
      %p541 = por %p539, %p540
      %p542 = scmp.ne.s32.totalorder %s528, %s529
      %p543 = scmp.eq.s32.totalorder %s41, 3
      %p544 = por %p542, %p543
      %p546 = scmp.ne.s32.totalorder %s529, %s545
      %p547 = scmp.eq.s32.totalorder %s41, 0
      %p548 = por %p546, %p547
      %s549 = ssub.s32 %s43, %s50
      %p550 = scmp.eq.s32.totalorder %s549, 0
      %s552 = sadd.s32 %s551, 1
      %s553 = scalar_select %p550, %s551, %s552
      %p556 = pneg %p550
      %p557 = scmp.eq.s32.totalorder %s35, 3
      %p558 = por %p556, %p557
      %p559 = scmp.ne.s32.totalorder %s551, %s554
      %p560 = scmp.eq.s32.totalorder %s35, 0
      %p561 = por %p559, %p560
      %p562 = scmp.ne.s32.totalorder %s551, %s554
      %p563 = scmp.eq.s32.totalorder %s40, 3
      %p564 = por %p562, %p563
      %p565 = scmp.ne.s32.totalorder %s554, %s555
      %p566 = scmp.eq.s32.totalorder %s40, 0
      %p567 = por %p565, %p566
      %p568 = scmp.ne.s32.totalorder %s554, %s555
      %p569 = scmp.eq.s32.totalorder %s41, 3
      %p570 = por %p568, %p569
      %p572 = scmp.ne.s32.totalorder %s555, %s571
      %p573 = scmp.eq.s32.totalorder %s41, 0
      %p574 = por %p572, %p573
      %s575 = ssub.s32 %s43, %s50
      %p576 = scmp.eq.s32.totalorder %s575, 0
      %s578 = sadd.s32 %s577, 1
      %s579 = scalar_select %p576, %s577, %s578
      %p582 = pneg %p576
      %p583 = scmp.eq.s32.totalorder %s35, 3
      %p584 = por %p582, %p583
      %p585 = scmp.ne.s32.totalorder %s577, %s580
      %p586 = scmp.eq.s32.totalorder %s35, 0
      %p587 = por %p585, %p586
      %p588 = scmp.ne.s32.totalorder %s577, %s580
      %p589 = scmp.eq.s32.totalorder %s40, 3
      %p590 = por %p588, %p589
      %p591 = scmp.ne.s32.totalorder %s580, %s581
      %p592 = scmp.eq.s32.totalorder %s40, 0
      %p593 = por %p591, %p592
      %p594 = scmp.ne.s32.totalorder %s580, %s581
      %p595 = scmp.eq.s32.totalorder %s41, 3
      %p596 = por %p594, %p595
      %p598 = scmp.ne.s32.totalorder %s581, %s597
      %p599 = scmp.eq.s32.totalorder %s41, 0
      %p600 = por %p598, %p599
      %s601 = ssub.s32 %s43, %s50
      %p602 = scmp.eq.s32.totalorder %s601, 0
      %s604 = sadd.s32 %s603, 1
      %s605 = scalar_select %p602, %s603, %s604
      %p608 = pneg %p602
      %p609 = scmp.eq.s32.totalorder %s35, 3
      %p610 = por %p608, %p609
      %p611 = scmp.ne.s32.totalorder %s603, %s606
      %p612 = scmp.eq.s32.totalorder %s35, 0
      %p613 = por %p611, %p612
      %p614 = scmp.ne.s32.totalorder %s603, %s606
      %p615 = scmp.eq.s32.totalorder %s40, 3
      %p616 = por %p614, %p615
      %p617 = scmp.ne.s32.totalorder %s606, %s607
      %p618 = scmp.eq.s32.totalorder %s40, 0
      %p619 = por %p617, %p618
      %p620 = scmp.ne.s32.totalorder %s606, %s607
      %p621 = scmp.eq.s32.totalorder %s41, 3
      %p622 = por %p620, %p621
      %p624 = scmp.ne.s32.totalorder %s607, %s623
      %p625 = scmp.eq.s32.totalorder %s41, 0
      %p626 = por %p624, %p625
      %s627 = ssub.s32 %s43, %s50
      %p628 = scmp.eq.s32.totalorder %s627, 0
      %s630 = sadd.s32 %s629, 1
      %s631 = scalar_select %p628, %s629, %s630
      %p634 = pneg %p628
      %p635 = scmp.eq.s32.totalorder %s35, 3
      %p636 = por %p634, %p635
      %p637 = scmp.ne.s32.totalorder %s629, %s632
      %p638 = scmp.eq.s32.totalorder %s35, 0
      %p639 = por %p637, %p638
      %p640 = scmp.ne.s32.totalorder %s629, %s632
      %p641 = scmp.eq.s32.totalorder %s40, 3
      %p642 = por %p640, %p641
      %p643 = scmp.ne.s32.totalorder %s632, %s633
      %p644 = scmp.eq.s32.totalorder %s40, 0
      %p645 = por %p643, %p644
      %p646 = scmp.ne.s32.totalorder %s632, %s633
      %p647 = scmp.eq.s32.totalorder %s41, 3
      %p648 = por %p646, %p647
      %p650 = scmp.ne.s32.totalorder %s633, %s649
      %p651 = scmp.eq.s32.totalorder %s41, 0
      %p652 = por %p650, %p651
      %s653 = ssub.s32 %s43, %s50
      %p654 = scmp.eq.s32.totalorder %s653, 0
      %s656 = sadd.s32 %s655, 1
      %s657 = scalar_select %p654, %s655, %s656
      %p660 = pneg %p654
      %p661 = scmp.eq.s32.totalorder %s35, 3
      %p662 = por %p660, %p661
      %p663 = scmp.ne.s32.totalorder %s655, %s658
      %p664 = scmp.eq.s32.totalorder %s35, 0
      %p665 = por %p663, %p664
      %p666 = scmp.ne.s32.totalorder %s655, %s658
      %p667 = scmp.eq.s32.totalorder %s40, 3
      %p668 = por %p666, %p667
      %p669 = scmp.ne.s32.totalorder %s658, %s659
      %p670 = scmp.eq.s32.totalorder %s40, 0
      %p671 = por %p669, %p670
      %p672 = scmp.ne.s32.totalorder %s658, %s659
      %p673 = scmp.eq.s32.totalorder %s41, 3
      %p674 = por %p672, %p673
      %p676 = scmp.ne.s32.totalorder %s659, %s675
      %p677 = scmp.eq.s32.totalorder %s41, 0
      %p678 = por %p676, %p677
      %s679 = ssub.s32 %s42, %s54
      %p680 = scmp.eq.s32.totalorder %s679, 0
      %s682 = sadd.s32 %s681, 1
      %s683 = scalar_select %p680, %s681, %s682
      %p686 = pneg %p680
      %p687 = scmp.eq.s32.totalorder %s35, 3
      %p688 = por %p686, %p687
      %p689 = scmp.ne.s32.totalorder %s681, %s684
      %p690 = scmp.eq.s32.totalorder %s35, 0
      %p691 = por %p689, %p690
      %p692 = scmp.ne.s32.totalorder %s681, %s684
      %p693 = scmp.eq.s32.totalorder %s40, 3
      %p694 = por %p692, %p693
      %p695 = scmp.ne.s32.totalorder %s684, %s685
      %p696 = scmp.eq.s32.totalorder %s40, 0
      %p697 = por %p695, %p696
      %p698 = scmp.ne.s32.totalorder %s684, %s685
      %p699 = scmp.eq.s32.totalorder %s41, 3
      %p700 = por %p698, %p699
      %p702 = scmp.ne.s32.totalorder %s685, %s701
      %p703 = scmp.eq.s32.totalorder %s41, 0
      %p704 = por %p702, %p703
      %s705 = ssub.s32 %s42, %s54
      %p706 = scmp.eq.s32.totalorder %s705, 0
      %s708 = sadd.s32 %s707, 1
      %s709 = scalar_select %p706, %s707, %s708
      %p712 = pneg %p706
      %p713 = scmp.eq.s32.totalorder %s35, 3
      %p714 = por %p712, %p713
      %p715 = scmp.ne.s32.totalorder %s707, %s710
      %p716 = scmp.eq.s32.totalorder %s35, 0
      %p717 = por %p715, %p716
      %p718 = scmp.ne.s32.totalorder %s707, %s710
      %p719 = scmp.eq.s32.totalorder %s40, 3
      %p720 = por %p718, %p719
      %p721 = scmp.ne.s32.totalorder %s710, %s711
      %p722 = scmp.eq.s32.totalorder %s40, 0
      %p723 = por %p721, %p722
      %p724 = scmp.ne.s32.totalorder %s710, %s711
      %p725 = scmp.eq.s32.totalorder %s41, 3
      %p726 = por %p724, %p725
      %p728 = scmp.ne.s32.totalorder %s711, %s727
      %p729 = scmp.eq.s32.totalorder %s41, 0
      %p730 = por %p728, %p729
      %p731 = scmp.le.s32.totalorder 1, %s35
      %p732 = scmp.lt.s32.totalorder %s35, 5
      %p733 = pnand %p731, %p732
      %p734 = pneg %p733
      // Predicated region
      $region9: #{seq2seq_forward.4} parent=5 // pred_check
        _
      $region10: #{seq2seq_forward.4} parent=5 // pred_check_branch
        %736 = sbr.rel (%p733) target = $region12
      $region11: #{seq2seq_forward.4} parent=5 // pred_region
        %s737 = ssub.s32 %s35, 1
      $region12: #{seq2seq_forward.4} parent=5 // pred_fallthru
        _
      %p738 = scmp.lt.s32.totalorder %s35, 4
      // Predicated region
      $region13: #{seq2seq_forward.4} parent=5 // pred_check
        %p739 = pneg %p738
      $region14: #{seq2seq_forward.4} parent=5 // pred_check_branch
        %741 = sbr.rel (%p739) target = $region16
      $region15: #{seq2seq_forward.4} parent=5 // pred_region
        // Predicated region
        $region17: #{seq2seq_forward.4} parent=15 // pred_check
          %p742 = pneg %p67
        $region18: #{seq2seq_forward.4} parent=15 // pred_check_branch
          %744 = sbr.rel (%p742) target = $region20
        $region19: #{seq2seq_forward.4} parent=15 // pred_region
          %p745 = scmp.lt.s32.totalorder %s42, 1
          %s746 = scalar_select %p745, %s42, 1
          %s747 = smul.addr %s746, 8
          %s748 = scalar_lea.vmem %s0, %s747
        $region20: #{seq2seq_forward.4} parent=15 // pred_fallthru
          _
        // Predicated region
        $region21: #{seq2seq_forward.4} parent=15 // pred_check
          %p749 = pneg %p93
        $region22: #{seq2seq_forward.4} parent=15 // pred_check_branch
          %751 = sbr.rel (%p749) target = $region24
        $region23: #{seq2seq_forward.4} parent=15 // pred_region
          %p752 = scmp.lt.s32.totalorder %s42, 1
          %s753 = scalar_select %p752, %s42, 1
          %s754 = smul.addr %s753, 8
          %s755 = scalar_lea.vmem %s1, %s754
        $region24: #{seq2seq_forward.4} parent=15 // pred_fallthru
          _
        // Predicated region
        $region25: #{seq2seq_forward.4} parent=15 // pred_check
          %p756 = pneg %p119
        $region26: #{seq2seq_forward.4} parent=15 // pred_check_branch
          %758 = sbr.rel (%p756) target = $region28
        $region27: #{seq2seq_forward.4} parent=15 // pred_region
          %p759 = scmp.lt.s32.totalorder %s42, 1
          %s760 = scalar_select %p759, %s42, 1
          %s761 = smul.addr %s760, 8
          %s762 = scalar_lea.vmem %s2, %s761
        $region28: #{seq2seq_forward.4} parent=15 // pred_fallthru
          _
        // Predicated region
        $region29: #{seq2seq_forward.4} parent=15 // pred_check
          %p763 = pneg %p145
        $region30: #{seq2seq_forward.4} parent=15 // pred_check_branch
          %765 = sbr.rel (%p763) target = $region32
        $region31: #{seq2seq_forward.4} parent=15 // pred_region
          %p766 = scmp.lt.s32.totalorder %s42, 1
          %s767 = scalar_select %p766, %s42, 1
          %s768 = scalar_lea.vmem %s3, %s767
        $region32: #{seq2seq_forward.4} parent=15 // pred_fallthru
          _
        // Predicated region
        $region33: #{seq2seq_forward.4} parent=15 // pred_check
          %p769 = pneg %p171
        $region34: #{seq2seq_forward.4} parent=15 // pred_check_branch
          %771 = sbr.rel (%p769) target = $region36
        $region35: #{seq2seq_forward.4} parent=15 // pred_region
          %p772 = scmp.lt.s32.totalorder %s43, 1
          %s773 = scalar_select %p772, %s43, 1
          %s774 = smul.addr %s773, 4
          %s775 = smul.addr %s774, 8
          %s776 = scalar_lea.vmem %s4, %s775
        $region36: #{seq2seq_forward.4} parent=15 // pred_fallthru
          _
        // Predicated region
        $region37: #{seq2seq_forward.4} parent=15 // pred_check
          %p777 = pneg %p197
        $region38: #{seq2seq_forward.4} parent=15 // pred_check_branch
          %779 = sbr.rel (%p777) target = $region40
        $region39: #{seq2seq_forward.4} parent=15 // pred_region
          %p780 = scmp.lt.s32.totalorder %s43, 1
          %s781 = scalar_select %p780, %s43, 1
          %s782 = scalar_lea.vmem %s5, %s781
        $region40: #{seq2seq_forward.4} parent=15 // pred_fallthru
          _
        // Predicated region
        $region41: #{seq2seq_forward.4} parent=15 // pred_check
          %p783 = pneg %p223
        $region42: #{seq2seq_forward.4} parent=15 // pred_check_branch
          %785 = sbr.rel (%p783) target = $region44
        $region43: #{seq2seq_forward.4} parent=15 // pred_region
          %p786 = scmp.lt.s32.totalorder %s43, 1
          %s787 = scalar_select %p786, %s43, 1
          %s788 = smul.addr %s787, 4
          %s789 = smul.addr %s788, 8
          %s790 = scalar_lea.vmem %s6, %s789
        $region44: #{seq2seq_forward.4} parent=15 // pred_fallthru
          _
        // Predicated region
        $region45: #{seq2seq_forward.4} parent=15 // pred_check
          %p791 = pneg %p249
        $region46: #{seq2seq_forward.4} parent=15 // pred_check_branch
          %793 = sbr.rel (%p791) target = $region48
        $region47: #{seq2seq_forward.4} parent=15 // pred_region
          %p794 = scmp.lt.s32.totalorder %s43, 1
          %s795 = scalar_select %p794, %s43, 1
          %s796 = scalar_lea.vmem %s7, %s795
        $region48: #{seq2seq_forward.4} parent=15 // pred_fallthru
          _
        // Predicated region
        $region49: #{seq2seq_forward.4} parent=15 // pred_check
          %p797 = pneg %p275
        $region50: #{seq2seq_forward.4} parent=15 // pred_check_branch
          %799 = sbr.rel (%p797) target = $region52
        $region51: #{seq2seq_forward.4} parent=15 // pred_region
          %p800 = scmp.lt.s32.totalorder %s43, 1
          %s801 = scalar_select %p800, %s43, 1
          %s802 = scalar_lea.vmem %s8, %s801
        $region52: #{seq2seq_forward.4} parent=15 // pred_fallthru
          _
        // Predicated region
        $region53: #{seq2seq_forward.4} parent=15 // pred_check
          %p803 = pneg %p301
        $region54: #{seq2seq_forward.4} parent=15 // pred_check_branch
          %805 = sbr.rel (%p803) target = $region56
        $region55: #{seq2seq_forward.4} parent=15 // pred_region
          %p806 = scmp.lt.s32.totalorder %s43, 1
          %s807 = scalar_select %p806, %s43, 1
          %s808 = scalar_lea.vmem %s9, %s807
        $region56: #{seq2seq_forward.4} parent=15 // pred_fallthru
          _
        // Predicated region
        $region57: #{seq2seq_forward.4} parent=15 // pred_check
          %p809 = pneg %p327
        $region58: #{seq2seq_forward.4} parent=15 // pred_check_branch
          %811 = sbr.rel (%p809) target = $region60
        $region59: #{seq2seq_forward.4} parent=15 // pred_region
          %p812 = scmp.lt.s32.totalorder %s43, 1
          %s813 = scalar_select %p812, %s43, 1
          %s814 = smul.addr %s813, 4
          %s815 = smul.addr %s814, 8
          %s816 = scalar_lea.vmem %s10, %s815
        $region60: #{seq2seq_forward.4} parent=15 // pred_fallthru
          _
        // Predicated region
        $region61: #{seq2seq_forward.4} parent=15 // pred_check
          %p817 = pneg %p353
        $region62: #{seq2seq_forward.4} parent=15 // pred_check_branch
          %819 = sbr.rel (%p817) target = $region64
        $region63: #{seq2seq_forward.4} parent=15 // pred_region
          %p820 = scmp.lt.s32.totalorder %s43, 1
          %s821 = scalar_select %p820, %s43, 1
          %s822 = scalar_lea.vmem %s11, %s821
        $region64: #{seq2seq_forward.4} parent=15 // pred_fallthru
          _
        // Predicated region
        $region65: #{seq2seq_forward.4} parent=15 // pred_check
          %p823 = pneg %p379
        $region66: #{seq2seq_forward.4} parent=15 // pred_check_branch
          %825 = sbr.rel (%p823) target = $region68
        $region67: #{seq2seq_forward.4} parent=15 // pred_region
          %p826 = scmp.lt.s32.totalorder %s43, 1
          %s827 = scalar_select %p826, %s43, 1
          %s828 = smul.addr %s827, 4
          %s829 = smul.addr %s828, 8
          %s830 = scalar_lea.vmem %s12, %s829
        $region68: #{seq2seq_forward.4} parent=15 // pred_fallthru
          _
        // Predicated region
        $region69: #{seq2seq_forward.4} parent=15 // pred_check
          %p831 = pneg %p405
        $region70: #{seq2seq_forward.4} parent=15 // pred_check_branch
          %833 = sbr.rel (%p831) target = $region72
        $region71: #{seq2seq_forward.4} parent=15 // pred_region
          %p834 = scmp.lt.s32.totalorder %s43, 1
          %s835 = scalar_select %p834, %s43, 1
          %s836 = scalar_lea.vmem %s13, %s835
        $region72: #{seq2seq_forward.4} parent=15 // pred_fallthru
          _
        // Predicated region
        $region73: #{seq2seq_forward.4} parent=15 // pred_check
          %p837 = pneg %p431
        $region74: #{seq2seq_forward.4} parent=15 // pred_check_branch
          %839 = sbr.rel (%p837) target = $region76
        $region75: #{seq2seq_forward.4} parent=15 // pred_region
          %p840 = scmp.lt.s32.totalorder %s43, 1
          %s841 = scalar_select %p840, %s43, 1
          %s842 = smul.addr %s841, 4
          %s843 = smul.addr %s842, 8
          %s844 = scalar_lea.vmem %s14, %s843
        $region76: #{seq2seq_forward.4} parent=15 // pred_fallthru
          _
        // Predicated region
        $region77: #{seq2seq_forward.4} parent=15 // pred_check
          %p845 = pneg %p457
        $region78: #{seq2seq_forward.4} parent=15 // pred_check_branch
          %847 = sbr.rel (%p845) target = $region80
        $region79: #{seq2seq_forward.4} parent=15 // pred_region
          %p848 = scmp.lt.s32.totalorder %s43, 1
          %s849 = scalar_select %p848, %s43, 1
          %s850 = scalar_lea.vmem %s15, %s849
        $region80: #{seq2seq_forward.4} parent=15 // pred_fallthru
          _
        // Predicated region
        $region81: #{seq2seq_forward.4} parent=15 // pred_check
          %p851 = pneg %p483
        $region82: #{seq2seq_forward.4} parent=15 // pred_check_branch
          %853 = sbr.rel (%p851) target = $region84
        $region83: #{seq2seq_forward.4} parent=15 // pred_region
          %p854 = scmp.lt.s32.totalorder %s43, 1
          %s855 = scalar_select %p854, %s43, 1
          %s856 = scalar_lea.vmem %s16, %s855
        $region84: #{seq2seq_forward.4} parent=15 // pred_fallthru
          _
        // Predicated region
        $region85: #{seq2seq_forward.4} parent=15 // pred_check
          %p857 = pneg %p509
        $region86: #{seq2seq_forward.4} parent=15 // pred_check_branch
          %859 = sbr.rel (%p857) target = $region88
        $region87: #{seq2seq_forward.4} parent=15 // pred_region
          %p860 = scmp.lt.s32.totalorder %s43, 1
          %s861 = scalar_select %p860, %s43, 1
          %s862 = scalar_lea.vmem %s17, %s861
        $region88: #{seq2seq_forward.4} parent=15 // pred_fallthru
          _
        // Predicated region
        $region89: #{seq2seq_forward.4} parent=15 // pred_check
          %p863 = pneg %p535
        $region90: #{seq2seq_forward.4} parent=15 // pred_check_branch
          %865 = sbr.rel (%p863) target = $region92
        $region91: #{seq2seq_forward.4} parent=15 // pred_region
          %p866 = scmp.lt.s32.totalorder %s43, 1
          %s867 = scalar_select %p866, %s43, 1
          %s868 = smul.addr %s867, 4
          %s869 = smul.addr %s868, 8
          %s870 = scalar_lea.vmem %s18, %s869
        $region92: #{seq2seq_forward.4} parent=15 // pred_fallthru
          _
        // Predicated region
        $region93: #{seq2seq_forward.4} parent=15 // pred_check
          %p871 = pneg %p561
        $region94: #{seq2seq_forward.4} parent=15 // pred_check_branch
          %873 = sbr.rel (%p871) target = $region96
        $region95: #{seq2seq_forward.4} parent=15 // pred_region
          %p874 = scmp.lt.s32.totalorder %s43, 1
          %s875 = scalar_select %p874, %s43, 1
          %s876 = scalar_lea.vmem %s19, %s875
        $region96: #{seq2seq_forward.4} parent=15 // pred_fallthru
          _
        // Predicated region
        $region97: #{seq2seq_forward.4} parent=15 // pred_check
          %p877 = pneg %p587
        $region98: #{seq2seq_forward.4} parent=15 // pred_check_branch
          %879 = sbr.rel (%p877) target = $region100
        $region99: #{seq2seq_forward.4} parent=15 // pred_region
          %p880 = scmp.lt.s32.totalorder %s43, 1
          %s881 = scalar_select %p880, %s43, 1
          %s882 = smul.addr %s881, 8
          %s883 = smul.addr %s882, 8
          %s884 = scalar_lea.vmem %s20, %s883
        $region100: #{seq2seq_forward.4} parent=15 // pred_fallthru
          _
        // Predicated region
        $region101: #{seq2seq_forward.4} parent=15 // pred_check
          %p885 = pneg %p613
        $region102: #{seq2seq_forward.4} parent=15 // pred_check_branch
          %887 = sbr.rel (%p885) target = $region104
        $region103: #{seq2seq_forward.4} parent=15 // pred_region
          %p888 = scmp.lt.s32.totalorder %s43, 1
          %s889 = scalar_select %p888, %s43, 1
          %s890 = scalar_lea.vmem %s21, %s889
        $region104: #{seq2seq_forward.4} parent=15 // pred_fallthru
          _
        // Predicated region
        $region105: #{seq2seq_forward.4} parent=15 // pred_check
          %p891 = pneg %p639
        $region106: #{seq2seq_forward.4} parent=15 // pred_check_branch
          %893 = sbr.rel (%p891) target = $region108
        $region107: #{seq2seq_forward.4} parent=15 // pred_region
          %p894 = scmp.lt.s32.totalorder %s43, 1
          %s895 = scalar_select %p894, %s43, 1
          %s896 = scalar_lea.vmem %s22, %s895
        $region108: #{seq2seq_forward.4} parent=15 // pred_fallthru
          _
        // Predicated region
        $region109: #{seq2seq_forward.4} parent=15 // pred_check
          %p897 = pneg %p665
        $region110: #{seq2seq_forward.4} parent=15 // pred_check_branch
          %899 = sbr.rel (%p897) target = $region112
        $region111: #{seq2seq_forward.4} parent=15 // pred_region
          %p900 = scmp.lt.s32.totalorder %s43, 1
          %s901 = scalar_select %p900, %s43, 1
          %s902 = scalar_lea.vmem %s23, %s901
        $region112: #{seq2seq_forward.4} parent=15 // pred_fallthru
          _
      $region16: #{seq2seq_forward.4} parent=5 // pred_fallthru
        _
      %p903 = scmp.le.s32.totalorder 1, %s35
      %p904 = scmp.lt.s32.totalorder %s35, 5
      %p905 = pnand %p903, %p904
      %p906 = pneg %p905
      // Predicated region
      $region113: #{seq2seq_forward.4} parent=5 // pred_check
        _
      $region114: #{seq2seq_forward.4} parent=5 // pred_check_branch
        %908 = sbr.rel (%p905) target = $region116
      $region115: #{seq2seq_forward.4} parent=5 // pred_region
        %s909 = ssub.s32 %s35, 1
        %p910 = scmp.lt.s32.totalorder %s44, 1
        %s911 = scalar_select %p910, %s44, 1
        %s912 = smul.addr %s911, 8
        %s913 = scalar_lea.vmem %s0, %s912
        %p914 = pneg %p73
        %p915 = pneg %p70
        %p916 = scmp.lt.s32.totalorder %s44, 1
        %s917 = scalar_select %p916, %s44, 1
        %s918 = smul.addr %s917, 8
        %s919 = scalar_lea.vmem %s1, %s918
        %p920 = pneg %p99
        %p921 = pneg %p96
        %p922 = scmp.lt.s32.totalorder %s44, 1
        %s923 = scalar_select %p922, %s44, 1
        %s924 = smul.addr %s923, 8
        %s925 = scalar_lea.vmem %s2, %s924
        %p926 = pneg %p125
        %p927 = pneg %p122
        %p928 = scmp.lt.s32.totalorder %s44, 1
        %s929 = scalar_select %p928, %s44, 1
        %s930 = scalar_lea.vmem %s3, %s929
        %p931 = pneg %p151
        %p932 = pneg %p148
        %p933 = scmp.lt.s32.totalorder %s45, 1
        %s934 = scalar_select %p933, %s45, 1
        %s935 = smul.addr %s934, 4
        %s936 = smul.addr %s935, 8
        %s937 = scalar_lea.vmem %s4, %s936
        %p938 = pneg %p177
        %p939 = pneg %p174
        %p940 = scmp.lt.s32.totalorder %s45, 1
        %s941 = scalar_select %p940, %s45, 1
        %s942 = scalar_lea.vmem %s5, %s941
        %p943 = pneg %p203
        %p944 = pneg %p200
        %p945 = scmp.lt.s32.totalorder %s45, 1
        %s946 = scalar_select %p945, %s45, 1
        %s947 = smul.addr %s946, 4
        %s948 = smul.addr %s947, 8
        %s949 = scalar_lea.vmem %s6, %s948
        %p950 = pneg %p229
        %p951 = pneg %p226
        %p952 = scmp.lt.s32.totalorder %s45, 1
        %s953 = scalar_select %p952, %s45, 1
        %s954 = scalar_lea.vmem %s7, %s953
        %p955 = pneg %p255
        %p956 = pneg %p252
        %p957 = scmp.lt.s32.totalorder %s45, 1
        %s958 = scalar_select %p957, %s45, 1
        %s959 = scalar_lea.vmem %s8, %s958
        %p960 = pneg %p281
        %p961 = pneg %p278
        %p962 = scmp.lt.s32.totalorder %s45, 1
        %s963 = scalar_select %p962, %s45, 1
        %s964 = scalar_lea.vmem %s9, %s963
        %p965 = pneg %p307
        %p966 = pneg %p304
        %p967 = scmp.lt.s32.totalorder %s45, 1
        %s968 = scalar_select %p967, %s45, 1
        %s969 = smul.addr %s968, 4
        %s970 = smul.addr %s969, 8
        %s971 = scalar_lea.vmem %s10, %s970
        %p972 = pneg %p333
        %p973 = pneg %p330
        %p974 = scmp.lt.s32.totalorder %s45, 1
        %s975 = scalar_select %p974, %s45, 1
        %s976 = scalar_lea.vmem %s11, %s975
        %p977 = pneg %p359
        %p978 = pneg %p356
        %p979 = scmp.lt.s32.totalorder %s45, 1
        %s980 = scalar_select %p979, %s45, 1
        %s981 = smul.addr %s980, 4
        %s982 = smul.addr %s981, 8
        %s983 = scalar_lea.vmem %s12, %s982
        %p984 = pneg %p385
        %p985 = pneg %p382
        %p986 = scmp.lt.s32.totalorder %s45, 1
        %s987 = scalar_select %p986, %s45, 1
        %s988 = scalar_lea.vmem %s13, %s987
        %p989 = pneg %p411
        %p990 = pneg %p408
        %p991 = scmp.lt.s32.totalorder %s45, 1
        %s992 = scalar_select %p991, %s45, 1
        %s993 = smul.addr %s992, 4
        %s994 = smul.addr %s993, 8
        %s995 = scalar_lea.vmem %s14, %s994
        %p996 = pneg %p437
        %p997 = pneg %p434
        %p998 = scmp.lt.s32.totalorder %s45, 1
        %s999 = scalar_select %p998, %s45, 1
        %s1000 = scalar_lea.vmem %s15, %s999
        %p1001 = pneg %p463
        %p1002 = pneg %p460
        %p1003 = scmp.lt.s32.totalorder %s45, 1
        %s1004 = scalar_select %p1003, %s45, 1
        %s1005 = scalar_lea.vmem %s16, %s1004
        %p1006 = pneg %p489
        %p1007 = pneg %p486
        %p1008 = scmp.lt.s32.totalorder %s45, 1
        %s1009 = scalar_select %p1008, %s45, 1
        %s1010 = scalar_lea.vmem %s17, %s1009
        %p1011 = pneg %p515
        %p1012 = pneg %p512
        %p1013 = scmp.lt.s32.totalorder %s45, 1
        %s1014 = scalar_select %p1013, %s45, 1
        %s1015 = smul.addr %s1014, 4
        %s1016 = smul.addr %s1015, 8
        %s1017 = scalar_lea.vmem %s18, %s1016
        %p1018 = pneg %p541
        %p1019 = pneg %p538
        %p1020 = scmp.lt.s32.totalorder %s45, 1
        %s1021 = scalar_select %p1020, %s45, 1
        %s1022 = scalar_lea.vmem %s19, %s1021
        %p1023 = pneg %p567
        %p1024 = pneg %p564
        %p1025 = scmp.lt.s32.totalorder %s45, 1
        %s1026 = scalar_select %p1025, %s45, 1
        %s1027 = smul.addr %s1026, 8
        %s1028 = smul.addr %s1027, 8
        %s1029 = scalar_lea.vmem %s20, %s1028
        %p1030 = pneg %p593
        %p1031 = pneg %p590
        %p1032 = scmp.lt.s32.totalorder %s45, 1
        %s1033 = scalar_select %p1032, %s45, 1
        %s1034 = scalar_lea.vmem %s21, %s1033
        %p1035 = pneg %p619
        %p1036 = pneg %p616
        %p1037 = scmp.lt.s32.totalorder %s45, 1
        %s1038 = scalar_select %p1037, %s45, 1
        %s1039 = scalar_lea.vmem %s22, %s1038
        %p1040 = pneg %p645
        %p1041 = pneg %p642
        %p1042 = scmp.lt.s32.totalorder %s45, 1
        %s1043 = scalar_select %p1042, %s45, 1
        %s1044 = scalar_lea.vmem %s23, %s1043
        %p1045 = pneg %p671
        %p1046 = pneg %p668
        %p1047 = pneg %p697
        %p1048 = pneg %p694
        %p1049 = scmp.lt.s32.totalorder %s44, 1
        %s1050 = scalar_select %p1049, %s44, 1
        %s1051 = smul.addr %s1050, 8
        %s1052 = scalar_lea.vmem %s24, %s1051
        %p1053 = pneg %p723
        %p1054 = pneg %p720
        %s1055 = sand.u32 %s710, 1
        %s1056 = scalar_lea.sflag [#allocation3], %s1055
        %s1057 = sand.u32 %s710, 1
        %s1058 = smul.addr %s1057, 32
        %s1059 = scalar_lea.vmem [#allocation2], %s1058
        %p1060 = scmp.lt.s32.totalorder %s44, 1
        %s1061 = scalar_select %p1060, %s44, 1
        %s1062 = smul.addr %s1061, 8
        %s1063 = scalar_lea.vmem %s0, %s1062
        %p1064 = scmp.lt.s32.totalorder %s44, 1
        %s1065 = scalar_select %p1064, %s44, 1
        %s1066 = smul.addr %s1065, 8
        %s1067 = scalar_lea.vmem %s1, %s1066
        %p1068 = scmp.lt.s32.totalorder %s44, 1
        %s1069 = scalar_select %p1068, %s44, 1
        %s1070 = smul.addr %s1069, 8
        %s1071 = scalar_lea.vmem %s2, %s1070
        %p1072 = scmp.lt.s32.totalorder %s44, 1
        %s1073 = scalar_select %p1072, %s44, 1
        %s1074 = scalar_lea.vmem %s3, %s1073
        %p1075 = scmp.lt.s32.totalorder %s45, 1
        %s1076 = scalar_select %p1075, %s45, 1
        %s1077 = smul.addr %s1076, 4
        %s1078 = smul.addr %s1077, 8
        %s1079 = scalar_lea.vmem %s4, %s1078
        %p1080 = scmp.lt.s32.totalorder %s45, 1
        %s1081 = scalar_select %p1080, %s45, 1
        %s1082 = scalar_lea.vmem %s5, %s1081
        %p1083 = scmp.lt.s32.totalorder %s45, 1
        %s1084 = scalar_select %p1083, %s45, 1
        %s1085 = smul.addr %s1084, 4
        %s1086 = smul.addr %s1085, 8
        %s1087 = scalar_lea.vmem %s6, %s1086
        %p1088 = scmp.lt.s32.totalorder %s45, 1
        %s1089 = scalar_select %p1088, %s45, 1
        %s1090 = scalar_lea.vmem %s7, %s1089
        %p1091 = scmp.lt.s32.totalorder %s45, 1
        %s1092 = scalar_select %p1091, %s45, 1
        %s1093 = scalar_lea.vmem %s8, %s1092
        %p1094 = scmp.lt.s32.totalorder %s45, 1
        %s1095 = scalar_select %p1094, %s45, 1
        %s1096 = scalar_lea.vmem %s9, %s1095
        %p1097 = scmp.lt.s32.totalorder %s45, 1
        %s1098 = scalar_select %p1097, %s45, 1
        %s1099 = smul.addr %s1098, 4
        %s1100 = smul.addr %s1099, 8
        %s1101 = scalar_lea.vmem %s10, %s1100
        %p1102 = scmp.lt.s32.totalorder %s45, 1
        %s1103 = scalar_select %p1102, %s45, 1
        %s1104 = scalar_lea.vmem %s11, %s1103
        %p1105 = scmp.lt.s32.totalorder %s45, 1
        %s1106 = scalar_select %p1105, %s45, 1
        %s1107 = smul.addr %s1106, 4
        %s1108 = smul.addr %s1107, 8
        %s1109 = scalar_lea.vmem %s12, %s1108
        %p1110 = scmp.lt.s32.totalorder %s45, 1
        %s1111 = scalar_select %p1110, %s45, 1
        %s1112 = scalar_lea.vmem %s13, %s1111
        %p1113 = scmp.lt.s32.totalorder %s45, 1
        %s1114 = scalar_select %p1113, %s45, 1
        %s1115 = smul.addr %s1114, 4
        %s1116 = smul.addr %s1115, 8
        %s1117 = scalar_lea.vmem %s14, %s1116
        %p1118 = scmp.lt.s32.totalorder %s45, 1
        %s1119 = scalar_select %p1118, %s45, 1
        %s1120 = scalar_lea.vmem %s15, %s1119
        %p1121 = scmp.lt.s32.totalorder %s45, 1
        %s1122 = scalar_select %p1121, %s45, 1
        %s1123 = scalar_lea.vmem %s16, %s1122
        %p1124 = scmp.lt.s32.totalorder %s45, 1
        %s1125 = scalar_select %p1124, %s45, 1
        %s1126 = scalar_lea.vmem %s17, %s1125
        %p1127 = scmp.lt.s32.totalorder %s45, 1
        %s1128 = scalar_select %p1127, %s45, 1
        %s1129 = smul.addr %s1128, 4
        %s1130 = smul.addr %s1129, 8
        %s1131 = scalar_lea.vmem %s18, %s1130
        %p1132 = scmp.lt.s32.totalorder %s45, 1
        %s1133 = scalar_select %p1132, %s45, 1
        %s1134 = scalar_lea.vmem %s19, %s1133
        %p1135 = scmp.lt.s32.totalorder %s45, 1
        %s1136 = scalar_select %p1135, %s45, 1
        %s1137 = smul.addr %s1136, 8
        %s1138 = smul.addr %s1137, 8
        %s1139 = scalar_lea.vmem %s20, %s1138
        %p1140 = scmp.lt.s32.totalorder %s45, 1
        %s1141 = scalar_select %p1140, %s45, 1
        %s1142 = scalar_lea.vmem %s21, %s1141
        %p1143 = scmp.lt.s32.totalorder %s45, 1
        %s1144 = scalar_select %p1143, %s45, 1
        %s1145 = scalar_lea.vmem %s22, %s1144
        %p1146 = scmp.lt.s32.totalorder %s45, 1
        %s1147 = scalar_select %p1146, %s45, 1
        %s1148 = scalar_lea.vmem %s23, %s1147
        %p1149 = scmp.lt.s32.totalorder %s44, 1
        %s1150 = scalar_select %p1149, %s44, 1
        %s1151 = smul.addr %s1150, 8
        %s1152 = scalar_lea.vmem %s24, %s1151
        %p1153 = scmp.eq.s32.totalorder %s45, 0
        // Predicated region
        $region117: #{seq2seq_forward.4} parent=115 // pred_check
          %p1154 = pneg %p1153
        $region118: #{seq2seq_forward.4} parent=115 // pred_check_branch
          %1156 = sbr.rel (%p1154) target = $region120
        $region119: #{seq2seq_forward.4} parent=115 // pred_region
          %v1157 = vld [vmem:[%s1063] sm:$0xff]
          %vm1158 = vcmask 261120
          %1159 = vst.msk [vmem:[%s1152] sm:$0xff] %vm1158, %v1157
        $region120: #{seq2seq_forward.4} parent=115 // pred_fallthru
          _
        %v1160 = vld [vmem:[%s1152] sm:$0xff]
        %v1161 = vld [vmem:[%s1067] sm:$0xff]
        %v1162 = vld [vmem:[%s1071] sm:$0xff]
        %v1163 = vld [vmem:[%s1074] sm:$0x1]
        %v1164 = vld [vmem:[%s1079] sm:$0xff]
        %v1165 = vld [vmem:[%s1079 + $0x8] sm:$0xff]
        %v1166 = vld [vmem:[%s1079 + $0x10] sm:$0xff]
        %v1167 = vld [vmem:[%s1079 + $0x18] sm:$0xff]
        %v1168 = vld [vmem:[%s1082] sm:$0x1]
        %v1169 = vld [vmem:[%s1087] sm:$0xff]
        %v1170 = vld [vmem:[%s1087 + $0x8] sm:$0xff]
        %v1171 = vld [vmem:[%s1087 + $0x10] sm:$0xff]
        %v1172 = vld [vmem:[%s1087 + $0x18] sm:$0xff]
        %v1173 = vld [vmem:[%s1090] sm:$0x1]
        %v1175 = vlaneseq
        %v1176 = vshrl.u32 %v1175, 7
        %v1177 = vsub.s32 0, %v1176
        %v1178 = vrot.slane %v1168, %v1177
        %vm1180 = vcmask 261120
        %v1182 = vsel %vm1180, %v1160, 0
        %1184 = vmatprep.subr.mxu0 0.0
        %1185 = vmatpush1.msra.mxu0 %v1164
        %1186 = vmatprep.subr.mxu0 0.0
        %1187 = vmatpush1.msra.mxu0 %v1165
        %1188 = vmatprep.subr.mxu0 0.0
        %1189 = vmatpush1.msra.mxu0 %v1166
        %1190 = vmatprep.subr.mxu0 0.0
        %1191 = vmatpush1.msra.mxu0 %v1167
        %1192 = vmatprep.subr.mxu0 0.0
        %1193 = vmatpush1.msra.mxu0 0.0
        %1194 = vmatprep.subr.mxu0 0.0
        %1195 = vmatpush1.msra.mxu0 0.0
        %1196 = vmatprep.subr.mxu0 0.0
        %1197 = vmatpush1.msra.mxu0 0.0
        %1198 = vmatprep.subr.mxu0 0.0
        %1199 = vmatpush1.msra.mxu0 0.0
        %1200 = vmatprep.subr.mxu0 0.0
        %1201 = vmatpush1.msra.mxu0 0.0
        %1202 = vmatprep.subr.mxu0 0.0
        %1203 = vmatpush1.msra.mxu0 0.0
        %1204 = vmatprep.subr.mxu0 0.0
        %1205 = vmatpush1.msra.mxu0 0.0
        %1206 = vmatprep.subr.mxu0 0.0
        %1207 = vmatpush1.msra.mxu0 0.0
        %1208 = vmatprep.subr.mxu0 0.0
        %1209 = vmatpush1.msra.mxu0 0.0
        %1210 = vmatprep.subr.mxu0 0.0
        %1211 = vmatpush1.msra.mxu0 0.0
        %1212 = vmatprep.subr.mxu0 0.0
        %1213 = vmatpush1.msra.mxu0 0.0
        %1214 = vmatprep.subr.mxu0 0.0
        %1215 = vmatpush1.msra.mxu0 0.0
        %1216 = vmatprep.subr.mxu0 0.0
        %1217 = vmatpush1.msra.mxu0 0.0
        %1218 = vmatprep.subr.mxu0 0.0
        %1219 = vmatpush1.msra.mxu0 0.0
        %1220 = vmatprep.subr.mxu0 0.0
        %1221 = vmatpush1.msra.mxu0 0.0
        %1222 = vmatprep.subr.mxu0 0.0
        %1223 = vmatpush1.msra.mxu0 0.0
        %1224 = vmatprep.subr.mxu0 0.0
        %1225 = vmatpush1.msra.mxu0 0.0
        %1226 = vmatprep.subr.mxu0 0.0
        %1227 = vmatpush1.msra.mxu0 0.0
        %1228 = vmatprep.subr.mxu0 0.0
        %1229 = vmatpush1.msra.mxu0 0.0
        %1230 = vmatprep.subr.mxu0 0.0
        %1231 = vmatpush1.msra.mxu0 0.0
        %1232 = vmatprep.subr.mxu0 0.0
        %1233 = vmatpush1.msra.mxu0 0.0
        %1234 = vmatprep.subr.mxu0 0.0
        %1235 = vmatpush1.msra.mxu0 0.0
        %1236 = vmatprep.subr.mxu0 0.0
        %1237 = vmatpush1.msra.mxu0 0.0
        %1238 = vmatprep.subr.mxu0 0.0
        %1239 = vmatpush1.msra.mxu0 0.0
        %1240 = vmatprep.subr.mxu0 0.0
        %1241 = vmatpush1.msra.mxu0 0.0
        %1242 = vmatprep.subr.mxu0 0.0
        %1243 = vmatpush1.msra.mxu0 0.0
        %1244 = vmatprep.subr.mxu0 0.0
        %1245 = vmatpush1.msra.mxu0 0.0
        %1246 = vmatprep.subr.mxu0 0.0
        %1247 = vmatpush1.msra.mxu0 0.0
        %1248 = vmatprep.mubr.f32.mxu0 0.0
        %1249 = vmatmul.mubr.f32.gmra.mrb[0].mxu0 %v1182
        %v1250 = vpop.f32.mrb[0].mxu0
        %v1251 = vadd.f32 %v1178, %v1250
        %v1252 = vpop.f32.mrb[0].mxu0
        %1253 = vdwg.mxu0
        %1255 = vrot.lane.b32.xlu0 %v1251, 96
        %v1256 = vpop.permute.xlu0 %1255
        %vm1257 = vcmask 64512
        %v1258 = vsel %vm1257, %v1251, 0
        %v1260 = vsel %vm1257, %v1256, 0
        %1262 = vmatprep.subr.mxu0 0.0
        %1263 = vmatpush1.xpose.msra.mxu0 %v1260
        %1264 = vmatprep.subr.mxu0 0.0
        %1265 = vmatpush1.xpose.msra.mxu0 0.0
        %1266 = vmatprep.subr.mxu0 0.0
        %1267 = vmatpush1.xpose.msra.mxu0 0.0
        %1268 = vmatprep.subr.mxu0 0.0
        %1269 = vmatpush1.xpose.msra.mxu0 0.0
        %1270 = vmatprep.subr.mxu0 0.0
        %1271 = vmatpush1.xpose.msra.mxu0 0.0
        %1272 = vmatprep.subr.mxu0 0.0
        %1273 = vmatpush1.xpose.msra.mxu0 0.0
        %1274 = vmatprep.subr.mxu0 0.0
        %1275 = vmatpush1.xpose.msra.mxu0 0.0
        %1276 = vmatprep.subr.mxu0 0.0
        %1277 = vmatpush1.xpose.msra.mxu0 0.0
        %1278 = vmatprep.subr.mxu0 0.0
        %1279 = vmatpush1.xpose.msra.mxu0 0.0
        %1280 = vmatprep.subr.mxu0 0.0
        %1281 = vmatpush1.xpose.msra.mxu0 0.0
        %1282 = vmatprep.subr.mxu0 0.0
        %1283 = vmatpush1.xpose.msra.mxu0 0.0
        %1284 = vmatprep.subr.mxu0 0.0
        %1285 = vmatpush1.xpose.msra.mxu0 0.0
        %1286 = vmatprep.subr.mxu0 0.0
        %1287 = vmatpush1.xpose.msra.mxu0 0.0
        %1288 = vmatprep.subr.mxu0 0.0
        %1289 = vmatpush1.xpose.msra.mxu0 0.0
        %1290 = vmatprep.subr.mxu0 0.0
        %1291 = vmatpush1.xpose.msra.mxu0 0.0
        %1292 = vmatprep.subr.mxu0 0.0
        %1293 = vmatpush1.xpose.msra.mxu0 0.0
        %1294 = vmatprep.subr.mxu0 0.0
        %1295 = vmatpush1.xpose.msra.mxu0 0.0
        %1296 = vmatprep.subr.mxu0 0.0
        %1297 = vmatpush1.xpose.msra.mxu0 0.0
        %1298 = vmatprep.subr.mxu0 0.0
        %1299 = vmatpush1.xpose.msra.mxu0 0.0
        %1300 = vmatprep.subr.mxu0 0.0
        %1301 = vmatpush1.xpose.msra.mxu0 0.0
        %1302 = vmatprep.subr.mxu0 0.0
        %1303 = vmatpush1.xpose.msra.mxu0 0.0
        %1304 = vmatprep.subr.mxu0 0.0
        %1305 = vmatpush1.xpose.msra.mxu0 0.0
        %1306 = vmatprep.subr.mxu0 0.0
        %1307 = vmatpush1.xpose.msra.mxu0 0.0
        %1308 = vmatprep.subr.mxu0 0.0
        %1309 = vmatpush1.xpose.msra.mxu0 0.0
        %1310 = vmatprep.subr.mxu0 0.0
        %1311 = vmatpush1.xpose.msra.mxu0 0.0
        %1312 = vmatprep.subr.mxu0 0.0
        %1313 = vmatpush1.xpose.msra.mxu0 0.0
        %1314 = vmatprep.subr.mxu0 0.0
        %1315 = vmatpush1.xpose.msra.mxu0 0.0
        %1316 = vmatprep.subr.mxu0 0.0
        %1317 = vmatpush1.xpose.msra.mxu0 0.0
        %1318 = vmatprep.subr.mxu0 0.0
        %1319 = vmatpush1.xpose.msra.mxu0 0.0
        %1320 = vmatprep.subr.mxu0 0.0
        %1321 = vmatpush1.xpose.msra.mxu0 0.0
        %1322 = vmatprep.subr.mxu0 0.0
        %1323 = vmatpush1.xpose.msra.mxu0 0.0
        %1324 = vmatprep.subr.mxu0 0.0
        %1325 = vmatpush1.xpose.msra.mxu0 0.0
        %1326 = vmatprep.mubr.f32.mxu0 0.0
        %1327 = vmatmul.mubr.f32.gmra.mrb[0].mxu0 %v1258
        %v1328 = vpop.f32.mrb[0].mxu0
        %v1329 = vadd.f32 0.0, %v1328
        %v1330 = vpop.f32.mrb[0].mxu0
        %1331 = vdwg.mxu0
        %v1332 = vmul.f32 %v1329, 0.35355338
        %v1333 = vadd.f32 %v1332, %v1162
        %v1334 = vsel %vm1257, %v1333, -inf
        %1335 = vmax.xlane.f32.xlu0 %v1334
        %v1336 = vpop.xlane.xlu0 %1335
        %v1337 = vsub.f32 %v1333, %v1336
        %v1338 = vmul.f32 %v1337, 1.442695
        %v1339 = vpow.pop %v1338
        %v1340 = vsel %vm1257, %v1339, 0.0
        %1341 = vadd.xlane.f32.xlu0 %v1340
        %v1342 = vpop.xlane.xlu0 %1341
        %v1343 = vrcp.pop %v1342
        %v1344 = vmul.f32 %v1339, %v1343
        %1345 = vrot.lane.b32.xlu0 %v1251, 64
        %v1346 = vpop.permute.xlu0 %1345
        %v1349 = vsel %vm1257, %v1344, 0
        %1351 = vmatprep.subr.mxu0 0.0
        %1352 = vmatpush1.msra.mxu0 %v1346
        %1353 = vmatprep.subr.mxu0 0.0
        %1354 = vmatpush1.msra.mxu0 0.0
        %1355 = vmatprep.subr.mxu0 0.0
        %1356 = vmatpush1.msra.mxu0 0.0
        %1357 = vmatprep.subr.mxu0 0.0
        %1358 = vmatpush1.msra.mxu0 0.0
        %1359 = vmatprep.subr.mxu0 0.0
        %1360 = vmatpush1.msra.mxu0 0.0
        %1361 = vmatprep.subr.mxu0 0.0
        %1362 = vmatpush1.msra.mxu0 0.0
        %1363 = vmatprep.subr.mxu0 0.0
        %1364 = vmatpush1.msra.mxu0 0.0
        %1365 = vmatprep.subr.mxu0 0.0
        %1366 = vmatpush1.msra.mxu0 0.0
        %1367 = vmatprep.subr.mxu0 0.0
        %1368 = vmatpush1.msra.mxu0 0.0
        %1369 = vmatprep.subr.mxu0 0.0
        %1370 = vmatpush1.msra.mxu0 0.0
        %1371 = vmatprep.subr.mxu0 0.0
        %1372 = vmatpush1.msra.mxu0 0.0
        %1373 = vmatprep.subr.mxu0 0.0
        %1374 = vmatpush1.msra.mxu0 0.0
        %1375 = vmatprep.subr.mxu0 0.0
        %1376 = vmatpush1.msra.mxu0 0.0
        %1377 = vmatprep.subr.mxu0 0.0
        %1378 = vmatpush1.msra.mxu0 0.0
        %1379 = vmatprep.subr.mxu0 0.0
        %1380 = vmatpush1.msra.mxu0 0.0
        %1381 = vmatprep.subr.mxu0 0.0
        %1382 = vmatpush1.msra.mxu0 0.0
        %1383 = vmatprep.subr.mxu0 0.0
        %1384 = vmatpush1.msra.mxu0 0.0
        %1385 = vmatprep.subr.mxu0 0.0
        %1386 = vmatpush1.msra.mxu0 0.0
        %1387 = vmatprep.subr.mxu0 0.0
        %1388 = vmatpush1.msra.mxu0 0.0
        %1389 = vmatprep.subr.mxu0 0.0
        %1390 = vmatpush1.msra.mxu0 0.0
        %1391 = vmatprep.subr.mxu0 0.0
        %1392 = vmatpush1.msra.mxu0 0.0
        %1393 = vmatprep.subr.mxu0 0.0
        %1394 = vmatpush1.msra.mxu0 0.0
        %1395 = vmatprep.subr.mxu0 0.0
        %1396 = vmatpush1.msra.mxu0 0.0
        %1397 = vmatprep.subr.mxu0 0.0
        %1398 = vmatpush1.msra.mxu0 0.0
        %1399 = vmatprep.subr.mxu0 0.0
        %1400 = vmatpush1.msra.mxu0 0.0
        %1401 = vmatprep.subr.mxu0 0.0
        %1402 = vmatpush1.msra.mxu0 0.0
        %1403 = vmatprep.subr.mxu0 0.0
        %1404 = vmatpush1.msra.mxu0 0.0
        %1405 = vmatprep.subr.mxu0 0.0
        %1406 = vmatpush1.msra.mxu0 0.0
        %1407 = vmatprep.subr.mxu0 0.0
        %1408 = vmatpush1.msra.mxu0 0.0
        %1409 = vmatprep.subr.mxu0 0.0
        %1410 = vmatpush1.msra.mxu0 0.0
        %1411 = vmatprep.subr.mxu0 0.0
        %1412 = vmatpush1.msra.mxu0 0.0
        %1413 = vmatprep.subr.mxu0 0.0
        %1414 = vmatpush1.msra.mxu0 0.0
        %1415 = vmatprep.mubr.f32.mxu0 0.0
        %1416 = vmatmul.mubr.f32.gmra.mrb[0].mxu0 %v1349
        %v1417 = vpop.f32.mrb[0].mxu0
        %v1418 = vadd.f32 0.0, %v1417
        %v1419 = vpop.f32.mrb[0].mxu0
        %1420 = vdwg.mxu0
        %1421 = vrot.lane.b32.xlu0 %v1251, 120
        %v1422 = vpop.permute.xlu0 %1421
        %1423 = vrot.lane.b32.xlu0 %v1251, 88
        %v1424 = vpop.permute.xlu0 %1423
        %v1425 = vsel %vm1257, %v1422, 0
        %v1427 = vsel %vm1257, %v1424, 0
        %1429 = vmatprep.subr.mxu0 0.0
        %1430 = vmatpush1.xpose.msra.mxu0 %v1427
        %1431 = vmatprep.subr.mxu0 0.0
        %1432 = vmatpush1.xpose.msra.mxu0 0.0
        %1433 = vmatprep.subr.mxu0 0.0
        %1434 = vmatpush1.xpose.msra.mxu0 0.0
        %1435 = vmatprep.subr.mxu0 0.0
        %1436 = vmatpush1.xpose.msra.mxu0 0.0
        %1437 = vmatprep.subr.mxu0 0.0
        %1438 = vmatpush1.xpose.msra.mxu0 0.0
        %1439 = vmatprep.subr.mxu0 0.0
        %1440 = vmatpush1.xpose.msra.mxu0 0.0
        %1441 = vmatprep.subr.mxu0 0.0
        %1442 = vmatpush1.xpose.msra.mxu0 0.0
        %1443 = vmatprep.subr.mxu0 0.0
        %1444 = vmatpush1.xpose.msra.mxu0 0.0
        %1445 = vmatprep.subr.mxu0 0.0
        %1446 = vmatpush1.xpose.msra.mxu0 0.0
        %1447 = vmatprep.subr.mxu0 0.0
        %1448 = vmatpush1.xpose.msra.mxu0 0.0
        %1449 = vmatprep.subr.mxu0 0.0
        %1450 = vmatpush1.xpose.msra.mxu0 0.0
        %1451 = vmatprep.subr.mxu0 0.0
        %1452 = vmatpush1.xpose.msra.mxu0 0.0
        %1453 = vmatprep.subr.mxu0 0.0
        %1454 = vmatpush1.xpose.msra.mxu0 0.0
        %1455 = vmatprep.subr.mxu0 0.0
        %1456 = vmatpush1.xpose.msra.mxu0 0.0
        %1457 = vmatprep.subr.mxu0 0.0
        %1458 = vmatpush1.xpose.msra.mxu0 0.0
        %1459 = vmatprep.subr.mxu0 0.0
        %1460 = vmatpush1.xpose.msra.mxu0 0.0
        %1461 = vmatprep.subr.mxu0 0.0
        %1462 = vmatpush1.xpose.msra.mxu0 0.0
        %1463 = vmatprep.subr.mxu0 0.0
        %1464 = vmatpush1.xpose.msra.mxu0 0.0
        %1465 = vmatprep.subr.mxu0 0.0
        %1466 = vmatpush1.xpose.msra.mxu0 0.0
        %1467 = vmatprep.subr.mxu0 0.0
        %1468 = vmatpush1.xpose.msra.mxu0 0.0
        %1469 = vmatprep.subr.mxu0 0.0
        %1470 = vmatpush1.xpose.msra.mxu0 0.0
        %1471 = vmatprep.subr.mxu0 0.0
        %1472 = vmatpush1.xpose.msra.mxu0 0.0
        %1473 = vmatprep.subr.mxu0 0.0
        %1474 = vmatpush1.xpose.msra.mxu0 0.0
        %1475 = vmatprep.subr.mxu0 0.0
        %1476 = vmatpush1.xpose.msra.mxu0 0.0
        %1477 = vmatprep.subr.mxu0 0.0
        %1478 = vmatpush1.xpose.msra.mxu0 0.0
        %1479 = vmatprep.subr.mxu0 0.0
        %1480 = vmatpush1.xpose.msra.mxu0 0.0
        %1481 = vmatprep.subr.mxu0 0.0
        %1482 = vmatpush1.xpose.msra.mxu0 0.0
        %1483 = vmatprep.subr.mxu0 0.0
        %1484 = vmatpush1.xpose.msra.mxu0 0.0
        %1485 = vmatprep.subr.mxu0 0.0
        %1486 = vmatpush1.xpose.msra.mxu0 0.0
        %1487 = vmatprep.subr.mxu0 0.0
        %1488 = vmatpush1.xpose.msra.mxu0 0.0
        %1489 = vmatprep.subr.mxu0 0.0
        %1490 = vmatpush1.xpose.msra.mxu0 0.0
        %1491 = vmatprep.subr.mxu0 0.0
        %1492 = vmatpush1.xpose.msra.mxu0 0.0
        %1493 = vmatprep.mubr.f32.mxu0 0.0
        %1494 = vmatmul.mubr.f32.gmra.mrb[0].mxu0 %v1425
        %v1495 = vpop.f32.mrb[0].mxu0
        %v1496 = vadd.f32 0.0, %v1495
        %v1497 = vpop.f32.mrb[0].mxu0
        %1498 = vdwg.mxu0
        %v1499 = vmul.f32 %v1496, 0.35355338
        %v1500 = vadd.f32 %v1499, %v1162
        %v1501 = vsel %vm1257, %v1500, -inf
        %1502 = vmax.xlane.f32.xlu0 %v1501
        %v1503 = vpop.xlane.xlu0 %1502
        %v1504 = vsub.f32 %v1500, %v1503
        %v1505 = vmul.f32 %v1504, 1.442695
        %v1506 = vpow.pop %v1505
        %v1507 = vsel %vm1257, %v1506, 0.0
        %1508 = vadd.xlane.f32.xlu0 %v1507
        %v1509 = vpop.xlane.xlu0 %1508
        %v1510 = vrcp.pop %v1509
        %v1511 = vmul.f32 %v1506, %v1510
        %1512 = vrot.lane.b32.xlu0 %v1251, 56
        %v1513 = vpop.permute.xlu0 %1512
        %v1516 = vsel %vm1257, %v1511, 0
        %1518 = vmatprep.subr.mxu0 0.0
        %1519 = vmatpush1.msra.mxu0 %v1513
        %1520 = vmatprep.subr.mxu0 0.0
        %1521 = vmatpush1.msra.mxu0 0.0
        %1522 = vmatprep.subr.mxu0 0.0
        %1523 = vmatpush1.msra.mxu0 0.0
        %1524 = vmatprep.subr.mxu0 0.0
        %1525 = vmatpush1.msra.mxu0 0.0
        %1526 = vmatprep.subr.mxu0 0.0
        %1527 = vmatpush1.msra.mxu0 0.0
        %1528 = vmatprep.subr.mxu0 0.0
        %1529 = vmatpush1.msra.mxu0 0.0
        %1530 = vmatprep.subr.mxu0 0.0
        %1531 = vmatpush1.msra.mxu0 0.0
        %1532 = vmatprep.subr.mxu0 0.0
        %1533 = vmatpush1.msra.mxu0 0.0
        %1534 = vmatprep.subr.mxu0 0.0
        %1535 = vmatpush1.msra.mxu0 0.0
        %1536 = vmatprep.subr.mxu0 0.0
        %1537 = vmatpush1.msra.mxu0 0.0
        %1538 = vmatprep.subr.mxu0 0.0
        %1539 = vmatpush1.msra.mxu0 0.0
        %1540 = vmatprep.subr.mxu0 0.0
        %1541 = vmatpush1.msra.mxu0 0.0
        %1542 = vmatprep.subr.mxu0 0.0
        %1543 = vmatpush1.msra.mxu0 0.0
        %1544 = vmatprep.subr.mxu0 0.0
        %1545 = vmatpush1.msra.mxu0 0.0
        %1546 = vmatprep.subr.mxu0 0.0
        %1547 = vmatpush1.msra.mxu0 0.0
        %1548 = vmatprep.subr.mxu0 0.0
        %1549 = vmatpush1.msra.mxu0 0.0
        %1550 = vmatprep.subr.mxu0 0.0
        %1551 = vmatpush1.msra.mxu0 0.0
        %1552 = vmatprep.subr.mxu0 0.0
        %1553 = vmatpush1.msra.mxu0 0.0
        %1554 = vmatprep.subr.mxu0 0.0
        %1555 = vmatpush1.msra.mxu0 0.0
        %1556 = vmatprep.subr.mxu0 0.0
        %1557 = vmatpush1.msra.mxu0 0.0
        %1558 = vmatprep.subr.mxu0 0.0
        %1559 = vmatpush1.msra.mxu0 0.0
        %1560 = vmatprep.subr.mxu0 0.0
        %1561 = vmatpush1.msra.mxu0 0.0
        %1562 = vmatprep.subr.mxu0 0.0
        %1563 = vmatpush1.msra.mxu0 0.0
        %1564 = vmatprep.subr.mxu0 0.0
        %1565 = vmatpush1.msra.mxu0 0.0
        %1566 = vmatprep.subr.mxu0 0.0
        %1567 = vmatpush1.msra.mxu0 0.0
        %1568 = vmatprep.subr.mxu0 0.0
        %1569 = vmatpush1.msra.mxu0 0.0
        %1570 = vmatprep.subr.mxu0 0.0
        %1571 = vmatpush1.msra.mxu0 0.0
        %1572 = vmatprep.subr.mxu0 0.0
        %1573 = vmatpush1.msra.mxu0 0.0
        %1574 = vmatprep.subr.mxu0 0.0
        %1575 = vmatpush1.msra.mxu0 0.0
        %1576 = vmatprep.subr.mxu0 0.0
        %1577 = vmatpush1.msra.mxu0 0.0
        %1578 = vmatprep.subr.mxu0 0.0
        %1579 = vmatpush1.msra.mxu0 0.0
        %1580 = vmatprep.subr.mxu0 0.0
        %1581 = vmatpush1.msra.mxu0 0.0
        %1582 = vmatprep.mubr.f32.mxu0 0.0
        %1583 = vmatmul.mubr.f32.gmra.mrb[0].mxu0 %v1516
        %v1584 = vpop.f32.mrb[0].mxu0
        %v1585 = vadd.f32 0.0, %v1584
        %v1586 = vpop.f32.mrb[0].mxu0
        %1587 = vdwg.mxu0
        %v1589 = vsel %vm1257, %v1585, 0
        %1591 = vmatprep.subr.mxu0 0.0
        %1592 = vmatpush1.msra.mxu0 %v1170
        %1593 = vmatprep.subr.mxu0 0.0
        %1594 = vmatpush1.msra.mxu0 0.0
        %1595 = vmatprep.subr.mxu0 0.0
        %1596 = vmatpush1.msra.mxu0 0.0
        %1597 = vmatprep.subr.mxu0 0.0
        %1598 = vmatpush1.msra.mxu0 0.0
        %1599 = vmatprep.subr.mxu0 0.0
        %1600 = vmatpush1.msra.mxu0 0.0
        %1601 = vmatprep.subr.mxu0 0.0
        %1602 = vmatpush1.msra.mxu0 0.0
        %1603 = vmatprep.subr.mxu0 0.0
        %1604 = vmatpush1.msra.mxu0 0.0
        %1605 = vmatprep.subr.mxu0 0.0
        %1606 = vmatpush1.msra.mxu0 0.0
        %1607 = vmatprep.subr.mxu0 0.0
        %1608 = vmatpush1.msra.mxu0 0.0
        %1609 = vmatprep.subr.mxu0 0.0
        %1610 = vmatpush1.msra.mxu0 0.0
        %1611 = vmatprep.subr.mxu0 0.0
        %1612 = vmatpush1.msra.mxu0 0.0
        %1613 = vmatprep.subr.mxu0 0.0
        %1614 = vmatpush1.msra.mxu0 0.0
        %1615 = vmatprep.subr.mxu0 0.0
        %1616 = vmatpush1.msra.mxu0 0.0
        %1617 = vmatprep.subr.mxu0 0.0
        %1618 = vmatpush1.msra.mxu0 0.0
        %1619 = vmatprep.subr.mxu0 0.0
        %1620 = vmatpush1.msra.mxu0 0.0
        %1621 = vmatprep.subr.mxu0 0.0
        %1622 = vmatpush1.msra.mxu0 0.0
        %1623 = vmatprep.subr.mxu0 0.0
        %1624 = vmatpush1.msra.mxu0 0.0
        %1625 = vmatprep.subr.mxu0 0.0
        %1626 = vmatpush1.msra.mxu0 0.0
        %1627 = vmatprep.subr.mxu0 0.0
        %1628 = vmatpush1.msra.mxu0 0.0
        %1629 = vmatprep.subr.mxu0 0.0
        %1630 = vmatpush1.msra.mxu0 0.0
        %1631 = vmatprep.subr.mxu0 0.0
        %1632 = vmatpush1.msra.mxu0 0.0
        %1633 = vmatprep.subr.mxu0 0.0
        %1634 = vmatpush1.msra.mxu0 0.0
        %1635 = vmatprep.subr.mxu0 0.0
        %1636 = vmatpush1.msra.mxu0 0.0
        %1637 = vmatprep.subr.mxu0 0.0
        %1638 = vmatpush1.msra.mxu0 0.0
        %1639 = vmatprep.subr.mxu0 0.0
        %1640 = vmatpush1.msra.mxu0 0.0
        %1641 = vmatprep.subr.mxu0 0.0
        %1642 = vmatpush1.msra.mxu0 0.0
        %1643 = vmatprep.subr.mxu0 0.0
        %1644 = vmatpush1.msra.mxu0 0.0
        %1645 = vmatprep.subr.mxu0 0.0
        %1646 = vmatpush1.msra.mxu0 0.0
        %1647 = vmatprep.subr.mxu0 0.0
        %1648 = vmatpush1.msra.mxu0 0.0
        %1649 = vmatprep.subr.mxu0 0.0
        %1650 = vmatpush1.msra.mxu0 0.0
        %1651 = vmatprep.subr.mxu0 0.0
        %1652 = vmatpush1.msra.mxu0 0.0
        %1653 = vmatprep.subr.mxu0 0.0
        %1654 = vmatpush1.msra.mxu0 0.0
        %1655 = vmatprep.mubr.f32.mxu0 0.0
        %1656 = vmatmul.mubr.f32.gmra.mrb[0].mxu0 %v1589
        %v1657 = vpop.f32.mrb[0].mxu0
        %v1658 = vadd.f32 0.0, %v1657
        %v1659 = vpop.f32.mrb[0].mxu0
        %1660 = vdwg.mxu0
        %v1662 = vsel %vm1257, %v1418, 0
        %1664 = vmatprep.subr.mxu0 0.0
        %1665 = vmatpush1.msra.mxu0 %v1169
        %1666 = vmatprep.subr.mxu0 0.0
        %1667 = vmatpush1.msra.mxu0 0.0
        %1668 = vmatprep.subr.mxu0 0.0
        %1669 = vmatpush1.msra.mxu0 0.0
        %1670 = vmatprep.subr.mxu0 0.0
        %1671 = vmatpush1.msra.mxu0 0.0
        %1672 = vmatprep.subr.mxu0 0.0
        %1673 = vmatpush1.msra.mxu0 0.0
        %1674 = vmatprep.subr.mxu0 0.0
        %1675 = vmatpush1.msra.mxu0 0.0
        %1676 = vmatprep.subr.mxu0 0.0
        %1677 = vmatpush1.msra.mxu0 0.0
        %1678 = vmatprep.subr.mxu0 0.0
        %1679 = vmatpush1.msra.mxu0 0.0
        %1680 = vmatprep.subr.mxu0 0.0
        %1681 = vmatpush1.msra.mxu0 0.0
        %1682 = vmatprep.subr.mxu0 0.0
        %1683 = vmatpush1.msra.mxu0 0.0
        %1684 = vmatprep.subr.mxu0 0.0
        %1685 = vmatpush1.msra.mxu0 0.0
        %1686 = vmatprep.subr.mxu0 0.0
        %1687 = vmatpush1.msra.mxu0 0.0
        %1688 = vmatprep.subr.mxu0 0.0
        %1689 = vmatpush1.msra.mxu0 0.0
        %1690 = vmatprep.subr.mxu0 0.0
        %1691 = vmatpush1.msra.mxu0 0.0
        %1692 = vmatprep.subr.mxu0 0.0
        %1693 = vmatpush1.msra.mxu0 0.0
        %1694 = vmatprep.subr.mxu0 0.0
        %1695 = vmatpush1.msra.mxu0 0.0
        %1696 = vmatprep.subr.mxu0 0.0
        %1697 = vmatpush1.msra.mxu0 0.0
        %1698 = vmatprep.subr.mxu0 0.0
        %1699 = vmatpush1.msra.mxu0 0.0
        %1700 = vmatprep.subr.mxu0 0.0
        %1701 = vmatpush1.msra.mxu0 0.0
        %1702 = vmatprep.subr.mxu0 0.0
        %1703 = vmatpush1.msra.mxu0 0.0
        %1704 = vmatprep.subr.mxu0 0.0
        %1705 = vmatpush1.msra.mxu0 0.0
        %1706 = vmatprep.subr.mxu0 0.0
        %1707 = vmatpush1.msra.mxu0 0.0
        %1708 = vmatprep.subr.mxu0 0.0
        %1709 = vmatpush1.msra.mxu0 0.0
        %1710 = vmatprep.subr.mxu0 0.0
        %1711 = vmatpush1.msra.mxu0 0.0
        %1712 = vmatprep.subr.mxu0 0.0
        %1713 = vmatpush1.msra.mxu0 0.0
        %1714 = vmatprep.subr.mxu0 0.0
        %1715 = vmatpush1.msra.mxu0 0.0
        %1716 = vmatprep.subr.mxu0 0.0
        %1717 = vmatpush1.msra.mxu0 0.0
        %1718 = vmatprep.subr.mxu0 0.0
        %1719 = vmatpush1.msra.mxu0 0.0
        %1720 = vmatprep.subr.mxu0 0.0
        %1721 = vmatpush1.msra.mxu0 0.0
        %1722 = vmatprep.subr.mxu0 0.0
        %1723 = vmatpush1.msra.mxu0 0.0
        %1724 = vmatprep.subr.mxu0 0.0
        %1725 = vmatpush1.msra.mxu0 0.0
        %1726 = vmatprep.subr.mxu0 0.0
        %1727 = vmatpush1.msra.mxu0 0.0
        %1728 = vmatprep.mubr.f32.mxu0 0.0
        %1729 = vmatmul.mubr.f32.gmra.mrb[0].mxu0 %v1662
        %v1730 = vpop.f32.mrb[0].mxu0
        %v1731 = vadd.f32 %v1658, %v1730
        %v1732 = vpop.f32.mrb[0].mxu0
        %1733 = vdwg.mxu0
        %1734 = vrot.lane.b32.xlu0 %v1251, 112
        %v1735 = vpop.permute.xlu0 %1734
        %1736 = vrot.lane.b32.xlu0 %v1251, 80
        %v1737 = vpop.permute.xlu0 %1736
        %v1738 = vsel %vm1257, %v1735, 0
        %v1740 = vsel %vm1257, %v1737, 0
        %1742 = vmatprep.subr.mxu0 0.0
        %1743 = vmatpush1.xpose.msra.mxu0 %v1740
        %1744 = vmatprep.subr.mxu0 0.0
        %1745 = vmatpush1.xpose.msra.mxu0 0.0
        %1746 = vmatprep.subr.mxu0 0.0
        %1747 = vmatpush1.xpose.msra.mxu0 0.0
        %1748 = vmatprep.subr.mxu0 0.0
        %1749 = vmatpush1.xpose.msra.mxu0 0.0
        %1750 = vmatprep.subr.mxu0 0.0
        %1751 = vmatpush1.xpose.msra.mxu0 0.0
        %1752 = vmatprep.subr.mxu0 0.0
        %1753 = vmatpush1.xpose.msra.mxu0 0.0
        %1754 = vmatprep.subr.mxu0 0.0
        %1755 = vmatpush1.xpose.msra.mxu0 0.0
        %1756 = vmatprep.subr.mxu0 0.0
        %1757 = vmatpush1.xpose.msra.mxu0 0.0
        %1758 = vmatprep.subr.mxu0 0.0
        %1759 = vmatpush1.xpose.msra.mxu0 0.0
        %1760 = vmatprep.subr.mxu0 0.0
        %1761 = vmatpush1.xpose.msra.mxu0 0.0
        %1762 = vmatprep.subr.mxu0 0.0
        %1763 = vmatpush1.xpose.msra.mxu0 0.0
        %1764 = vmatprep.subr.mxu0 0.0
        %1765 = vmatpush1.xpose.msra.mxu0 0.0
        %1766 = vmatprep.subr.mxu0 0.0
        %1767 = vmatpush1.xpose.msra.mxu0 0.0
        %1768 = vmatprep.subr.mxu0 0.0
        %1769 = vmatpush1.xpose.msra.mxu0 0.0
        %1770 = vmatprep.subr.mxu0 0.0
        %1771 = vmatpush1.xpose.msra.mxu0 0.0
        %1772 = vmatprep.subr.mxu0 0.0
        %1773 = vmatpush1.xpose.msra.mxu0 0.0
        %1774 = vmatprep.subr.mxu0 0.0
        %1775 = vmatpush1.xpose.msra.mxu0 0.0
        %1776 = vmatprep.subr.mxu0 0.0
        %1777 = vmatpush1.xpose.msra.mxu0 0.0
        %1778 = vmatprep.subr.mxu0 0.0
        %1779 = vmatpush1.xpose.msra.mxu0 0.0
        %1780 = vmatprep.subr.mxu0 0.0
        %1781 = vmatpush1.xpose.msra.mxu0 0.0
        %1782 = vmatprep.subr.mxu0 0.0
        %1783 = vmatpush1.xpose.msra.mxu0 0.0
        %1784 = vmatprep.subr.mxu0 0.0
        %1785 = vmatpush1.xpose.msra.mxu0 0.0
        %1786 = vmatprep.subr.mxu0 0.0
        %1787 = vmatpush1.xpose.msra.mxu0 0.0
        %1788 = vmatprep.subr.mxu0 0.0
        %1789 = vmatpush1.xpose.msra.mxu0 0.0
        %1790 = vmatprep.subr.mxu0 0.0
        %1791 = vmatpush1.xpose.msra.mxu0 0.0
        %1792 = vmatprep.subr.mxu0 0.0
        %1793 = vmatpush1.xpose.msra.mxu0 0.0
        %1794 = vmatprep.subr.mxu0 0.0
        %1795 = vmatpush1.xpose.msra.mxu0 0.0
        %1796 = vmatprep.subr.mxu0 0.0
        %1797 = vmatpush1.xpose.msra.mxu0 0.0
        %1798 = vmatprep.subr.mxu0 0.0
        %1799 = vmatpush1.xpose.msra.mxu0 0.0
        %1800 = vmatprep.subr.mxu0 0.0
        %1801 = vmatpush1.xpose.msra.mxu0 0.0
        %1802 = vmatprep.subr.mxu0 0.0
        %1803 = vmatpush1.xpose.msra.mxu0 0.0
        %1804 = vmatprep.subr.mxu0 0.0
        %1805 = vmatpush1.xpose.msra.mxu0 0.0
        %1806 = vmatprep.mubr.f32.mxu0 0.0
        %1807 = vmatmul.mubr.f32.gmra.mrb[0].mxu0 %v1738
        %v1808 = vpop.f32.mrb[0].mxu0
        %v1809 = vadd.f32 0.0, %v1808
        %v1810 = vpop.f32.mrb[0].mxu0
        %1811 = vdwg.mxu0
        %v1812 = vmul.f32 %v1809, 0.35355338
        %v1813 = vadd.f32 %v1812, %v1162
        %v1814 = vsel %vm1257, %v1813, -inf
        %1815 = vmax.xlane.f32.xlu0 %v1814
        %v1816 = vpop.xlane.xlu0 %1815
        %v1817 = vsub.f32 %v1813, %v1816
        %v1818 = vmul.f32 %v1817, 1.442695
        %v1819 = vpow.pop %v1818
        %v1820 = vsel %vm1257, %v1819, 0.0
        %1821 = vadd.xlane.f32.xlu0 %v1820
        %v1822 = vpop.xlane.xlu0 %1821
        %v1823 = vrcp.pop %v1822
        %v1824 = vmul.f32 %v1819, %v1823
        %1825 = vrot.lane.b32.xlu0 %v1251, 48
        %v1826 = vpop.permute.xlu0 %1825
        %v1829 = vsel %vm1257, %v1824, 0
        %1831 = vmatprep.subr.mxu0 0.0
        %1832 = vmatpush1.msra.mxu0 %v1826
        %1833 = vmatprep.subr.mxu0 0.0
        %1834 = vmatpush1.msra.mxu0 0.0
        %1835 = vmatprep.subr.mxu0 0.0
        %1836 = vmatpush1.msra.mxu0 0.0
        %1837 = vmatprep.subr.mxu0 0.0
        %1838 = vmatpush1.msra.mxu0 0.0
        %1839 = vmatprep.subr.mxu0 0.0
        %1840 = vmatpush1.msra.mxu0 0.0
        %1841 = vmatprep.subr.mxu0 0.0
        %1842 = vmatpush1.msra.mxu0 0.0
        %1843 = vmatprep.subr.mxu0 0.0
        %1844 = vmatpush1.msra.mxu0 0.0
        %1845 = vmatprep.subr.mxu0 0.0
        %1846 = vmatpush1.msra.mxu0 0.0
        %1847 = vmatprep.subr.mxu0 0.0
        %1848 = vmatpush1.msra.mxu0 0.0
        %1849 = vmatprep.subr.mxu0 0.0
        %1850 = vmatpush1.msra.mxu0 0.0
        %1851 = vmatprep.subr.mxu0 0.0
        %1852 = vmatpush1.msra.mxu0 0.0
        %1853 = vmatprep.subr.mxu0 0.0
        %1854 = vmatpush1.msra.mxu0 0.0
        %1855 = vmatprep.subr.mxu0 0.0
        %1856 = vmatpush1.msra.mxu0 0.0
        %1857 = vmatprep.subr.mxu0 0.0
        %1858 = vmatpush1.msra.mxu0 0.0
        %1859 = vmatprep.subr.mxu0 0.0
        %1860 = vmatpush1.msra.mxu0 0.0
        %1861 = vmatprep.subr.mxu0 0.0
        %1862 = vmatpush1.msra.mxu0 0.0
        %1863 = vmatprep.subr.mxu0 0.0
        %1864 = vmatpush1.msra.mxu0 0.0
        %1865 = vmatprep.subr.mxu0 0.0
        %1866 = vmatpush1.msra.mxu0 0.0
        %1867 = vmatprep.subr.mxu0 0.0
        %1868 = vmatpush1.msra.mxu0 0.0
        %1869 = vmatprep.subr.mxu0 0.0
        %1870 = vmatpush1.msra.mxu0 0.0
        %1871 = vmatprep.subr.mxu0 0.0
        %1872 = vmatpush1.msra.mxu0 0.0
        %1873 = vmatprep.subr.mxu0 0.0
        %1874 = vmatpush1.msra.mxu0 0.0
        %1875 = vmatprep.subr.mxu0 0.0
        %1876 = vmatpush1.msra.mxu0 0.0
        %1877 = vmatprep.subr.mxu0 0.0
        %1878 = vmatpush1.msra.mxu0 0.0
        %1879 = vmatprep.subr.mxu0 0.0
        %1880 = vmatpush1.msra.mxu0 0.0
        %1881 = vmatprep.subr.mxu0 0.0
        %1882 = vmatpush1.msra.mxu0 0.0
        %1883 = vmatprep.subr.mxu0 0.0
        %1884 = vmatpush1.msra.mxu0 0.0
        %1885 = vmatprep.subr.mxu0 0.0
        %1886 = vmatpush1.msra.mxu0 0.0
        %1887 = vmatprep.subr.mxu0 0.0
        %1888 = vmatpush1.msra.mxu0 0.0
        %1889 = vmatprep.subr.mxu0 0.0
        %1890 = vmatpush1.msra.mxu0 0.0
        %1891 = vmatprep.subr.mxu0 0.0
        %1892 = vmatpush1.msra.mxu0 0.0
        %1893 = vmatprep.subr.mxu0 0.0
        %1894 = vmatpush1.msra.mxu0 0.0
        %1895 = vmatprep.mubr.f32.mxu0 0.0
        %1896 = vmatmul.mubr.f32.gmra.mrb[0].mxu0 %v1829
        %v1897 = vpop.f32.mrb[0].mxu0
        %v1898 = vadd.f32 0.0, %v1897
        %v1899 = vpop.f32.mrb[0].mxu0
        %1900 = vdwg.mxu0
        %v1902 = vsel %vm1257, %v1898, 0
        %1904 = vmatprep.subr.mxu0 0.0
        %1905 = vmatpush1.msra.mxu0 %v1171
        %1906 = vmatprep.subr.mxu0 0.0
        %1907 = vmatpush1.msra.mxu0 0.0
        %1908 = vmatprep.subr.mxu0 0.0
        %1909 = vmatpush1.msra.mxu0 0.0
        %1910 = vmatprep.subr.mxu0 0.0
        %1911 = vmatpush1.msra.mxu0 0.0
        %1912 = vmatprep.subr.mxu0 0.0
        %1913 = vmatpush1.msra.mxu0 0.0
        %1914 = vmatprep.subr.mxu0 0.0
        %1915 = vmatpush1.msra.mxu0 0.0
        %1916 = vmatprep.subr.mxu0 0.0
        %1917 = vmatpush1.msra.mxu0 0.0
        %1918 = vmatprep.subr.mxu0 0.0
        %1919 = vmatpush1.msra.mxu0 0.0
        %1920 = vmatprep.subr.mxu0 0.0
        %1921 = vmatpush1.msra.mxu0 0.0
        %1922 = vmatprep.subr.mxu0 0.0
        %1923 = vmatpush1.msra.mxu0 0.0
        %1924 = vmatprep.subr.mxu0 0.0
        %1925 = vmatpush1.msra.mxu0 0.0
        %1926 = vmatprep.subr.mxu0 0.0
        %1927 = vmatpush1.msra.mxu0 0.0
        %1928 = vmatprep.subr.mxu0 0.0
        %1929 = vmatpush1.msra.mxu0 0.0
        %1930 = vmatprep.subr.mxu0 0.0
        %1931 = vmatpush1.msra.mxu0 0.0
        %1932 = vmatprep.subr.mxu0 0.0
        %1933 = vmatpush1.msra.mxu0 0.0
        %1934 = vmatprep.subr.mxu0 0.0
        %1935 = vmatpush1.msra.mxu0 0.0
        %1936 = vmatprep.subr.mxu0 0.0
        %1937 = vmatpush1.msra.mxu0 0.0
        %1938 = vmatprep.subr.mxu0 0.0
        %1939 = vmatpush1.msra.mxu0 0.0
        %1940 = vmatprep.subr.mxu0 0.0
        %1941 = vmatpush1.msra.mxu0 0.0
        %1942 = vmatprep.subr.mxu0 0.0
        %1943 = vmatpush1.msra.mxu0 0.0
        %1944 = vmatprep.subr.mxu0 0.0
        %1945 = vmatpush1.msra.mxu0 0.0
        %1946 = vmatprep.subr.mxu0 0.0
        %1947 = vmatpush1.msra.mxu0 0.0
        %1948 = vmatprep.subr.mxu0 0.0
        %1949 = vmatpush1.msra.mxu0 0.0
        %1950 = vmatprep.subr.mxu0 0.0
        %1951 = vmatpush1.msra.mxu0 0.0
        %1952 = vmatprep.subr.mxu0 0.0
        %1953 = vmatpush1.msra.mxu0 0.0
        %1954 = vmatprep.subr.mxu0 0.0
        %1955 = vmatpush1.msra.mxu0 0.0
        %1956 = vmatprep.subr.mxu0 0.0
        %1957 = vmatpush1.msra.mxu0 0.0
        %1958 = vmatprep.subr.mxu0 0.0
        %1959 = vmatpush1.msra.mxu0 0.0
        %1960 = vmatprep.subr.mxu0 0.0
        %1961 = vmatpush1.msra.mxu0 0.0
        %1962 = vmatprep.subr.mxu0 0.0
        %1963 = vmatpush1.msra.mxu0 0.0
        %1964 = vmatprep.subr.mxu0 0.0
        %1965 = vmatpush1.msra.mxu0 0.0
        %1966 = vmatprep.subr.mxu0 0.0
        %1967 = vmatpush1.msra.mxu0 0.0
        %1968 = vmatprep.mubr.f32.mxu0 0.0
        %1969 = vmatmul.mubr.f32.gmra.mrb[0].mxu0 %v1902
        %v1970 = vpop.f32.mrb[0].mxu0
        %v1971 = vadd.f32 0.0, %v1970
        %v1972 = vpop.f32.mrb[0].mxu0
        %1973 = vdwg.mxu0
        %v1974 = vadd.f32 %v1731, %v1971
        %1975 = vrot.lane.b32.xlu0 %v1251, 104
        %v1976 = vpop.permute.xlu0 %1975
        %1977 = vrot.lane.b32.xlu0 %v1251, 72
        %v1978 = vpop.permute.xlu0 %1977
        %v1979 = vsel %vm1257, %v1976, 0
        %v1981 = vsel %vm1257, %v1978, 0
        %1983 = vmatprep.subr.mxu0 0.0
        %1984 = vmatpush1.xpose.msra.mxu0 %v1981
        %1985 = vmatprep.subr.mxu0 0.0
        %1986 = vmatpush1.xpose.msra.mxu0 0.0
        %1987 = vmatprep.subr.mxu0 0.0
        %1988 = vmatpush1.xpose.msra.mxu0 0.0
        %1989 = vmatprep.subr.mxu0 0.0
        %1990 = vmatpush1.xpose.msra.mxu0 0.0
        %1991 = vmatprep.subr.mxu0 0.0
        %1992 = vmatpush1.xpose.msra.mxu0 0.0
        %1993 = vmatprep.subr.mxu0 0.0
        %1994 = vmatpush1.xpose.msra.mxu0 0.0
        %1995 = vmatprep.subr.mxu0 0.0
        %1996 = vmatpush1.xpose.msra.mxu0 0.0
        %1997 = vmatprep.subr.mxu0 0.0
        %1998 = vmatpush1.xpose.msra.mxu0 0.0
        %1999 = vmatprep.subr.mxu0 0.0
        %2000 = vmatpush1.xpose.msra.mxu0 0.0
        %2001 = vmatprep.subr.mxu0 0.0
        %2002 = vmatpush1.xpose.msra.mxu0 0.0
        %2003 = vmatprep.subr.mxu0 0.0
        %2004 = vmatpush1.xpose.msra.mxu0 0.0
        %2005 = vmatprep.subr.mxu0 0.0
        %2006 = vmatpush1.xpose.msra.mxu0 0.0
        %2007 = vmatprep.subr.mxu0 0.0
        %2008 = vmatpush1.xpose.msra.mxu0 0.0
        %2009 = vmatprep.subr.mxu0 0.0
        %2010 = vmatpush1.xpose.msra.mxu0 0.0
        %2011 = vmatprep.subr.mxu0 0.0
        %2012 = vmatpush1.xpose.msra.mxu0 0.0
        %2013 = vmatprep.subr.mxu0 0.0
        %2014 = vmatpush1.xpose.msra.mxu0 0.0
        %2015 = vmatprep.subr.mxu0 0.0
        %2016 = vmatpush1.xpose.msra.mxu0 0.0
        %2017 = vmatprep.subr.mxu0 0.0
        %2018 = vmatpush1.xpose.msra.mxu0 0.0
        %2019 = vmatprep.subr.mxu0 0.0
        %2020 = vmatpush1.xpose.msra.mxu0 0.0
        %2021 = vmatprep.subr.mxu0 0.0
        %2022 = vmatpush1.xpose.msra.mxu0 0.0
        %2023 = vmatprep.subr.mxu0 0.0
        %2024 = vmatpush1.xpose.msra.mxu0 0.0
        %2025 = vmatprep.subr.mxu0 0.0
        %2026 = vmatpush1.xpose.msra.mxu0 0.0
        %2027 = vmatprep.subr.mxu0 0.0
        %2028 = vmatpush1.xpose.msra.mxu0 0.0
        %2029 = vmatprep.subr.mxu0 0.0
        %2030 = vmatpush1.xpose.msra.mxu0 0.0
        %2031 = vmatprep.subr.mxu0 0.0
        %2032 = vmatpush1.xpose.msra.mxu0 0.0
        %2033 = vmatprep.subr.mxu0 0.0
        %2034 = vmatpush1.xpose.msra.mxu0 0.0
        %2035 = vmatprep.subr.mxu0 0.0
        %2036 = vmatpush1.xpose.msra.mxu0 0.0
        %2037 = vmatprep.subr.mxu0 0.0
        %2038 = vmatpush1.xpose.msra.mxu0 0.0
        %2039 = vmatprep.subr.mxu0 0.0
        %2040 = vmatpush1.xpose.msra.mxu0 0.0
        %2041 = vmatprep.subr.mxu0 0.0
        %2042 = vmatpush1.xpose.msra.mxu0 0.0
        %2043 = vmatprep.subr.mxu0 0.0
        %2044 = vmatpush1.xpose.msra.mxu0 0.0
        %2045 = vmatprep.subr.mxu0 0.0
        %2046 = vmatpush1.xpose.msra.mxu0 0.0
        %2047 = vmatprep.mubr.f32.mxu0 0.0
        %2048 = vmatmul.mubr.f32.gmra.mrb[0].mxu0 %v1979
        %v2049 = vpop.f32.mrb[0].mxu0
        %v2050 = vadd.f32 0.0, %v2049
        %v2051 = vpop.f32.mrb[0].mxu0
        %2052 = vdwg.mxu0
        %v2053 = vmul.f32 %v2050, 0.35355338
        %v2054 = vadd.f32 %v2053, %v1162
        %v2055 = vsel %vm1257, %v2054, -inf
        %2056 = vmax.xlane.f32.xlu0 %v2055
        %v2057 = vpop.xlane.xlu0 %2056
        %v2058 = vsub.f32 %v2054, %v2057
        %v2059 = vmul.f32 %v2058, 1.442695
        %v2060 = vpow.pop %v2059
        %v2061 = vsel %vm1257, %v2060, 0.0
        %2062 = vadd.xlane.f32.xlu0 %v2061
        %v2063 = vpop.xlane.xlu0 %2062
        %v2064 = vrcp.pop %v2063
        %v2065 = vmul.f32 %v2060, %v2064
        %2066 = vrot.lane.b32.xlu0 %v1251, 40
        %v2067 = vpop.permute.xlu0 %2066
        %v2070 = vsel %vm1257, %v2065, 0
        %2072 = vmatprep.subr.mxu0 0.0
        %2073 = vmatpush1.msra.mxu0 %v2067
        %2074 = vmatprep.subr.mxu0 0.0
        %2075 = vmatpush1.msra.mxu0 0.0
        %2076 = vmatprep.subr.mxu0 0.0
        %2077 = vmatpush1.msra.mxu0 0.0
        %2078 = vmatprep.subr.mxu0 0.0
        %2079 = vmatpush1.msra.mxu0 0.0
        %2080 = vmatprep.subr.mxu0 0.0
        %2081 = vmatpush1.msra.mxu0 0.0
        %2082 = vmatprep.subr.mxu0 0.0
        %2083 = vmatpush1.msra.mxu0 0.0
        %2084 = vmatprep.subr.mxu0 0.0
        %2085 = vmatpush1.msra.mxu0 0.0
        %2086 = vmatprep.subr.mxu0 0.0
        %2087 = vmatpush1.msra.mxu0 0.0
        %2088 = vmatprep.subr.mxu0 0.0
        %2089 = vmatpush1.msra.mxu0 0.0
        %2090 = vmatprep.subr.mxu0 0.0
        %2091 = vmatpush1.msra.mxu0 0.0
        %2092 = vmatprep.subr.mxu0 0.0
        %2093 = vmatpush1.msra.mxu0 0.0
        %2094 = vmatprep.subr.mxu0 0.0
        %2095 = vmatpush1.msra.mxu0 0.0
        %2096 = vmatprep.subr.mxu0 0.0
        %2097 = vmatpush1.msra.mxu0 0.0
        %2098 = vmatprep.subr.mxu0 0.0
        %2099 = vmatpush1.msra.mxu0 0.0
        %2100 = vmatprep.subr.mxu0 0.0
        %2101 = vmatpush1.msra.mxu0 0.0
        %2102 = vmatprep.subr.mxu0 0.0
        %2103 = vmatpush1.msra.mxu0 0.0
        %2104 = vmatprep.subr.mxu0 0.0
        %2105 = vmatpush1.msra.mxu0 0.0
        %2106 = vmatprep.subr.mxu0 0.0
        %2107 = vmatpush1.msra.mxu0 0.0
        %2108 = vmatprep.subr.mxu0 0.0
        %2109 = vmatpush1.msra.mxu0 0.0
        %2110 = vmatprep.subr.mxu0 0.0
        %2111 = vmatpush1.msra.mxu0 0.0
        %2112 = vmatprep.subr.mxu0 0.0
        %2113 = vmatpush1.msra.mxu0 0.0
        %2114 = vmatprep.subr.mxu0 0.0
        %2115 = vmatpush1.msra.mxu0 0.0
        %2116 = vmatprep.subr.mxu0 0.0
        %2117 = vmatpush1.msra.mxu0 0.0
        %2118 = vmatprep.subr.mxu0 0.0
        %2119 = vmatpush1.msra.mxu0 0.0
        %2120 = vmatprep.subr.mxu0 0.0
        %2121 = vmatpush1.msra.mxu0 0.0
        %2122 = vmatprep.subr.mxu0 0.0
        %2123 = vmatpush1.msra.mxu0 0.0
        %2124 = vmatprep.subr.mxu0 0.0
        %2125 = vmatpush1.msra.mxu0 0.0
        %2126 = vmatprep.subr.mxu0 0.0
        %2127 = vmatpush1.msra.mxu0 0.0
        %2128 = vmatprep.subr.mxu0 0.0
        %2129 = vmatpush1.msra.mxu0 0.0
        %2130 = vmatprep.subr.mxu0 0.0
        %2131 = vmatpush1.msra.mxu0 0.0
        %2132 = vmatprep.subr.mxu0 0.0
        %2133 = vmatpush1.msra.mxu0 0.0
        %2134 = vmatprep.subr.mxu0 0.0
        %2135 = vmatpush1.msra.mxu0 0.0
        %2136 = vmatprep.mubr.f32.mxu0 0.0
        %2137 = vmatmul.mubr.f32.gmra.mrb[0].mxu0 %v2070
        %v2138 = vpop.f32.mrb[0].mxu0
        %v2139 = vadd.f32 0.0, %v2138
        %v2140 = vpop.f32.mrb[0].mxu0
        %2141 = vdwg.mxu0
        %v2143 = vsel %vm1257, %v2139, 0
        %2145 = vmatprep.subr.mxu0 0.0
        %2146 = vmatpush1.msra.mxu0 %v1172
        %2147 = vmatprep.subr.mxu0 0.0
        %2148 = vmatpush1.msra.mxu0 0.0
        %2149 = vmatprep.subr.mxu0 0.0
        %2150 = vmatpush1.msra.mxu0 0.0
        %2151 = vmatprep.subr.mxu0 0.0
        %2152 = vmatpush1.msra.mxu0 0.0
        %2153 = vmatprep.subr.mxu0 0.0
        %2154 = vmatpush1.msra.mxu0 0.0
        %2155 = vmatprep.subr.mxu0 0.0
        %2156 = vmatpush1.msra.mxu0 0.0
        %2157 = vmatprep.subr.mxu0 0.0
        %2158 = vmatpush1.msra.mxu0 0.0
        %2159 = vmatprep.subr.mxu0 0.0
        %2160 = vmatpush1.msra.mxu0 0.0
        %2161 = vmatprep.subr.mxu0 0.0
        %2162 = vmatpush1.msra.mxu0 0.0
        %2163 = vmatprep.subr.mxu0 0.0
        %2164 = vmatpush1.msra.mxu0 0.0
        %2165 = vmatprep.subr.mxu0 0.0
        %2166 = vmatpush1.msra.mxu0 0.0
        %2167 = vmatprep.subr.mxu0 0.0
        %2168 = vmatpush1.msra.mxu0 0.0
        %2169 = vmatprep.subr.mxu0 0.0
        %2170 = vmatpush1.msra.mxu0 0.0
        %2171 = vmatprep.subr.mxu0 0.0
        %2172 = vmatpush1.msra.mxu0 0.0
        %2173 = vmatprep.subr.mxu0 0.0
        %2174 = vmatpush1.msra.mxu0 0.0
        %2175 = vmatprep.subr.mxu0 0.0
        %2176 = vmatpush1.msra.mxu0 0.0
        %2177 = vmatprep.subr.mxu0 0.0
        %2178 = vmatpush1.msra.mxu0 0.0
        %2179 = vmatprep.subr.mxu0 0.0
        %2180 = vmatpush1.msra.mxu0 0.0
        %2181 = vmatprep.subr.mxu0 0.0
        %2182 = vmatpush1.msra.mxu0 0.0
        %2183 = vmatprep.subr.mxu0 0.0
        %2184 = vmatpush1.msra.mxu0 0.0
        %2185 = vmatprep.subr.mxu0 0.0
        %2186 = vmatpush1.msra.mxu0 0.0
        %2187 = vmatprep.subr.mxu0 0.0
        %2188 = vmatpush1.msra.mxu0 0.0
        %2189 = vmatprep.subr.mxu0 0.0
        %2190 = vmatpush1.msra.mxu0 0.0
        %2191 = vmatprep.subr.mxu0 0.0
        %2192 = vmatpush1.msra.mxu0 0.0
        %2193 = vmatprep.subr.mxu0 0.0
        %2194 = vmatpush1.msra.mxu0 0.0
        %2195 = vmatprep.subr.mxu0 0.0
        %2196 = vmatpush1.msra.mxu0 0.0
        %2197 = vmatprep.subr.mxu0 0.0
        %2198 = vmatpush1.msra.mxu0 0.0
        %2199 = vmatprep.subr.mxu0 0.0
        %2200 = vmatpush1.msra.mxu0 0.0
        %2201 = vmatprep.subr.mxu0 0.0
        %2202 = vmatpush1.msra.mxu0 0.0
        %2203 = vmatprep.subr.mxu0 0.0
        %2204 = vmatpush1.msra.mxu0 0.0
        %2205 = vmatprep.subr.mxu0 0.0
        %2206 = vmatpush1.msra.mxu0 0.0
        %2207 = vmatprep.subr.mxu0 0.0
        %2208 = vmatpush1.msra.mxu0 0.0
        %2209 = vmatprep.mubr.f32.mxu0 0.0
        %2210 = vmatmul.mubr.f32.gmra.mrb[0].mxu0 %v2143
        %v2211 = vpop.f32.mrb[0].mxu0
        %v2212 = vadd.f32 0.0, %v2211
        %v2213 = vpop.f32.mrb[0].mxu0
        %2214 = vdwg.mxu0
        %v2215 = vadd.f32 %v1974, %v2212
        %v2217 = vlaneseq
        %v2218 = vshrl.u32 %v2217, 7
        %v2219 = vsub.s32 0, %v2218
        %v2220 = vrot.slane %v1173, %v2219
        %v2222 = vadd.f32 %v2215, %v2220
        %v2223 = vadd.f32 %v1160, %v2222
        %v2224 = vld [vmem:[%s1093] sm:$0x1]
        %v2225 = vld [vmem:[%s1096] sm:$0x1]
        %v2226 = vsel %vm1180, %v2223, 0.0
        %2227 = vadd.xlane.f32.xlu0 %v2226
        %v2228 = vpop.xlane.xlu0 %2227
        %v2229 = vrcp.pop 32.0
        %v2230 = vmul.f32 %v2228, %v2229
        %v2231 = vsub.f32 %v2223, %v2230
        %v2232 = vmul.f32 %v2231, %v2231
        %v2233 = vsel %vm1180, %v2232, 0.0
        %2234 = vadd.xlane.f32.xlu0 %v2233
        %v2235 = vpop.xlane.xlu0 %2234
        %v2236 = vmul.f32 %v2235, %v2229
        %v2237 = vadd.f32 %v2236, 1e-05
        %v2238 = vrsqrt.pop %v2237
        %v2239 = vmul.f32 %v2231, %v2238
        %v2241 = vlaneseq
        %v2242 = vshrl.u32 %v2241, 7
        %v2243 = vsub.s32 0, %v2242
        %v2244 = vrot.slane %v2224, %v2243
        %v2246 = vmul.f32 %v2239, %v2244
        %v2248 = vlaneseq
        %v2249 = vshrl.u32 %v2248, 7
        %v2250 = vsub.s32 0, %v2249
        %v2251 = vrot.slane %v2225, %v2250
        %v2253 = vadd.f32 %v2246, %v2251
        %v2254 = vld [vmem:[%s1101] sm:$0xff]
        %v2255 = vld [vmem:[%s1101 + $0x8] sm:$0xff]
        %v2256 = vld [vmem:[%s1101 + $0x10] sm:$0xff]
        %v2257 = vld [vmem:[%s1101 + $0x18] sm:$0xff]
        %v2258 = vld [vmem:[%s1104] sm:$0x1]
        %v2259 = vld [vmem:[%s1109] sm:$0xff]
        %v2260 = vld [vmem:[%s1109 + $0x8] sm:$0xff]
        %v2261 = vld [vmem:[%s1109 + $0x10] sm:$0xff]
        %v2262 = vld [vmem:[%s1109 + $0x18] sm:$0xff]
        %v2263 = vld [vmem:[%s1112] sm:$0x1]
        %v2264 = vld [vmem:[%s1117] sm:$0xff]
        %v2265 = vld [vmem:[%s1117 + $0x8] sm:$0xff]
        %v2266 = vld [vmem:[%s1117 + $0x10] sm:$0xff]
        %v2267 = vld [vmem:[%s1117 + $0x18] sm:$0xff]
        %v2268 = vld [vmem:[%s1120] sm:$0x1]
        %v2270 = vlaneseq
        %v2271 = vshrl.u32 %v2270, 7
        %v2272 = vsub.s32 0, %v2271
        %v2273 = vrot.slane %v2258, %v2272
        %v2276 = vsel %vm1180, %v2253, 0
        %2278 = vmatprep.subr.mxu0 0.0
        %2279 = vmatpush1.msra.mxu0 %v2254
        %2280 = vmatprep.subr.mxu0 0.0
        %2281 = vmatpush1.msra.mxu0 %v2255
        %2282 = vmatprep.subr.mxu0 0.0
        %2283 = vmatpush1.msra.mxu0 %v2256
        %2284 = vmatprep.subr.mxu0 0.0
        %2285 = vmatpush1.msra.mxu0 %v2257
        %2286 = vmatprep.subr.mxu0 0.0
        %2287 = vmatpush1.msra.mxu0 0.0
        %2288 = vmatprep.subr.mxu0 0.0
        %2289 = vmatpush1.msra.mxu0 0.0
        %2290 = vmatprep.subr.mxu0 0.0
        %2291 = vmatpush1.msra.mxu0 0.0
        %2292 = vmatprep.subr.mxu0 0.0
        %2293 = vmatpush1.msra.mxu0 0.0
        %2294 = vmatprep.subr.mxu0 0.0
        %2295 = vmatpush1.msra.mxu0 0.0
        %2296 = vmatprep.subr.mxu0 0.0
        %2297 = vmatpush1.msra.mxu0 0.0
        %2298 = vmatprep.subr.mxu0 0.0
        %2299 = vmatpush1.msra.mxu0 0.0
        %2300 = vmatprep.subr.mxu0 0.0
        %2301 = vmatpush1.msra.mxu0 0.0
        %2302 = vmatprep.subr.mxu0 0.0
        %2303 = vmatpush1.msra.mxu0 0.0
        %2304 = vmatprep.subr.mxu0 0.0
        %2305 = vmatpush1.msra.mxu0 0.0
        %2306 = vmatprep.subr.mxu0 0.0
        %2307 = vmatpush1.msra.mxu0 0.0
        %2308 = vmatprep.subr.mxu0 0.0
        %2309 = vmatpush1.msra.mxu0 0.0
        %2310 = vmatprep.subr.mxu0 0.0
        %2311 = vmatpush1.msra.mxu0 0.0
        %2312 = vmatprep.subr.mxu0 0.0
        %2313 = vmatpush1.msra.mxu0 0.0
        %2314 = vmatprep.subr.mxu0 0.0
        %2315 = vmatpush1.msra.mxu0 0.0
        %2316 = vmatprep.subr.mxu0 0.0
        %2317 = vmatpush1.msra.mxu0 0.0
        %2318 = vmatprep.subr.mxu0 0.0
        %2319 = vmatpush1.msra.mxu0 0.0
        %2320 = vmatprep.subr.mxu0 0.0
        %2321 = vmatpush1.msra.mxu0 0.0
        %2322 = vmatprep.subr.mxu0 0.0
        %2323 = vmatpush1.msra.mxu0 0.0
        %2324 = vmatprep.subr.mxu0 0.0
        %2325 = vmatpush1.msra.mxu0 0.0
        %2326 = vmatprep.subr.mxu0 0.0
        %2327 = vmatpush1.msra.mxu0 0.0
        %2328 = vmatprep.subr.mxu0 0.0
        %2329 = vmatpush1.msra.mxu0 0.0
        %2330 = vmatprep.subr.mxu0 0.0
        %2331 = vmatpush1.msra.mxu0 0.0
        %2332 = vmatprep.subr.mxu0 0.0
        %2333 = vmatpush1.msra.mxu0 0.0
        %2334 = vmatprep.subr.mxu0 0.0
        %2335 = vmatpush1.msra.mxu0 0.0
        %2336 = vmatprep.subr.mxu0 0.0
        %2337 = vmatpush1.msra.mxu0 0.0
        %2338 = vmatprep.subr.mxu0 0.0
        %2339 = vmatpush1.msra.mxu0 0.0
        %2340 = vmatprep.subr.mxu0 0.0
        %2341 = vmatpush1.msra.mxu0 0.0
        %2342 = vmatprep.mubr.f32.mxu0 0.0
        %2343 = vmatmul.mubr.f32.gmra.mrb[0].mxu0 %v2276
        %v2344 = vpop.f32.mrb[0].mxu0
        %v2345 = vadd.f32 %v2273, %v2344
        %v2346 = vpop.f32.mrb[0].mxu0
        %2347 = vdwg.mxu0
        %v2349 = vlaneseq
        %v2350 = vshrl.u32 %v2349, 7
        %v2351 = vsub.s32 0, %v2350
        %v2352 = vrot.slane %v2263, %v2351
        %v2355 = vsel %vm1180, %v1161, 0
        %2357 = vmatprep.subr.mxu0 0.0
        %2358 = vmatpush1.msra.mxu0 %v2259
        %2359 = vmatprep.subr.mxu0 0.0
        %2360 = vmatpush1.msra.mxu0 %v2260
        %2361 = vmatprep.subr.mxu0 0.0
        %2362 = vmatpush1.msra.mxu0 %v2261
        %2363 = vmatprep.subr.mxu0 0.0
        %2364 = vmatpush1.msra.mxu0 %v2262
        %2365 = vmatprep.subr.mxu0 0.0
        %2366 = vmatpush1.msra.mxu0 0.0
        %2367 = vmatprep.subr.mxu0 0.0
        %2368 = vmatpush1.msra.mxu0 0.0
        %2369 = vmatprep.subr.mxu0 0.0
        %2370 = vmatpush1.msra.mxu0 0.0
        %2371 = vmatprep.subr.mxu0 0.0
        %2372 = vmatpush1.msra.mxu0 0.0
        %2373 = vmatprep.subr.mxu0 0.0
        %2374 = vmatpush1.msra.mxu0 0.0
        %2375 = vmatprep.subr.mxu0 0.0
        %2376 = vmatpush1.msra.mxu0 0.0
        %2377 = vmatprep.subr.mxu0 0.0
        %2378 = vmatpush1.msra.mxu0 0.0
        %2379 = vmatprep.subr.mxu0 0.0
        %2380 = vmatpush1.msra.mxu0 0.0
        %2381 = vmatprep.subr.mxu0 0.0
        %2382 = vmatpush1.msra.mxu0 0.0
        %2383 = vmatprep.subr.mxu0 0.0
        %2384 = vmatpush1.msra.mxu0 0.0
        %2385 = vmatprep.subr.mxu0 0.0
        %2386 = vmatpush1.msra.mxu0 0.0
        %2387 = vmatprep.subr.mxu0 0.0
        %2388 = vmatpush1.msra.mxu0 0.0
        %2389 = vmatprep.subr.mxu0 0.0
        %2390 = vmatpush1.msra.mxu0 0.0
        %2391 = vmatprep.subr.mxu0 0.0
        %2392 = vmatpush1.msra.mxu0 0.0
        %2393 = vmatprep.subr.mxu0 0.0
        %2394 = vmatpush1.msra.mxu0 0.0
        %2395 = vmatprep.subr.mxu0 0.0
        %2396 = vmatpush1.msra.mxu0 0.0
        %2397 = vmatprep.subr.mxu0 0.0
        %2398 = vmatpush1.msra.mxu0 0.0
        %2399 = vmatprep.subr.mxu0 0.0
        %2400 = vmatpush1.msra.mxu0 0.0
        %2401 = vmatprep.subr.mxu0 0.0
        %2402 = vmatpush1.msra.mxu0 0.0
        %2403 = vmatprep.subr.mxu0 0.0
        %2404 = vmatpush1.msra.mxu0 0.0
        %2405 = vmatprep.subr.mxu0 0.0
        %2406 = vmatpush1.msra.mxu0 0.0
        %2407 = vmatprep.subr.mxu0 0.0
        %2408 = vmatpush1.msra.mxu0 0.0
        %2409 = vmatprep.subr.mxu0 0.0
        %2410 = vmatpush1.msra.mxu0 0.0
        %2411 = vmatprep.subr.mxu0 0.0
        %2412 = vmatpush1.msra.mxu0 0.0
        %2413 = vmatprep.subr.mxu0 0.0
        %2414 = vmatpush1.msra.mxu0 0.0
        %2415 = vmatprep.subr.mxu0 0.0
        %2416 = vmatpush1.msra.mxu0 0.0
        %2417 = vmatprep.subr.mxu0 0.0
        %2418 = vmatpush1.msra.mxu0 0.0
        %2419 = vmatprep.subr.mxu0 0.0
        %2420 = vmatpush1.msra.mxu0 0.0
        %2421 = vmatprep.mubr.f32.mxu0 0.0
        %2422 = vmatmul.mubr.f32.gmra.mrb[0].mxu0 %v2355
        %v2423 = vpop.f32.mrb[0].mxu0
        %v2424 = vadd.f32 %v2352, %v2423
        %v2425 = vpop.f32.mrb[0].mxu0
        %2426 = vdwg.mxu0
        %v2428 = vsel %vm1257, %v2345, 0
        %v2431 = vsel %vm1257, %v2424, 0
        %2433 = vmatprep.subr.mxu0 0.0
        %2434 = vmatpush1.xpose.msra.mxu0 %v2431
        %2435 = vmatprep.subr.mxu0 0.0
        %2436 = vmatpush1.xpose.msra.mxu0 0.0
        %2437 = vmatprep.subr.mxu0 0.0
        %2438 = vmatpush1.xpose.msra.mxu0 0.0
        %2439 = vmatprep.subr.mxu0 0.0
        %2440 = vmatpush1.xpose.msra.mxu0 0.0
        %2441 = vmatprep.subr.mxu0 0.0
        %2442 = vmatpush1.xpose.msra.mxu0 0.0
        %2443 = vmatprep.subr.mxu0 0.0
        %2444 = vmatpush1.xpose.msra.mxu0 0.0
        %2445 = vmatprep.subr.mxu0 0.0
        %2446 = vmatpush1.xpose.msra.mxu0 0.0
        %2447 = vmatprep.subr.mxu0 0.0
        %2448 = vmatpush1.xpose.msra.mxu0 0.0
        %2449 = vmatprep.subr.mxu0 0.0
        %2450 = vmatpush1.xpose.msra.mxu0 0.0
        %2451 = vmatprep.subr.mxu0 0.0
        %2452 = vmatpush1.xpose.msra.mxu0 0.0
        %2453 = vmatprep.subr.mxu0 0.0
        %2454 = vmatpush1.xpose.msra.mxu0 0.0
        %2455 = vmatprep.subr.mxu0 0.0
        %2456 = vmatpush1.xpose.msra.mxu0 0.0
        %2457 = vmatprep.subr.mxu0 0.0
        %2458 = vmatpush1.xpose.msra.mxu0 0.0
        %2459 = vmatprep.subr.mxu0 0.0
        %2460 = vmatpush1.xpose.msra.mxu0 0.0
        %2461 = vmatprep.subr.mxu0 0.0
        %2462 = vmatpush1.xpose.msra.mxu0 0.0
        %2463 = vmatprep.subr.mxu0 0.0
        %2464 = vmatpush1.xpose.msra.mxu0 0.0
        %2465 = vmatprep.subr.mxu0 0.0
        %2466 = vmatpush1.xpose.msra.mxu0 0.0
        %2467 = vmatprep.subr.mxu0 0.0
        %2468 = vmatpush1.xpose.msra.mxu0 0.0
        %2469 = vmatprep.subr.mxu0 0.0
        %2470 = vmatpush1.xpose.msra.mxu0 0.0
        %2471 = vmatprep.subr.mxu0 0.0
        %2472 = vmatpush1.xpose.msra.mxu0 0.0
        %2473 = vmatprep.subr.mxu0 0.0
        %2474 = vmatpush1.xpose.msra.mxu0 0.0
        %2475 = vmatprep.subr.mxu0 0.0
        %2476 = vmatpush1.xpose.msra.mxu0 0.0
        %2477 = vmatprep.subr.mxu0 0.0
        %2478 = vmatpush1.xpose.msra.mxu0 0.0
        %2479 = vmatprep.subr.mxu0 0.0
        %2480 = vmatpush1.xpose.msra.mxu0 0.0
        %2481 = vmatprep.subr.mxu0 0.0
        %2482 = vmatpush1.xpose.msra.mxu0 0.0
        %2483 = vmatprep.subr.mxu0 0.0
        %2484 = vmatpush1.xpose.msra.mxu0 0.0
        %2485 = vmatprep.subr.mxu0 0.0
        %2486 = vmatpush1.xpose.msra.mxu0 0.0
        %2487 = vmatprep.subr.mxu0 0.0
        %2488 = vmatpush1.xpose.msra.mxu0 0.0
        %2489 = vmatprep.subr.mxu0 0.0
        %2490 = vmatpush1.xpose.msra.mxu0 0.0
        %2491 = vmatprep.subr.mxu0 0.0
        %2492 = vmatpush1.xpose.msra.mxu0 0.0
        %2493 = vmatprep.subr.mxu0 0.0
        %2494 = vmatpush1.xpose.msra.mxu0 0.0
        %2495 = vmatprep.subr.mxu0 0.0
        %2496 = vmatpush1.xpose.msra.mxu0 0.0
        %2497 = vmatprep.mubr.f32.mxu0 0.0
        %2498 = vmatmul.mubr.f32.gmra.mrb[0].mxu0 %v2428
        %v2499 = vpop.f32.mrb[0].mxu0
        %v2500 = vadd.f32 0.0, %v2499
        %v2501 = vpop.f32.mrb[0].mxu0
        %2502 = vdwg.mxu0
        %v2503 = vmul.f32 %v2500, 0.35355338
        %v2505 = vlaneseq
        %v2506 = vshrl.u32 %v2505, 7
        %v2507 = vsub.s32 0, %v2506
        %v2508 = vrot.slane %v1163, %v2507
        %v2510 = vadd.f32 %v2503, %v2508
        %v2511 = vsel %vm1257, %v2510, -inf
        %2512 = vmax.xlane.f32.xlu0 %v2511
        %v2513 = vpop.xlane.xlu0 %2512
        %v2514 = vsub.f32 %v2510, %v2513
        %v2515 = vmul.f32 %v2514, 1.442695
        %v2516 = vpow.pop %v2515
        %v2517 = vsel %vm1257, %v2516, 0.0
        %2518 = vadd.xlane.f32.xlu0 %v2517
        %v2519 = vpop.xlane.xlu0 %2518
        %v2520 = vrcp.pop %v2519
        %v2521 = vmul.f32 %v2516, %v2520
        %2522 = vst.msk [vmem:[%s1059] sm:$0xff] %vm1257, %v2521
        %2523 = vrot.lane.b32.xlu0 %v2424, 96
        %v2524 = vpop.permute.xlu0 %2523
        %v2527 = vsel %vm1257, %v2521, 0
        %2529 = vmatprep.subr.mxu0 0.0
        %2530 = vmatpush1.msra.mxu0 %v2524
        %2531 = vmatprep.subr.mxu0 0.0
        %2532 = vmatpush1.msra.mxu0 0.0
        %2533 = vmatprep.subr.mxu0 0.0
        %2534 = vmatpush1.msra.mxu0 0.0
        %2535 = vmatprep.subr.mxu0 0.0
        %2536 = vmatpush1.msra.mxu0 0.0
        %2537 = vmatprep.subr.mxu0 0.0
        %2538 = vmatpush1.msra.mxu0 0.0
        %2539 = vmatprep.subr.mxu0 0.0
        %2540 = vmatpush1.msra.mxu0 0.0
        %2541 = vmatprep.subr.mxu0 0.0
        %2542 = vmatpush1.msra.mxu0 0.0
        %2543 = vmatprep.subr.mxu0 0.0
        %2544 = vmatpush1.msra.mxu0 0.0
        %2545 = vmatprep.subr.mxu0 0.0
        %2546 = vmatpush1.msra.mxu0 0.0
        %2547 = vmatprep.subr.mxu0 0.0
        %2548 = vmatpush1.msra.mxu0 0.0
        %2549 = vmatprep.subr.mxu0 0.0
        %2550 = vmatpush1.msra.mxu0 0.0
        %2551 = vmatprep.subr.mxu0 0.0
        %2552 = vmatpush1.msra.mxu0 0.0
        %2553 = vmatprep.subr.mxu0 0.0
        %2554 = vmatpush1.msra.mxu0 0.0
        %2555 = vmatprep.subr.mxu0 0.0
        %2556 = vmatpush1.msra.mxu0 0.0
        %2557 = vmatprep.subr.mxu0 0.0
        %2558 = vmatpush1.msra.mxu0 0.0
        %2559 = vmatprep.subr.mxu0 0.0
        %2560 = vmatpush1.msra.mxu0 0.0
        %2561 = vmatprep.subr.mxu0 0.0
        %2562 = vmatpush1.msra.mxu0 0.0
        %2563 = vmatprep.subr.mxu0 0.0
        %2564 = vmatpush1.msra.mxu0 0.0
        %2565 = vmatprep.subr.mxu0 0.0
        %2566 = vmatpush1.msra.mxu0 0.0
        %2567 = vmatprep.subr.mxu0 0.0
        %2568 = vmatpush1.msra.mxu0 0.0
        %2569 = vmatprep.subr.mxu0 0.0
        %2570 = vmatpush1.msra.mxu0 0.0
        %2571 = vmatprep.subr.mxu0 0.0
        %2572 = vmatpush1.msra.mxu0 0.0
        %2573 = vmatprep.subr.mxu0 0.0
        %2574 = vmatpush1.msra.mxu0 0.0
        %2575 = vmatprep.subr.mxu0 0.0
        %2576 = vmatpush1.msra.mxu0 0.0
        %2577 = vmatprep.subr.mxu0 0.0
        %2578 = vmatpush1.msra.mxu0 0.0
        %2579 = vmatprep.subr.mxu0 0.0
        %2580 = vmatpush1.msra.mxu0 0.0
        %2581 = vmatprep.subr.mxu0 0.0
        %2582 = vmatpush1.msra.mxu0 0.0
        %2583 = vmatprep.subr.mxu0 0.0
        %2584 = vmatpush1.msra.mxu0 0.0
        %2585 = vmatprep.subr.mxu0 0.0
        %2586 = vmatpush1.msra.mxu0 0.0
        %2587 = vmatprep.subr.mxu0 0.0
        %2588 = vmatpush1.msra.mxu0 0.0
        %2589 = vmatprep.subr.mxu0 0.0
        %2590 = vmatpush1.msra.mxu0 0.0
        %2591 = vmatprep.subr.mxu0 0.0
        %2592 = vmatpush1.msra.mxu0 0.0
        %2593 = vmatprep.mubr.f32.mxu0 0.0
        %2594 = vmatmul.mubr.f32.gmra.mrb[0].mxu0 %v2527
        %v2595 = vpop.f32.mrb[0].mxu0
        %v2596 = vadd.f32 0.0, %v2595
        %v2597 = vpop.f32.mrb[0].mxu0
        %2598 = vdwg.mxu0
        %2599 = vrot.lane.b32.xlu0 %v2345, 120
        %v2600 = vpop.permute.xlu0 %2599
        %2601 = vrot.lane.b32.xlu0 %v2424, 120
        %v2602 = vpop.permute.xlu0 %2601
        %v2603 = vsel %vm1257, %v2600, 0
        %v2605 = vsel %vm1257, %v2602, 0
        %2607 = vmatprep.subr.mxu0 0.0
        %2608 = vmatpush1.xpose.msra.mxu0 %v2605
        %2609 = vmatprep.subr.mxu0 0.0
        %2610 = vmatpush1.xpose.msra.mxu0 0.0
        %2611 = vmatprep.subr.mxu0 0.0
        %2612 = vmatpush1.xpose.msra.mxu0 0.0
        %2613 = vmatprep.subr.mxu0 0.0
        %2614 = vmatpush1.xpose.msra.mxu0 0.0
        %2615 = vmatprep.subr.mxu0 0.0
        %2616 = vmatpush1.xpose.msra.mxu0 0.0
        %2617 = vmatprep.subr.mxu0 0.0
        %2618 = vmatpush1.xpose.msra.mxu0 0.0
        %2619 = vmatprep.subr.mxu0 0.0
        %2620 = vmatpush1.xpose.msra.mxu0 0.0
        %2621 = vmatprep.subr.mxu0 0.0
        %2622 = vmatpush1.xpose.msra.mxu0 0.0
        %2623 = vmatprep.subr.mxu0 0.0
        %2624 = vmatpush1.xpose.msra.mxu0 0.0
        %2625 = vmatprep.subr.mxu0 0.0
        %2626 = vmatpush1.xpose.msra.mxu0 0.0
        %2627 = vmatprep.subr.mxu0 0.0
        %2628 = vmatpush1.xpose.msra.mxu0 0.0
        %2629 = vmatprep.subr.mxu0 0.0
        %2630 = vmatpush1.xpose.msra.mxu0 0.0
        %2631 = vmatprep.subr.mxu0 0.0
        %2632 = vmatpush1.xpose.msra.mxu0 0.0
        %2633 = vmatprep.subr.mxu0 0.0
        %2634 = vmatpush1.xpose.msra.mxu0 0.0
        %2635 = vmatprep.subr.mxu0 0.0
        %2636 = vmatpush1.xpose.msra.mxu0 0.0
        %2637 = vmatprep.subr.mxu0 0.0
        %2638 = vmatpush1.xpose.msra.mxu0 0.0
        %2639 = vmatprep.subr.mxu0 0.0
        %2640 = vmatpush1.xpose.msra.mxu0 0.0
        %2641 = vmatprep.subr.mxu0 0.0
        %2642 = vmatpush1.xpose.msra.mxu0 0.0
        %2643 = vmatprep.subr.mxu0 0.0
        %2644 = vmatpush1.xpose.msra.mxu0 0.0
        %2645 = vmatprep.subr.mxu0 0.0
        %2646 = vmatpush1.xpose.msra.mxu0 0.0
        %2647 = vmatprep.subr.mxu0 0.0
        %2648 = vmatpush1.xpose.msra.mxu0 0.0
        %2649 = vmatprep.subr.mxu0 0.0
        %2650 = vmatpush1.xpose.msra.mxu0 0.0
        %2651 = vmatprep.subr.mxu0 0.0
        %2652 = vmatpush1.xpose.msra.mxu0 0.0
        %2653 = vmatprep.subr.mxu0 0.0
        %2654 = vmatpush1.xpose.msra.mxu0 0.0
        %2655 = vmatprep.subr.mxu0 0.0
        %2656 = vmatpush1.xpose.msra.mxu0 0.0
        %2657 = vmatprep.subr.mxu0 0.0
        %2658 = vmatpush1.xpose.msra.mxu0 0.0
        %2659 = vmatprep.subr.mxu0 0.0
        %2660 = vmatpush1.xpose.msra.mxu0 0.0
        %2661 = vmatprep.subr.mxu0 0.0
        %2662 = vmatpush1.xpose.msra.mxu0 0.0
        %2663 = vmatprep.subr.mxu0 0.0
        %2664 = vmatpush1.xpose.msra.mxu0 0.0
        %2665 = vmatprep.subr.mxu0 0.0
        %2666 = vmatpush1.xpose.msra.mxu0 0.0
        %2667 = vmatprep.subr.mxu0 0.0
        %2668 = vmatpush1.xpose.msra.mxu0 0.0
        %2669 = vmatprep.subr.mxu0 0.0
        %2670 = vmatpush1.xpose.msra.mxu0 0.0
        %2671 = vmatprep.mubr.f32.mxu0 0.0
        %2672 = vmatmul.mubr.f32.gmra.mrb[0].mxu0 %v2603
        %v2673 = vpop.f32.mrb[0].mxu0
        %v2674 = vadd.f32 0.0, %v2673
        %v2675 = vpop.f32.mrb[0].mxu0
        %2676 = vdwg.mxu0
        %v2677 = vmul.f32 %v2674, 0.35355338
        %v2678 = vadd.f32 %v2677, %v2508
        %v2679 = vsel %vm1257, %v2678, -inf
        %2680 = vmax.xlane.f32.xlu0 %v2679
        %v2681 = vpop.xlane.xlu0 %2680
        %v2682 = vsub.f32 %v2678, %v2681
        %v2683 = vmul.f32 %v2682, 1.442695
        %v2684 = vpow.pop %v2683
        %v2685 = vsel %vm1257, %v2684, 0.0
        %2686 = vadd.xlane.f32.xlu0 %v2685
        %v2687 = vpop.xlane.xlu0 %2686
        %v2688 = vrcp.pop %v2687
        %v2689 = vmul.f32 %v2684, %v2688
        %s2690 = scalar_lea.vmem %s1059, 8 [#allocation2]
        %2691 = vst.msk [vmem:[%s2690] sm:$0xff] %vm1257, %v2689
        %2692 = vrot.lane.b32.xlu0 %v2424, 88
        %v2693 = vpop.permute.xlu0 %2692
        %v2696 = vsel %vm1257, %v2689, 0
        %2698 = vmatprep.subr.mxu0 0.0
        %2699 = vmatpush1.msra.mxu0 %v2693
        %2700 = vmatprep.subr.mxu0 0.0
        %2701 = vmatpush1.msra.mxu0 0.0
        %2702 = vmatprep.subr.mxu0 0.0
        %2703 = vmatpush1.msra.mxu0 0.0
        %2704 = vmatprep.subr.mxu0 0.0
        %2705 = vmatpush1.msra.mxu0 0.0
        %2706 = vmatprep.subr.mxu0 0.0
        %2707 = vmatpush1.msra.mxu0 0.0
        %2708 = vmatprep.subr.mxu0 0.0
        %2709 = vmatpush1.msra.mxu0 0.0
        %2710 = vmatprep.subr.mxu0 0.0
        %2711 = vmatpush1.msra.mxu0 0.0
        %2712 = vmatprep.subr.mxu0 0.0
        %2713 = vmatpush1.msra.mxu0 0.0
        %2714 = vmatprep.subr.mxu0 0.0
        %2715 = vmatpush1.msra.mxu0 0.0
        %2716 = vmatprep.subr.mxu0 0.0
        %2717 = vmatpush1.msra.mxu0 0.0
        %2718 = vmatprep.subr.mxu0 0.0
        %2719 = vmatpush1.msra.mxu0 0.0
        %2720 = vmatprep.subr.mxu0 0.0
        %2721 = vmatpush1.msra.mxu0 0.0
        %2722 = vmatprep.subr.mxu0 0.0
        %2723 = vmatpush1.msra.mxu0 0.0
        %2724 = vmatprep.subr.mxu0 0.0
        %2725 = vmatpush1.msra.mxu0 0.0
        %2726 = vmatprep.subr.mxu0 0.0
        %2727 = vmatpush1.msra.mxu0 0.0
        %2728 = vmatprep.subr.mxu0 0.0
        %2729 = vmatpush1.msra.mxu0 0.0
        %2730 = vmatprep.subr.mxu0 0.0
        %2731 = vmatpush1.msra.mxu0 0.0
        %2732 = vmatprep.subr.mxu0 0.0
        %2733 = vmatpush1.msra.mxu0 0.0
        %2734 = vmatprep.subr.mxu0 0.0
        %2735 = vmatpush1.msra.mxu0 0.0
        %2736 = vmatprep.subr.mxu0 0.0
        %2737 = vmatpush1.msra.mxu0 0.0
        %2738 = vmatprep.subr.mxu0 0.0
        %2739 = vmatpush1.msra.mxu0 0.0
        %2740 = vmatprep.subr.mxu0 0.0
        %2741 = vmatpush1.msra.mxu0 0.0
        %2742 = vmatprep.subr.mxu0 0.0
        %2743 = vmatpush1.msra.mxu0 0.0
        %2744 = vmatprep.subr.mxu0 0.0
        %2745 = vmatpush1.msra.mxu0 0.0
        %2746 = vmatprep.subr.mxu0 0.0
        %2747 = vmatpush1.msra.mxu0 0.0
        %2748 = vmatprep.subr.mxu0 0.0
        %2749 = vmatpush1.msra.mxu0 0.0
        %2750 = vmatprep.subr.mxu0 0.0
        %2751 = vmatpush1.msra.mxu0 0.0
        %2752 = vmatprep.subr.mxu0 0.0
        %2753 = vmatpush1.msra.mxu0 0.0
        %2754 = vmatprep.subr.mxu0 0.0
        %2755 = vmatpush1.msra.mxu0 0.0
        %2756 = vmatprep.subr.mxu0 0.0
        %2757 = vmatpush1.msra.mxu0 0.0
        %2758 = vmatprep.subr.mxu0 0.0
        %2759 = vmatpush1.msra.mxu0 0.0
        %2760 = vmatprep.subr.mxu0 0.0
        %2761 = vmatpush1.msra.mxu0 0.0
        %2762 = vmatprep.mubr.f32.mxu0 0.0
        %2763 = vmatmul.mubr.f32.gmra.mrb[0].mxu0 %v2696
        %v2764 = vpop.f32.mrb[0].mxu0
        %v2765 = vadd.f32 0.0, %v2764
        %v2766 = vpop.f32.mrb[0].mxu0
        %2767 = vdwg.mxu0
        %v2769 = vsel %vm1257, %v2765, 0
        %2771 = vmatprep.subr.mxu0 0.0
        %2772 = vmatpush1.msra.mxu0 %v2265
        %2773 = vmatprep.subr.mxu0 0.0
        %2774 = vmatpush1.msra.mxu0 0.0
        %2775 = vmatprep.subr.mxu0 0.0
        %2776 = vmatpush1.msra.mxu0 0.0
        %2777 = vmatprep.subr.mxu0 0.0
        %2778 = vmatpush1.msra.mxu0 0.0
        %2779 = vmatprep.subr.mxu0 0.0
        %2780 = vmatpush1.msra.mxu0 0.0
        %2781 = vmatprep.subr.mxu0 0.0
        %2782 = vmatpush1.msra.mxu0 0.0
        %2783 = vmatprep.subr.mxu0 0.0
        %2784 = vmatpush1.msra.mxu0 0.0
        %2785 = vmatprep.subr.mxu0 0.0
        %2786 = vmatpush1.msra.mxu0 0.0
        %2787 = vmatprep.subr.mxu0 0.0
        %2788 = vmatpush1.msra.mxu0 0.0
        %2789 = vmatprep.subr.mxu0 0.0
        %2790 = vmatpush1.msra.mxu0 0.0
        %2791 = vmatprep.subr.mxu0 0.0
        %2792 = vmatpush1.msra.mxu0 0.0
        %2793 = vmatprep.subr.mxu0 0.0
        %2794 = vmatpush1.msra.mxu0 0.0
        %2795 = vmatprep.subr.mxu0 0.0
        %2796 = vmatpush1.msra.mxu0 0.0
        %2797 = vmatprep.subr.mxu0 0.0
        %2798 = vmatpush1.msra.mxu0 0.0
        %2799 = vmatprep.subr.mxu0 0.0
        %2800 = vmatpush1.msra.mxu0 0.0
        %2801 = vmatprep.subr.mxu0 0.0
        %2802 = vmatpush1.msra.mxu0 0.0
        %2803 = vmatprep.subr.mxu0 0.0
        %2804 = vmatpush1.msra.mxu0 0.0
        %2805 = vmatprep.subr.mxu0 0.0
        %2806 = vmatpush1.msra.mxu0 0.0
        %2807 = vmatprep.subr.mxu0 0.0
        %2808 = vmatpush1.msra.mxu0 0.0
        %2809 = vmatprep.subr.mxu0 0.0
        %2810 = vmatpush1.msra.mxu0 0.0
        %2811 = vmatprep.subr.mxu0 0.0
        %2812 = vmatpush1.msra.mxu0 0.0
        %2813 = vmatprep.subr.mxu0 0.0
        %2814 = vmatpush1.msra.mxu0 0.0
        %2815 = vmatprep.subr.mxu0 0.0
        %2816 = vmatpush1.msra.mxu0 0.0
        %2817 = vmatprep.subr.mxu0 0.0
        %2818 = vmatpush1.msra.mxu0 0.0
        %2819 = vmatprep.subr.mxu0 0.0
        %2820 = vmatpush1.msra.mxu0 0.0
        %2821 = vmatprep.subr.mxu0 0.0
        %2822 = vmatpush1.msra.mxu0 0.0
        %2823 = vmatprep.subr.mxu0 0.0
        %2824 = vmatpush1.msra.mxu0 0.0
        %2825 = vmatprep.subr.mxu0 0.0
        %2826 = vmatpush1.msra.mxu0 0.0
        %2827 = vmatprep.subr.mxu0 0.0
        %2828 = vmatpush1.msra.mxu0 0.0
        %2829 = vmatprep.subr.mxu0 0.0
        %2830 = vmatpush1.msra.mxu0 0.0
        %2831 = vmatprep.subr.mxu0 0.0
        %2832 = vmatpush1.msra.mxu0 0.0
        %2833 = vmatprep.subr.mxu0 0.0
        %2834 = vmatpush1.msra.mxu0 0.0
        %2835 = vmatprep.mubr.f32.mxu0 0.0
        %2836 = vmatmul.mubr.f32.gmra.mrb[0].mxu0 %v2769
        %v2837 = vpop.f32.mrb[0].mxu0
        %v2838 = vadd.f32 0.0, %v2837
        %v2839 = vpop.f32.mrb[0].mxu0
        %2840 = vdwg.mxu0
        %v2842 = vsel %vm1257, %v2596, 0
        %2844 = vmatprep.subr.mxu0 0.0
        %2845 = vmatpush1.msra.mxu0 %v2264
        %2846 = vmatprep.subr.mxu0 0.0
        %2847 = vmatpush1.msra.mxu0 0.0
        %2848 = vmatprep.subr.mxu0 0.0
        %2849 = vmatpush1.msra.mxu0 0.0
        %2850 = vmatprep.subr.mxu0 0.0
        %2851 = vmatpush1.msra.mxu0 0.0
        %2852 = vmatprep.subr.mxu0 0.0
        %2853 = vmatpush1.msra.mxu0 0.0
        %2854 = vmatprep.subr.mxu0 0.0
        %2855 = vmatpush1.msra.mxu0 0.0
        %2856 = vmatprep.subr.mxu0 0.0
        %2857 = vmatpush1.msra.mxu0 0.0
        %2858 = vmatprep.subr.mxu0 0.0
        %2859 = vmatpush1.msra.mxu0 0.0
        %2860 = vmatprep.subr.mxu0 0.0
        %2861 = vmatpush1.msra.mxu0 0.0
        %2862 = vmatprep.subr.mxu0 0.0
        %2863 = vmatpush1.msra.mxu0 0.0
        %2864 = vmatprep.subr.mxu0 0.0
        %2865 = vmatpush1.msra.mxu0 0.0
        %2866 = vmatprep.subr.mxu0 0.0
        %2867 = vmatpush1.msra.mxu0 0.0
        %2868 = vmatprep.subr.mxu0 0.0
        %2869 = vmatpush1.msra.mxu0 0.0
        %2870 = vmatprep.subr.mxu0 0.0
        %2871 = vmatpush1.msra.mxu0 0.0
        %2872 = vmatprep.subr.mxu0 0.0
        %2873 = vmatpush1.msra.mxu0 0.0
        %2874 = vmatprep.subr.mxu0 0.0
        %2875 = vmatpush1.msra.mxu0 0.0
        %2876 = vmatprep.subr.mxu0 0.0
        %2877 = vmatpush1.msra.mxu0 0.0
        %2878 = vmatprep.subr.mxu0 0.0
        %2879 = vmatpush1.msra.mxu0 0.0
        %2880 = vmatprep.subr.mxu0 0.0
        %2881 = vmatpush1.msra.mxu0 0.0
        %2882 = vmatprep.subr.mxu0 0.0
        %2883 = vmatpush1.msra.mxu0 0.0
        %2884 = vmatprep.subr.mxu0 0.0
        %2885 = vmatpush1.msra.mxu0 0.0
        %2886 = vmatprep.subr.mxu0 0.0
        %2887 = vmatpush1.msra.mxu0 0.0
        %2888 = vmatprep.subr.mxu0 0.0
        %2889 = vmatpush1.msra.mxu0 0.0
        %2890 = vmatprep.subr.mxu0 0.0
        %2891 = vmatpush1.msra.mxu0 0.0
        %2892 = vmatprep.subr.mxu0 0.0
        %2893 = vmatpush1.msra.mxu0 0.0
        %2894 = vmatprep.subr.mxu0 0.0
        %2895 = vmatpush1.msra.mxu0 0.0
        %2896 = vmatprep.subr.mxu0 0.0
        %2897 = vmatpush1.msra.mxu0 0.0
        %2898 = vmatprep.subr.mxu0 0.0
        %2899 = vmatpush1.msra.mxu0 0.0
        %2900 = vmatprep.subr.mxu0 0.0
        %2901 = vmatpush1.msra.mxu0 0.0
        %2902 = vmatprep.subr.mxu0 0.0
        %2903 = vmatpush1.msra.mxu0 0.0
        %2904 = vmatprep.subr.mxu0 0.0
        %2905 = vmatpush1.msra.mxu0 0.0
        %2906 = vmatprep.subr.mxu0 0.0
        %2907 = vmatpush1.msra.mxu0 0.0
        %2908 = vmatprep.mubr.f32.mxu0 0.0
        %2909 = vmatmul.mubr.f32.gmra.mrb[0].mxu0 %v2842
        %v2910 = vpop.f32.mrb[0].mxu0
        %v2911 = vadd.f32 %v2838, %v2910
        %v2912 = vpop.f32.mrb[0].mxu0
        %2913 = vdwg.mxu0
        %2914 = vrot.lane.b32.xlu0 %v2345, 112
        %v2915 = vpop.permute.xlu0 %2914
        %2916 = vrot.lane.b32.xlu0 %v2424, 112
        %v2917 = vpop.permute.xlu0 %2916
        %v2918 = vsel %vm1257, %v2915, 0
        %v2920 = vsel %vm1257, %v2917, 0
        %2922 = vmatprep.subr.mxu0 0.0
        %2923 = vmatpush1.xpose.msra.mxu0 %v2920
        %2924 = vmatprep.subr.mxu0 0.0
        %2925 = vmatpush1.xpose.msra.mxu0 0.0
        %2926 = vmatprep.subr.mxu0 0.0
        %2927 = vmatpush1.xpose.msra.mxu0 0.0
        %2928 = vmatprep.subr.mxu0 0.0
        %2929 = vmatpush1.xpose.msra.mxu0 0.0
        %2930 = vmatprep.subr.mxu0 0.0
        %2931 = vmatpush1.xpose.msra.mxu0 0.0
        %2932 = vmatprep.subr.mxu0 0.0
        %2933 = vmatpush1.xpose.msra.mxu0 0.0
        %2934 = vmatprep.subr.mxu0 0.0
        %2935 = vmatpush1.xpose.msra.mxu0 0.0
        %2936 = vmatprep.subr.mxu0 0.0
        %2937 = vmatpush1.xpose.msra.mxu0 0.0
        %2938 = vmatprep.subr.mxu0 0.0
        %2939 = vmatpush1.xpose.msra.mxu0 0.0
        %2940 = vmatprep.subr.mxu0 0.0
        %2941 = vmatpush1.xpose.msra.mxu0 0.0
        %2942 = vmatprep.subr.mxu0 0.0
        %2943 = vmatpush1.xpose.msra.mxu0 0.0
        %2944 = vmatprep.subr.mxu0 0.0
        %2945 = vmatpush1.xpose.msra.mxu0 0.0
        %2946 = vmatprep.subr.mxu0 0.0
        %2947 = vmatpush1.xpose.msra.mxu0 0.0
        %2948 = vmatprep.subr.mxu0 0.0
        %2949 = vmatpush1.xpose.msra.mxu0 0.0
        %2950 = vmatprep.subr.mxu0 0.0
        %2951 = vmatpush1.xpose.msra.mxu0 0.0
        %2952 = vmatprep.subr.mxu0 0.0
        %2953 = vmatpush1.xpose.msra.mxu0 0.0
        %2954 = vmatprep.subr.mxu0 0.0
        %2955 = vmatpush1.xpose.msra.mxu0 0.0
        %2956 = vmatprep.subr.mxu0 0.0
        %2957 = vmatpush1.xpose.msra.mxu0 0.0
        %2958 = vmatprep.subr.mxu0 0.0
        %2959 = vmatpush1.xpose.msra.mxu0 0.0
        %2960 = vmatprep.subr.mxu0 0.0
        %2961 = vmatpush1.xpose.msra.mxu0 0.0
        %2962 = vmatprep.subr.mxu0 0.0
        %2963 = vmatpush1.xpose.msra.mxu0 0.0
        %2964 = vmatprep.subr.mxu0 0.0
        %2965 = vmatpush1.xpose.msra.mxu0 0.0
        %2966 = vmatprep.subr.mxu0 0.0
        %2967 = vmatpush1.xpose.msra.mxu0 0.0
        %2968 = vmatprep.subr.mxu0 0.0
        %2969 = vmatpush1.xpose.msra.mxu0 0.0
        %2970 = vmatprep.subr.mxu0 0.0
        %2971 = vmatpush1.xpose.msra.mxu0 0.0
        %2972 = vmatprep.subr.mxu0 0.0
        %2973 = vmatpush1.xpose.msra.mxu0 0.0
        %2974 = vmatprep.subr.mxu0 0.0
        %2975 = vmatpush1.xpose.msra.mxu0 0.0
        %2976 = vmatprep.subr.mxu0 0.0
        %2977 = vmatpush1.xpose.msra.mxu0 0.0
        %2978 = vmatprep.subr.mxu0 0.0
        %2979 = vmatpush1.xpose.msra.mxu0 0.0
        %2980 = vmatprep.subr.mxu0 0.0
        %2981 = vmatpush1.xpose.msra.mxu0 0.0
        %2982 = vmatprep.subr.mxu0 0.0
        %2983 = vmatpush1.xpose.msra.mxu0 0.0
        %2984 = vmatprep.subr.mxu0 0.0
        %2985 = vmatpush1.xpose.msra.mxu0 0.0
        %2986 = vmatprep.mubr.f32.mxu0 0.0
        %2987 = vmatmul.mubr.f32.gmra.mrb[0].mxu0 %v2918
        %v2988 = vpop.f32.mrb[0].mxu0
        %v2989 = vadd.f32 0.0, %v2988
        %v2990 = vpop.f32.mrb[0].mxu0
        %2991 = vdwg.mxu0
        %v2992 = vmul.f32 %v2989, 0.35355338
        %v2993 = vadd.f32 %v2992, %v2508
        %v2994 = vsel %vm1257, %v2993, -inf
        %2995 = vmax.xlane.f32.xlu0 %v2994
        %v2996 = vpop.xlane.xlu0 %2995
        %v2997 = vsub.f32 %v2993, %v2996
        %v2998 = vmul.f32 %v2997, 1.442695
        %v2999 = vpow.pop %v2998
        %v3000 = vsel %vm1257, %v2999, 0.0
        %3001 = vadd.xlane.f32.xlu0 %v3000
        %v3002 = vpop.xlane.xlu0 %3001
        %v3003 = vrcp.pop %v3002
        %v3004 = vmul.f32 %v2999, %v3003
        %s3005 = scalar_lea.vmem %s1059, 16 [#allocation2]
        %3006 = vst.msk [vmem:[%s3005] sm:$0xff] %vm1257, %v3004
        %3007 = vrot.lane.b32.xlu0 %v2424, 80
        %v3008 = vpop.permute.xlu0 %3007
        %v3011 = vsel %vm1257, %v3004, 0
        %3013 = vmatprep.subr.mxu0 0.0
        %3014 = vmatpush1.msra.mxu0 %v3008
        %3015 = vmatprep.subr.mxu0 0.0
        %3016 = vmatpush1.msra.mxu0 0.0
        %3017 = vmatprep.subr.mxu0 0.0
        %3018 = vmatpush1.msra.mxu0 0.0
        %3019 = vmatprep.subr.mxu0 0.0
        %3020 = vmatpush1.msra.mxu0 0.0
        %3021 = vmatprep.subr.mxu0 0.0
        %3022 = vmatpush1.msra.mxu0 0.0
        %3023 = vmatprep.subr.mxu0 0.0
        %3024 = vmatpush1.msra.mxu0 0.0
        %3025 = vmatprep.subr.mxu0 0.0
        %3026 = vmatpush1.msra.mxu0 0.0
        %3027 = vmatprep.subr.mxu0 0.0
        %3028 = vmatpush1.msra.mxu0 0.0
        %3029 = vmatprep.subr.mxu0 0.0
        %3030 = vmatpush1.msra.mxu0 0.0
        %3031 = vmatprep.subr.mxu0 0.0
        %3032 = vmatpush1.msra.mxu0 0.0
        %3033 = vmatprep.subr.mxu0 0.0
        %3034 = vmatpush1.msra.mxu0 0.0
        %3035 = vmatprep.subr.mxu0 0.0
        %3036 = vmatpush1.msra.mxu0 0.0
        %3037 = vmatprep.subr.mxu0 0.0
        %3038 = vmatpush1.msra.mxu0 0.0
        %3039 = vmatprep.subr.mxu0 0.0
        %3040 = vmatpush1.msra.mxu0 0.0
        %3041 = vmatprep.subr.mxu0 0.0
        %3042 = vmatpush1.msra.mxu0 0.0
        %3043 = vmatprep.subr.mxu0 0.0
        %3044 = vmatpush1.msra.mxu0 0.0
        %3045 = vmatprep.subr.mxu0 0.0
        %3046 = vmatpush1.msra.mxu0 0.0
        %3047 = vmatprep.subr.mxu0 0.0
        %3048 = vmatpush1.msra.mxu0 0.0
        %3049 = vmatprep.subr.mxu0 0.0
        %3050 = vmatpush1.msra.mxu0 0.0
        %3051 = vmatprep.subr.mxu0 0.0
        %3052 = vmatpush1.msra.mxu0 0.0
        %3053 = vmatprep.subr.mxu0 0.0
        %3054 = vmatpush1.msra.mxu0 0.0
        %3055 = vmatprep.subr.mxu0 0.0
        %3056 = vmatpush1.msra.mxu0 0.0
        %3057 = vmatprep.subr.mxu0 0.0
        %3058 = vmatpush1.msra.mxu0 0.0
        %3059 = vmatprep.subr.mxu0 0.0
        %3060 = vmatpush1.msra.mxu0 0.0
        %3061 = vmatprep.subr.mxu0 0.0
        %3062 = vmatpush1.msra.mxu0 0.0
        %3063 = vmatprep.subr.mxu0 0.0
        %3064 = vmatpush1.msra.mxu0 0.0
        %3065 = vmatprep.subr.mxu0 0.0
        %3066 = vmatpush1.msra.mxu0 0.0
        %3067 = vmatprep.subr.mxu0 0.0
        %3068 = vmatpush1.msra.mxu0 0.0
        %3069 = vmatprep.subr.mxu0 0.0
        %3070 = vmatpush1.msra.mxu0 0.0
        %3071 = vmatprep.subr.mxu0 0.0
        %3072 = vmatpush1.msra.mxu0 0.0
        %3073 = vmatprep.subr.mxu0 0.0
        %3074 = vmatpush1.msra.mxu0 0.0
        %3075 = vmatprep.subr.mxu0 0.0
        %3076 = vmatpush1.msra.mxu0 0.0
        %3077 = vmatprep.mubr.f32.mxu0 0.0
        %3078 = vmatmul.mubr.f32.gmra.mrb[0].mxu0 %v3011
        %v3079 = vpop.f32.mrb[0].mxu0
        %v3080 = vadd.f32 0.0, %v3079
        %v3081 = vpop.f32.mrb[0].mxu0
        %3082 = vdwg.mxu0
        %v3084 = vsel %vm1257, %v3080, 0
        %3086 = vmatprep.subr.mxu0 0.0
        %3087 = vmatpush1.msra.mxu0 %v2266
        %3088 = vmatprep.subr.mxu0 0.0
        %3089 = vmatpush1.msra.mxu0 0.0
        %3090 = vmatprep.subr.mxu0 0.0
        %3091 = vmatpush1.msra.mxu0 0.0
        %3092 = vmatprep.subr.mxu0 0.0
        %3093 = vmatpush1.msra.mxu0 0.0
        %3094 = vmatprep.subr.mxu0 0.0
        %3095 = vmatpush1.msra.mxu0 0.0
        %3096 = vmatprep.subr.mxu0 0.0
        %3097 = vmatpush1.msra.mxu0 0.0
        %3098 = vmatprep.subr.mxu0 0.0
        %3099 = vmatpush1.msra.mxu0 0.0
        %3100 = vmatprep.subr.mxu0 0.0
        %3101 = vmatpush1.msra.mxu0 0.0
        %3102 = vmatprep.subr.mxu0 0.0
        %3103 = vmatpush1.msra.mxu0 0.0
        %3104 = vmatprep.subr.mxu0 0.0
        %3105 = vmatpush1.msra.mxu0 0.0
        %3106 = vmatprep.subr.mxu0 0.0
        %3107 = vmatpush1.msra.mxu0 0.0
        %3108 = vmatprep.subr.mxu0 0.0
        %3109 = vmatpush1.msra.mxu0 0.0
        %3110 = vmatprep.subr.mxu0 0.0
        %3111 = vmatpush1.msra.mxu0 0.0
        %3112 = vmatprep.subr.mxu0 0.0
        %3113 = vmatpush1.msra.mxu0 0.0
        %3114 = vmatprep.subr.mxu0 0.0
        %3115 = vmatpush1.msra.mxu0 0.0
        %3116 = vmatprep.subr.mxu0 0.0
        %3117 = vmatpush1.msra.mxu0 0.0
        %3118 = vmatprep.subr.mxu0 0.0
        %3119 = vmatpush1.msra.mxu0 0.0
        %3120 = vmatprep.subr.mxu0 0.0
        %3121 = vmatpush1.msra.mxu0 0.0
        %3122 = vmatprep.subr.mxu0 0.0
        %3123 = vmatpush1.msra.mxu0 0.0
        %3124 = vmatprep.subr.mxu0 0.0
        %3125 = vmatpush1.msra.mxu0 0.0
        %3126 = vmatprep.subr.mxu0 0.0
        %3127 = vmatpush1.msra.mxu0 0.0
        %3128 = vmatprep.subr.mxu0 0.0
        %3129 = vmatpush1.msra.mxu0 0.0
        %3130 = vmatprep.subr.mxu0 0.0
        %3131 = vmatpush1.msra.mxu0 0.0
        %3132 = vmatprep.subr.mxu0 0.0
        %3133 = vmatpush1.msra.mxu0 0.0
        %3134 = vmatprep.subr.mxu0 0.0
        %3135 = vmatpush1.msra.mxu0 0.0
        %3136 = vmatprep.subr.mxu0 0.0
        %3137 = vmatpush1.msra.mxu0 0.0
        %3138 = vmatprep.subr.mxu0 0.0
        %3139 = vmatpush1.msra.mxu0 0.0
        %3140 = vmatprep.subr.mxu0 0.0
        %3141 = vmatpush1.msra.mxu0 0.0
        %3142 = vmatprep.subr.mxu0 0.0
        %3143 = vmatpush1.msra.mxu0 0.0
        %3144 = vmatprep.subr.mxu0 0.0
        %3145 = vmatpush1.msra.mxu0 0.0
        %3146 = vmatprep.subr.mxu0 0.0
        %3147 = vmatpush1.msra.mxu0 0.0
        %3148 = vmatprep.subr.mxu0 0.0
        %3149 = vmatpush1.msra.mxu0 0.0
        %3150 = vmatprep.mubr.f32.mxu0 0.0
        %3151 = vmatmul.mubr.f32.gmra.mrb[0].mxu0 %v3084
        %v3152 = vpop.f32.mrb[0].mxu0
        %v3153 = vadd.f32 0.0, %v3152
        %v3154 = vpop.f32.mrb[0].mxu0
        %3155 = vdwg.mxu0
        %v3156 = vadd.f32 %v2911, %v3153
        %3157 = vrot.lane.b32.xlu0 %v2345, 104
        %v3158 = vpop.permute.xlu0 %3157
        %3159 = vrot.lane.b32.xlu0 %v2424, 104
        %v3160 = vpop.permute.xlu0 %3159
        %v3161 = vsel %vm1257, %v3158, 0
        %v3163 = vsel %vm1257, %v3160, 0
        %3165 = vmatprep.subr.mxu0 0.0
        %3166 = vmatpush1.xpose.msra.mxu0 %v3163
        %3167 = vmatprep.subr.mxu0 0.0
        %3168 = vmatpush1.xpose.msra.mxu0 0.0
        %3169 = vmatprep.subr.mxu0 0.0
        %3170 = vmatpush1.xpose.msra.mxu0 0.0
        %3171 = vmatprep.subr.mxu0 0.0
        %3172 = vmatpush1.xpose.msra.mxu0 0.0
        %3173 = vmatprep.subr.mxu0 0.0
        %3174 = vmatpush1.xpose.msra.mxu0 0.0
        %3175 = vmatprep.subr.mxu0 0.0
        %3176 = vmatpush1.xpose.msra.mxu0 0.0
        %3177 = vmatprep.subr.mxu0 0.0
        %3178 = vmatpush1.xpose.msra.mxu0 0.0
        %3179 = vmatprep.subr.mxu0 0.0
        %3180 = vmatpush1.xpose.msra.mxu0 0.0
        %3181 = vmatprep.subr.mxu0 0.0
        %3182 = vmatpush1.xpose.msra.mxu0 0.0
        %3183 = vmatprep.subr.mxu0 0.0
        %3184 = vmatpush1.xpose.msra.mxu0 0.0
        %3185 = vmatprep.subr.mxu0 0.0
        %3186 = vmatpush1.xpose.msra.mxu0 0.0
        %3187 = vmatprep.subr.mxu0 0.0
        %3188 = vmatpush1.xpose.msra.mxu0 0.0
        %3189 = vmatprep.subr.mxu0 0.0
        %3190 = vmatpush1.xpose.msra.mxu0 0.0
        %3191 = vmatprep.subr.mxu0 0.0
        %3192 = vmatpush1.xpose.msra.mxu0 0.0
        %3193 = vmatprep.subr.mxu0 0.0
        %3194 = vmatpush1.xpose.msra.mxu0 0.0
        %3195 = vmatprep.subr.mxu0 0.0
        %3196 = vmatpush1.xpose.msra.mxu0 0.0
        %3197 = vmatprep.subr.mxu0 0.0
        %3198 = vmatpush1.xpose.msra.mxu0 0.0
        %3199 = vmatprep.subr.mxu0 0.0
        %3200 = vmatpush1.xpose.msra.mxu0 0.0
        %3201 = vmatprep.subr.mxu0 0.0
        %3202 = vmatpush1.xpose.msra.mxu0 0.0
        %3203 = vmatprep.subr.mxu0 0.0
        %3204 = vmatpush1.xpose.msra.mxu0 0.0
        %3205 = vmatprep.subr.mxu0 0.0
        %3206 = vmatpush1.xpose.msra.mxu0 0.0
        %3207 = vmatprep.subr.mxu0 0.0
        %3208 = vmatpush1.xpose.msra.mxu0 0.0
        %3209 = vmatprep.subr.mxu0 0.0
        %3210 = vmatpush1.xpose.msra.mxu0 0.0
        %3211 = vmatprep.subr.mxu0 0.0
        %3212 = vmatpush1.xpose.msra.mxu0 0.0
        %3213 = vmatprep.subr.mxu0 0.0
        %3214 = vmatpush1.xpose.msra.mxu0 0.0
        %3215 = vmatprep.subr.mxu0 0.0
        %3216 = vmatpush1.xpose.msra.mxu0 0.0
        %3217 = vmatprep.subr.mxu0 0.0
        %3218 = vmatpush1.xpose.msra.mxu0 0.0
        %3219 = vmatprep.subr.mxu0 0.0
        %3220 = vmatpush1.xpose.msra.mxu0 0.0
        %3221 = vmatprep.subr.mxu0 0.0
        %3222 = vmatpush1.xpose.msra.mxu0 0.0
        %3223 = vmatprep.subr.mxu0 0.0
        %3224 = vmatpush1.xpose.msra.mxu0 0.0
        %3225 = vmatprep.subr.mxu0 0.0
        %3226 = vmatpush1.xpose.msra.mxu0 0.0
        %3227 = vmatprep.subr.mxu0 0.0
        %3228 = vmatpush1.xpose.msra.mxu0 0.0
        %3229 = vmatprep.mubr.f32.mxu0 0.0
        %3230 = vmatmul.mubr.f32.gmra.mrb[0].mxu0 %v3161
        %v3231 = vpop.f32.mrb[0].mxu0
        %v3232 = vadd.f32 0.0, %v3231
        %v3233 = vpop.f32.mrb[0].mxu0
        %3234 = vdwg.mxu0
        %v3235 = vmul.f32 %v3232, 0.35355338
        %v3236 = vadd.f32 %v3235, %v2508
        %v3237 = vsel %vm1257, %v3236, -inf
        %3238 = vmax.xlane.f32.xlu0 %v3237
        %v3239 = vpop.xlane.xlu0 %3238
        %v3240 = vsub.f32 %v3236, %v3239
        %v3241 = vmul.f32 %v3240, 1.442695
        %v3242 = vpow.pop %v3241
        %v3243 = vsel %vm1257, %v3242, 0.0
        %3244 = vadd.xlane.f32.xlu0 %v3243
        %v3245 = vpop.xlane.xlu0 %3244
        %v3246 = vrcp.pop %v3245
        %v3247 = vmul.f32 %v3242, %v3246
        %s3248 = scalar_lea.vmem %s1059, 24 [#allocation2]
        %3249 = vst.msk [vmem:[%s3248] sm:$0xff] %vm1257, %v3247
        %3250 = vrot.lane.b32.xlu0 %v2424, 72
        %v3251 = vpop.permute.xlu0 %3250
        %v3254 = vsel %vm1257, %v3247, 0
        %3256 = vmatprep.subr.mxu0 0.0
        %3257 = vmatpush1.msra.mxu0 %v3251
        %3258 = vmatprep.subr.mxu0 0.0
        %3259 = vmatpush1.msra.mxu0 0.0
        %3260 = vmatprep.subr.mxu0 0.0
        %3261 = vmatpush1.msra.mxu0 0.0
        %3262 = vmatprep.subr.mxu0 0.0
        %3263 = vmatpush1.msra.mxu0 0.0
        %3264 = vmatprep.subr.mxu0 0.0
        %3265 = vmatpush1.msra.mxu0 0.0
        %3266 = vmatprep.subr.mxu0 0.0
        %3267 = vmatpush1.msra.mxu0 0.0
        %3268 = vmatprep.subr.mxu0 0.0
        %3269 = vmatpush1.msra.mxu0 0.0
        %3270 = vmatprep.subr.mxu0 0.0
        %3271 = vmatpush1.msra.mxu0 0.0
        %3272 = vmatprep.subr.mxu0 0.0
        %3273 = vmatpush1.msra.mxu0 0.0
        %3274 = vmatprep.subr.mxu0 0.0
        %3275 = vmatpush1.msra.mxu0 0.0
        %3276 = vmatprep.subr.mxu0 0.0
        %3277 = vmatpush1.msra.mxu0 0.0
        %3278 = vmatprep.subr.mxu0 0.0
        %3279 = vmatpush1.msra.mxu0 0.0
        %3280 = vmatprep.subr.mxu0 0.0
        %3281 = vmatpush1.msra.mxu0 0.0
        %3282 = vmatprep.subr.mxu0 0.0
        %3283 = vmatpush1.msra.mxu0 0.0
        %3284 = vmatprep.subr.mxu0 0.0
        %3285 = vmatpush1.msra.mxu0 0.0
        %3286 = vmatprep.subr.mxu0 0.0
        %3287 = vmatpush1.msra.mxu0 0.0
        %3288 = vmatprep.subr.mxu0 0.0
        %3289 = vmatpush1.msra.mxu0 0.0
        %3290 = vmatprep.subr.mxu0 0.0
        %3291 = vmatpush1.msra.mxu0 0.0
        %3292 = vmatprep.subr.mxu0 0.0
        %3293 = vmatpush1.msra.mxu0 0.0
        %3294 = vmatprep.subr.mxu0 0.0
        %3295 = vmatpush1.msra.mxu0 0.0
        %3296 = vmatprep.subr.mxu0 0.0
        %3297 = vmatpush1.msra.mxu0 0.0
        %3298 = vmatprep.subr.mxu0 0.0
        %3299 = vmatpush1.msra.mxu0 0.0
        %3300 = vmatprep.subr.mxu0 0.0
        %3301 = vmatpush1.msra.mxu0 0.0
        %3302 = vmatprep.subr.mxu0 0.0
        %3303 = vmatpush1.msra.mxu0 0.0
        %3304 = vmatprep.subr.mxu0 0.0
        %3305 = vmatpush1.msra.mxu0 0.0
        %3306 = vmatprep.subr.mxu0 0.0
        %3307 = vmatpush1.msra.mxu0 0.0
        %3308 = vmatprep.subr.mxu0 0.0
        %3309 = vmatpush1.msra.mxu0 0.0
        %3310 = vmatprep.subr.mxu0 0.0
        %3311 = vmatpush1.msra.mxu0 0.0
        %3312 = vmatprep.subr.mxu0 0.0
        %3313 = vmatpush1.msra.mxu0 0.0
        %3314 = vmatprep.subr.mxu0 0.0
        %3315 = vmatpush1.msra.mxu0 0.0
        %3316 = vmatprep.subr.mxu0 0.0
        %3317 = vmatpush1.msra.mxu0 0.0
        %3318 = vmatprep.subr.mxu0 0.0
        %3319 = vmatpush1.msra.mxu0 0.0
        %3320 = vmatprep.mubr.f32.mxu0 0.0
        %3321 = vmatmul.mubr.f32.gmra.mrb[0].mxu0 %v3254
        %v3322 = vpop.f32.mrb[0].mxu0
        %v3323 = vadd.f32 0.0, %v3322
        %v3324 = vpop.f32.mrb[0].mxu0
        %3325 = vdwg.mxu0
        %v3327 = vsel %vm1257, %v3323, 0
        %3329 = vmatprep.subr.mxu0 0.0
        %3330 = vmatpush1.msra.mxu0 %v2267
        %3331 = vmatprep.subr.mxu0 0.0
        %3332 = vmatpush1.msra.mxu0 0.0
        %3333 = vmatprep.subr.mxu0 0.0
        %3334 = vmatpush1.msra.mxu0 0.0
        %3335 = vmatprep.subr.mxu0 0.0
        %3336 = vmatpush1.msra.mxu0 0.0
        %3337 = vmatprep.subr.mxu0 0.0
        %3338 = vmatpush1.msra.mxu0 0.0
        %3339 = vmatprep.subr.mxu0 0.0
        %3340 = vmatpush1.msra.mxu0 0.0
        %3341 = vmatprep.subr.mxu0 0.0
        %3342 = vmatpush1.msra.mxu0 0.0
        %3343 = vmatprep.subr.mxu0 0.0
        %3344 = vmatpush1.msra.mxu0 0.0
        %3345 = vmatprep.subr.mxu0 0.0
        %3346 = vmatpush1.msra.mxu0 0.0
        %3347 = vmatprep.subr.mxu0 0.0
        %3348 = vmatpush1.msra.mxu0 0.0
        %3349 = vmatprep.subr.mxu0 0.0
        %3350 = vmatpush1.msra.mxu0 0.0
        %3351 = vmatprep.subr.mxu0 0.0
        %3352 = vmatpush1.msra.mxu0 0.0
        %3353 = vmatprep.subr.mxu0 0.0
        %3354 = vmatpush1.msra.mxu0 0.0
        %3355 = vmatprep.subr.mxu0 0.0
        %3356 = vmatpush1.msra.mxu0 0.0
        %3357 = vmatprep.subr.mxu0 0.0
        %3358 = vmatpush1.msra.mxu0 0.0
        %3359 = vmatprep.subr.mxu0 0.0
        %3360 = vmatpush1.msra.mxu0 0.0
        %3361 = vmatprep.subr.mxu0 0.0
        %3362 = vmatpush1.msra.mxu0 0.0
        %3363 = vmatprep.subr.mxu0 0.0
        %3364 = vmatpush1.msra.mxu0 0.0
        %3365 = vmatprep.subr.mxu0 0.0
        %3366 = vmatpush1.msra.mxu0 0.0
        %3367 = vmatprep.subr.mxu0 0.0
        %3368 = vmatpush1.msra.mxu0 0.0
        %3369 = vmatprep.subr.mxu0 0.0
        %3370 = vmatpush1.msra.mxu0 0.0
        %3371 = vmatprep.subr.mxu0 0.0
        %3372 = vmatpush1.msra.mxu0 0.0
        %3373 = vmatprep.subr.mxu0 0.0
        %3374 = vmatpush1.msra.mxu0 0.0
        %3375 = vmatprep.subr.mxu0 0.0
        %3376 = vmatpush1.msra.mxu0 0.0
        %3377 = vmatprep.subr.mxu0 0.0
        %3378 = vmatpush1.msra.mxu0 0.0
        %3379 = vmatprep.subr.mxu0 0.0
        %3380 = vmatpush1.msra.mxu0 0.0
        %3381 = vmatprep.subr.mxu0 0.0
        %3382 = vmatpush1.msra.mxu0 0.0
        %3383 = vmatprep.subr.mxu0 0.0
        %3384 = vmatpush1.msra.mxu0 0.0
        %3385 = vmatprep.subr.mxu0 0.0
        %3386 = vmatpush1.msra.mxu0 0.0
        %3387 = vmatprep.subr.mxu0 0.0
        %3388 = vmatpush1.msra.mxu0 0.0
        %3389 = vmatprep.subr.mxu0 0.0
        %3390 = vmatpush1.msra.mxu0 0.0
        %3391 = vmatprep.subr.mxu0 0.0
        %3392 = vmatpush1.msra.mxu0 0.0
        %3393 = vmatprep.mubr.f32.mxu0 0.0
        %3394 = vmatmul.mubr.f32.gmra.mrb[0].mxu0 %v3327
        %v3395 = vpop.f32.mrb[0].mxu0
        %v3396 = vadd.f32 0.0, %v3395
        %v3397 = vpop.f32.mrb[0].mxu0
        %3398 = vdwg.mxu0
        %v3399 = vadd.f32 %v3156, %v3396
        %v3401 = vlaneseq
        %v3402 = vshrl.u32 %v3401, 7
        %v3403 = vsub.s32 0, %v3402
        %v3404 = vrot.slane %v2268, %v3403
        %v3406 = vadd.f32 %v3399, %v3404
        %v3407 = vadd.f32 %v2253, %v3406
        %v3408 = vld [vmem:[%s1123] sm:$0x1]
        %v3409 = vld [vmem:[%s1126] sm:$0x1]
        %v3410 = vsel %vm1180, %v3407, 0.0
        %3411 = vadd.xlane.f32.xlu0 %v3410
        %v3412 = vpop.xlane.xlu0 %3411
        %v3413 = vmul.f32 %v3412, %v2229
        %v3414 = vsub.f32 %v3407, %v3413
        %v3415 = vmul.f32 %v3414, %v3414
        %v3416 = vsel %vm1180, %v3415, 0.0
        %3417 = vadd.xlane.f32.xlu0 %v3416
        %v3418 = vpop.xlane.xlu0 %3417
        %v3419 = vmul.f32 %v3418, %v2229
        %v3420 = vadd.f32 %v3419, 1e-05
        %v3421 = vrsqrt.pop %v3420
        %v3422 = vmul.f32 %v3414, %v3421
        %v3424 = vlaneseq
        %v3425 = vshrl.u32 %v3424, 7
        %v3426 = vsub.s32 0, %v3425
        %v3427 = vrot.slane %v3408, %v3426
        %v3429 = vmul.f32 %v3422, %v3427
        %v3431 = vlaneseq
        %v3432 = vshrl.u32 %v3431, 7
        %v3433 = vsub.s32 0, %v3432
        %v3434 = vrot.slane %v3409, %v3433
        %v3436 = vadd.f32 %v3429, %v3434
        %v3437 = vld [vmem:[%s1131] sm:$0xff]
        %v3438 = vld [vmem:[%s1131 + $0x8] sm:$0xff]
        %v3439 = vld [vmem:[%s1131 + $0x10] sm:$0xff]
        %v3440 = vld [vmem:[%s1131 + $0x18] sm:$0xff]
        %v3441 = vld [vmem:[%s1134] sm:$0x1]
        %v3442 = vld [vmem:[%s1139] sm:$0xff]
        %v3443 = vld [vmem:[%s1139 + $0x8] sm:$0xff]
        %v3444 = vld [vmem:[%s1139 + $0x10] sm:$0xff]
        %v3445 = vld [vmem:[%s1139 + $0x18] sm:$0xff]
        %v3446 = vld [vmem:[%s1139 + $0x20] sm:$0xff]
        %v3447 = vld [vmem:[%s1139 + $0x28] sm:$0xff]
        %v3448 = vld [vmem:[%s1139 + $0x30] sm:$0xff]
        %v3449 = vld [vmem:[%s1139 + $0x38] sm:$0xff]
        %v3450 = vld [vmem:[%s1142] sm:$0x1]
        %v3452 = vlaneseq
        %v3453 = vshrl.u32 %v3452, 7
        %v3454 = vsub.s32 0, %v3453
        %v3455 = vrot.slane %v3441, %v3454
        %v3458 = vsel %vm1180, %v3436, 0
        %3460 = vmatprep.subr.mxu0 0.0
        %3461 = vmatpush1.msra.mxu0 %v3437
        %3462 = vmatprep.subr.mxu0 0.0
        %3463 = vmatpush1.msra.mxu0 %v3438
        %3464 = vmatprep.subr.mxu0 0.0
        %3465 = vmatpush1.msra.mxu0 %v3439
        %3466 = vmatprep.subr.mxu0 0.0
        %3467 = vmatpush1.msra.mxu0 %v3440
        %3468 = vmatprep.subr.mxu0 0.0
        %3469 = vmatpush1.msra.mxu0 0.0
        %3470 = vmatprep.subr.mxu0 0.0
        %3471 = vmatpush1.msra.mxu0 0.0
        %3472 = vmatprep.subr.mxu0 0.0
        %3473 = vmatpush1.msra.mxu0 0.0
        %3474 = vmatprep.subr.mxu0 0.0
        %3475 = vmatpush1.msra.mxu0 0.0
        %3476 = vmatprep.subr.mxu0 0.0
        %3477 = vmatpush1.msra.mxu0 0.0
        %3478 = vmatprep.subr.mxu0 0.0
        %3479 = vmatpush1.msra.mxu0 0.0
        %3480 = vmatprep.subr.mxu0 0.0
        %3481 = vmatpush1.msra.mxu0 0.0
        %3482 = vmatprep.subr.mxu0 0.0
        %3483 = vmatpush1.msra.mxu0 0.0
        %3484 = vmatprep.subr.mxu0 0.0
        %3485 = vmatpush1.msra.mxu0 0.0
        %3486 = vmatprep.subr.mxu0 0.0
        %3487 = vmatpush1.msra.mxu0 0.0
        %3488 = vmatprep.subr.mxu0 0.0
        %3489 = vmatpush1.msra.mxu0 0.0
        %3490 = vmatprep.subr.mxu0 0.0
        %3491 = vmatpush1.msra.mxu0 0.0
        %3492 = vmatprep.subr.mxu0 0.0
        %3493 = vmatpush1.msra.mxu0 0.0
        %3494 = vmatprep.subr.mxu0 0.0
        %3495 = vmatpush1.msra.mxu0 0.0
        %3496 = vmatprep.subr.mxu0 0.0
        %3497 = vmatpush1.msra.mxu0 0.0
        %3498 = vmatprep.subr.mxu0 0.0
        %3499 = vmatpush1.msra.mxu0 0.0
        %3500 = vmatprep.subr.mxu0 0.0
        %3501 = vmatpush1.msra.mxu0 0.0
        %3502 = vmatprep.subr.mxu0 0.0
        %3503 = vmatpush1.msra.mxu0 0.0
        %3504 = vmatprep.subr.mxu0 0.0
        %3505 = vmatpush1.msra.mxu0 0.0
        %3506 = vmatprep.subr.mxu0 0.0
        %3507 = vmatpush1.msra.mxu0 0.0
        %3508 = vmatprep.subr.mxu0 0.0
        %3509 = vmatpush1.msra.mxu0 0.0
        %3510 = vmatprep.subr.mxu0 0.0
        %3511 = vmatpush1.msra.mxu0 0.0
        %3512 = vmatprep.subr.mxu0 0.0
        %3513 = vmatpush1.msra.mxu0 0.0
        %3514 = vmatprep.subr.mxu0 0.0
        %3515 = vmatpush1.msra.mxu0 0.0
        %3516 = vmatprep.subr.mxu0 0.0
        %3517 = vmatpush1.msra.mxu0 0.0
        %3518 = vmatprep.subr.mxu0 0.0
        %3519 = vmatpush1.msra.mxu0 0.0
        %3520 = vmatprep.subr.mxu0 0.0
        %3521 = vmatpush1.msra.mxu0 0.0
        %3522 = vmatprep.subr.mxu0 0.0
        %3523 = vmatpush1.msra.mxu0 0.0
        %3524 = vmatprep.mubr.f32.mxu0 0.0
        %3525 = vmatmul.mubr.f32.gmra.mrb[0].mxu0 %v3458
        %v3526 = vpop.f32.mrb[0].mxu0
        %v3527 = vadd.f32 %v3455, %v3526
        %v3528 = vpop.f32.mrb[0].mxu0
        %3529 = vdwg.mxu0
        %v3530 = vmax.f32 %v3527, 0.0
        %v3532 = vlaneseq
        %v3533 = vshrl.u32 %v3532, 7
        %v3534 = vsub.s32 0, %v3533
        %v3535 = vrot.slane %v3450, %v3534
        %vm3537 = vcmask 523264
        %v3539 = vsel %vm3537, %v3530, 0
        %3541 = vmatprep.subr.mxu0 0.0
        %3542 = vmatpush1.msra.mxu0 %v3442
        %3543 = vmatprep.subr.mxu0 0.0
        %3544 = vmatpush1.msra.mxu0 %v3443
        %3545 = vmatprep.subr.mxu0 0.0
        %3546 = vmatpush1.msra.mxu0 %v3444
        %3547 = vmatprep.subr.mxu0 0.0
        %3548 = vmatpush1.msra.mxu0 %v3445
        %3549 = vmatprep.subr.mxu0 0.0
        %3550 = vmatpush1.msra.mxu0 %v3446
        %3551 = vmatprep.subr.mxu0 0.0
        %3552 = vmatpush1.msra.mxu0 %v3447
        %3553 = vmatprep.subr.mxu0 0.0
        %3554 = vmatpush1.msra.mxu0 %v3448
        %3555 = vmatprep.subr.mxu0 0.0
        %3556 = vmatpush1.msra.mxu0 %v3449
        %3557 = vmatprep.subr.mxu0 0.0
        %3558 = vmatpush1.msra.mxu0 0.0
        %3559 = vmatprep.subr.mxu0 0.0
        %3560 = vmatpush1.msra.mxu0 0.0
        %3561 = vmatprep.subr.mxu0 0.0
        %3562 = vmatpush1.msra.mxu0 0.0
        %3563 = vmatprep.subr.mxu0 0.0
        %3564 = vmatpush1.msra.mxu0 0.0
        %3565 = vmatprep.subr.mxu0 0.0
        %3566 = vmatpush1.msra.mxu0 0.0
        %3567 = vmatprep.subr.mxu0 0.0
        %3568 = vmatpush1.msra.mxu0 0.0
        %3569 = vmatprep.subr.mxu0 0.0
        %3570 = vmatpush1.msra.mxu0 0.0
        %3571 = vmatprep.subr.mxu0 0.0
        %3572 = vmatpush1.msra.mxu0 0.0
        %3573 = vmatprep.subr.mxu0 0.0
        %3574 = vmatpush1.msra.mxu0 0.0
        %3575 = vmatprep.subr.mxu0 0.0
        %3576 = vmatpush1.msra.mxu0 0.0
        %3577 = vmatprep.subr.mxu0 0.0
        %3578 = vmatpush1.msra.mxu0 0.0
        %3579 = vmatprep.subr.mxu0 0.0
        %3580 = vmatpush1.msra.mxu0 0.0
        %3581 = vmatprep.subr.mxu0 0.0
        %3582 = vmatpush1.msra.mxu0 0.0
        %3583 = vmatprep.subr.mxu0 0.0
        %3584 = vmatpush1.msra.mxu0 0.0
        %3585 = vmatprep.subr.mxu0 0.0
        %3586 = vmatpush1.msra.mxu0 0.0
        %3587 = vmatprep.subr.mxu0 0.0
        %3588 = vmatpush1.msra.mxu0 0.0
        %3589 = vmatprep.subr.mxu0 0.0
        %3590 = vmatpush1.msra.mxu0 0.0
        %3591 = vmatprep.subr.mxu0 0.0
        %3592 = vmatpush1.msra.mxu0 0.0
        %3593 = vmatprep.subr.mxu0 0.0
        %3594 = vmatpush1.msra.mxu0 0.0
        %3595 = vmatprep.subr.mxu0 0.0
        %3596 = vmatpush1.msra.mxu0 0.0
        %3597 = vmatprep.subr.mxu0 0.0
        %3598 = vmatpush1.msra.mxu0 0.0
        %3599 = vmatprep.subr.mxu0 0.0
        %3600 = vmatpush1.msra.mxu0 0.0
        %3601 = vmatprep.subr.mxu0 0.0
        %3602 = vmatpush1.msra.mxu0 0.0
        %3603 = vmatprep.subr.mxu0 0.0
        %3604 = vmatpush1.msra.mxu0 0.0
        %3605 = vmatprep.mubr.f32.mxu0 0.0
        %3606 = vmatmul.mubr.f32.gmra.mrb[0].mxu0 %v3539
        %v3607 = vpop.f32.mrb[0].mxu0
        %v3608 = vadd.f32 %v3535, %v3607
        %v3609 = vpop.f32.mrb[0].mxu0
        %3610 = vdwg.mxu0
        %v3611 = vadd.f32 %v3436, %v3608
        %v3612 = vld [vmem:[%s1145] sm:$0x1]
        %v3613 = vld [vmem:[%s1148] sm:$0x1]
        %v3614 = vsel %vm1180, %v3611, 0.0
        %3615 = vadd.xlane.f32.xlu0 %v3614
        %v3616 = vpop.xlane.xlu0 %3615
        %v3617 = vmul.f32 %v3616, %v2229
        %v3618 = vsub.f32 %v3611, %v3617
        %v3619 = vmul.f32 %v3618, %v3618
        %v3620 = vsel %vm1180, %v3619, 0.0
        %3621 = vadd.xlane.f32.xlu0 %v3620
        %v3622 = vpop.xlane.xlu0 %3621
        %v3623 = vmul.f32 %v3622, %v2229
        %v3624 = vadd.f32 %v3623, 1e-05
        %v3625 = vrsqrt.pop %v3624
        %v3626 = vmul.f32 %v3618, %v3625
        %v3628 = vlaneseq
        %v3629 = vshrl.u32 %v3628, 7
        %v3630 = vsub.s32 0, %v3629
        %v3631 = vrot.slane %v3612, %v3630
        %v3633 = vmul.f32 %v3626, %v3631
        %v3635 = vlaneseq
        %v3636 = vshrl.u32 %v3635, 7
        %v3637 = vsub.s32 0, %v3636
        %v3638 = vrot.slane %v3613, %v3637
        %v3640 = vadd.f32 %v3633, %v3638
        %3641 = vst.msk [vmem:[%s1152] sm:$0xff] %vm1180, %v3640
        %p3642 = scmp.lt.s32.totalorder %s44, 1
        %s3643 = scalar_select %p3642, %s44, 1
        %s3644 = smul.addr %s3643, 8
        %s3645 = scalar_lea.vmem %s24, %s3644
        %s3646 = sand.u32 %s710, 1
        %s3647 = scalar_lea.sflag [#allocation3], %s3646
        %s3648 = sand.u32 %s710, 1
        %s3649 = smul.addr %s3648, 32
        %s3650 = scalar_lea.vmem [#allocation2], %s3649
        // Predicated region
        $region121: #{seq2seq_forward.4} parent=115 // pred_check
          %p3651 = pneg %p694
        $region122: #{seq2seq_forward.4} parent=115 // pred_check_branch
          %3653 = sbr.rel (%p3651) target = $region124
        $region123: #{seq2seq_forward.4} parent=115 // pred_region
          _
        $region124: #{seq2seq_forward.4} parent=115 // pred_fallthru
          _
        // Predicated region
        $region125: #{seq2seq_forward.4} parent=115 // pred_check
          %p3654 = pneg %p720
        $region126: #{seq2seq_forward.4} parent=115 // pred_check_branch
          %3656 = sbr.rel (%p3654) target = $region128
        $region127: #{seq2seq_forward.4} parent=115 // pred_region
          %s3658 = ssub.s32 512, 512
          %3659 = vsyncadd %s3647, %s3658
          %s3660 = smul.addr %s44, 4
          %s3661 = smul.addr %s3660, 128
          %s3662 = scalar_lea.hbm %s25, %s3661
          %s3663 = sshll.u32 %s3650, 4
          %s3664 = int_to_ptr.vmem [resolvable:$true] %s3663
          %3669 = dma.vmem_to_hbm [thread:$0]  %s3664, 512, %s3662, %s3647, 128, 128, 8
        $region128: #{seq2seq_forward.4} parent=115 // pred_fallthru
          _
      $region116: #{seq2seq_forward.4} parent=5 // pred_fallthru
        _
      %p3670 = scmp.le.s32.totalorder 2, %s35
      // Predicated region
      $region129: #{seq2seq_forward.4} parent=5 // pred_check
        %p3671 = pneg %p3670
      $region130: #{seq2seq_forward.4} parent=5 // pred_check_branch
        %3673 = sbr.rel (%p3671) target = $region132
      $region131: #{seq2seq_forward.4} parent=5 // pred_region
        %s3674 = ssub.s32 %s35, 2
        // Predicated region
        $region133: #{seq2seq_forward.4} parent=131 // pred_check
          %p3675 = pneg %p700
        $region134: #{seq2seq_forward.4} parent=131 // pred_check_branch
          %3677 = sbr.rel (%p3675) target = $region136
        $region135: #{seq2seq_forward.4} parent=131 // pred_region
          %p3678 = scmp.lt.s32.totalorder %s46, 1
          %s3679 = scalar_select %p3678, %s46, 1
          %s3680 = smul.addr %s3679, 8
          %s3681 = scalar_lea.vmem %s24, %s3680
        $region136: #{seq2seq_forward.4} parent=131 // pred_fallthru
          _
        // Predicated region
        $region137: #{seq2seq_forward.4} parent=131 // pred_check
          %p3682 = pneg %p726
        $region138: #{seq2seq_forward.4} parent=131 // pred_check_branch
          %3684 = sbr.rel (%p3682) target = $region140
        $region139: #{seq2seq_forward.4} parent=131 // pred_region
          %s3685 = sand.u32 %s711, 1
          %s3686 = scalar_lea.sflag [#allocation3], %s3685
          %s3687 = sand.u32 %s711, 1
          %s3688 = smul.addr %s3687, 32
          %s3689 = scalar_lea.vmem [#allocation2], %s3688
          %3690 = dma.done %s3686, 512
        $region140: #{seq2seq_forward.4} parent=131 // pred_fallthru
          _
      $region132: #{seq2seq_forward.4} parent=5 // pred_fallthru
        _
    $region6: #{seq2seq_forward.4} parent=1 // loop_footer
      %s39 = sadd.s32 1, %s35
    $region7: #{seq2seq_forward.4} parent=1 // loop_footer_branch
      %34 = sbr.rel target = $region3
    $region8: #{seq2seq_forward.4} parent=1 // loop_exit
      _
    %3691 = vsyncpa [#allocation3], 1
    %s3692 = scalar_lea.sflag [#allocation3], 1
    %3693 = vsyncpa %s3692, 1

</llo_original>
